<compile_context>
chip_gen: v7x
topology: tpu7x:2x2x1
jax: 0.10.0
libtpu: 0.0.40
codegen_flags: <defaults>
</compile_context>

<pallas_src>
import functools
import math

import jax
import jax.numpy as jnp
from jax.experimental import pallas as pl
from jax.experimental.pallas import tpu as pltpu


def _silu(x):
    # numerically stable x * sigmoid(x)
    e = jnp.exp(-jnp.abs(x))
    sig = jnp.where(x >= 0, 1.0 / (1.0 + e), e / (1.0 + e))
    return x * sig


def _softplus(x):
    # matches PyTorch softplus (linear branch above threshold)
    return jnp.where(x > 20.0, x, jnp.log1p(jnp.exp(jnp.minimum(x, 20.0))))


def _shift2d(x, dh, dw):
    """y[h, w, :] = x[h+dh, w+dw, :], zero outside the image."""
    H, W, C = x.shape
    if dh > 0:
        x = jnp.concatenate([x[dh:], jnp.zeros((dh, W, C), x.dtype)], axis=0)
    elif dh < 0:
        x = jnp.concatenate([jnp.zeros((-dh, W, C), x.dtype), x[:dh]], axis=0)
    if dw > 0:
        x = jnp.concatenate([x[:, dw:], jnp.zeros((H, dw, C), x.dtype)], axis=1)
    elif dw < 0:
        x = jnp.concatenate([jnp.zeros((H, -dw, C), x.dtype), x[:, :dw]], axis=1)
    return x


# --------------------------------------------------------------------------
# Fused depth-stack of Light_VSSBlock layers.
# grid = (batch, layer); activation stays resident in the output VMEM block
# across the layer axis (output BlockSpec index depends only on batch).
# --------------------------------------------------------------------------
def vss_stack_kernel(x_ref,
                     ln1_g, ln1_b,
                     in_w, in_b,
                     conv_w, conv_b,
                     xproj_w, dt_bias,
                     a_log_t, d_par,
                     on_g, on_b,
                     out_w, out_b,
                     o_ref,
                     dt_s, u_s, y_s, b_s, c_s,
                     *, H, W, C, d_inner, d_state, scan_blk):
    L = H * W
    layer = pl.program_id(1)

    # Layer 0: seed the resident activation block from the HBM input tile.
    @pl.when(layer == 0)
    def _():
        o_ref[...] = x_ref[...]

    x_in = o_ref[...]                                           # (H, W, C)

    # ---- LayerNorm (ln_1) over channels ----
    mu = jnp.mean(x_in, axis=-1, keepdims=True)
    var = jnp.mean((x_in - mu) ** 2, axis=-1, keepdims=True)
    xn = (x_in - mu) * jax.lax.rsqrt(var + 1e-5) * ln1_g[...] + ln1_b[...]

    # ---- in_proj: C -> 2*d_inner (bf16 MXU, f32 accum) ----
    xz = jnp.dot(xn.reshape(L, C).astype(jnp.bfloat16), in_w[...],
                 preferred_element_type=jnp.float32) + in_b[...]
    xc = xz[:, :d_inner].reshape(H, W, d_inner)
    z = xz[:, d_inner:]                                         # (L, d_inner)

    # ---- depthwise 3x3 conv (padding=1) + SiLU ----
    cw = conv_w[...]                                            # (9, d_inner)
    acc = jnp.zeros((H, W, d_inner), jnp.float32)
    for dh in (-1, 0, 1):
        for dw in (-1, 0, 1):
            acc = acc + _shift2d(xc, dh, dw) * cw[(dh + 1) * 3 + (dw + 1)]
    acc = acc + conv_b[...]                                     # bias hoisted
    u = _silu(acc).reshape(L, d_inner)

    # ---- fused x_proj + dt_proj:  u @ W -> [dt_pre | B | C] ----
    xdbl = jnp.dot(u.astype(jnp.bfloat16), xproj_w[...],
                   preferred_element_type=jnp.float32)
    dt = _softplus(xdbl[:, :d_inner] + dt_bias[...])            # (L, d_inner)

    u_s[...] = u
    dt_s[...] = dt
    b_s[...] = xdbl[:, d_inner:d_inner + d_state]               # (L, d_state)
    c_s[...] = xdbl[:, d_inner + d_state:d_inner + 2 * d_state]

    # ---- chunked selective scan ----
    # state h layout: (d_state, d_inner) -> d_inner on lanes, d_state reduced
    # on sublanes; per-chunk discretization, y accumulated inside the scan
    # (no (L, d_inner, d_state) scratch).
    A_t = -jnp.exp(a_log_t[...])                                # (d_state, d_inner)
    T = scan_blk
    n_blk = L // T
    A_full = jnp.broadcast_to(A_t[None], (T, d_state, d_inner))  # hoisted

    def blk_body(blk, h):
        t0 = pl.multiple_of(blk * T, T)
        dtb = dt_s[pl.ds(t0, T), :]                             # (T, d_inner)
        ub = u_s[pl.ds(t0, T), :]
        Bb = b_s[pl.ds(t0, T), :]                               # (T, d_state)
        Cb = c_s[pl.ds(t0, T), :]
        dA = jnp.exp(dtb[:, None, :] * A_full)                  # (T, S, D)
        dBu = (dtb * ub)[:, None, :] * Bb[:, :, None]           # (T, S, D)
        rows = []
        for i in range(T):                                      # unrolled
            h = dA[i] * h + dBu[i]                              # (S, D)
            rows.append(jnp.sum(h * Cb[i, :, None], axis=0)[None, :])
        y_s[pl.ds(t0, T), :] = jnp.concatenate(rows, axis=0)
        return h

    jax.lax.fori_loop(0, n_blk, blk_body,
                      jnp.zeros((d_state, d_inner), jnp.float32))

    y = y_s[...] + u_s[...] * d_par[...]                        # (L, d_inner)

    # ---- out_norm (LayerNorm over d_inner) ----
    mu2 = jnp.mean(y, axis=-1, keepdims=True)
    var2 = jnp.mean((y - mu2) ** 2, axis=-1, keepdims=True)
    y = (y - mu2) * jax.lax.rsqrt(var2 + 1e-5) * on_g[...] + on_b[...]

    # ---- gate + out_proj + residual ----
    y = y * _silu(z)
    out = jnp.dot(y.astype(jnp.bfloat16), out_w[...],
                  preferred_element_type=jnp.float32) + out_b[...]
    o_ref[...] = x_in + out.reshape(H, W, C)


def run_vss_stack(x_nhwc, layer_params):
    B, H, W, C = x_nhwc.shape
    depth = len(layer_params)
    d_inner = layer_params[0]["in_proj_w"].shape[1] // 2
    d_state = layer_params[0]["A_log"].shape[1]
    dt_rank = layer_params[0]["dt_proj_w"].shape[0]
    L = H * W
    scan_blk = 8 if L % 8 == 0 else 1   # inner-scan unroll / chunk size

    def fused_xproj(p):
        w = p["x_proj_w"]
        # dt_low @ dt_proj_w == u @ (x_proj_w[:, :dt_rank] @ dt_proj_w)
        return jnp.concatenate([w[:, :dt_rank] @ p["dt_proj_w"],
                                w[:, dt_rank:]], axis=1)

    def stack(fn, dtype=jnp.float32):
        return jnp.stack([fn(p) for p in layer_params]).astype(dtype)

    weights = [
        stack(lambda p: p["ln1_g"]), stack(lambda p: p["ln1_b"]),
        stack(lambda p: p["in_proj_w"], jnp.bfloat16),
        stack(lambda p: p["in_proj_b"]),
        stack(lambda p: p["conv_w"]), stack(lambda p: p["conv_b"]),
        stack(fused_xproj, jnp.bfloat16),
        stack(lambda p: p["dt_proj_b"]),
        stack(lambda p: p["A_log"].T),          # (d_state, d_inner) layout
        stack(lambda p: p["D"]),
        stack(lambda p: p["out_norm_g"]), stack(lambda p: p["out_norm_b"]),
        stack(lambda p: p["out_proj_w"], jnp.bfloat16),
        stack(lambda p: p["out_proj_b"]),
    ]

    kern = functools.partial(vss_stack_kernel, H=H, W=W, C=C,
                             d_inner=d_inner, d_state=d_state,
                             scan_blk=scan_blk)

    def wspec(w):
        nd = w.ndim
        return pl.BlockSpec((None,) + tuple(w.shape[1:]),
                            lambda b, l, _n=nd: (l,) + (0,) * (_n - 1))

    in_specs = [pl.BlockSpec((None, H, W, C), lambda b, l: (b, 0, 0, 0))]
    in_specs += [wspec(w) for w in weights]

    flops_step = (2 * L * (C * 2 * d_inner + d_inner * (d_inner + 2 * d_state)
                           + d_inner * C)
                  + 6 * L * d_state * d_inner + 18 * L * d_inner)
    trans_step = L * d_state * d_inner + 4 * L * d_inner
    bytes_step = (8 * H * W * C + 16 * L * d_inner
                  + sum(int(w.size) * w.dtype.itemsize for w in weights) // depth)

    return pl.pallas_call(
        kern,
        out_shape=jax.ShapeDtypeStruct((B, H, W, C), jnp.float32),
        grid_spec=pltpu.PrefetchScalarGridSpec(
            num_scalar_prefetch=0,
            grid=(B, depth),
            in_specs=in_specs,
            out_specs=pl.BlockSpec((None, H, W, C), lambda b, l: (b, 0, 0, 0)),
            scratch_shapes=[
                pltpu.VMEM((L, d_inner), jnp.float32),   # dt
                pltpu.VMEM((L, d_inner), jnp.float32),   # u
                pltpu.VMEM((L, d_inner), jnp.float32),   # y
                pltpu.VMEM((L, d_state), jnp.float32),   # B
                pltpu.VMEM((L, d_state), jnp.float32),   # C
            ]),
        compiler_params=pltpu.CompilerParams(
            dimension_semantics=("parallel", "arbitrary"),
            vmem_limit_bytes=48 * 1024 * 1024),
        cost_estimate=pl.CostEstimate(
            flops=int(B * depth * flops_step),
            transcendentals=int(B * depth * trans_step),
            bytes_accessed=int(B * depth * bytes_step)),
    )(x_nhwc, *weights)


# --------------------------------------------------------------------------
# PatchMerging2D downsample kernel (norm + channel reduction in Pallas)
# --------------------------------------------------------------------------
def patch_merge_kernel(x_ref, g_ref, b_ref, w_ref, o_ref, *, Hd, Wd, C4, C2):
    x = x_ref[...]                                              # (Hd, Wd, 4C)
    mu = jnp.mean(x, axis=-1, keepdims=True)
    var = jnp.mean((x - mu) ** 2, axis=-1, keepdims=True)
    xn = (x - mu) * jax.lax.rsqrt(var + 1e-5) * g_ref[...] + b_ref[...]
    y = jnp.dot(xn.reshape(Hd * Wd, C4).astype(jnp.bfloat16), w_ref[...],
                preferred_element_type=jnp.float32)             # (Hd*Wd, 2C)
    o_ref[...] = y.reshape(Hd, Wd, C2)


def run_patch_merging(x_nhwc, p):
    B, H, W, C = x_nhwc.shape
    # TODO(synk): 2x2 neighborhood gather kept as plain-JAX glue (strided
    # slicing inside the kernel would need strided ref reads).
    x0 = x_nhwc[:, 0::2, 0::2, :]
    x1 = x_nhwc[:, 1::2, 0::2, :]
    x2 = x_nhwc[:, 0::2, 1::2, :]
    x3 = x_nhwc[:, 1::2, 1::2, :]
    xc = jnp.concatenate([x0, x1, x2, x3], axis=-1)             # (B, H/2, W/2, 4C)
    Hd, Wd, C4, C2 = H // 2, W // 2, 4 * C, 2 * C

    kern = functools.partial(patch_merge_kernel, Hd=Hd, Wd=Wd, C4=C4, C2=C2)
    return pl.pallas_call(
        kern,
        out_shape=jax.ShapeDtypeStruct((B, Hd, Wd, C2), jnp.float32),
        grid_spec=pltpu.PrefetchScalarGridSpec(
            num_scalar_prefetch=0,
            grid=(B,),
            in_specs=[
                pl.BlockSpec((None, Hd, Wd, C4), lambda b: (b, 0, 0, 0)),
                pl.BlockSpec((1, C4), lambda b: (0, 0)),
                pl.BlockSpec((1, C4), lambda b: (0, 0)),
                pl.BlockSpec((C4, C2), lambda b: (0, 0)),
            ],
            out_specs=pl.BlockSpec((None, Hd, Wd, C2), lambda b: (b, 0, 0, 0))),
        compiler_params=pltpu.CompilerParams(
            dimension_semantics=("parallel",)),
    )(xc, p["norm_g"], p["norm_b"], p["red_w"].astype(jnp.bfloat16))


# --------------------------------------------------------------------------
# Full backbone block forward:  (x_downsampled, x)  like the PyTorch module
# --------------------------------------------------------------------------
def mamba_backbone_block_forward(x_nchw, layer_params, ds_params):
    x = jnp.transpose(x_nchw, (0, 2, 3, 1))          # NCHW -> NHWC
    x = run_vss_stack(x, layer_params)               # all layers, one kernel
    x_out_nchw = jnp.transpose(x, (0, 3, 1, 2))      # back to NCHW
    if ds_params is not None:
        x_ds = run_patch_merging(x, ds_params)       # consumes NHWC (= permute(0,2,3,1))
    else:
        x_ds = None
    return x_ds, x_out_nchw


# --------------------------------------------------------------------------
# Deterministic parameter initialization (PyTorch-like per-layer layout)
# --------------------------------------------------------------------------
def init_vss_params(key, dim, d_state):
    d_inner = 2 * dim
    dt_rank = max(1, math.ceil(dim / 16))
    ks = jax.random.split(key, 6)

    def nrm(k, shape, scale=0.02):
        return (scale * jax.random.normal(k, shape)).astype(jnp.float32)

    A = jnp.tile(jnp.arange(1, d_state + 1, dtype=jnp.float32)[None, :],
                 (d_inner, 1))
    return dict(
        ln1_g=jnp.ones((1, dim), jnp.float32),
        ln1_b=jnp.zeros((1, dim), jnp.float32),
        in_proj_w=nrm(ks[0], (dim, 2 * d_inner)),
        in_proj_b=jnp.zeros((1, 2 * d_inner), jnp.float32),
        conv_w=nrm(ks[1], (9, d_inner), 0.1),          # (3*3, d_inner) depthwise
        conv_b=jnp.zeros((1, d_inner), jnp.float32),
        x_proj_w=nrm(ks[2], (d_inner, dt_rank + 2 * d_state)),
        dt_proj_w=nrm(ks[3], (dt_rank, d_inner), 0.1),
        dt_proj_b=nrm(ks[4], (1, d_inner), 0.1),
        A_log=jnp.log(A),
        D=jnp.ones((1, d_inner), jnp.float32),
        out_norm_g=jnp.ones((1, d_inner), jnp.float32),
        out_norm_b=jnp.zeros((1, d_inner), jnp.float32),
        out_proj_w=nrm(ks[5], (d_inner, dim)),
        out_proj_b=jnp.zeros((1, dim), jnp.float32),
    )


def init_patch_merge_params(key, dim):
    return dict(
        norm_g=jnp.ones((1, 4 * dim), jnp.float32),
        norm_b=jnp.zeros((1, 4 * dim), jnp.float32),
        red_w=(0.02 * jax.random.normal(key, (4 * dim, 2 * dim))).astype(jnp.float32),
    )


if __name__ == "__main__":
    key = jax.random.PRNGKey(0)
    B, C, H, W = 2, 4, 16, 16
    depth, d_state = 2, 16

    kx, kp = jax.random.split(key)
    x = jax.random.normal(kx, (B, C, H, W), dtype=jnp.float32)   # NCHW input

    layer_keys = jax.random.split(kp, depth + 1)
    layer_params = [init_vss_params(layer_keys[i], C, d_state) for i in range(depth)]
    ds_params = init_patch_merge_params(layer_keys[-1], C)

    x_ds, x_out = mamba_backbone_block_forward(x, layer_params, ds_params)
    jax.block_until_ready((x_ds, x_out))
    assert x_out.shape == (B, C, H, W)
    assert x_ds.shape == (B, H // 2, W // 2, 2 * C)
    assert bool(jnp.all(jnp.isfinite(x_out))) and bool(jnp.all(jnp.isfinite(x_ds)))
    print("KERNEL_OK")
</pallas_src>

<mosaic_0001>
module attributes {stable_mosaic.version = 11 : i64} {
  func.func @vss_stack_kernel(%arg0: i32, %arg1: i32, %arg2: memref<1x16x16x4xf32, #tpu.memory_space<vmem>>, %arg3: memref<1x1x4xf32, #tpu.memory_space<vmem>>, %arg4: memref<1x1x4xf32, #tpu.memory_space<vmem>>, %arg5: memref<1x4x16xbf16, #tpu.memory_space<vmem>>, %arg6: memref<1x1x16xf32, #tpu.memory_space<vmem>>, %arg7: memref<1x9x8xf32, #tpu.memory_space<vmem>>, %arg8: memref<1x1x8xf32, #tpu.memory_space<vmem>>, %arg9: memref<1x8x40xbf16, #tpu.memory_space<vmem>>, %arg10: memref<1x1x8xf32, #tpu.memory_space<vmem>>, %arg11: memref<1x16x8xf32, #tpu.memory_space<vmem>>, %arg12: memref<1x1x8xf32, #tpu.memory_space<vmem>>, %arg13: memref<1x1x8xf32, #tpu.memory_space<vmem>>, %arg14: memref<1x1x8xf32, #tpu.memory_space<vmem>>, %arg15: memref<1x8x4xbf16, #tpu.memory_space<vmem>>, %arg16: memref<1x1x4xf32, #tpu.memory_space<vmem>>, %arg17: memref<1x16x16x4xf32, #tpu.memory_space<vmem>>, %arg18: memref<256x8xf32, #tpu.memory_space<vmem>>, %arg19: memref<256x8xf32, #tpu.memory_space<vmem>>, %arg20: memref<256x8xf32, #tpu.memory_space<vmem>>, %arg21: memref<256x16xf32, #tpu.memory_space<vmem>>, %arg22: memref<256x16xf32, #tpu.memory_space<vmem>>) attributes {dimension_semantics = [#tpu.dimension_semantics<parallel>, #tpu.dimension_semantics<arbitrary>], iteration_bounds = array<i64: 2, 2>, scalar_prefetch = 0 : i64, scratch_operands = 5 : i64, tpu.core_type = #tpu.core_type<tc>, window_params = [{transform_indices = @transform_0, window_bounds = array<i64: 1, 16, 16, 4>}, {transform_indices = @transform_1, window_bounds = array<i64: 1, 1, 4>}, {transform_indices = @transform_2, window_bounds = array<i64: 1, 1, 4>}, {transform_indices = @transform_3, window_bounds = array<i64: 1, 4, 16>}, {transform_indices = @transform_4, window_bounds = array<i64: 1, 1, 16>}, {transform_indices = @transform_5, window_bounds = array<i64: 1, 9, 8>}, {transform_indices = @transform_6, window_bounds = array<i64: 1, 1, 8>}, {transform_indices = @transform_7, window_bounds = array<i64: 1, 8, 40>}, {transform_indices = @transform_8, window_bounds = array<i64: 1, 1, 8>}, {transform_indices = @transform_9, window_bounds = array<i64: 1, 16, 8>}, {transform_indices = @transform_10, window_bounds = array<i64: 1, 1, 8>}, {transform_indices = @transform_11, window_bounds = array<i64: 1, 1, 8>}, {transform_indices = @transform_12, window_bounds = array<i64: 1, 1, 8>}, {transform_indices = @transform_13, window_bounds = array<i64: 1, 8, 4>}, {transform_indices = @transform_14, window_bounds = array<i64: 1, 1, 4>}, {transform_indices = @transform_15, window_bounds = array<i64: 1, 16, 16, 4>}]} {
    %c0_i32 = arith.constant 0 : i32
    %0 = arith.cmpi eq, %arg1, %c0_i32 : i32
    %1 = arith.extui %0 : i1 to i32
    %c0_i32_0 = arith.constant 0 : i32
    %2 = arith.cmpi ne, %1, %c0_i32_0 : i32
    scf.if %2 {
      %c0_103 = arith.constant 0 : index
      %c0_104 = arith.constant 0 : index
      %c0_105 = arith.constant 0 : index
      %c0_106 = arith.constant 0 : index
      %254 = vector.load %arg2[%c0_103, %c0_104, %c0_105, %c0_106] : memref<1x16x16x4xf32, #tpu.memory_space<vmem>>, vector<1x16x16x4xf32>
      %255 = vector.shape_cast %254 : vector<1x16x16x4xf32> to vector<16x16x4xf32>
      %c0_107 = arith.constant 0 : index
      %c0_108 = arith.constant 0 : index
      %c0_109 = arith.constant 0 : index
      %c0_110 = arith.constant 0 : index
      %256 = vector.load %arg17[%c0_107, %c0_108, %c0_109, %c0_110] : memref<1x16x16x4xf32, #tpu.memory_space<vmem>>, vector<1x16x16x4xf32>
      %257 = vector.shape_cast %256 : vector<1x16x16x4xf32> to vector<16x16x4xf32>
      %258 = vector.shape_cast %255 : vector<16x16x4xf32> to vector<1x16x16x4xf32>
      tpu.vector_store %arg17[%c0_107, %c0_108, %c0_109, %c0_110], %258 {strides = array<i32>} : memref<1x16x16x4xf32, #tpu.memory_space<vmem>>, vector<1x16x16x4xf32>,
    } else {
    }
    %c0 = arith.constant 0 : index
    %c0_1 = arith.constant 0 : index
    %c0_2 = arith.constant 0 : index
    %c0_3 = arith.constant 0 : index
    %3 = vector.load %arg17[%c0, %c0_1, %c0_2, %c0_3] : memref<1x16x16x4xf32, #tpu.memory_space<vmem>>, vector<1x16x16x4xf32>
    %4 = vector.shape_cast %3 : vector<1x16x16x4xf32> to vector<16x16x4xf32>
    %cst = arith.constant dense<0.000000e+00> : vector<16x16xf32>
    %5 = vector.multi_reduction <add>, %4, %cst [2] : vector<16x16x4xf32> to vector<16x16xf32>
    %6 = vector.shape_cast %5 : vector<16x16xf32> to vector<16x16x1xf32>
    %cst_4 = arith.constant 4.000000e+00 : f32
    %7 = vector.broadcast %cst_4 : f32 to vector<16x16x1xf32>
    %8 = arith.divf %6, %7 : vector<16x16x1xf32>
    %9 = vector.broadcast %8 : vector<16x16x1xf32> to vector<16x16x4xf32>
    %10 = arith.subf %4, %9 : vector<16x16x4xf32>
    %11 = arith.mulf %10, %10 : vector<16x16x4xf32>
    %cst_5 = arith.constant dense<0.000000e+00> : vector<16x16xf32>
    %12 = vector.multi_reduction <add>, %11, %cst_5 [2] : vector<16x16x4xf32> to vector<16x16xf32>
    %13 = vector.shape_cast %12 : vector<16x16xf32> to vector<16x16x1xf32>
    %cst_6 = arith.constant 4.000000e+00 : f32
    %14 = vector.broadcast %cst_6 : f32 to vector<16x16x1xf32>
    %15 = arith.divf %13, %14 : vector<16x16x1xf32>
    %16 = vector.broadcast %8 : vector<16x16x1xf32> to vector<16x16x4xf32>
    %17 = arith.subf %4, %16 : vector<16x16x4xf32>
    %cst_7 = arith.constant 9.99999974E-6 : f32
    %18 = vector.broadcast %cst_7 : f32 to vector<16x16x1xf32>
    %19 = arith.addf %15, %18 : vector<16x16x1xf32>
    %20 = math.rsqrt %19 : vector<16x16x1xf32>
    %21 = vector.broadcast %20 : vector<16x16x1xf32> to vector<16x16x4xf32>
    %22 = arith.mulf %17, %21 : vector<16x16x4xf32>
    %c0_8 = arith.constant 0 : index
    %c0_9 = arith.constant 0 : index
    %c0_10 = arith.constant 0 : index
    %23 = vector.load %arg3[%c0_8, %c0_9, %c0_10] : memref<1x1x4xf32, #tpu.memory_space<vmem>>, vector<1x1x4xf32>
    %24 = vector.shape_cast %23 : vector<1x1x4xf32> to vector<1x4xf32>
    %25 = vector.shape_cast %24 : vector<1x4xf32> to vector<1x1x4xf32>
    %26 = vector.broadcast %25 : vector<1x1x4xf32> to vector<16x16x4xf32>
    %27 = arith.mulf %22, %26 : vector<16x16x4xf32>
    %c0_11 = arith.constant 0 : index
    %c0_12 = arith.constant 0 : index
    %c0_13 = arith.constant 0 : index
    %28 = vector.load %arg4[%c0_11, %c0_12, %c0_13] : memref<1x1x4xf32, #tpu.memory_space<vmem>>, vector<1x1x4xf32>
    %29 = vector.shape_cast %28 : vector<1x1x4xf32> to vector<1x4xf32>
    %30 = vector.shape_cast %29 : vector<1x4xf32> to vector<1x1x4xf32>
    %31 = vector.broadcast %30 : vector<1x1x4xf32> to vector<16x16x4xf32>
    %32 = arith.addf %27, %31 : vector<16x16x4xf32>
    %33 = vector.shape_cast %32 : vector<16x16x4xf32> to vector<256x4xf32>
    %34 = arith.truncf %33 : vector<256x4xf32> to vector<256x4xbf16>
    %c0_14 = arith.constant 0 : index
    %c0_15 = arith.constant 0 : index
    %c0_16 = arith.constant 0 : index
    %35 = vector.load %arg5[%c0_14, %c0_15, %c0_16] : memref<1x4x16xbf16, #tpu.memory_space<vmem>>, vector<1x4x16xbf16>
    %36 = vector.shape_cast %35 : vector<1x4x16xbf16> to vector<4x16xbf16>
    %cst_17 = arith.constant dense<0.000000e+00> : vector<256x16xf32>
    %37 = tpu.matmul %34, %36, %cst_17 {dimension_numbers = #tpu.dot_dimension_numbers<[1], [0], [0], [1], [0, 0, 1, 1], [], []>} : vector<256x4xbf16>, vector<4x16xbf16>, vector<256x16xf32> -> vector<256x16xf32>
    %c0_18 = arith.constant 0 : index
    %c0_19 = arith.constant 0 : index
    %c0_20 = arith.constant 0 : index
    %38 = vector.load %arg6[%c0_18, %c0_19, %c0_20] : memref<1x1x16xf32, #tpu.memory_space<vmem>>, vector<1x1x16xf32>
    %39 = vector.shape_cast %38 : vector<1x1x16xf32> to vector<1x16xf32>
    %40 = vector.broadcast %39 : vector<1x16xf32> to vector<256x16xf32>
    %41 = arith.addf %37, %40 : vector<256x16xf32>
    %42 = vector.extract_strided_slice %41 {offsets = [0, 0], sizes = [256, 8], strides = [1, 1]} : vector<256x16xf32> to vector<256x8xf32>
    %43 = vector.shape_cast %42 : vector<256x8xf32> to vector<16x16x8xf32>
    %44 = vector.extract_strided_slice %41 {offsets = [0, 8], sizes = [256, 8], strides = [1, 1]} : vector<256x16xf32> to vector<256x8xf32>
    %c0_21 = arith.constant 0 : index
    %c0_22 = arith.constant 0 : index
    %c0_23 = arith.constant 0 : index
    %45 = vector.load %arg7[%c0_21, %c0_22, %c0_23] : memref<1x9x8xf32, #tpu.memory_space<vmem>>, vector<1x9x8xf32>
    %46 = vector.shape_cast %45 : vector<1x9x8xf32> to vector<9x8xf32>
    %cst_24 = arith.constant 0.000000e+00 : f32
    %47 = vector.broadcast %cst_24 : f32 to vector<16x16x8xf32>
    %cst_25 = arith.constant 0.000000e+00 : f32
    %48 = vector.broadcast %cst_25 : f32 to vector<1x16x8xf32>
    %49 = vector.extract_strided_slice %43 {offsets = [0, 0, 0], sizes = [15, 16, 8], strides = [1, 1, 1]} : vector<16x16x8xf32> to vector<15x16x8xf32>
    %50 = tpu.concatenate %48, %49 in 0 : vector<1x16x8xf32>, vector<15x16x8xf32> -> vector<16x16x8xf32>
    %cst_26 = arith.constant 0.000000e+00 : f32
    %51 = vector.broadcast %cst_26 : f32 to vector<16x1x8xf32>
    %52 = vector.extract_strided_slice %50 {offsets = [0, 0, 0], sizes = [16, 15, 8], strides = [1, 1, 1]} : vector<16x16x8xf32> to vector<16x15x8xf32>
    %53 = tpu.concatenate %51, %52 in 1 : vector<16x1x8xf32>, vector<16x15x8xf32> -> vector<16x16x8xf32>
    %54 = vector.extract_strided_slice %46 {offsets = [0, 0], sizes = [1, 8], strides = [1, 1]} : vector<9x8xf32> to vector<1x8xf32>
    %55 = vector.shape_cast %54 : vector<1x8xf32> to vector<8xf32>
    %56 = vector.shape_cast %55 : vector<8xf32> to vector<1x1x8xf32>
    %57 = vector.broadcast %56 : vector<1x1x8xf32> to vector<16x16x8xf32>
    %58 = arith.mulf %53, %57 : vector<16x16x8xf32>
    %59 = arith.addf %47, %58 : vector<16x16x8xf32>
    %cst_27 = arith.constant 0.000000e+00 : f32
    %60 = vector.broadcast %cst_27 : f32 to vector<1x16x8xf32>
    %61 = vector.extract_strided_slice %43 {offsets = [0, 0, 0], sizes = [15, 16, 8], strides = [1, 1, 1]} : vector<16x16x8xf32> to vector<15x16x8xf32>
    %62 = tpu.concatenate %60, %61 in 0 : vector<1x16x8xf32>, vector<15x16x8xf32> -> vector<16x16x8xf32>
    %63 = vector.extract_strided_slice %46 {offsets = [1, 0], sizes = [1, 8], strides = [1, 1]} : vector<9x8xf32> to vector<1x8xf32>
    %64 = vector.shape_cast %63 : vector<1x8xf32> to vector<8xf32>
    %65 = vector.shape_cast %64 : vector<8xf32> to vector<1x1x8xf32>
    %66 = vector.broadcast %65 : vector<1x1x8xf32> to vector<16x16x8xf32>
    %67 = arith.mulf %62, %66 : vector<16x16x8xf32>
    %68 = arith.addf %59, %67 : vector<16x16x8xf32>
    %cst_28 = arith.constant 0.000000e+00 : f32
    %69 = vector.broadcast %cst_28 : f32 to vector<1x16x8xf32>
    %70 = vector.extract_strided_slice %43 {offsets = [0, 0, 0], sizes = [15, 16, 8], strides = [1, 1, 1]} : vector<16x16x8xf32> to vector<15x16x8xf32>
    %71 = tpu.concatenate %69, %70 in 0 : vector<1x16x8xf32>, vector<15x16x8xf32> -> vector<16x16x8xf32>
    %72 = vector.extract_strided_slice %71 {offsets = [0, 1, 0], sizes = [16, 15, 8], strides = [1, 1, 1]} : vector<16x16x8xf32> to vector<16x15x8xf32>
    %cst_29 = arith.constant 0.000000e+00 : f32
    %73 = vector.broadcast %cst_29 : f32 to vector<16x1x8xf32>
    %74 = tpu.concatenate %72, %73 in 1 : vector<16x15x8xf32>, vector<16x1x8xf32> -> vector<16x16x8xf32>
    %75 = vector.extract_strided_slice %46 {offsets = [2, 0], sizes = [1, 8], strides = [1, 1]} : vector<9x8xf32> to vector<1x8xf32>
    %76 = vector.shape_cast %75 : vector<1x8xf32> to vector<8xf32>
    %77 = vector.shape_cast %76 : vector<8xf32> to vector<1x1x8xf32>
    %78 = vector.broadcast %77 : vector<1x1x8xf32> to vector<16x16x8xf32>
    %79 = arith.mulf %74, %78 : vector<16x16x8xf32>
    %80 = arith.addf %68, %79 : vector<16x16x8xf32>
    %cst_30 = arith.constant 0.000000e+00 : f32
    %81 = vector.broadcast %cst_30 : f32 to vector<16x1x8xf32>
    %82 = vector.extract_strided_slice %43 {offsets = [0, 0, 0], sizes = [16, 15, 8], strides = [1, 1, 1]} : vector<16x16x8xf32> to vector<16x15x8xf32>
    %83 = tpu.concatenate %81, %82 in 1 : vector<16x1x8xf32>, vector<16x15x8xf32> -> vector<16x16x8xf32>
    %84 = vector.extract_strided_slice %46 {offsets = [3, 0], sizes = [1, 8], strides = [1, 1]} : vector<9x8xf32> to vector<1x8xf32>
    %85 = vector.shape_cast %84 : vector<1x8xf32> to vector<8xf32>
    %86 = vector.shape_cast %85 : vector<8xf32> to vector<1x1x8xf32>
    %87 = vector.broadcast %86 : vector<1x1x8xf32> to vector<16x16x8xf32>
    %88 = arith.mulf %83, %87 : vector<16x16x8xf32>
    %89 = arith.addf %80, %88 : vector<16x16x8xf32>
    %90 = vector.extract_strided_slice %46 {offsets = [4, 0], sizes = [1, 8], strides = [1, 1]} : vector<9x8xf32> to vector<1x8xf32>
    %91 = vector.shape_cast %90 : vector<1x8xf32> to vector<8xf32>
    %92 = vector.shape_cast %91 : vector<8xf32> to vector<1x1x8xf32>
    %93 = vector.broadcast %92 : vector<1x1x8xf32> to vector<16x16x8xf32>
    %94 = arith.mulf %43, %93 : vector<16x16x8xf32>
    %95 = arith.addf %89, %94 : vector<16x16x8xf32>
    %96 = vector.extract_strided_slice %43 {offsets = [0, 1, 0], sizes = [16, 15, 8], strides = [1, 1, 1]} : vector<16x16x8xf32> to vector<16x15x8xf32>
    %cst_31 = arith.constant 0.000000e+00 : f32
    %97 = vector.broadcast %cst_31 : f32 to vector<16x1x8xf32>
    %98 = tpu.concatenate %96, %97 in 1 : vector<16x15x8xf32>, vector<16x1x8xf32> -> vector<16x16x8xf32>
    %99 = vector.extract_strided_slice %46 {offsets = [5, 0], sizes = [1, 8], strides = [1, 1]} : vector<9x8xf32> to vector<1x8xf32>
    %100 = vector.shape_cast %99 : vector<1x8xf32> to vector<8xf32>
    %101 = vector.shape_cast %100 : vector<8xf32> to vector<1x1x8xf32>
    %102 = vector.broadcast %101 : vector<1x1x8xf32> to vector<16x16x8xf32>
    %103 = arith.mulf %98, %102 : vector<16x16x8xf32>
    %104 = arith.addf %95, %103 : vector<16x16x8xf32>
    %105 = vector.extract_strided_slice %43 {offsets = [1, 0, 0], sizes = [15, 16, 8], strides = [1, 1, 1]} : vector<16x16x8xf32> to vector<15x16x8xf32>
    %cst_32 = arith.constant 0.000000e+00 : f32
    %106 = vector.broadcast %cst_32 : f32 to vector<1x16x8xf32>
    %107 = tpu.concatenate %105, %106 in 0 : vector<15x16x8xf32>, vector<1x16x8xf32> -> vector<16x16x8xf32>
    %cst_33 = arith.constant 0.000000e+00 : f32
    %108 = vector.broadcast %cst_33 : f32 to vector<16x1x8xf32>
    %109 = vector.extract_strided_slice %107 {offsets = [0, 0, 0], sizes = [16, 15, 8], strides = [1, 1, 1]} : vector<16x16x8xf32> to vector<16x15x8xf32>
    %110 = tpu.concatenate %108, %109 in 1 : vector<16x1x8xf32>, vector<16x15x8xf32> -> vector<16x16x8xf32>
    %111 = vector.extract_strided_slice %46 {offsets = [6, 0], sizes = [1, 8], strides = [1, 1]} : vector<9x8xf32> to vector<1x8xf32>
    %112 = vector.shape_cast %111 : vector<1x8xf32> to vector<8xf32>
    %113 = vector.shape_cast %112 : vector<8xf32> to vector<1x1x8xf32>
    %114 = vector.broadcast %113 : vector<1x1x8xf32> to vector<16x16x8xf32>
    %115 = arith.mulf %110, %114 : vector<16x16x8xf32>
    %116 = arith.addf %104, %115 : vector<16x16x8xf32>
    %117 = vector.extract_strided_slice %43 {offsets = [1, 0, 0], sizes = [15, 16, 8], strides = [1, 1, 1]} : vector<16x16x8xf32> to vector<15x16x8xf32>
    %cst_34 = arith.constant 0.000000e+00 : f32
    %118 = vector.broadcast %cst_34 : f32 to vector<1x16x8xf32>
    %119 = tpu.concatenate %117, %118 in 0 : vector<15x16x8xf32>, vector<1x16x8xf32> -> vector<16x16x8xf32>
    %120 = vector.extract_strided_slice %46 {offsets = [7, 0], sizes = [1, 8], strides = [1, 1]} : vector<9x8xf32> to vector<1x8xf32>
    %121 = vector.shape_cast %120 : vector<1x8xf32> to vector<8xf32>
    %122 = vector.shape_cast %121 : vector<8xf32> to vector<1x1x8xf32>
    %123 = vector.broadcast %122 : vector<1x1x8xf32> to vector<16x16x8xf32>
    %124 = arith.mulf %119, %123 : vector<16x16x8xf32>
    %125 = arith.addf %116, %124 : vector<16x16x8xf32>
    %126 = vector.extract_strided_slice %43 {offsets = [1, 0, 0], sizes = [15, 16, 8], strides = [1, 1, 1]} : vector<16x16x8xf32> to vector<15x16x8xf32>
    %cst_35 = arith.constant 0.000000e+00 : f32
    %127 = vector.broadcast %cst_35 : f32 to vector<1x16x8xf32>
    %128 = tpu.concatenate %126, %127 in 0 : vector<15x16x8xf32>, vector<1x16x8xf32> -> vector<16x16x8xf32>
    %129 = vector.extract_strided_slice %128 {offsets = [0, 1, 0], sizes = [16, 15, 8], strides = [1, 1, 1]} : vector<16x16x8xf32> to vector<16x15x8xf32>
    %cst_36 = arith.constant 0.000000e+00 : f32
    %130 = vector.broadcast %cst_36 : f32 to vector<16x1x8xf32>
    %131 = tpu.concatenate %129, %130 in 1 : vector<16x15x8xf32>, vector<16x1x8xf32> -> vector<16x16x8xf32>
    %132 = vector.extract_strided_slice %46 {offsets = [8, 0], sizes = [1, 8], strides = [1, 1]} : vector<9x8xf32> to vector<1x8xf32>
    %133 = vector.shape_cast %132 : vector<1x8xf32> to vector<8xf32>
    %134 = vector.shape_cast %133 : vector<8xf32> to vector<1x1x8xf32>
    %135 = vector.broadcast %134 : vector<1x1x8xf32> to vector<16x16x8xf32>
    %136 = arith.mulf %131, %135 : vector<16x16x8xf32>
    %137 = arith.addf %125, %136 : vector<16x16x8xf32>
    %c0_37 = arith.constant 0 : index
    %c0_38 = arith.constant 0 : index
    %c0_39 = arith.constant 0 : index
    %138 = vector.load %arg8[%c0_37, %c0_38, %c0_39] : memref<1x1x8xf32, #tpu.memory_space<vmem>>, vector<1x1x8xf32>
    %139 = vector.shape_cast %138 : vector<1x1x8xf32> to vector<1x8xf32>
    %140 = vector.shape_cast %139 : vector<1x8xf32> to vector<1x1x8xf32>
    %141 = vector.broadcast %140 : vector<1x1x8xf32> to vector<16x16x8xf32>
    %142 = arith.addf %137, %141 : vector<16x16x8xf32>
    %143 = math.absf %142 : vector<16x16x8xf32>
    %cst_40 = arith.constant 0.000000e+00 : f32
    %144 = vector.broadcast %cst_40 : f32 to vector<16x16x8xf32>
    %145 = arith.subf %144, %143 : vector<16x16x8xf32>
    %146 = math.exp %145 : vector<16x16x8xf32>
    %cst_41 = arith.constant 0.000000e+00 : f32
    %147 = vector.broadcast %cst_41 : f32 to vector<16x16x8xf32>
    %148 = arith.cmpf oge, %142, %147 : vector<16x16x8xf32>
    %cst_42 = arith.constant 1.000000e+00 : f32
    %149 = vector.broadcast %cst_42 : f32 to vector<16x16x8xf32>
    %150 = arith.addf %149, %146 : vector<16x16x8xf32>
    %cst_43 = arith.constant 1.000000e+00 : f32
    %151 = vector.broadcast %cst_43 : f32 to vector<16x16x8xf32>
    %152 = arith.divf %151, %150 : vector<16x16x8xf32>
    %cst_44 = arith.constant 1.000000e+00 : f32
    %153 = vector.broadcast %cst_44 : f32 to vector<16x16x8xf32>
    %154 = arith.addf %153, %146 : vector<16x16x8xf32>
    %155 = arith.divf %146, %154 : vector<16x16x8xf32>
    %156 = arith.select %148, %152, %155 : vector<16x16x8xi1>, vector<16x16x8xf32>
    %157 = arith.mulf %142, %156 : vector<16x16x8xf32>
    %158 = vector.shape_cast %157 : vector<16x16x8xf32> to vector<256x8xf32>
    %159 = arith.truncf %158 : vector<256x8xf32> to vector<256x8xbf16>
    %c0_45 = arith.constant 0 : index
    %c0_46 = arith.constant 0 : index
    %c0_47 = arith.constant 0 : index
    %160 = vector.load %arg9[%c0_45, %c0_46, %c0_47] : memref<1x8x40xbf16, #tpu.memory_space<vmem>>, vector<1x8x40xbf16>
    %161 = vector.shape_cast %160 : vector<1x8x40xbf16> to vector<8x40xbf16>
    %cst_48 = arith.constant dense<0.000000e+00> : vector<256x40xf32>
    %162 = tpu.matmul %159, %161, %cst_48 {dimension_numbers = #tpu.dot_dimension_numbers<[1], [0], [0], [1], [0, 0, 1, 1], [], []>} : vector<256x8xbf16>, vector<8x40xbf16>, vector<256x40xf32> -> vector<256x40xf32>
    %163 = vector.extract_strided_slice %162 {offsets = [0, 0], sizes = [256, 8], strides = [1, 1]} : vector<256x40xf32> to vector<256x8xf32>
    %c0_49 = arith.constant 0 : index
    %c0_50 = arith.constant 0 : index
    %c0_51 = arith.constant 0 : index
    %164 = vector.load %arg10[%c0_49, %c0_50, %c0_51] : memref<1x1x8xf32, #tpu.memory_space<vmem>>, vector<1x1x8xf32>
    %165 = vector.shape_cast %164 : vector<1x1x8xf32> to vector<1x8xf32>
    %166 = vector.broadcast %165 : vector<1x8xf32> to vector<256x8xf32>
    %167 = arith.addf %163, %166 : vector<256x8xf32>
    %cst_52 = arith.constant 2.000000e+01 : f32
    %168 = vector.broadcast %cst_52 : f32 to vector<256x8xf32>
    %169 = arith.cmpf ogt, %167, %168 : vector<256x8xf32>
    %cst_53 = arith.constant 2.000000e+01 : f32
    %170 = vector.broadcast %cst_53 : f32 to vector<256x8xf32>
    %171 = arith.minimumf %167, %170 : vector<256x8xf32>
    %172 = math.exp %171 : vector<256x8xf32>
    %173 = math.log1p %172 : vector<256x8xf32>
    %174 = arith.select %169, %167, %173 : vector<256x8xi1>, vector<256x8xf32>
    %c0_54 = arith.constant 0 : index
    %c0_55 = arith.constant 0 : index
    %175 = vector.load %arg19[%c0_54, %c0_55] : memref<256x8xf32, #tpu.memory_space<vmem>>, vector<256x8xf32>
    tpu.vector_store %arg19[%c0_54, %c0_55], %158 {strides = array<i32>} : memref<256x8xf32, #tpu.memory_space<vmem>>, vector<256x8xf32>,
    %c0_56 = arith.constant 0 : index
    %c0_57 = arith.constant 0 : index
    %176 = vector.load %arg18[%c0_56, %c0_57] : memref<256x8xf32, #tpu.memory_space<vmem>>, vector<256x8xf32>
    tpu.vector_store %arg18[%c0_56, %c0_57], %174 {strides = array<i32>} : memref<256x8xf32, #tpu.memory_space<vmem>>, vector<256x8xf32>,
    %177 = vector.extract_strided_slice %162 {offsets = [0, 8], sizes = [256, 16], strides = [1, 1]} : vector<256x40xf32> to vector<256x16xf32>
    %c0_58 = arith.constant 0 : index
    %c0_59 = arith.constant 0 : index
    %178 = vector.load %arg21[%c0_58, %c0_59] : memref<256x16xf32, #tpu.memory_space<vmem>>, vector<256x16xf32>
    tpu.vector_store %arg21[%c0_58, %c0_59], %177 {strides = array<i32>} : memref<256x16xf32, #tpu.memory_space<vmem>>, vector<256x16xf32>,
    %179 = vector.extract_strided_slice %162 {offsets = [0, 24], sizes = [256, 16], strides = [1, 1]} : vector<256x40xf32> to vector<256x16xf32>
    %c0_60 = arith.constant 0 : index
    %c0_61 = arith.constant 0 : index
    %180 = vector.load %arg22[%c0_60, %c0_61] : memref<256x16xf32, #tpu.memory_space<vmem>>, vector<256x16xf32>
    tpu.vector_store %arg22[%c0_60, %c0_61], %179 {strides = array<i32>} : memref<256x16xf32, #tpu.memory_space<vmem>>, vector<256x16xf32>,
    %c0_62 = arith.constant 0 : index
    %c0_63 = arith.constant 0 : index
    %c0_64 = arith.constant 0 : index
    %181 = vector.load %arg11[%c0_62, %c0_63, %c0_64] : memref<1x16x8xf32, #tpu.memory_space<vmem>>, vector<1x16x8xf32>
    %182 = vector.shape_cast %181 : vector<1x16x8xf32> to vector<16x8xf32>
    %183 = math.exp %182 : vector<16x8xf32>
    %cst_65 = arith.constant 0.000000e+00 : f32
    %184 = vector.broadcast %cst_65 : f32 to vector<16x8xf32>
    %185 = arith.subf %184, %183 : vector<16x8xf32>
    %186 = vector.shape_cast %185 : vector<16x8xf32> to vector<1x16x8xf32>
    %187 = vector.shape_cast %186 : vector<1x16x8xf32> to vector<1x16x8xf32>
    %188 = vector.broadcast %187 : vector<1x16x8xf32> to vector<8x16x8xf32>
    %cst_66 = arith.constant 0.000000e+00 : f32
    %189 = vector.broadcast %cst_66 : f32 to vector<16x8xf32>
    %c0_i32_67 = arith.constant 0 : i32
    %c32_i32 = arith.constant 32 : i32
    %190 = arith.addi %c0_i32_67, %c32_i32 : i32
    %c1_i32 = arith.constant 1 : i32
    %191 = scf.for %arg23 = %c0_i32_67 to %190 step %c1_i32 iter_args(%arg24 = %189) -> (vector<16x8xf32>)  : i32 {
      %c8_i32 = arith.constant 8 : i32
      %254 = arith.muli %arg23, %c8_i32 : i32
      %255 = tpu.assume_multiple %254, 8 : i32
      %256 = arith.index_cast %255 : i32 to index
      %c0_103 = arith.constant 0 : index
      %257 = vector.load %arg18[%256, %c0_103] : memref<256x8xf32, #tpu.memory_space<vmem>>, vector<8x8xf32>
      %258 = arith.index_cast %255 : i32 to index
      %c0_104 = arith.constant 0 : index
      %259 = vector.load %arg19[%258, %c0_104] : memref<256x8xf32, #tpu.memory_space<vmem>>, vector<8x8xf32>
      %260 = arith.index_cast %255 : i32 to index
      %c0_105 = arith.constant 0 : index
      %261 = vector.load %arg21[%260, %c0_105] : memref<256x16xf32, #tpu.memory_space<vmem>>, vector<8x16xf32>
      %262 = arith.index_cast %255 : i32 to index
      %c0_106 = arith.constant 0 : index
      %263 = vector.load %arg22[%262, %c0_106] : memref<256x16xf32, #tpu.memory_space<vmem>>, vector<8x16xf32>
      %264 = vector.shape_cast %257 : vector<8x8xf32> to vector<8x1x8xf32>
      %265 = vector.broadcast %264 : vector<8x1x8xf32> to vector<8x16x8xf32>
      %266 = arith.mulf %265, %188 : vector<8x16x8xf32>
      %267 = math.exp %266 : vector<8x16x8xf32>
      %268 = arith.mulf %257, %259 : vector<8x8xf32>
      %269 = vector.shape_cast %268 : vector<8x8xf32> to vector<8x1x8xf32>
      %270 = vector.shape_cast %261 : vector<8x16xf32> to vector<8x16x1xf32>
      %271 = vector.broadcast %269 : vector<8x1x8xf32> to vector<8x16x8xf32>
      %272 = vector.broadcast %270 : vector<8x16x1xf32> to vector<8x16x8xf32>
      %273 = arith.mulf %271, %272 : vector<8x16x8xf32>
      %274 = vector.extract_strided_slice %267 {offsets = [0, 0, 0], sizes = [1, 16, 8], strides = [1, 1, 1]} : vector<8x16x8xf32> to vector<1x16x8xf32>
      %275 = vector.shape_cast %274 : vector<1x16x8xf32> to vector<16x8xf32>
      %276 = arith.mulf %275, %arg24 : vector<16x8xf32>
      %277 = vector.extract_strided_slice %273 {offsets = [0, 0, 0], sizes = [1, 16, 8], strides = [1, 1, 1]} : vector<8x16x8xf32> to vector<1x16x8xf32>
      %278 = vector.shape_cast %277 : vector<1x16x8xf32> to vector<16x8xf32>
      %279 = arith.addf %276, %278 : vector<16x8xf32>
      %280 = vector.extract_strided_slice %263 {offsets = [0, 0], sizes = [1, 16], strides = [1, 1]} : vector<8x16xf32> to vector<1x16xf32>
      %281 = vector.shape_cast %280 : vector<1x16xf32> to vector<16xf32>
      %282 = vector.shape_cast %281 : vector<16xf32> to vector<16x1xf32>
      %283 = vector.broadcast %282 : vector<16x1xf32> to vector<16x8xf32>
      %284 = arith.mulf %279, %283 : vector<16x8xf32>
      %cst_107 = arith.constant dense<0.000000e+00> : vector<8xf32>
      %285 = vector.multi_reduction <add>, %284, %cst_107 [0] : vector<16x8xf32> to vector<8xf32>
      %286 = vector.shape_cast %285 : vector<8xf32> to vector<1x8xf32>
      %287 = vector.extract_strided_slice %267 {offsets = [1, 0, 0], sizes = [1, 16, 8], strides = [1, 1, 1]} : vector<8x16x8xf32> to vector<1x16x8xf32>
      %288 = vector.shape_cast %287 : vector<1x16x8xf32> to vector<16x8xf32>
      %289 = arith.mulf %288, %279 : vector<16x8xf32>
      %290 = vector.extract_strided_slice %273 {offsets = [1, 0, 0], sizes = [1, 16, 8], strides = [1, 1, 1]} : vector<8x16x8xf32> to vector<1x16x8xf32>
      %291 = vector.shape_cast %290 : vector<1x16x8xf32> to vector<16x8xf32>
      %292 = arith.addf %289, %291 : vector<16x8xf32>
      %293 = vector.extract_strided_slice %263 {offsets = [1, 0], sizes = [1, 16], strides = [1, 1]} : vector<8x16xf32> to vector<1x16xf32>
      %294 = vector.shape_cast %293 : vector<1x16xf32> to vector<16xf32>
      %295 = vector.shape_cast %294 : vector<16xf32> to vector<16x1xf32>
      %296 = vector.broadcast %295 : vector<16x1xf32> to vector<16x8xf32>
      %297 = arith.mulf %292, %296 : vector<16x8xf32>
      %cst_108 = arith.constant dense<0.000000e+00> : vector<8xf32>
      %298 = vector.multi_reduction <add>, %297, %cst_108 [0] : vector<16x8xf32> to vector<8xf32>
      %299 = vector.shape_cast %298 : vector<8xf32> to vector<1x8xf32>
      %300 = vector.extract_strided_slice %267 {offsets = [2, 0, 0], sizes = [1, 16, 8], strides = [1, 1, 1]} : vector<8x16x8xf32> to vector<1x16x8xf32>
      %301 = vector.shape_cast %300 : vector<1x16x8xf32> to vector<16x8xf32>
      %302 = arith.mulf %301, %292 : vector<16x8xf32>
      %303 = vector.extract_strided_slice %273 {offsets = [2, 0, 0], sizes = [1, 16, 8], strides = [1, 1, 1]} : vector<8x16x8xf32> to vector<1x16x8xf32>
      %304 = vector.shape_cast %303 : vector<1x16x8xf32> to vector<16x8xf32>
      %305 = arith.addf %302, %304 : vector<16x8xf32>
      %306 = vector.extract_strided_slice %263 {offsets = [2, 0], sizes = [1, 16], strides = [1, 1]} : vector<8x16xf32> to vector<1x16xf32>
      %307 = vector.shape_cast %306 : vector<1x16xf32> to vector<16xf32>
      %308 = vector.shape_cast %307 : vector<16xf32> to vector<16x1xf32>
      %309 = vector.broadcast %308 : vector<16x1xf32> to vector<16x8xf32>
      %310 = arith.mulf %305, %309 : vector<16x8xf32>
      %cst_109 = arith.constant dense<0.000000e+00> : vector<8xf32>
      %311 = vector.multi_reduction <add>, %310, %cst_109 [0] : vector<16x8xf32> to vector<8xf32>
      %312 = vector.shape_cast %311 : vector<8xf32> to vector<1x8xf32>
      %313 = vector.extract_strided_slice %267 {offsets = [3, 0, 0], sizes = [1, 16, 8], strides = [1, 1, 1]} : vector<8x16x8xf32> to vector<1x16x8xf32>
      %314 = vector.shape_cast %313 : vector<1x16x8xf32> to vector<16x8xf32>
      %315 = arith.mulf %314, %305 : vector<16x8xf32>
      %316 = vector.extract_strided_slice %273 {offsets = [3, 0, 0], sizes = [1, 16, 8], strides = [1, 1, 1]} : vector<8x16x8xf32> to vector<1x16x8xf32>
      %317 = vector.shape_cast %316 : vector<1x16x8xf32> to vector<16x8xf32>
      %318 = arith.addf %315, %317 : vector<16x8xf32>
      %319 = vector.extract_strided_slice %263 {offsets = [3, 0], sizes = [1, 16], strides = [1, 1]} : vector<8x16xf32> to vector<1x16xf32>
      %320 = vector.shape_cast %319 : vector<1x16xf32> to vector<16xf32>
      %321 = vector.shape_cast %320 : vector<16xf32> to vector<16x1xf32>
      %322 = vector.broadcast %321 : vector<16x1xf32> to vector<16x8xf32>
      %323 = arith.mulf %318, %322 : vector<16x8xf32>
      %cst_110 = arith.constant dense<0.000000e+00> : vector<8xf32>
      %324 = vector.multi_reduction <add>, %323, %cst_110 [0] : vector<16x8xf32> to vector<8xf32>
      %325 = vector.shape_cast %324 : vector<8xf32> to vector<1x8xf32>
      %326 = vector.extract_strided_slice %267 {offsets = [4, 0, 0], sizes = [1, 16, 8], strides = [1, 1, 1]} : vector<8x16x8xf32> to vector<1x16x8xf32>
      %327 = vector.shape_cast %326 : vector<1x16x8xf32> to vector<16x8xf32>
      %328 = arith.mulf %327, %318 : vector<16x8xf32>
      %329 = vector.extract_strided_slice %273 {offsets = [4, 0, 0], sizes = [1, 16, 8], strides = [1, 1, 1]} : vector<8x16x8xf32> to vector<1x16x8xf32>
      %330 = vector.shape_cast %329 : vector<1x16x8xf32> to vector<16x8xf32>
      %331 = arith.addf %328, %330 : vector<16x8xf32>
      %332 = vector.extract_strided_slice %263 {offsets = [4, 0], sizes = [1, 16], strides = [1, 1]} : vector<8x16xf32> to vector<1x16xf32>
      %333 = vector.shape_cast %332 : vector<1x16xf32> to vector<16xf32>
      %334 = vector.shape_cast %333 : vector<16xf32> to vector<16x1xf32>
      %335 = vector.broadcast %334 : vector<16x1xf32> to vector<16x8xf32>
      %336 = arith.mulf %331, %335 : vector<16x8xf32>
      %cst_111 = arith.constant dense<0.000000e+00> : vector<8xf32>
      %337 = vector.multi_reduction <add>, %336, %cst_111 [0] : vector<16x8xf32> to vector<8xf32>
      %338 = vector.shape_cast %337 : vector<8xf32> to vector<1x8xf32>
      %339 = vector.extract_strided_slice %267 {offsets = [5, 0, 0], sizes = [1, 16, 8], strides = [1, 1, 1]} : vector<8x16x8xf32> to vector<1x16x8xf32>
      %340 = vector.shape_cast %339 : vector<1x16x8xf32> to vector<16x8xf32>
      %341 = arith.mulf %340, %331 : vector<16x8xf32>
      %342 = vector.extract_strided_slice %273 {offsets = [5, 0, 0], sizes = [1, 16, 8], strides = [1, 1, 1]} : vector<8x16x8xf32> to vector<1x16x8xf32>
      %343 = vector.shape_cast %342 : vector<1x16x8xf32> to vector<16x8xf32>
      %344 = arith.addf %341, %343 : vector<16x8xf32>
      %345 = vector.extract_strided_slice %263 {offsets = [5, 0], sizes = [1, 16], strides = [1, 1]} : vector<8x16xf32> to vector<1x16xf32>
      %346 = vector.shape_cast %345 : vector<1x16xf32> to vector<16xf32>
      %347 = vector.shape_cast %346 : vector<16xf32> to vector<16x1xf32>
      %348 = vector.broadcast %347 : vector<16x1xf32> to vector<16x8xf32>
      %349 = arith.mulf %344, %348 : vector<16x8xf32>
      %cst_112 = arith.constant dense<0.000000e+00> : vector<8xf32>
      %350 = vector.multi_reduction <add>, %349, %cst_112 [0] : vector<16x8xf32> to vector<8xf32>
      %351 = vector.shape_cast %350 : vector<8xf32> to vector<1x8xf32>
      %352 = vector.extract_strided_slice %267 {offsets = [6, 0, 0], sizes = [1, 16, 8], strides = [1, 1, 1]} : vector<8x16x8xf32> to vector<1x16x8xf32>
      %353 = vector.shape_cast %352 : vector<1x16x8xf32> to vector<16x8xf32>
      %354 = arith.mulf %353, %344 : vector<16x8xf32>
      %355 = vector.extract_strided_slice %273 {offsets = [6, 0, 0], sizes = [1, 16, 8], strides = [1, 1, 1]} : vector<8x16x8xf32> to vector<1x16x8xf32>
      %356 = vector.shape_cast %355 : vector<1x16x8xf32> to vector<16x8xf32>
      %357 = arith.addf %354, %356 : vector<16x8xf32>
      %358 = vector.extract_strided_slice %263 {offsets = [6, 0], sizes = [1, 16], strides = [1, 1]} : vector<8x16xf32> to vector<1x16xf32>
      %359 = vector.shape_cast %358 : vector<1x16xf32> to vector<16xf32>
      %360 = vector.shape_cast %359 : vector<16xf32> to vector<16x1xf32>
      %361 = vector.broadcast %360 : vector<16x1xf32> to vector<16x8xf32>
      %362 = arith.mulf %357, %361 : vector<16x8xf32>
      %cst_113 = arith.constant dense<0.000000e+00> : vector<8xf32>
      %363 = vector.multi_reduction <add>, %362, %cst_113 [0] : vector<16x8xf32> to vector<8xf32>
      %364 = vector.shape_cast %363 : vector<8xf32> to vector<1x8xf32>
      %365 = vector.extract_strided_slice %267 {offsets = [7, 0, 0], sizes = [1, 16, 8], strides = [1, 1, 1]} : vector<8x16x8xf32> to vector<1x16x8xf32>
      %366 = vector.shape_cast %365 : vector<1x16x8xf32> to vector<16x8xf32>
      %367 = arith.mulf %366, %357 : vector<16x8xf32>
      %368 = vector.extract_strided_slice %273 {offsets = [7, 0, 0], sizes = [1, 16, 8], strides = [1, 1, 1]} : vector<8x16x8xf32> to vector<1x16x8xf32>
      %369 = vector.shape_cast %368 : vector<1x16x8xf32> to vector<16x8xf32>
      %370 = arith.addf %367, %369 : vector<16x8xf32>
      %371 = vector.extract_strided_slice %263 {offsets = [7, 0], sizes = [1, 16], strides = [1, 1]} : vector<8x16xf32> to vector<1x16xf32>
      %372 = vector.shape_cast %371 : vector<1x16xf32> to vector<16xf32>
      %373 = vector.shape_cast %372 : vector<16xf32> to vector<16x1xf32>
      %374 = vector.broadcast %373 : vector<16x1xf32> to vector<16x8xf32>
      %375 = arith.mulf %370, %374 : vector<16x8xf32>
      %cst_114 = arith.constant dense<0.000000e+00> : vector<8xf32>
      %376 = vector.multi_reduction <add>, %375, %cst_114 [0] : vector<16x8xf32> to vector<8xf32>
      %377 = vector.shape_cast %376 : vector<8xf32> to vector<1x8xf32>
      %378 = tpu.concatenate %286, %299, %312, %325, %338, %351, %364, %377 in 0 : vector<1x8xf32>, vector<1x8xf32>, vector<1x8xf32>, vector<1x8xf32>, vector<1x8xf32>, vector<1x8xf32>, vector<1x8xf32>, vector<1x8xf32> -> vector<8x8xf32>
      %379 = arith.index_cast %255 : i32 to index
      %c0_115 = arith.constant 0 : index
      %380 = vector.load %arg20[%379, %c0_115] : memref<256x8xf32, #tpu.memory_space<vmem>>, vector<8x8xf32>
      tpu.vector_store %arg20[%379, %c0_115], %378 {strides = array<i32>} : memref<256x8xf32, #tpu.memory_space<vmem>>, vector<8x8xf32>,
      scf.yield %370 : vector<16x8xf32>
    }
    %c32_i32_68 = arith.constant 32 : i32
    %c0_69 = arith.constant 0 : index
    %c0_70 = arith.constant 0 : index
    %192 = vector.load %arg20[%c0_69, %c0_70] : memref<256x8xf32, #tpu.memory_space<vmem>>, vector<256x8xf32>
    %c0_71 = arith.constant 0 : index
    %c0_72 = arith.constant 0 : index
    %193 = vector.load %arg19[%c0_71, %c0_72] : memref<256x8xf32, #tpu.memory_space<vmem>>, vector<256x8xf32>
    %c0_73 = arith.constant 0 : index
    %c0_74 = arith.constant 0 : index
    %c0_75 = arith.constant 0 : index
    %194 = vector.load %arg12[%c0_73, %c0_74, %c0_75] : memref<1x1x8xf32, #tpu.memory_space<vmem>>, vector<1x1x8xf32>
    %195 = vector.shape_cast %194 : vector<1x1x8xf32> to vector<1x8xf32>
    %196 = vector.broadcast %195 : vector<1x8xf32> to vector<256x8xf32>
    %197 = arith.mulf %193, %196 : vector<256x8xf32>
    %198 = arith.addf %192, %197 : vector<256x8xf32>
    %cst_76 = arith.constant dense<0.000000e+00> : vector<256xf32>
    %199 = vector.multi_reduction <add>, %198, %cst_76 [1] : vector<256x8xf32> to vector<256xf32>
    %200 = vector.shape_cast %199 : vector<256xf32> to vector<256x1xf32>
    %cst_77 = arith.constant 8.000000e+00 : f32
    %201 = vector.broadcast %cst_77 : f32 to vector<256x1xf32>
    %202 = arith.divf %200, %201 : vector<256x1xf32>
    %203 = vector.broadcast %202 : vector<256x1xf32> to vector<256x8xf32>
    %204 = arith.subf %198, %203 : vector<256x8xf32>
    %205 = arith.mulf %204, %204 : vector<256x8xf32>
    %cst_78 = arith.constant dense<0.000000e+00> : vector<256xf32>
    %206 = vector.multi_reduction <add>, %205, %cst_78 [1] : vector<256x8xf32> to vector<256xf32>
    %207 = vector.shape_cast %206 : vector<256xf32> to vector<256x1xf32>
    %cst_79 = arith.constant 8.000000e+00 : f32
    %208 = vector.broadcast %cst_79 : f32 to vector<256x1xf32>
    %209 = arith.divf %207, %208 : vector<256x1xf32>
    %210 = vector.broadcast %202 : vector<256x1xf32> to vector<256x8xf32>
    %211 = arith.subf %198, %210 : vector<256x8xf32>
    %cst_80 = arith.constant 9.99999974E-6 : f32
    %212 = vector.broadcast %cst_80 : f32 to vector<256x1xf32>
    %213 = arith.addf %209, %212 : vector<256x1xf32>
    %214 = math.rsqrt %213 : vector<256x1xf32>
    %215 = vector.broadcast %214 : vector<256x1xf32> to vector<256x8xf32>
    %216 = arith.mulf %211, %215 : vector<256x8xf32>
    %c0_81 = arith.constant 0 : index
    %c0_82 = arith.constant 0 : index
    %c0_83 = arith.constant 0 : index
    %217 = vector.load %arg13[%c0_81, %c0_82, %c0_83] : memref<1x1x8xf32, #tpu.memory_space<vmem>>, vector<1x1x8xf32>
    %218 = vector.shape_cast %217 : vector<1x1x8xf32> to vector<1x8xf32>
    %219 = vector.broadcast %218 : vector<1x8xf32> to vector<256x8xf32>
    %220 = arith.mulf %216, %219 : vector<256x8xf32>
    %c0_84 = arith.constant 0 : index
    %c0_85 = arith.constant 0 : index
    %c0_86 = arith.constant 0 : index
    %221 = vector.load %arg14[%c0_84, %c0_85, %c0_86] : memref<1x1x8xf32, #tpu.memory_space<vmem>>, vector<1x1x8xf32>
    %222 = vector.shape_cast %221 : vector<1x1x8xf32> to vector<1x8xf32>
    %223 = vector.broadcast %222 : vector<1x8xf32> to vector<256x8xf32>
    %224 = arith.addf %220, %223 : vector<256x8xf32>
    %225 = math.absf %44 : vector<256x8xf32>
    %cst_87 = arith.constant 0.000000e+00 : f32
    %226 = vector.broadcast %cst_87 : f32 to vector<256x8xf32>
    %227 = arith.subf %226, %225 : vector<256x8xf32>
    %228 = math.exp %227 : vector<256x8xf32>
    %cst_88 = arith.constant 0.000000e+00 : f32
    %229 = vector.broadcast %cst_88 : f32 to vector<256x8xf32>
    %230 = arith.cmpf oge, %44, %229 : vector<256x8xf32>
    %cst_89 = arith.constant 1.000000e+00 : f32
    %231 = vector.broadcast %cst_89 : f32 to vector<256x8xf32>
    %232 = arith.addf %231, %228 : vector<256x8xf32>
    %cst_90 = arith.constant 1.000000e+00 : f32
    %233 = vector.broadcast %cst_90 : f32 to vector<256x8xf32>
    %234 = arith.divf %233, %232 : vector<256x8xf32>
    %cst_91 = arith.constant 1.000000e+00 : f32
    %235 = vector.broadcast %cst_91 : f32 to vector<256x8xf32>
    %236 = arith.addf %235, %228 : vector<256x8xf32>
    %237 = arith.divf %228, %236 : vector<256x8xf32>
    %238 = arith.select %230, %234, %237 : vector<256x8xi1>, vector<256x8xf32>
    %239 = arith.mulf %44, %238 : vector<256x8xf32>
    %240 = arith.mulf %224, %239 : vector<256x8xf32>
    %241 = arith.truncf %240 : vector<256x8xf32> to vector<256x8xbf16>
    %c0_92 = arith.constant 0 : index
    %c0_93 = arith.constant 0 : index
    %c0_94 = arith.constant 0 : index
    %242 = vector.load %arg15[%c0_92, %c0_93, %c0_94] : memref<1x8x4xbf16, #tpu.memory_space<vmem>>, vector<1x8x4xbf16>
    %243 = vector.shape_cast %242 : vector<1x8x4xbf16> to vector<8x4xbf16>
    %cst_95 = arith.constant dense<0.000000e+00> : vector<256x4xf32>
    %244 = tpu.matmul %241, %243, %cst_95 {dimension_numbers = #tpu.dot_dimension_numbers<[1], [0], [0], [1], [0, 0, 1, 1], [], []>} : vector<256x8xbf16>, vector<8x4xbf16>, vector<256x4xf32> -> vector<256x4xf32>
    %c0_96 = arith.constant 0 : index
    %c0_97 = arith.constant 0 : index
    %c0_98 = arith.constant 0 : index
    %245 = vector.load %arg16[%c0_96, %c0_97, %c0_98] : memref<1x1x4xf32, #tpu.memory_space<vmem>>, vector<1x1x4xf32>
    %246 = vector.shape_cast %245 : vector<1x1x4xf32> to vector<1x4xf32>
    %247 = vector.broadcast %246 : vector<1x4xf32> to vector<256x4xf32>
    %248 = arith.addf %244, %247 : vector<256x4xf32>
    %249 = vector.shape_cast %248 : vector<256x4xf32> to vector<16x16x4xf32>
    %250 = arith.addf %4, %249 : vector<16x16x4xf32>
    %c0_99 = arith.constant 0 : index
    %c0_100 = arith.constant 0 : index
    %c0_101 = arith.constant 0 : index
    %c0_102 = arith.constant 0 : index
    %251 = vector.load %arg17[%c0_99, %c0_100, %c0_101, %c0_102] : memref<1x16x16x4xf32, #tpu.memory_space<vmem>>, vector<1x16x16x4xf32>
    %252 = vector.shape_cast %251 : vector<1x16x16x4xf32> to vector<16x16x4xf32>
    %253 = vector.shape_cast %250 : vector<16x16x4xf32> to vector<1x16x16x4xf32>
    tpu.vector_store %arg17[%c0_99, %c0_100, %c0_101, %c0_102], %253 {strides = array<i32>} : memref<1x16x16x4xf32, #tpu.memory_space<vmem>>, vector<1x16x16x4xf32>,
    return
  }
  func.func @transform_0(%arg0: i32, %arg1: i32) -> (i32, i32, i32, i32) {
    %c0_i32 = arith.constant 0 : i32
    %c0_i32_0 = arith.constant 0 : i32
    %c0_i32_1 = arith.constant 0 : i32
    %c0_i32_2 = arith.constant 0 : i32
    return %arg0, %c0_i32, %c0_i32_0, %c0_i32_1 : i32, i32, i32, i32
  }
  func.func @transform_1(%arg0: i32, %arg1: i32) -> (i32, i32, i32) {
    %c0_i32 = arith.constant 0 : i32
    %c0_i32_0 = arith.constant 0 : i32
    %c0_i32_1 = arith.constant 0 : i32
    return %arg1, %c0_i32, %c0_i32_0 : i32, i32, i32
  }
  func.func @transform_2(%arg0: i32, %arg1: i32) -> (i32, i32, i32) {
    %c0_i32 = arith.constant 0 : i32
    %c0_i32_0 = arith.constant 0 : i32
    %c0_i32_1 = arith.constant 0 : i32
    return %arg1, %c0_i32, %c0_i32_0 : i32, i32, i32
  }
  func.func @transform_3(%arg0: i32, %arg1: i32) -> (i32, i32, i32) {
    %c0_i32 = arith.constant 0 : i32
    %c0_i32_0 = arith.constant 0 : i32
    %c0_i32_1 = arith.constant 0 : i32
    return %arg1, %c0_i32, %c0_i32_0 : i32, i32, i32
  }
  func.func @transform_4(%arg0: i32, %arg1: i32) -> (i32, i32, i32) {
    %c0_i32 = arith.constant 0 : i32
    %c0_i32_0 = arith.constant 0 : i32
    %c0_i32_1 = arith.constant 0 : i32
    return %arg1, %c0_i32, %c0_i32_0 : i32, i32, i32
  }
  func.func @transform_5(%arg0: i32, %arg1: i32) -> (i32, i32, i32) {
    %c0_i32 = arith.constant 0 : i32
    %c0_i32_0 = arith.constant 0 : i32
    %c0_i32_1 = arith.constant 0 : i32
    return %arg1, %c0_i32, %c0_i32_0 : i32, i32, i32
  }
  func.func @transform_6(%arg0: i32, %arg1: i32) -> (i32, i32, i32) {
    %c0_i32 = arith.constant 0 : i32
    %c0_i32_0 = arith.constant 0 : i32
    %c0_i32_1 = arith.constant 0 : i32
    return %arg1, %c0_i32, %c0_i32_0 : i32, i32, i32
  }
  func.func @transform_7(%arg0: i32, %arg1: i32) -> (i32, i32, i32) {
    %c0_i32 = arith.constant 0 : i32
    %c0_i32_0 = arith.constant 0 : i32
    %c0_i32_1 = arith.constant 0 : i32
    return %arg1, %c0_i32, %c0_i32_0 : i32, i32, i32
  }
  func.func @transform_8(%arg0: i32, %arg1: i32) -> (i32, i32, i32) {
    %c0_i32 = arith.constant 0 : i32
    %c0_i32_0 = arith.constant 0 : i32
    %c0_i32_1 = arith.constant 0 : i32
    return %arg1, %c0_i32, %c0_i32_0 : i32, i32, i32
  }
  func.func @transform_9(%arg0: i32, %arg1: i32) -> (i32, i32, i32) {
    %c0_i32 = arith.constant 0 : i32
    %c0_i32_0 = arith.constant 0 : i32
    %c0_i32_1 = arith.constant 0 : i32
    return %arg1, %c0_i32, %c0_i32_0 : i32, i32, i32
  }
  func.func @transform_10(%arg0: i32, %arg1: i32) -> (i32, i32, i32) {
    %c0_i32 = arith.constant 0 : i32
    %c0_i32_0 = arith.constant 0 : i32
    %c0_i32_1 = arith.constant 0 : i32
    return %arg1, %c0_i32, %c0_i32_0 : i32, i32, i32
  }
  func.func @transform_11(%arg0: i32, %arg1: i32) -> (i32, i32, i32) {
    %c0_i32 = arith.constant 0 : i32
    %c0_i32_0 = arith.constant 0 : i32
    %c0_i32_1 = arith.constant 0 : i32
    return %arg1, %c0_i32, %c0_i32_0 : i32, i32, i32
  }
  func.func @transform_12(%arg0: i32, %arg1: i32) -> (i32, i32, i32) {
    %c0_i32 = arith.constant 0 : i32
    %c0_i32_0 = arith.constant 0 : i32
    %c0_i32_1 = arith.constant 0 : i32
    return %arg1, %c0_i32, %c0_i32_0 : i32, i32, i32
  }
  func.func @transform_13(%arg0: i32, %arg1: i32) -> (i32, i32, i32) {
    %c0_i32 = arith.constant 0 : i32
    %c0_i32_0 = arith.constant 0 : i32
    %c0_i32_1 = arith.constant 0 : i32
    return %arg1, %c0_i32, %c0_i32_0 : i32, i32, i32
  }
  func.func @transform_14(%arg0: i32, %arg1: i32) -> (i32, i32, i32) {
    %c0_i32 = arith.constant 0 : i32
    %c0_i32_0 = arith.constant 0 : i32
    %c0_i32_1 = arith.constant 0 : i32
    return %arg1, %c0_i32, %c0_i32_0 : i32, i32, i32
  }
  func.func @transform_15(%arg0: i32, %arg1: i32) -> (i32, i32, i32, i32) {
    %c0_i32 = arith.constant 0 : i32
    %c0_i32_0 = arith.constant 0 : i32
    %c0_i32_1 = arith.constant 0 : i32
    %c0_i32_2 = arith.constant 0 : i32
    return %arg0, %c0_i32, %c0_i32_0, %c0_i32_1 : i32, i32, i32, i32
  }
}

</mosaic_0001>

<llo_original>
// kernel: tpu_custom_call.1
$region0: #{tpu_custom_call.1}
  #allocation0 [shape = 'u32[]', space=smem, size = 0x4, offset = 0x4, fixed_abs, tag = 'smem constant byte address 0x4 - core index']
  #allocation1 [shape = 'u32[144,128]{1,0:T(1,128)}', space=vmem, size = 0x12000, scoped, tag = 'internal scratch']
  #allocation2 [shape = 'f32[256,8]{1,0:T(8,128)}', space=vmem, size = 0x20000, scoped, tag = 'scratch operand']
  #allocation3 [shape = 'f32[256,8]{1,0:T(8,128)}', space=vmem, size = 0x20000, scoped, tag = 'scratch operand']
  #allocation4 [shape = 'f32[256,8]{1,0:T(8,128)}', space=vmem, size = 0x20000, scoped, tag = 'scratch operand']
  #allocation5 [shape = 'f32[256,16]{1,0:T(8,128)}', space=vmem, size = 0x20000, scoped, tag = 'scratch operand']
  #allocation6 [shape = 'f32[256,16]{1,0:T(8,128)}', space=vmem, size = 0x20000, scoped, tag = 'scratch operand']
  %s0 = inlined_call_operand.vmem [shape: f32[2,16,16,4], index: 0, kind: input, shape index: {}]
  %s1 = inlined_call_operand.vmem [shape: f32[2,1,4], index: 1, kind: input, shape index: {}]
  %s2 = inlined_call_operand.vmem [shape: f32[2,1,4], index: 2, kind: input, shape index: {}]
  %s3 = inlined_call_operand.vmem [shape: bf16[2,4,16], index: 3, kind: input, shape index: {}]
  %s4 = inlined_call_operand.vmem [shape: f32[2,1,16], index: 4, kind: input, shape index: {}]
  %s5 = inlined_call_operand.vmem [shape: f32[2,9,8], index: 5, kind: input, shape index: {}]
  %s6 = inlined_call_operand.vmem [shape: f32[2,1,8], index: 6, kind: input, shape index: {}]
  %s7 = inlined_call_operand.vmem [shape: bf16[2,8,40], index: 7, kind: input, shape index: {}]
  %s8 = inlined_call_operand.vmem [shape: f32[2,1,8], index: 8, kind: input, shape index: {}]
  %s9 = inlined_call_operand.vmem [shape: f32[2,16,8], index: 9, kind: input, shape index: {}]
  %s10 = inlined_call_operand.vmem [shape: f32[2,1,8], index: 10, kind: input, shape index: {}]
  %s11 = inlined_call_operand.vmem [shape: f32[2,1,8], index: 11, kind: input, shape index: {}]
  %s12 = inlined_call_operand.vmem [shape: f32[2,1,8], index: 12, kind: input, shape index: {}]
  %s13 = inlined_call_operand.vmem [shape: bf16[2,8,4], index: 13, kind: input, shape index: {}]
  %s14 = inlined_call_operand.vmem [shape: f32[2,1,4], index: 14, kind: input, shape index: {}]
  %s15 = inlined_call_operand.vmem [shape: f32[2,16,16,4], index: 15, kind: output, shape index: {}]
  %s16 = sld [smem:[#allocation0]]
  $region104: #{tpu_custom_call.1} parent=0
    _
  %s18 = ssub.s32 1, %s16
  %s19 = scalar_select 0, %s18, %s16
  loop: start=0, step=1, limit=6
  $region2: #{tpu_custom_call.1} parent=0 // loop_pre_header
    _
  $region3: #{tpu_custom_call.1} parent=0 // loop_header
    %s21 = sphi 0, %s25
    %p22 = scmp.ge.s32.totalorder %s21, 6
    %s28 = sphi 0, %s40
    %s29 = sphi 0, %s36
    %s30 = sphi 0, %s28
    %s31 = sphi 0, %s29
    %s32 = sphi 0, %s30
    %s33 = sphi 0, %s31
    %s43 = sphi 0, %s45
    %s46 = sphi 0, %s43
    %s47 = sphi 0, %s46
    %s63 = sphi 0, %s47
    %s69 = sphi 0, %s71
    %s72 = sphi 0, %s69
    %s73 = sphi 0, %s72
    %s89 = sphi 0, %s73
    %s95 = sphi 0, %s97
    %s98 = sphi 0, %s95
    %s99 = sphi 0, %s98
    %s115 = sphi 0, %s99
    %s121 = sphi 0, %s123
    %s124 = sphi 0, %s121
    %s125 = sphi 0, %s124
    %s141 = sphi 0, %s125
    %s147 = sphi 0, %s149
    %s150 = sphi 0, %s147
    %s151 = sphi 0, %s150
    %s167 = sphi 0, %s151
    %s173 = sphi 0, %s175
    %s176 = sphi 0, %s173
    %s177 = sphi 0, %s176
    %s193 = sphi 0, %s177
    %s199 = sphi 0, %s201
    %s202 = sphi 0, %s199
    %s203 = sphi 0, %s202
    %s219 = sphi 0, %s203
    %s225 = sphi 0, %s227
    %s228 = sphi 0, %s225
    %s229 = sphi 0, %s228
    %s245 = sphi 0, %s229
    %s251 = sphi 0, %s253
    %s254 = sphi 0, %s251
    %s255 = sphi 0, %s254
    %s271 = sphi 0, %s255
    %s277 = sphi 0, %s279
    %s280 = sphi 0, %s277
    %s281 = sphi 0, %s280
    %s297 = sphi 0, %s281
    %s303 = sphi 0, %s305
    %s306 = sphi 0, %s303
    %s307 = sphi 0, %s306
    %s323 = sphi 0, %s307
    %s329 = sphi 0, %s331
    %s332 = sphi 0, %s329
    %s333 = sphi 0, %s332
    %s349 = sphi 0, %s333
    %s355 = sphi 0, %s357
    %s358 = sphi 0, %s355
    %s359 = sphi 0, %s358
    %s375 = sphi 0, %s359
    %s381 = sphi 0, %s383
    %s384 = sphi 0, %s381
    %s385 = sphi 0, %s384
    %s401 = sphi 0, %s385
    %s407 = sphi 0, %s409
    %s410 = sphi 0, %s407
    %s411 = sphi 0, %s410
    %s427 = sphi 0, %s411
    %s433 = sphi 0, %s435
    %s436 = sphi 0, %s433
    %s437 = sphi 0, %s436
    %s453 = sphi 0, %s437
  $region4: #{tpu_custom_call.1} parent=0 // loop_header_branch
    %24 = sbr.rel (%p22) target = $region8
  $region5: #{tpu_custom_call.1} parent=0 // loop_body
    %s26 = ssub.s32 %s21, 1
    %s27 = ssub.s32 %s21, 2
    %s34 = sadd.s32 1, %s29
    %p35 = scmp.ge.s32.totalorder %s34, 2
    %s36 = scalar_select %p35, 0, %s34
    %s37 = sadd.s32 1, %s28
    %s38 = scalar_select %p35, %s37, %s28
    %p39 = scmp.ge.s32.totalorder %s38, 2
    %s40 = scalar_select %p39, 0, %s38
    %s41 = ssub.s32 %s28, %s40
    %p42 = scmp.eq.s32.totalorder %s41, 0
    %s44 = sadd.s32 %s43, 1
    %s45 = scalar_select %p42, %s43, %s44
    %p48 = pneg %p42
    %p49 = scmp.eq.s32.totalorder %s21, 3
    %p50 = por %p48, %p49
    %p51 = scmp.ne.s32.totalorder %s43, %s46
    %p52 = scmp.eq.s32.totalorder %s21, 0
    %p53 = por %p51, %p52
    %p54 = scmp.ne.s32.totalorder %s43, %s46
    %p55 = scmp.eq.s32.totalorder %s26, 3
    %p56 = por %p54, %p55
    %p57 = scmp.ne.s32.totalorder %s46, %s47
    %p58 = scmp.eq.s32.totalorder %s26, 0
    %p59 = por %p57, %p58
    %p60 = scmp.ne.s32.totalorder %s46, %s47
    %p61 = scmp.eq.s32.totalorder %s27, 3
    %p62 = por %p60, %p61
    %p64 = scmp.ne.s32.totalorder %s47, %s63
    %p65 = scmp.eq.s32.totalorder %s27, 0
    %p66 = por %p64, %p65
    %s67 = ssub.s32 %s29, %s36
    %p68 = scmp.eq.s32.totalorder %s67, 0
    %s70 = sadd.s32 %s69, 1
    %s71 = scalar_select %p68, %s69, %s70
    %p74 = pneg %p68
    %p75 = scmp.eq.s32.totalorder %s21, 3
    %p76 = por %p74, %p75
    %p77 = scmp.ne.s32.totalorder %s69, %s72
    %p78 = scmp.eq.s32.totalorder %s21, 0
    %p79 = por %p77, %p78
    %p80 = scmp.ne.s32.totalorder %s69, %s72
    %p81 = scmp.eq.s32.totalorder %s26, 3
    %p82 = por %p80, %p81
    %p83 = scmp.ne.s32.totalorder %s72, %s73
    %p84 = scmp.eq.s32.totalorder %s26, 0
    %p85 = por %p83, %p84
    %p86 = scmp.ne.s32.totalorder %s72, %s73
    %p87 = scmp.eq.s32.totalorder %s27, 3
    %p88 = por %p86, %p87
    %p90 = scmp.ne.s32.totalorder %s73, %s89
    %p91 = scmp.eq.s32.totalorder %s27, 0
    %p92 = por %p90, %p91
    %s93 = ssub.s32 %s29, %s36
    %p94 = scmp.eq.s32.totalorder %s93, 0
    %s96 = sadd.s32 %s95, 1
    %s97 = scalar_select %p94, %s95, %s96
    %p100 = pneg %p94
    %p101 = scmp.eq.s32.totalorder %s21, 3
    %p102 = por %p100, %p101
    %p103 = scmp.ne.s32.totalorder %s95, %s98
    %p104 = scmp.eq.s32.totalorder %s21, 0
    %p105 = por %p103, %p104
    %p106 = scmp.ne.s32.totalorder %s95, %s98
    %p107 = scmp.eq.s32.totalorder %s26, 3
    %p108 = por %p106, %p107
    %p109 = scmp.ne.s32.totalorder %s98, %s99
    %p110 = scmp.eq.s32.totalorder %s26, 0
    %p111 = por %p109, %p110
    %p112 = scmp.ne.s32.totalorder %s98, %s99
    %p113 = scmp.eq.s32.totalorder %s27, 3
    %p114 = por %p112, %p113
    %p116 = scmp.ne.s32.totalorder %s99, %s115
    %p117 = scmp.eq.s32.totalorder %s27, 0
    %p118 = por %p116, %p117
    %s119 = ssub.s32 %s29, %s36
    %p120 = scmp.eq.s32.totalorder %s119, 0
    %s122 = sadd.s32 %s121, 1
    %s123 = scalar_select %p120, %s121, %s122
    %p126 = pneg %p120
    %p127 = scmp.eq.s32.totalorder %s21, 3
    %p128 = por %p126, %p127
    %p129 = scmp.ne.s32.totalorder %s121, %s124
    %p130 = scmp.eq.s32.totalorder %s21, 0
    %p131 = por %p129, %p130
    %p132 = scmp.ne.s32.totalorder %s121, %s124
    %p133 = scmp.eq.s32.totalorder %s26, 3
    %p134 = por %p132, %p133
    %p135 = scmp.ne.s32.totalorder %s124, %s125
    %p136 = scmp.eq.s32.totalorder %s26, 0
    %p137 = por %p135, %p136
    %p138 = scmp.ne.s32.totalorder %s124, %s125
    %p139 = scmp.eq.s32.totalorder %s27, 3
    %p140 = por %p138, %p139
    %p142 = scmp.ne.s32.totalorder %s125, %s141
    %p143 = scmp.eq.s32.totalorder %s27, 0
    %p144 = por %p142, %p143
    %s145 = ssub.s32 %s29, %s36
    %p146 = scmp.eq.s32.totalorder %s145, 0
    %s148 = sadd.s32 %s147, 1
    %s149 = scalar_select %p146, %s147, %s148
    %p152 = pneg %p146
    %p153 = scmp.eq.s32.totalorder %s21, 3
    %p154 = por %p152, %p153
    %p155 = scmp.ne.s32.totalorder %s147, %s150
    %p156 = scmp.eq.s32.totalorder %s21, 0
    %p157 = por %p155, %p156
    %p158 = scmp.ne.s32.totalorder %s147, %s150
    %p159 = scmp.eq.s32.totalorder %s26, 3
    %p160 = por %p158, %p159
    %p161 = scmp.ne.s32.totalorder %s150, %s151
    %p162 = scmp.eq.s32.totalorder %s26, 0
    %p163 = por %p161, %p162
    %p164 = scmp.ne.s32.totalorder %s150, %s151
    %p165 = scmp.eq.s32.totalorder %s27, 3
    %p166 = por %p164, %p165
    %p168 = scmp.ne.s32.totalorder %s151, %s167
    %p169 = scmp.eq.s32.totalorder %s27, 0
    %p170 = por %p168, %p169
    %s171 = ssub.s32 %s29, %s36
    %p172 = scmp.eq.s32.totalorder %s171, 0
    %s174 = sadd.s32 %s173, 1
    %s175 = scalar_select %p172, %s173, %s174
    %p178 = pneg %p172
    %p179 = scmp.eq.s32.totalorder %s21, 3
    %p180 = por %p178, %p179
    %p181 = scmp.ne.s32.totalorder %s173, %s176
    %p182 = scmp.eq.s32.totalorder %s21, 0
    %p183 = por %p181, %p182
    %p184 = scmp.ne.s32.totalorder %s173, %s176
    %p185 = scmp.eq.s32.totalorder %s26, 3
    %p186 = por %p184, %p185
    %p187 = scmp.ne.s32.totalorder %s176, %s177
    %p188 = scmp.eq.s32.totalorder %s26, 0
    %p189 = por %p187, %p188
    %p190 = scmp.ne.s32.totalorder %s176, %s177
    %p191 = scmp.eq.s32.totalorder %s27, 3
    %p192 = por %p190, %p191
    %p194 = scmp.ne.s32.totalorder %s177, %s193
    %p195 = scmp.eq.s32.totalorder %s27, 0
    %p196 = por %p194, %p195
    %s197 = ssub.s32 %s29, %s36
    %p198 = scmp.eq.s32.totalorder %s197, 0
    %s200 = sadd.s32 %s199, 1
    %s201 = scalar_select %p198, %s199, %s200
    %p204 = pneg %p198
    %p205 = scmp.eq.s32.totalorder %s21, 3
    %p206 = por %p204, %p205
    %p207 = scmp.ne.s32.totalorder %s199, %s202
    %p208 = scmp.eq.s32.totalorder %s21, 0
    %p209 = por %p207, %p208
    %p210 = scmp.ne.s32.totalorder %s199, %s202
    %p211 = scmp.eq.s32.totalorder %s26, 3
    %p212 = por %p210, %p211
    %p213 = scmp.ne.s32.totalorder %s202, %s203
    %p214 = scmp.eq.s32.totalorder %s26, 0
    %p215 = por %p213, %p214
    %p216 = scmp.ne.s32.totalorder %s202, %s203
    %p217 = scmp.eq.s32.totalorder %s27, 3
    %p218 = por %p216, %p217
    %p220 = scmp.ne.s32.totalorder %s203, %s219
    %p221 = scmp.eq.s32.totalorder %s27, 0
    %p222 = por %p220, %p221
    %s223 = ssub.s32 %s29, %s36
    %p224 = scmp.eq.s32.totalorder %s223, 0
    %s226 = sadd.s32 %s225, 1
    %s227 = scalar_select %p224, %s225, %s226
    %p230 = pneg %p224
    %p231 = scmp.eq.s32.totalorder %s21, 3
    %p232 = por %p230, %p231
    %p233 = scmp.ne.s32.totalorder %s225, %s228
    %p234 = scmp.eq.s32.totalorder %s21, 0
    %p235 = por %p233, %p234
    %p236 = scmp.ne.s32.totalorder %s225, %s228
    %p237 = scmp.eq.s32.totalorder %s26, 3
    %p238 = por %p236, %p237
    %p239 = scmp.ne.s32.totalorder %s228, %s229
    %p240 = scmp.eq.s32.totalorder %s26, 0
    %p241 = por %p239, %p240
    %p242 = scmp.ne.s32.totalorder %s228, %s229
    %p243 = scmp.eq.s32.totalorder %s27, 3
    %p244 = por %p242, %p243
    %p246 = scmp.ne.s32.totalorder %s229, %s245
    %p247 = scmp.eq.s32.totalorder %s27, 0
    %p248 = por %p246, %p247
    %s249 = ssub.s32 %s29, %s36
    %p250 = scmp.eq.s32.totalorder %s249, 0
    %s252 = sadd.s32 %s251, 1
    %s253 = scalar_select %p250, %s251, %s252
    %p256 = pneg %p250
    %p257 = scmp.eq.s32.totalorder %s21, 3
    %p258 = por %p256, %p257
    %p259 = scmp.ne.s32.totalorder %s251, %s254
    %p260 = scmp.eq.s32.totalorder %s21, 0
    %p261 = por %p259, %p260
    %p262 = scmp.ne.s32.totalorder %s251, %s254
    %p263 = scmp.eq.s32.totalorder %s26, 3
    %p264 = por %p262, %p263
    %p265 = scmp.ne.s32.totalorder %s254, %s255
    %p266 = scmp.eq.s32.totalorder %s26, 0
    %p267 = por %p265, %p266
    %p268 = scmp.ne.s32.totalorder %s254, %s255
    %p269 = scmp.eq.s32.totalorder %s27, 3
    %p270 = por %p268, %p269
    %p272 = scmp.ne.s32.totalorder %s255, %s271
    %p273 = scmp.eq.s32.totalorder %s27, 0
    %p274 = por %p272, %p273
    %s275 = ssub.s32 %s29, %s36
    %p276 = scmp.eq.s32.totalorder %s275, 0
    %s278 = sadd.s32 %s277, 1
    %s279 = scalar_select %p276, %s277, %s278
    %p282 = pneg %p276
    %p283 = scmp.eq.s32.totalorder %s21, 3
    %p284 = por %p282, %p283
    %p285 = scmp.ne.s32.totalorder %s277, %s280
    %p286 = scmp.eq.s32.totalorder %s21, 0
    %p287 = por %p285, %p286
    %p288 = scmp.ne.s32.totalorder %s277, %s280
    %p289 = scmp.eq.s32.totalorder %s26, 3
    %p290 = por %p288, %p289
    %p291 = scmp.ne.s32.totalorder %s280, %s281
    %p292 = scmp.eq.s32.totalorder %s26, 0
    %p293 = por %p291, %p292
    %p294 = scmp.ne.s32.totalorder %s280, %s281
    %p295 = scmp.eq.s32.totalorder %s27, 3
    %p296 = por %p294, %p295
    %p298 = scmp.ne.s32.totalorder %s281, %s297
    %p299 = scmp.eq.s32.totalorder %s27, 0
    %p300 = por %p298, %p299
    %s301 = ssub.s32 %s29, %s36
    %p302 = scmp.eq.s32.totalorder %s301, 0
    %s304 = sadd.s32 %s303, 1
    %s305 = scalar_select %p302, %s303, %s304
    %p308 = pneg %p302
    %p309 = scmp.eq.s32.totalorder %s21, 3
    %p310 = por %p308, %p309
    %p311 = scmp.ne.s32.totalorder %s303, %s306
    %p312 = scmp.eq.s32.totalorder %s21, 0
    %p313 = por %p311, %p312
    %p314 = scmp.ne.s32.totalorder %s303, %s306
    %p315 = scmp.eq.s32.totalorder %s26, 3
    %p316 = por %p314, %p315
    %p317 = scmp.ne.s32.totalorder %s306, %s307
    %p318 = scmp.eq.s32.totalorder %s26, 0
    %p319 = por %p317, %p318
    %p320 = scmp.ne.s32.totalorder %s306, %s307
    %p321 = scmp.eq.s32.totalorder %s27, 3
    %p322 = por %p320, %p321
    %p324 = scmp.ne.s32.totalorder %s307, %s323
    %p325 = scmp.eq.s32.totalorder %s27, 0
    %p326 = por %p324, %p325
    %s327 = ssub.s32 %s29, %s36
    %p328 = scmp.eq.s32.totalorder %s327, 0
    %s330 = sadd.s32 %s329, 1
    %s331 = scalar_select %p328, %s329, %s330
    %p334 = pneg %p328
    %p335 = scmp.eq.s32.totalorder %s21, 3
    %p336 = por %p334, %p335
    %p337 = scmp.ne.s32.totalorder %s329, %s332
    %p338 = scmp.eq.s32.totalorder %s21, 0
    %p339 = por %p337, %p338
    %p340 = scmp.ne.s32.totalorder %s329, %s332
    %p341 = scmp.eq.s32.totalorder %s26, 3
    %p342 = por %p340, %p341
    %p343 = scmp.ne.s32.totalorder %s332, %s333
    %p344 = scmp.eq.s32.totalorder %s26, 0
    %p345 = por %p343, %p344
    %p346 = scmp.ne.s32.totalorder %s332, %s333
    %p347 = scmp.eq.s32.totalorder %s27, 3
    %p348 = por %p346, %p347
    %p350 = scmp.ne.s32.totalorder %s333, %s349
    %p351 = scmp.eq.s32.totalorder %s27, 0
    %p352 = por %p350, %p351
    %s353 = ssub.s32 %s29, %s36
    %p354 = scmp.eq.s32.totalorder %s353, 0
    %s356 = sadd.s32 %s355, 1
    %s357 = scalar_select %p354, %s355, %s356
    %p360 = pneg %p354
    %p361 = scmp.eq.s32.totalorder %s21, 3
    %p362 = por %p360, %p361
    %p363 = scmp.ne.s32.totalorder %s355, %s358
    %p364 = scmp.eq.s32.totalorder %s21, 0
    %p365 = por %p363, %p364
    %p366 = scmp.ne.s32.totalorder %s355, %s358
    %p367 = scmp.eq.s32.totalorder %s26, 3
    %p368 = por %p366, %p367
    %p369 = scmp.ne.s32.totalorder %s358, %s359
    %p370 = scmp.eq.s32.totalorder %s26, 0
    %p371 = por %p369, %p370
    %p372 = scmp.ne.s32.totalorder %s358, %s359
    %p373 = scmp.eq.s32.totalorder %s27, 3
    %p374 = por %p372, %p373
    %p376 = scmp.ne.s32.totalorder %s359, %s375
    %p377 = scmp.eq.s32.totalorder %s27, 0
    %p378 = por %p376, %p377
    %s379 = ssub.s32 %s29, %s36
    %p380 = scmp.eq.s32.totalorder %s379, 0
    %s382 = sadd.s32 %s381, 1
    %s383 = scalar_select %p380, %s381, %s382
    %p386 = pneg %p380
    %p387 = scmp.eq.s32.totalorder %s21, 3
    %p388 = por %p386, %p387
    %p389 = scmp.ne.s32.totalorder %s381, %s384
    %p390 = scmp.eq.s32.totalorder %s21, 0
    %p391 = por %p389, %p390
    %p392 = scmp.ne.s32.totalorder %s381, %s384
    %p393 = scmp.eq.s32.totalorder %s26, 3
    %p394 = por %p392, %p393
    %p395 = scmp.ne.s32.totalorder %s384, %s385
    %p396 = scmp.eq.s32.totalorder %s26, 0
    %p397 = por %p395, %p396
    %p398 = scmp.ne.s32.totalorder %s384, %s385
    %p399 = scmp.eq.s32.totalorder %s27, 3
    %p400 = por %p398, %p399
    %p402 = scmp.ne.s32.totalorder %s385, %s401
    %p403 = scmp.eq.s32.totalorder %s27, 0
    %p404 = por %p402, %p403
    %s405 = ssub.s32 %s29, %s36
    %p406 = scmp.eq.s32.totalorder %s405, 0
    %s408 = sadd.s32 %s407, 1
    %s409 = scalar_select %p406, %s407, %s408
    %p412 = pneg %p406
    %p413 = scmp.eq.s32.totalorder %s21, 3
    %p414 = por %p412, %p413
    %p415 = scmp.ne.s32.totalorder %s407, %s410
    %p416 = scmp.eq.s32.totalorder %s21, 0
    %p417 = por %p415, %p416
    %p418 = scmp.ne.s32.totalorder %s407, %s410
    %p419 = scmp.eq.s32.totalorder %s26, 3
    %p420 = por %p418, %p419
    %p421 = scmp.ne.s32.totalorder %s410, %s411
    %p422 = scmp.eq.s32.totalorder %s26, 0
    %p423 = por %p421, %p422
    %p424 = scmp.ne.s32.totalorder %s410, %s411
    %p425 = scmp.eq.s32.totalorder %s27, 3
    %p426 = por %p424, %p425
    %p428 = scmp.ne.s32.totalorder %s411, %s427
    %p429 = scmp.eq.s32.totalorder %s27, 0
    %p430 = por %p428, %p429
    %s431 = ssub.s32 %s28, %s40
    %p432 = scmp.eq.s32.totalorder %s431, 0
    %s434 = sadd.s32 %s433, 1
    %s435 = scalar_select %p432, %s433, %s434
    %p438 = pneg %p432
    %p439 = scmp.eq.s32.totalorder %s21, 3
    %p440 = por %p438, %p439
    %p441 = scmp.ne.s32.totalorder %s433, %s436
    %p442 = scmp.eq.s32.totalorder %s21, 0
    %p443 = por %p441, %p442
    %p444 = scmp.ne.s32.totalorder %s433, %s436
    %p445 = scmp.eq.s32.totalorder %s26, 3
    %p446 = por %p444, %p445
    %p447 = scmp.ne.s32.totalorder %s436, %s437
    %p448 = scmp.eq.s32.totalorder %s26, 0
    %p449 = por %p447, %p448
    %p450 = scmp.ne.s32.totalorder %s436, %s437
    %p451 = scmp.eq.s32.totalorder %s27, 3
    %p452 = por %p450, %p451
    %p454 = scmp.ne.s32.totalorder %s437, %s453
    %p455 = scmp.eq.s32.totalorder %s27, 0
    %p456 = por %p454, %p455
    %p457 = scmp.le.s32.totalorder 1, %s21
    %p458 = scmp.lt.s32.totalorder %s21, 5
    %p459 = pnand %p457, %p458
    %p460 = pneg %p459
    // Predicated region
    $region9: #{tpu_custom_call.1} parent=5 // pred_check
      _
    $region10: #{tpu_custom_call.1} parent=5 // pred_check_branch
      %462 = sbr.rel (%p459) target = $region12
    $region11: #{tpu_custom_call.1} parent=5 // pred_region
      %s463 = ssub.s32 %s21, 1
    $region12: #{tpu_custom_call.1} parent=5 // pred_fallthru
      _
    %p464 = scmp.lt.s32.totalorder %s21, 4
    // Predicated region
    $region13: #{tpu_custom_call.1} parent=5 // pred_check
      %p465 = pneg %p464
    $region14: #{tpu_custom_call.1} parent=5 // pred_check_branch
      %467 = sbr.rel (%p465) target = $region16
    $region15: #{tpu_custom_call.1} parent=5 // pred_region
      // Predicated region
      $region17: #{tpu_custom_call.1} parent=15 // pred_check
        %p468 = pneg %p53
      $region18: #{tpu_custom_call.1} parent=15 // pred_check_branch
        %470 = sbr.rel (%p468) target = $region20
      $region19: #{tpu_custom_call.1} parent=15 // pred_region
        %p471 = scmp.lt.s32.totalorder %s28, 1
        %s472 = scalar_select %p471, %s28, 1
        %s473 = smul.addr %s472, 32
        %s474 = smul.addr %s473, 8
        %s475 = scalar_lea.vmem %s0, %s474
      $region20: #{tpu_custom_call.1} parent=15 // pred_fallthru
        _
      // Predicated region
      $region21: #{tpu_custom_call.1} parent=15 // pred_check
        %p476 = pneg %p79
      $region22: #{tpu_custom_call.1} parent=15 // pred_check_branch
        %478 = sbr.rel (%p476) target = $region24
      $region23: #{tpu_custom_call.1} parent=15 // pred_region
        %p479 = scmp.lt.s32.totalorder %s29, 1
        %s480 = scalar_select %p479, %s29, 1
        %s481 = scalar_lea.vmem %s1, %s480
      $region24: #{tpu_custom_call.1} parent=15 // pred_fallthru
        _
      // Predicated region
      $region25: #{tpu_custom_call.1} parent=15 // pred_check
        %p482 = pneg %p105
      $region26: #{tpu_custom_call.1} parent=15 // pred_check_branch
        %484 = sbr.rel (%p482) target = $region28
      $region27: #{tpu_custom_call.1} parent=15 // pred_region
        %p485 = scmp.lt.s32.totalorder %s29, 1
        %s486 = scalar_select %p485, %s29, 1
        %s487 = scalar_lea.vmem %s2, %s486
      $region28: #{tpu_custom_call.1} parent=15 // pred_fallthru
        _
      // Predicated region
      $region29: #{tpu_custom_call.1} parent=15 // pred_check
        %p488 = pneg %p131
      $region30: #{tpu_custom_call.1} parent=15 // pred_check_branch
        %490 = sbr.rel (%p488) target = $region32
      $region31: #{tpu_custom_call.1} parent=15 // pred_region
        %p491 = scmp.lt.s32.totalorder %s29, 1
        %s492 = scalar_select %p491, %s29, 1
        %s493 = smul.addr %s492, 2
        %s494 = scalar_lea.vmem %s3, %s493
      $region32: #{tpu_custom_call.1} parent=15 // pred_fallthru
        _
      // Predicated region
      $region33: #{tpu_custom_call.1} parent=15 // pred_check
        %p495 = pneg %p157
      $region34: #{tpu_custom_call.1} parent=15 // pred_check_branch
        %497 = sbr.rel (%p495) target = $region36
      $region35: #{tpu_custom_call.1} parent=15 // pred_region
        %p498 = scmp.lt.s32.totalorder %s29, 1
        %s499 = scalar_select %p498, %s29, 1
        %s500 = scalar_lea.vmem %s4, %s499
      $region36: #{tpu_custom_call.1} parent=15 // pred_fallthru
        _
      // Predicated region
      $region37: #{tpu_custom_call.1} parent=15 // pred_check
        %p501 = pneg %p183
      $region38: #{tpu_custom_call.1} parent=15 // pred_check_branch
        %503 = sbr.rel (%p501) target = $region40
      $region39: #{tpu_custom_call.1} parent=15 // pred_region
        %p504 = scmp.lt.s32.totalorder %s29, 1
        %s505 = scalar_select %p504, %s29, 1
        %s506 = smul.addr %s505, 2
        %s507 = smul.addr %s506, 8
        %s508 = scalar_lea.vmem %s5, %s507
      $region40: #{tpu_custom_call.1} parent=15 // pred_fallthru
        _
      // Predicated region
      $region41: #{tpu_custom_call.1} parent=15 // pred_check
        %p509 = pneg %p209
      $region42: #{tpu_custom_call.1} parent=15 // pred_check_branch
        %511 = sbr.rel (%p509) target = $region44
      $region43: #{tpu_custom_call.1} parent=15 // pred_region
        %p512 = scmp.lt.s32.totalorder %s29, 1
        %s513 = scalar_select %p512, %s29, 1
        %s514 = scalar_lea.vmem %s6, %s513
      $region44: #{tpu_custom_call.1} parent=15 // pred_fallthru
        _
      // Predicated region
      $region45: #{tpu_custom_call.1} parent=15 // pred_check
        %p515 = pneg %p235
      $region46: #{tpu_custom_call.1} parent=15 // pred_check_branch
        %517 = sbr.rel (%p515) target = $region48
      $region47: #{tpu_custom_call.1} parent=15 // pred_region
        %p518 = scmp.lt.s32.totalorder %s29, 1
        %s519 = scalar_select %p518, %s29, 1
        %s520 = smul.addr %s519, 4
        %s521 = scalar_lea.vmem %s7, %s520
      $region48: #{tpu_custom_call.1} parent=15 // pred_fallthru
        _
      // Predicated region
      $region49: #{tpu_custom_call.1} parent=15 // pred_check
        %p522 = pneg %p261
      $region50: #{tpu_custom_call.1} parent=15 // pred_check_branch
        %524 = sbr.rel (%p522) target = $region52
      $region51: #{tpu_custom_call.1} parent=15 // pred_region
        %p525 = scmp.lt.s32.totalorder %s29, 1
        %s526 = scalar_select %p525, %s29, 1
        %s527 = scalar_lea.vmem %s8, %s526
      $region52: #{tpu_custom_call.1} parent=15 // pred_fallthru
        _
      // Predicated region
      $region53: #{tpu_custom_call.1} parent=15 // pred_check
        %p528 = pneg %p287
      $region54: #{tpu_custom_call.1} parent=15 // pred_check_branch
        %530 = sbr.rel (%p528) target = $region56
      $region55: #{tpu_custom_call.1} parent=15 // pred_region
        %p531 = scmp.lt.s32.totalorder %s29, 1
        %s532 = scalar_select %p531, %s29, 1
        %s533 = smul.addr %s532, 2
        %s534 = smul.addr %s533, 8
        %s535 = scalar_lea.vmem %s9, %s534
      $region56: #{tpu_custom_call.1} parent=15 // pred_fallthru
        _
      // Predicated region
      $region57: #{tpu_custom_call.1} parent=15 // pred_check
        %p536 = pneg %p313
      $region58: #{tpu_custom_call.1} parent=15 // pred_check_branch
        %538 = sbr.rel (%p536) target = $region60
      $region59: #{tpu_custom_call.1} parent=15 // pred_region
        %p539 = scmp.lt.s32.totalorder %s29, 1
        %s540 = scalar_select %p539, %s29, 1
        %s541 = scalar_lea.vmem %s10, %s540
      $region60: #{tpu_custom_call.1} parent=15 // pred_fallthru
        _
      // Predicated region
      $region61: #{tpu_custom_call.1} parent=15 // pred_check
        %p542 = pneg %p339
      $region62: #{tpu_custom_call.1} parent=15 // pred_check_branch
        %544 = sbr.rel (%p542) target = $region64
      $region63: #{tpu_custom_call.1} parent=15 // pred_region
        %p545 = scmp.lt.s32.totalorder %s29, 1
        %s546 = scalar_select %p545, %s29, 1
        %s547 = scalar_lea.vmem %s11, %s546
      $region64: #{tpu_custom_call.1} parent=15 // pred_fallthru
        _
      // Predicated region
      $region65: #{tpu_custom_call.1} parent=15 // pred_check
        %p548 = pneg %p365
      $region66: #{tpu_custom_call.1} parent=15 // pred_check_branch
        %550 = sbr.rel (%p548) target = $region68
      $region67: #{tpu_custom_call.1} parent=15 // pred_region
        %p551 = scmp.lt.s32.totalorder %s29, 1
        %s552 = scalar_select %p551, %s29, 1
        %s553 = scalar_lea.vmem %s12, %s552
      $region68: #{tpu_custom_call.1} parent=15 // pred_fallthru
        _
      // Predicated region
      $region69: #{tpu_custom_call.1} parent=15 // pred_check
        %p554 = pneg %p391
      $region70: #{tpu_custom_call.1} parent=15 // pred_check_branch
        %556 = sbr.rel (%p554) target = $region72
      $region71: #{tpu_custom_call.1} parent=15 // pred_region
        %p557 = scmp.lt.s32.totalorder %s29, 1
        %s558 = scalar_select %p557, %s29, 1
        %s559 = smul.addr %s558, 4
        %s560 = scalar_lea.vmem %s13, %s559
      $region72: #{tpu_custom_call.1} parent=15 // pred_fallthru
        _
      // Predicated region
      $region73: #{tpu_custom_call.1} parent=15 // pred_check
        %p561 = pneg %p417
      $region74: #{tpu_custom_call.1} parent=15 // pred_check_branch
        %563 = sbr.rel (%p561) target = $region76
      $region75: #{tpu_custom_call.1} parent=15 // pred_region
        %p564 = scmp.lt.s32.totalorder %s29, 1
        %s565 = scalar_select %p564, %s29, 1
        %s566 = scalar_lea.vmem %s14, %s565
      $region76: #{tpu_custom_call.1} parent=15 // pred_fallthru
        _
    $region16: #{tpu_custom_call.1} parent=5 // pred_fallthru
      _
    %p567 = scmp.le.s32.totalorder 1, %s21
    %p568 = scmp.lt.s32.totalorder %s21, 5
    %p569 = pnand %p567, %p568
    %p570 = pneg %p569
    // Predicated region
    $region77: #{tpu_custom_call.1} parent=5 // pred_check
      _
    $region78: #{tpu_custom_call.1} parent=5 // pred_check_branch
      %572 = sbr.rel (%p569) target = $region80
    $region79: #{tpu_custom_call.1} parent=5 // pred_region
      %s573 = ssub.s32 %s21, 1
      %p574 = scmp.lt.s32.totalorder %s30, 1
      %s575 = scalar_select %p574, %s30, 1
      %s576 = smul.addr %s575, 32
      %s577 = smul.addr %s576, 8
      %s578 = scalar_lea.vmem %s0, %s577
      %p579 = pneg %p59
      %p580 = pneg %p56
      %p581 = scmp.lt.s32.totalorder %s31, 1
      %s582 = scalar_select %p581, %s31, 1
      %s583 = scalar_lea.vmem %s1, %s582
      %p584 = pneg %p85
      %p585 = pneg %p82
      %p586 = scmp.lt.s32.totalorder %s31, 1
      %s587 = scalar_select %p586, %s31, 1
      %s588 = scalar_lea.vmem %s2, %s587
      %p589 = pneg %p111
      %p590 = pneg %p108
      %p591 = scmp.lt.s32.totalorder %s31, 1
      %s592 = scalar_select %p591, %s31, 1
      %s593 = smul.addr %s592, 2
      %s594 = scalar_lea.vmem %s3, %s593
      %p595 = pneg %p137
      %p596 = pneg %p134
      %p597 = scmp.lt.s32.totalorder %s31, 1
      %s598 = scalar_select %p597, %s31, 1
      %s599 = scalar_lea.vmem %s4, %s598
      %p600 = pneg %p163
      %p601 = pneg %p160
      %p602 = scmp.lt.s32.totalorder %s31, 1
      %s603 = scalar_select %p602, %s31, 1
      %s604 = smul.addr %s603, 2
      %s605 = smul.addr %s604, 8
      %s606 = scalar_lea.vmem %s5, %s605
      %p607 = pneg %p189
      %p608 = pneg %p186
      %p609 = scmp.lt.s32.totalorder %s31, 1
      %s610 = scalar_select %p609, %s31, 1
      %s611 = scalar_lea.vmem %s6, %s610
      %p612 = pneg %p215
      %p613 = pneg %p212
      %p614 = scmp.lt.s32.totalorder %s31, 1
      %s615 = scalar_select %p614, %s31, 1
      %s616 = smul.addr %s615, 4
      %s617 = scalar_lea.vmem %s7, %s616
      %p618 = pneg %p241
      %p619 = pneg %p238
      %p620 = scmp.lt.s32.totalorder %s31, 1
      %s621 = scalar_select %p620, %s31, 1
      %s622 = scalar_lea.vmem %s8, %s621
      %p623 = pneg %p267
      %p624 = pneg %p264
      %p625 = scmp.lt.s32.totalorder %s31, 1
      %s626 = scalar_select %p625, %s31, 1
      %s627 = smul.addr %s626, 2
      %s628 = smul.addr %s627, 8
      %s629 = scalar_lea.vmem %s9, %s628
      %p630 = pneg %p293
      %p631 = pneg %p290
      %p632 = scmp.lt.s32.totalorder %s31, 1
      %s633 = scalar_select %p632, %s31, 1
      %s634 = scalar_lea.vmem %s10, %s633
      %p635 = pneg %p319
      %p636 = pneg %p316
      %p637 = scmp.lt.s32.totalorder %s31, 1
      %s638 = scalar_select %p637, %s31, 1
      %s639 = scalar_lea.vmem %s11, %s638
      %p640 = pneg %p345
      %p641 = pneg %p342
      %p642 = scmp.lt.s32.totalorder %s31, 1
      %s643 = scalar_select %p642, %s31, 1
      %s644 = scalar_lea.vmem %s12, %s643
      %p645 = pneg %p371
      %p646 = pneg %p368
      %p647 = scmp.lt.s32.totalorder %s31, 1
      %s648 = scalar_select %p647, %s31, 1
      %s649 = smul.addr %s648, 4
      %s650 = scalar_lea.vmem %s13, %s649
      %p651 = pneg %p397
      %p652 = pneg %p394
      %p653 = scmp.lt.s32.totalorder %s31, 1
      %s654 = scalar_select %p653, %s31, 1
      %s655 = scalar_lea.vmem %s14, %s654
      %p656 = pneg %p423
      %p657 = pneg %p420
      %p658 = pneg %p449
      %p659 = pneg %p446
      %p660 = scmp.lt.s32.totalorder %s30, 1
      %s661 = scalar_select %p660, %s30, 1
      %s662 = smul.addr %s661, 32
      %s663 = smul.addr %s662, 8
      %s664 = scalar_lea.vmem %s15, %s663
      %p665 = scmp.lt.s32.totalorder %s30, 1
      %s666 = scalar_select %p665, %s30, 1
      %s667 = smul.addr %s666, 32
      %s668 = smul.addr %s667, 8
      %s669 = scalar_lea.vmem %s0, %s668
      %p670 = scmp.lt.s32.totalorder %s31, 1
      %s671 = scalar_select %p670, %s31, 1
      %s672 = scalar_lea.vmem %s1, %s671
      %p673 = scmp.lt.s32.totalorder %s31, 1
      %s674 = scalar_select %p673, %s31, 1
      %s675 = scalar_lea.vmem %s2, %s674
      %p676 = scmp.lt.s32.totalorder %s31, 1
      %s677 = scalar_select %p676, %s31, 1
      %s678 = smul.addr %s677, 2
      %s679 = scalar_lea.vmem %s3, %s678
      %p680 = scmp.lt.s32.totalorder %s31, 1
      %s681 = scalar_select %p680, %s31, 1
      %s682 = scalar_lea.vmem %s4, %s681
      %p683 = scmp.lt.s32.totalorder %s31, 1
      %s684 = scalar_select %p683, %s31, 1
      %s685 = smul.addr %s684, 2
      %s686 = smul.addr %s685, 8
      %s687 = scalar_lea.vmem %s5, %s686
      %p688 = scmp.lt.s32.totalorder %s31, 1
      %s689 = scalar_select %p688, %s31, 1
      %s690 = scalar_lea.vmem %s6, %s689
      %p691 = scmp.lt.s32.totalorder %s31, 1
      %s692 = scalar_select %p691, %s31, 1
      %s693 = smul.addr %s692, 4
      %s694 = scalar_lea.vmem %s7, %s693
      %p695 = scmp.lt.s32.totalorder %s31, 1
      %s696 = scalar_select %p695, %s31, 1
      %s697 = scalar_lea.vmem %s8, %s696
      %p698 = scmp.lt.s32.totalorder %s31, 1
      %s699 = scalar_select %p698, %s31, 1
      %s700 = smul.addr %s699, 2
      %s701 = smul.addr %s700, 8
      %s702 = scalar_lea.vmem %s9, %s701
      %p703 = scmp.lt.s32.totalorder %s31, 1
      %s704 = scalar_select %p703, %s31, 1
      %s705 = scalar_lea.vmem %s10, %s704
      %p706 = scmp.lt.s32.totalorder %s31, 1
      %s707 = scalar_select %p706, %s31, 1
      %s708 = scalar_lea.vmem %s11, %s707
      %p709 = scmp.lt.s32.totalorder %s31, 1
      %s710 = scalar_select %p709, %s31, 1
      %s711 = scalar_lea.vmem %s12, %s710
      %p712 = scmp.lt.s32.totalorder %s31, 1
      %s713 = scalar_select %p712, %s31, 1
      %s714 = smul.addr %s713, 4
      %s715 = scalar_lea.vmem %s13, %s714
      %p716 = scmp.lt.s32.totalorder %s31, 1
      %s717 = scalar_select %p716, %s31, 1
      %s718 = scalar_lea.vmem %s14, %s717
      %p719 = scmp.lt.s32.totalorder %s30, 1
      %s720 = scalar_select %p719, %s30, 1
      %s721 = smul.addr %s720, 32
      %s722 = smul.addr %s721, 8
      %s723 = scalar_lea.vmem %s15, %s722
      %p725 = scmp.eq.s32.totalorder %s31, 0
      // Predicated region
      $region81: #{tpu_custom_call.1} parent=79 // pred_check
        %p726 = pneg %p725
      $region82: #{tpu_custom_call.1} parent=79 // pred_check_branch
        %728 = sbr.rel (%p726) target = $region84
      $region83: #{tpu_custom_call.1} parent=79 // pred_region
        %v729 = vld [vmem:[%s669] sm:$0xff]
        %v730 = vld [vmem:[%s669 + $0x8] sm:$0xff]
        %v731 = vld [vmem:[%s669 + $0x10] sm:$0xff]
        %v732 = vld [vmem:[%s669 + $0x18] sm:$0xff]
        %v733 = vld [vmem:[%s669 + $0x20] sm:$0xff]
        %v734 = vld [vmem:[%s669 + $0x28] sm:$0xff]
        %v735 = vld [vmem:[%s669 + $0x30] sm:$0xff]
        %v736 = vld [vmem:[%s669 + $0x38] sm:$0xff]
        %v737 = vld [vmem:[%s669 + $0x40] sm:$0xff]
        %v738 = vld [vmem:[%s669 + $0x48] sm:$0xff]
        %v739 = vld [vmem:[%s669 + $0x50] sm:$0xff]
        %v740 = vld [vmem:[%s669 + $0x58] sm:$0xff]
        %v741 = vld [vmem:[%s669 + $0x60] sm:$0xff]
        %v742 = vld [vmem:[%s669 + $0x68] sm:$0xff]
        %v743 = vld [vmem:[%s669 + $0x70] sm:$0xff]
        %v744 = vld [vmem:[%s669 + $0x78] sm:$0xff]
        %v745 = vld [vmem:[%s669 + $0x80] sm:$0xff]
        %v746 = vld [vmem:[%s669 + $0x88] sm:$0xff]
        %v747 = vld [vmem:[%s669 + $0x90] sm:$0xff]
        %v748 = vld [vmem:[%s669 + $0x98] sm:$0xff]
        %v749 = vld [vmem:[%s669 + $0xa0] sm:$0xff]
        %v750 = vld [vmem:[%s669 + $0xa8] sm:$0xff]
        %v751 = vld [vmem:[%s669 + $0xb0] sm:$0xff]
        %v752 = vld [vmem:[%s669 + $0xb8] sm:$0xff]
        %v753 = vld [vmem:[%s669 + $0xc0] sm:$0xff]
        %v754 = vld [vmem:[%s669 + $0xc8] sm:$0xff]
        %v755 = vld [vmem:[%s669 + $0xd0] sm:$0xff]
        %v756 = vld [vmem:[%s669 + $0xd8] sm:$0xff]
        %v757 = vld [vmem:[%s669 + $0xe0] sm:$0xff]
        %v758 = vld [vmem:[%s669 + $0xe8] sm:$0xff]
        %v759 = vld [vmem:[%s669 + $0xf0] sm:$0xff]
        %v760 = vld [vmem:[%s669 + $0xf8] sm:$0xff]
        %vm761 = vcmask 31744
        %762 = vst.msk [vmem:[%s723] sm:$0xff] %vm761, %v729
        %763 = vst.msk [vmem:[%s723 + $0x8] sm:$0xff] %vm761, %v730
        %764 = vst.msk [vmem:[%s723 + $0x10] sm:$0xff] %vm761, %v731
        %765 = vst.msk [vmem:[%s723 + $0x18] sm:$0xff] %vm761, %v732
        %766 = vst.msk [vmem:[%s723 + $0x20] sm:$0xff] %vm761, %v733
        %767 = vst.msk [vmem:[%s723 + $0x28] sm:$0xff] %vm761, %v734
        %768 = vst.msk [vmem:[%s723 + $0x30] sm:$0xff] %vm761, %v735
        %769 = vst.msk [vmem:[%s723 + $0x38] sm:$0xff] %vm761, %v736
        %770 = vst.msk [vmem:[%s723 + $0x40] sm:$0xff] %vm761, %v737
        %771 = vst.msk [vmem:[%s723 + $0x48] sm:$0xff] %vm761, %v738
        %772 = vst.msk [vmem:[%s723 + $0x50] sm:$0xff] %vm761, %v739
        %773 = vst.msk [vmem:[%s723 + $0x58] sm:$0xff] %vm761, %v740
        %774 = vst.msk [vmem:[%s723 + $0x60] sm:$0xff] %vm761, %v741
        %775 = vst.msk [vmem:[%s723 + $0x68] sm:$0xff] %vm761, %v742
        %776 = vst.msk [vmem:[%s723 + $0x70] sm:$0xff] %vm761, %v743
        %777 = vst.msk [vmem:[%s723 + $0x78] sm:$0xff] %vm761, %v744
        %778 = vst.msk [vmem:[%s723 + $0x80] sm:$0xff] %vm761, %v745
        %779 = vst.msk [vmem:[%s723 + $0x88] sm:$0xff] %vm761, %v746
        %780 = vst.msk [vmem:[%s723 + $0x90] sm:$0xff] %vm761, %v747
        %781 = vst.msk [vmem:[%s723 + $0x98] sm:$0xff] %vm761, %v748
        %782 = vst.msk [vmem:[%s723 + $0xa0] sm:$0xff] %vm761, %v749
        %783 = vst.msk [vmem:[%s723 + $0xa8] sm:$0xff] %vm761, %v750
        %784 = vst.msk [vmem:[%s723 + $0xb0] sm:$0xff] %vm761, %v751
        %785 = vst.msk [vmem:[%s723 + $0xb8] sm:$0xff] %vm761, %v752
        %786 = vst.msk [vmem:[%s723 + $0xc0] sm:$0xff] %vm761, %v753
        %787 = vst.msk [vmem:[%s723 + $0xc8] sm:$0xff] %vm761, %v754
        %788 = vst.msk [vmem:[%s723 + $0xd0] sm:$0xff] %vm761, %v755
        %789 = vst.msk [vmem:[%s723 + $0xd8] sm:$0xff] %vm761, %v756
        %790 = vst.msk [vmem:[%s723 + $0xe0] sm:$0xff] %vm761, %v757
        %791 = vst.msk [vmem:[%s723 + $0xe8] sm:$0xff] %vm761, %v758
        %792 = vst.msk [vmem:[%s723 + $0xf0] sm:$0xff] %vm761, %v759
        %793 = vst.msk [vmem:[%s723 + $0xf8] sm:$0xff] %vm761, %v760
      $region84: #{tpu_custom_call.1} parent=79 // pred_fallthru
        _
      %v794 = vld [vmem:[%s723] sm:$0xff]
      %v795 = vld [vmem:[%s723 + $0x8] sm:$0xff]
      %v796 = vld [vmem:[%s723 + $0x10] sm:$0xff]
      %v797 = vld [vmem:[%s723 + $0x18] sm:$0xff]
      %v798 = vld [vmem:[%s723 + $0x20] sm:$0xff]
      %v799 = vld [vmem:[%s723 + $0x28] sm:$0xff]
      %v800 = vld [vmem:[%s723 + $0x30] sm:$0xff]
      %v801 = vld [vmem:[%s723 + $0x38] sm:$0xff]
      %v802 = vld [vmem:[%s723 + $0x40] sm:$0xff]
      %v803 = vld [vmem:[%s723 + $0x48] sm:$0xff]
      %v804 = vld [vmem:[%s723 + $0x50] sm:$0xff]
      %v805 = vld [vmem:[%s723 + $0x58] sm:$0xff]
      %v806 = vld [vmem:[%s723 + $0x60] sm:$0xff]
      %v807 = vld [vmem:[%s723 + $0x68] sm:$0xff]
      %v808 = vld [vmem:[%s723 + $0x70] sm:$0xff]
      %v809 = vld [vmem:[%s723 + $0x78] sm:$0xff]
      %v810 = vld [vmem:[%s723 + $0x80] sm:$0xff]
      %v811 = vld [vmem:[%s723 + $0x88] sm:$0xff]
      %v812 = vld [vmem:[%s723 + $0x90] sm:$0xff]
      %v813 = vld [vmem:[%s723 + $0x98] sm:$0xff]
      %v814 = vld [vmem:[%s723 + $0xa0] sm:$0xff]
      %v815 = vld [vmem:[%s723 + $0xa8] sm:$0xff]
      %v816 = vld [vmem:[%s723 + $0xb0] sm:$0xff]
      %v817 = vld [vmem:[%s723 + $0xb8] sm:$0xff]
      %v818 = vld [vmem:[%s723 + $0xc0] sm:$0xff]
      %v819 = vld [vmem:[%s723 + $0xc8] sm:$0xff]
      %v820 = vld [vmem:[%s723 + $0xd0] sm:$0xff]
      %v821 = vld [vmem:[%s723 + $0xd8] sm:$0xff]
      %v822 = vld [vmem:[%s723 + $0xe0] sm:$0xff]
      %v823 = vld [vmem:[%s723 + $0xe8] sm:$0xff]
      %v824 = vld [vmem:[%s723 + $0xf0] sm:$0xff]
      %v825 = vld [vmem:[%s723 + $0xf8] sm:$0xff]
      %vm826 = vcmask 31744
      %v827 = vsel %vm826, %v794, 0.0
      %828 = vadd.xlane.f32.xlu0 %v827
      %v829 = vpop.xlane.xlu0 %828
      %v830 = vsel %vm826, %v795, 0.0
      %831 = vadd.xlane.f32.xlu0 %v830
      %v832 = vpop.xlane.xlu0 %831
      %v833 = vsel %vm826, %v796, 0.0
      %834 = vadd.xlane.f32.xlu0 %v833
      %v835 = vpop.xlane.xlu0 %834
      %v836 = vsel %vm826, %v797, 0.0
      %837 = vadd.xlane.f32.xlu0 %v836
      %v838 = vpop.xlane.xlu0 %837
      %v839 = vsel %vm826, %v798, 0.0
      %840 = vadd.xlane.f32.xlu0 %v839
      %v841 = vpop.xlane.xlu0 %840
      %v842 = vsel %vm826, %v799, 0.0
      %843 = vadd.xlane.f32.xlu0 %v842
      %v844 = vpop.xlane.xlu0 %843
      %v845 = vsel %vm826, %v800, 0.0
      %846 = vadd.xlane.f32.xlu0 %v845
      %v847 = vpop.xlane.xlu0 %846
      %v848 = vsel %vm826, %v801, 0.0
      %849 = vadd.xlane.f32.xlu0 %v848
      %v850 = vpop.xlane.xlu0 %849
      %v851 = vsel %vm826, %v802, 0.0
      %852 = vadd.xlane.f32.xlu0 %v851
      %v853 = vpop.xlane.xlu0 %852
      %v854 = vsel %vm826, %v803, 0.0
      %855 = vadd.xlane.f32.xlu0 %v854
      %v856 = vpop.xlane.xlu0 %855
      %v857 = vsel %vm826, %v804, 0.0
      %858 = vadd.xlane.f32.xlu0 %v857
      %v859 = vpop.xlane.xlu0 %858
      %v860 = vsel %vm826, %v805, 0.0
      %861 = vadd.xlane.f32.xlu0 %v860
      %v862 = vpop.xlane.xlu0 %861
      %v863 = vsel %vm826, %v806, 0.0
      %864 = vadd.xlane.f32.xlu0 %v863
      %v865 = vpop.xlane.xlu0 %864
      %v866 = vsel %vm826, %v807, 0.0
      %867 = vadd.xlane.f32.xlu0 %v866
      %v868 = vpop.xlane.xlu0 %867
      %v869 = vsel %vm826, %v808, 0.0
      %870 = vadd.xlane.f32.xlu0 %v869
      %v871 = vpop.xlane.xlu0 %870
      %v872 = vsel %vm826, %v809, 0.0
      %873 = vadd.xlane.f32.xlu0 %v872
      %v874 = vpop.xlane.xlu0 %873
      %v875 = vsel %vm826, %v810, 0.0
      %876 = vadd.xlane.f32.xlu0 %v875
      %v877 = vpop.xlane.xlu0 %876
      %v878 = vsel %vm826, %v811, 0.0
      %879 = vadd.xlane.f32.xlu0 %v878
      %v880 = vpop.xlane.xlu0 %879
      %v881 = vsel %vm826, %v812, 0.0
      %882 = vadd.xlane.f32.xlu0 %v881
      %v883 = vpop.xlane.xlu0 %882
      %v884 = vsel %vm826, %v813, 0.0
      %885 = vadd.xlane.f32.xlu0 %v884
      %v886 = vpop.xlane.xlu0 %885
      %v887 = vsel %vm826, %v814, 0.0
      %888 = vadd.xlane.f32.xlu0 %v887
      %v889 = vpop.xlane.xlu0 %888
      %v890 = vsel %vm826, %v815, 0.0
      %891 = vadd.xlane.f32.xlu0 %v890
      %v892 = vpop.xlane.xlu0 %891
      %v893 = vsel %vm826, %v816, 0.0
      %894 = vadd.xlane.f32.xlu0 %v893
      %v895 = vpop.xlane.xlu0 %894
      %v896 = vsel %vm826, %v817, 0.0
      %897 = vadd.xlane.f32.xlu0 %v896
      %v898 = vpop.xlane.xlu0 %897
      %v899 = vsel %vm826, %v818, 0.0
      %900 = vadd.xlane.f32.xlu0 %v899
      %v901 = vpop.xlane.xlu0 %900
      %v902 = vsel %vm826, %v819, 0.0
      %903 = vadd.xlane.f32.xlu0 %v902
      %v904 = vpop.xlane.xlu0 %903
      %v905 = vsel %vm826, %v820, 0.0
      %906 = vadd.xlane.f32.xlu0 %v905
      %v907 = vpop.xlane.xlu0 %906
      %v908 = vsel %vm826, %v821, 0.0
      %909 = vadd.xlane.f32.xlu0 %v908
      %v910 = vpop.xlane.xlu0 %909
      %v911 = vsel %vm826, %v822, 0.0
      %912 = vadd.xlane.f32.xlu0 %v911
      %v913 = vpop.xlane.xlu0 %912
      %v914 = vsel %vm826, %v823, 0.0
      %915 = vadd.xlane.f32.xlu0 %v914
      %v916 = vpop.xlane.xlu0 %915
      %v917 = vsel %vm826, %v824, 0.0
      %918 = vadd.xlane.f32.xlu0 %v917
      %v919 = vpop.xlane.xlu0 %918
      %v920 = vsel %vm826, %v825, 0.0
      %921 = vadd.xlane.f32.xlu0 %v920
      %v922 = vpop.xlane.xlu0 %921
      %v923 = vrcp.pop 4.0
      %v924 = vmul.f32 %v829, %v923
      %v925 = vmul.f32 %v832, %v923
      %v926 = vmul.f32 %v835, %v923
      %v927 = vmul.f32 %v838, %v923
      %v928 = vmul.f32 %v841, %v923
      %v929 = vmul.f32 %v844, %v923
      %v930 = vmul.f32 %v847, %v923
      %v931 = vmul.f32 %v850, %v923
      %v932 = vmul.f32 %v853, %v923
      %v933 = vmul.f32 %v856, %v923
      %v934 = vmul.f32 %v859, %v923
      %v935 = vmul.f32 %v862, %v923
      %v936 = vmul.f32 %v865, %v923
      %v937 = vmul.f32 %v868, %v923
      %v938 = vmul.f32 %v871, %v923
      %v939 = vmul.f32 %v874, %v923
      %v940 = vmul.f32 %v877, %v923
      %v941 = vmul.f32 %v880, %v923
      %v942 = vmul.f32 %v883, %v923
      %v943 = vmul.f32 %v886, %v923
      %v944 = vmul.f32 %v889, %v923
      %v945 = vmul.f32 %v892, %v923
      %v946 = vmul.f32 %v895, %v923
      %v947 = vmul.f32 %v898, %v923
      %v948 = vmul.f32 %v901, %v923
      %v949 = vmul.f32 %v904, %v923
      %v950 = vmul.f32 %v907, %v923
      %v951 = vmul.f32 %v910, %v923
      %v952 = vmul.f32 %v913, %v923
      %v953 = vmul.f32 %v916, %v923
      %v954 = vmul.f32 %v919, %v923
      %v955 = vmul.f32 %v922, %v923
      %v956 = vsub.f32 %v794, %v924
      %v957 = vsub.f32 %v795, %v925
      %v958 = vsub.f32 %v796, %v926
      %v959 = vsub.f32 %v797, %v927
      %v960 = vsub.f32 %v798, %v928
      %v961 = vsub.f32 %v799, %v929
      %v962 = vsub.f32 %v800, %v930
      %v963 = vsub.f32 %v801, %v931
      %v964 = vsub.f32 %v802, %v932
      %v965 = vsub.f32 %v803, %v933
      %v966 = vsub.f32 %v804, %v934
      %v967 = vsub.f32 %v805, %v935
      %v968 = vsub.f32 %v806, %v936
      %v969 = vsub.f32 %v807, %v937
      %v970 = vsub.f32 %v808, %v938
      %v971 = vsub.f32 %v809, %v939
      %v972 = vsub.f32 %v810, %v940
      %v973 = vsub.f32 %v811, %v941
      %v974 = vsub.f32 %v812, %v942
      %v975 = vsub.f32 %v813, %v943
      %v976 = vsub.f32 %v814, %v944
      %v977 = vsub.f32 %v815, %v945
      %v978 = vsub.f32 %v816, %v946
      %v979 = vsub.f32 %v817, %v947
      %v980 = vsub.f32 %v818, %v948
      %v981 = vsub.f32 %v819, %v949
      %v982 = vsub.f32 %v820, %v950
      %v983 = vsub.f32 %v821, %v951
      %v984 = vsub.f32 %v822, %v952
      %v985 = vsub.f32 %v823, %v953
      %v986 = vsub.f32 %v824, %v954
      %v987 = vsub.f32 %v825, %v955
      %v988 = vmul.f32 %v956, %v956
      %v989 = vmul.f32 %v957, %v957
      %v990 = vmul.f32 %v958, %v958
      %v991 = vmul.f32 %v959, %v959
      %v992 = vmul.f32 %v960, %v960
      %v993 = vmul.f32 %v961, %v961
      %v994 = vmul.f32 %v962, %v962
      %v995 = vmul.f32 %v963, %v963
      %v996 = vmul.f32 %v964, %v964
      %v997 = vmul.f32 %v965, %v965
      %v998 = vmul.f32 %v966, %v966
      %v999 = vmul.f32 %v967, %v967
      %v1000 = vmul.f32 %v968, %v968
      %v1001 = vmul.f32 %v969, %v969
      %v1002 = vmul.f32 %v970, %v970
      %v1003 = vmul.f32 %v971, %v971
      %v1004 = vmul.f32 %v972, %v972
      %v1005 = vmul.f32 %v973, %v973
      %v1006 = vmul.f32 %v974, %v974
      %v1007 = vmul.f32 %v975, %v975
      %v1008 = vmul.f32 %v976, %v976
      %v1009 = vmul.f32 %v977, %v977
      %v1010 = vmul.f32 %v978, %v978
      %v1011 = vmul.f32 %v979, %v979
      %v1012 = vmul.f32 %v980, %v980
      %v1013 = vmul.f32 %v981, %v981
      %v1014 = vmul.f32 %v982, %v982
      %v1015 = vmul.f32 %v983, %v983
      %v1016 = vmul.f32 %v984, %v984
      %v1017 = vmul.f32 %v985, %v985
      %v1018 = vmul.f32 %v986, %v986
      %v1019 = vmul.f32 %v987, %v987
      %v1020 = vsel %vm826, %v988, 0.0
      %1021 = vadd.xlane.f32.xlu0 %v1020
      %v1022 = vpop.xlane.xlu0 %1021
      %v1023 = vsel %vm826, %v989, 0.0
      %1024 = vadd.xlane.f32.xlu0 %v1023
      %v1025 = vpop.xlane.xlu0 %1024
      %v1026 = vsel %vm826, %v990, 0.0
      %1027 = vadd.xlane.f32.xlu0 %v1026
      %v1028 = vpop.xlane.xlu0 %1027
      %v1029 = vsel %vm826, %v991, 0.0
      %1030 = vadd.xlane.f32.xlu0 %v1029
      %v1031 = vpop.xlane.xlu0 %1030
      %v1032 = vsel %vm826, %v992, 0.0
      %1033 = vadd.xlane.f32.xlu0 %v1032
      %v1034 = vpop.xlane.xlu0 %1033
      %v1035 = vsel %vm826, %v993, 0.0
      %1036 = vadd.xlane.f32.xlu0 %v1035
      %v1037 = vpop.xlane.xlu0 %1036
      %v1038 = vsel %vm826, %v994, 0.0
      %1039 = vadd.xlane.f32.xlu0 %v1038
      %v1040 = vpop.xlane.xlu0 %1039
      %v1041 = vsel %vm826, %v995, 0.0
      %1042 = vadd.xlane.f32.xlu0 %v1041
      %v1043 = vpop.xlane.xlu0 %1042
      %v1044 = vsel %vm826, %v996, 0.0
      %1045 = vadd.xlane.f32.xlu0 %v1044
      %v1046 = vpop.xlane.xlu0 %1045
      %v1047 = vsel %vm826, %v997, 0.0
      %1048 = vadd.xlane.f32.xlu0 %v1047
      %v1049 = vpop.xlane.xlu0 %1048
      %v1050 = vsel %vm826, %v998, 0.0
      %1051 = vadd.xlane.f32.xlu0 %v1050
      %v1052 = vpop.xlane.xlu0 %1051
      %v1053 = vsel %vm826, %v999, 0.0
      %1054 = vadd.xlane.f32.xlu0 %v1053
      %v1055 = vpop.xlane.xlu0 %1054
      %v1056 = vsel %vm826, %v1000, 0.0
      %1057 = vadd.xlane.f32.xlu0 %v1056
      %v1058 = vpop.xlane.xlu0 %1057
      %v1059 = vsel %vm826, %v1001, 0.0
      %1060 = vadd.xlane.f32.xlu0 %v1059
      %v1061 = vpop.xlane.xlu0 %1060
      %v1062 = vsel %vm826, %v1002, 0.0
      %1063 = vadd.xlane.f32.xlu0 %v1062
      %v1064 = vpop.xlane.xlu0 %1063
      %v1065 = vsel %vm826, %v1003, 0.0
      %1066 = vadd.xlane.f32.xlu0 %v1065
      %v1067 = vpop.xlane.xlu0 %1066
      %v1068 = vsel %vm826, %v1004, 0.0
      %1069 = vadd.xlane.f32.xlu0 %v1068
      %v1070 = vpop.xlane.xlu0 %1069
      %v1071 = vsel %vm826, %v1005, 0.0
      %1072 = vadd.xlane.f32.xlu0 %v1071
      %v1073 = vpop.xlane.xlu0 %1072
      %v1074 = vsel %vm826, %v1006, 0.0
      %1075 = vadd.xlane.f32.xlu0 %v1074
      %v1076 = vpop.xlane.xlu0 %1075
      %v1077 = vsel %vm826, %v1007, 0.0
      %1078 = vadd.xlane.f32.xlu0 %v1077
      %v1079 = vpop.xlane.xlu0 %1078
      %v1080 = vsel %vm826, %v1008, 0.0
      %1081 = vadd.xlane.f32.xlu0 %v1080
      %v1082 = vpop.xlane.xlu0 %1081
      %v1083 = vsel %vm826, %v1009, 0.0
      %1084 = vadd.xlane.f32.xlu0 %v1083
      %v1085 = vpop.xlane.xlu0 %1084
      %v1086 = vsel %vm826, %v1010, 0.0
      %1087 = vadd.xlane.f32.xlu0 %v1086
      %v1088 = vpop.xlane.xlu0 %1087
      %v1089 = vsel %vm826, %v1011, 0.0
      %1090 = vadd.xlane.f32.xlu0 %v1089
      %v1091 = vpop.xlane.xlu0 %1090
      %v1092 = vsel %vm826, %v1012, 0.0
      %1093 = vadd.xlane.f32.xlu0 %v1092
      %v1094 = vpop.xlane.xlu0 %1093
      %v1095 = vsel %vm826, %v1013, 0.0
      %1096 = vadd.xlane.f32.xlu0 %v1095
      %v1097 = vpop.xlane.xlu0 %1096
      %v1098 = vsel %vm826, %v1014, 0.0
      %1099 = vadd.xlane.f32.xlu0 %v1098
      %v1100 = vpop.xlane.xlu0 %1099
      %v1101 = vsel %vm826, %v1015, 0.0
      %1102 = vadd.xlane.f32.xlu0 %v1101
      %v1103 = vpop.xlane.xlu0 %1102
      %v1104 = vsel %vm826, %v1016, 0.0
      %1105 = vadd.xlane.f32.xlu0 %v1104
      %v1106 = vpop.xlane.xlu0 %1105
      %v1107 = vsel %vm826, %v1017, 0.0
      %1108 = vadd.xlane.f32.xlu0 %v1107
      %v1109 = vpop.xlane.xlu0 %1108
      %v1110 = vsel %vm826, %v1018, 0.0
      %1111 = vadd.xlane.f32.xlu0 %v1110
      %v1112 = vpop.xlane.xlu0 %1111
      %v1113 = vsel %vm826, %v1019, 0.0
      %1114 = vadd.xlane.f32.xlu0 %v1113
      %v1115 = vpop.xlane.xlu0 %1114
      %v1116 = vmul.f32 %v1022, %v923
      %v1117 = vmul.f32 %v1025, %v923
      %v1118 = vmul.f32 %v1028, %v923
      %v1119 = vmul.f32 %v1031, %v923
      %v1120 = vmul.f32 %v1034, %v923
      %v1121 = vmul.f32 %v1037, %v923
      %v1122 = vmul.f32 %v1040, %v923
      %v1123 = vmul.f32 %v1043, %v923
      %v1124 = vmul.f32 %v1046, %v923
      %v1125 = vmul.f32 %v1049, %v923
      %v1126 = vmul.f32 %v1052, %v923
      %v1127 = vmul.f32 %v1055, %v923
      %v1128 = vmul.f32 %v1058, %v923
      %v1129 = vmul.f32 %v1061, %v923
      %v1130 = vmul.f32 %v1064, %v923
      %v1131 = vmul.f32 %v1067, %v923
      %v1132 = vmul.f32 %v1070, %v923
      %v1133 = vmul.f32 %v1073, %v923
      %v1134 = vmul.f32 %v1076, %v923
      %v1135 = vmul.f32 %v1079, %v923
      %v1136 = vmul.f32 %v1082, %v923
      %v1137 = vmul.f32 %v1085, %v923
      %v1138 = vmul.f32 %v1088, %v923
      %v1139 = vmul.f32 %v1091, %v923
      %v1140 = vmul.f32 %v1094, %v923
      %v1141 = vmul.f32 %v1097, %v923
      %v1142 = vmul.f32 %v1100, %v923
      %v1143 = vmul.f32 %v1103, %v923
      %v1144 = vmul.f32 %v1106, %v923
      %v1145 = vmul.f32 %v1109, %v923
      %v1146 = vmul.f32 %v1112, %v923
      %v1147 = vmul.f32 %v1115, %v923
      %v1148 = vadd.f32 %v1116, 1e-05
      %v1149 = vadd.f32 %v1117, 1e-05
      %v1150 = vadd.f32 %v1118, 1e-05
      %v1151 = vadd.f32 %v1119, 1e-05
      %v1152 = vadd.f32 %v1120, 1e-05
      %v1153 = vadd.f32 %v1121, 1e-05
      %v1154 = vadd.f32 %v1122, 1e-05
      %v1155 = vadd.f32 %v1123, 1e-05
      %v1156 = vadd.f32 %v1124, 1e-05
      %v1157 = vadd.f32 %v1125, 1e-05
      %v1158 = vadd.f32 %v1126, 1e-05
      %v1159 = vadd.f32 %v1127, 1e-05
      %v1160 = vadd.f32 %v1128, 1e-05
      %v1161 = vadd.f32 %v1129, 1e-05
      %v1162 = vadd.f32 %v1130, 1e-05
      %v1163 = vadd.f32 %v1131, 1e-05
      %v1164 = vadd.f32 %v1132, 1e-05
      %v1165 = vadd.f32 %v1133, 1e-05
      %v1166 = vadd.f32 %v1134, 1e-05
      %v1167 = vadd.f32 %v1135, 1e-05
      %v1168 = vadd.f32 %v1136, 1e-05
      %v1169 = vadd.f32 %v1137, 1e-05
      %v1170 = vadd.f32 %v1138, 1e-05
      %v1171 = vadd.f32 %v1139, 1e-05
      %v1172 = vadd.f32 %v1140, 1e-05
      %v1173 = vadd.f32 %v1141, 1e-05
      %v1174 = vadd.f32 %v1142, 1e-05
      %v1175 = vadd.f32 %v1143, 1e-05
      %v1176 = vadd.f32 %v1144, 1e-05
      %v1177 = vadd.f32 %v1145, 1e-05
      %v1178 = vadd.f32 %v1146, 1e-05
      %v1179 = vadd.f32 %v1147, 1e-05
      %v1180 = vrsqrt.pop %v1148
      %v1181 = vrsqrt.pop %v1149
      %v1182 = vrsqrt.pop %v1150
      %v1183 = vrsqrt.pop %v1151
      %v1184 = vrsqrt.pop %v1152
      %v1185 = vrsqrt.pop %v1153
      %v1186 = vrsqrt.pop %v1154
      %v1187 = vrsqrt.pop %v1155
      %v1188 = vrsqrt.pop %v1156
      %v1189 = vrsqrt.pop %v1157
      %v1190 = vrsqrt.pop %v1158
      %v1191 = vrsqrt.pop %v1159
      %v1192 = vrsqrt.pop %v1160
      %v1193 = vrsqrt.pop %v1161
      %v1194 = vrsqrt.pop %v1162
      %v1195 = vrsqrt.pop %v1163
      %v1196 = vrsqrt.pop %v1164
      %v1197 = vrsqrt.pop %v1165
      %v1198 = vrsqrt.pop %v1166
      %v1199 = vrsqrt.pop %v1167
      %v1200 = vrsqrt.pop %v1168
      %v1201 = vrsqrt.pop %v1169
      %v1202 = vrsqrt.pop %v1170
      %v1203 = vrsqrt.pop %v1171
      %v1204 = vrsqrt.pop %v1172
      %v1205 = vrsqrt.pop %v1173
      %v1206 = vrsqrt.pop %v1174
      %v1207 = vrsqrt.pop %v1175
      %v1208 = vrsqrt.pop %v1176
      %v1209 = vrsqrt.pop %v1177
      %v1210 = vrsqrt.pop %v1178
      %v1211 = vrsqrt.pop %v1179
      %v1212 = vmul.f32 %v956, %v1180
      %v1213 = vmul.f32 %v957, %v1181
      %v1214 = vmul.f32 %v958, %v1182
      %v1215 = vmul.f32 %v959, %v1183
      %v1216 = vmul.f32 %v960, %v1184
      %v1217 = vmul.f32 %v961, %v1185
      %v1218 = vmul.f32 %v962, %v1186
      %v1219 = vmul.f32 %v963, %v1187
      %v1220 = vmul.f32 %v964, %v1188
      %v1221 = vmul.f32 %v965, %v1189
      %v1222 = vmul.f32 %v966, %v1190
      %v1223 = vmul.f32 %v967, %v1191
      %v1224 = vmul.f32 %v968, %v1192
      %v1225 = vmul.f32 %v969, %v1193
      %v1226 = vmul.f32 %v970, %v1194
      %v1227 = vmul.f32 %v971, %v1195
      %v1228 = vmul.f32 %v972, %v1196
      %v1229 = vmul.f32 %v973, %v1197
      %v1230 = vmul.f32 %v974, %v1198
      %v1231 = vmul.f32 %v975, %v1199
      %v1232 = vmul.f32 %v976, %v1200
      %v1233 = vmul.f32 %v977, %v1201
      %v1234 = vmul.f32 %v978, %v1202
      %v1235 = vmul.f32 %v979, %v1203
      %v1236 = vmul.f32 %v980, %v1204
      %v1237 = vmul.f32 %v981, %v1205
      %v1238 = vmul.f32 %v982, %v1206
      %v1239 = vmul.f32 %v983, %v1207
      %v1240 = vmul.f32 %v984, %v1208
      %v1241 = vmul.f32 %v985, %v1209
      %v1242 = vmul.f32 %v986, %v1210
      %v1243 = vmul.f32 %v987, %v1211
      %v1244 = vld [vmem:[%s672] sm:$0x1]
      %v1246 = vlaneseq
      %v1247 = vshrl.u32 %v1246, 7
      %v1248 = vsub.s32 0, %v1247
      %v1249 = vrot.slane %v1244, %v1248
      %v1251 = vmul.f32 %v1212, %v1249
      %v1252 = vmul.f32 %v1213, %v1249
      %v1253 = vmul.f32 %v1214, %v1249
      %v1254 = vmul.f32 %v1215, %v1249
      %v1255 = vmul.f32 %v1216, %v1249
      %v1256 = vmul.f32 %v1217, %v1249
      %v1257 = vmul.f32 %v1218, %v1249
      %v1258 = vmul.f32 %v1219, %v1249
      %v1259 = vmul.f32 %v1220, %v1249
      %v1260 = vmul.f32 %v1221, %v1249
      %v1261 = vmul.f32 %v1222, %v1249
      %v1262 = vmul.f32 %v1223, %v1249
      %v1263 = vmul.f32 %v1224, %v1249
      %v1264 = vmul.f32 %v1225, %v1249
      %v1265 = vmul.f32 %v1226, %v1249
      %v1266 = vmul.f32 %v1227, %v1249
      %v1267 = vmul.f32 %v1228, %v1249
      %v1268 = vmul.f32 %v1229, %v1249
      %v1269 = vmul.f32 %v1230, %v1249
      %v1270 = vmul.f32 %v1231, %v1249
      %v1271 = vmul.f32 %v1232, %v1249
      %v1272 = vmul.f32 %v1233, %v1249
      %v1273 = vmul.f32 %v1234, %v1249
      %v1274 = vmul.f32 %v1235, %v1249
      %v1275 = vmul.f32 %v1236, %v1249
      %v1276 = vmul.f32 %v1237, %v1249
      %v1277 = vmul.f32 %v1238, %v1249
      %v1278 = vmul.f32 %v1239, %v1249
      %v1279 = vmul.f32 %v1240, %v1249
      %v1280 = vmul.f32 %v1241, %v1249
      %v1281 = vmul.f32 %v1242, %v1249
      %v1282 = vmul.f32 %v1243, %v1249
      %v1283 = vld [vmem:[%s675] sm:$0x1]
      %v1285 = vlaneseq
      %v1286 = vshrl.u32 %v1285, 7
      %v1287 = vsub.s32 0, %v1286
      %v1288 = vrot.slane %v1283, %v1287
      %v1290 = vadd.f32 %v1251, %v1288
      %v1291 = vadd.f32 %v1252, %v1288
      %v1292 = vadd.f32 %v1253, %v1288
      %v1293 = vadd.f32 %v1254, %v1288
      %v1294 = vadd.f32 %v1255, %v1288
      %v1295 = vadd.f32 %v1256, %v1288
      %v1296 = vadd.f32 %v1257, %v1288
      %v1297 = vadd.f32 %v1258, %v1288
      %v1298 = vadd.f32 %v1259, %v1288
      %v1299 = vadd.f32 %v1260, %v1288
      %v1300 = vadd.f32 %v1261, %v1288
      %v1301 = vadd.f32 %v1262, %v1288
      %v1302 = vadd.f32 %v1263, %v1288
      %v1303 = vadd.f32 %v1264, %v1288
      %v1304 = vadd.f32 %v1265, %v1288
      %v1305 = vadd.f32 %v1266, %v1288
      %v1306 = vadd.f32 %v1267, %v1288
      %v1307 = vadd.f32 %v1268, %v1288
      %v1308 = vadd.f32 %v1269, %v1288
      %v1309 = vadd.f32 %v1270, %v1288
      %v1310 = vadd.f32 %v1271, %v1288
      %v1311 = vadd.f32 %v1272, %v1288
      %v1312 = vadd.f32 %v1273, %v1288
      %v1313 = vadd.f32 %v1274, %v1288
      %v1314 = vadd.f32 %v1275, %v1288
      %v1315 = vadd.f32 %v1276, %v1288
      %v1316 = vadd.f32 %v1277, %v1288
      %v1317 = vadd.f32 %v1278, %v1288
      %v1318 = vadd.f32 %v1279, %v1288
      %v1319 = vadd.f32 %v1280, %v1288
      %v1320 = vadd.f32 %v1281, %v1288
      %v1321 = vadd.f32 %v1282, %v1288
      %v1322 = vpack.c.bf16 %v1291, %v1290
      %v1323 = vpack.c.bf16 %v1293, %v1292
      %v1324 = vpack.c.bf16 %v1295, %v1294
      %v1325 = vpack.c.bf16 %v1297, %v1296
      %v1326 = vpack.c.bf16 %v1299, %v1298
      %v1327 = vpack.c.bf16 %v1301, %v1300
      %v1328 = vpack.c.bf16 %v1303, %v1302
      %v1329 = vpack.c.bf16 %v1305, %v1304
      %v1330 = vpack.c.bf16 %v1307, %v1306
      %v1331 = vpack.c.bf16 %v1309, %v1308
      %v1332 = vpack.c.bf16 %v1311, %v1310
      %v1333 = vpack.c.bf16 %v1313, %v1312
      %v1334 = vpack.c.bf16 %v1315, %v1314
      %v1335 = vpack.c.bf16 %v1317, %v1316
      %v1336 = vpack.c.bf16 %v1319, %v1318
      %v1337 = vpack.c.bf16 %v1321, %v1320
      %v1338 = vld [vmem:[%s679] sm:$0x3]
      %v1339 = vld [vmem:[%s682] sm:$0x1]
      %v1341 = vlaneseq
      %v1342 = vshrl.u32 %v1341, 7
      %v1343 = vsub.s32 0, %v1342
      %v1344 = vrot.slane %v1339, %v1343
      %v1347 = vsel %vm826, %v1322, 0
      %v1350 = vsel %vm826, %v1323, 0
      %v1353 = vsel %vm826, %v1324, 0
      %v1356 = vsel %vm826, %v1325, 0
      %v1359 = vsel %vm826, %v1326, 0
      %v1362 = vsel %vm826, %v1327, 0
      %v1365 = vsel %vm826, %v1328, 0
      %v1368 = vsel %vm826, %v1329, 0
      %v1371 = vsel %vm826, %v1330, 0
      %v1374 = vsel %vm826, %v1331, 0
      %v1377 = vsel %vm826, %v1332, 0
      %v1380 = vsel %vm826, %v1333, 0
      %v1383 = vsel %vm826, %v1334, 0
      %v1386 = vsel %vm826, %v1335, 0
      %v1389 = vsel %vm826, %v1336, 0
      %v1392 = vsel %vm826, %v1337, 0
      %vm1394 = vcmask 1041408
      %v1396 = vsel %vm1394, %v1338, 0
      %1398 = vmatprep.subr.bf16.mxu0 0
      %1399 = vmatpush1.bf16.msra.mxu0 %v1396
      %1400 = vmatprep.subr.bf16.mxu0 0
      %1401 = vmatpush1.bf16.msra.mxu0 0
      %1402 = vmatprep.subr.bf16.mxu0 0
      %1403 = vmatpush1.bf16.msra.mxu0 0
      %1404 = vmatprep.subr.bf16.mxu0 0
      %1405 = vmatpush1.bf16.msra.mxu0 0
      %1406 = vmatprep.subr.bf16.mxu0 0
      %1407 = vmatpush1.bf16.msra.mxu0 0
      %1408 = vmatprep.subr.bf16.mxu0 0
      %1409 = vmatpush1.bf16.msra.mxu0 0
      %1410 = vmatprep.subr.bf16.mxu0 0
      %1411 = vmatpush1.bf16.msra.mxu0 0
      %1412 = vmatprep.subr.bf16.mxu0 0
      %1413 = vmatpush1.bf16.msra.mxu0 0
      %1414 = vmatprep.subr.bf16.mxu0 0
      %1415 = vmatpush1.bf16.msra.mxu0 0
      %1416 = vmatprep.subr.bf16.mxu0 0
      %1417 = vmatpush1.bf16.msra.mxu0 0
      %1418 = vmatprep.subr.bf16.mxu0 0
      %1419 = vmatpush1.bf16.msra.mxu0 0
      %1420 = vmatprep.subr.bf16.mxu0 0
      %1421 = vmatpush1.bf16.msra.mxu0 0
      %1422 = vmatprep.subr.bf16.mxu0 0
      %1423 = vmatpush1.bf16.msra.mxu0 0
      %1424 = vmatprep.subr.bf16.mxu0 0
      %1425 = vmatpush1.bf16.msra.mxu0 0
      %1426 = vmatprep.subr.bf16.mxu0 0
      %1427 = vmatpush1.bf16.msra.mxu0 0
      %1428 = vmatprep.subr.bf16.mxu0 0
      %1429 = vmatpush1.bf16.msra.mxu0 0
      %1430 = vmatprep.mubr.bf16.mxu0 0
      %1431 = vmatmul.mubr.bf16.gmra.mrb[0].mxu0 %v1347
      %v1432 = vpop.f32.mrb[0].mxu0
      %v1433 = vadd.f32 %v1344, %v1432
      %v1434 = vpop.f32.mrb[0].mxu0
      %v1435 = vpop.f32.mrb[0].mxu0
      %v1436 = vadd.f32 %v1344, %v1435
      %v1437 = vpop.f32.mrb[0].mxu0
      %1438 = vmatprep.mubr.bf16.mxu0 0
      %1439 = vmatmul.mubr.bf16.gmra.mrb[0].mxu0 %v1350
      %v1440 = vpop.f32.mrb[0].mxu0
      %v1441 = vadd.f32 %v1344, %v1440
      %v1442 = vpop.f32.mrb[0].mxu0
      %v1443 = vpop.f32.mrb[0].mxu0
      %v1444 = vadd.f32 %v1344, %v1443
      %v1445 = vpop.f32.mrb[0].mxu0
      %1446 = vmatprep.mubr.bf16.mxu0 0
      %1447 = vmatmul.mubr.bf16.gmra.mrb[0].mxu0 %v1353
      %v1448 = vpop.f32.mrb[0].mxu0
      %v1449 = vadd.f32 %v1344, %v1448
      %v1450 = vpop.f32.mrb[0].mxu0
      %v1451 = vpop.f32.mrb[0].mxu0
      %v1452 = vadd.f32 %v1344, %v1451
      %v1453 = vpop.f32.mrb[0].mxu0
      %1454 = vmatprep.mubr.bf16.mxu0 0
      %1455 = vmatmul.mubr.bf16.gmra.mrb[0].mxu0 %v1356
      %v1456 = vpop.f32.mrb[0].mxu0
      %v1457 = vadd.f32 %v1344, %v1456
      %v1458 = vpop.f32.mrb[0].mxu0
      %v1459 = vpop.f32.mrb[0].mxu0
      %v1460 = vadd.f32 %v1344, %v1459
      %v1461 = vpop.f32.mrb[0].mxu0
      %1462 = vmatprep.mubr.bf16.mxu0 0
      %1463 = vmatmul.mubr.bf16.gmra.mrb[0].mxu0 %v1359
      %v1464 = vpop.f32.mrb[0].mxu0
      %v1465 = vadd.f32 %v1344, %v1464
      %v1466 = vpop.f32.mrb[0].mxu0
      %v1467 = vpop.f32.mrb[0].mxu0
      %v1468 = vadd.f32 %v1344, %v1467
      %v1469 = vpop.f32.mrb[0].mxu0
      %1470 = vmatprep.mubr.bf16.mxu0 0
      %1471 = vmatmul.mubr.bf16.gmra.mrb[0].mxu0 %v1362
      %v1472 = vpop.f32.mrb[0].mxu0
      %v1473 = vadd.f32 %v1344, %v1472
      %v1474 = vpop.f32.mrb[0].mxu0
      %v1475 = vpop.f32.mrb[0].mxu0
      %v1476 = vadd.f32 %v1344, %v1475
      %v1477 = vpop.f32.mrb[0].mxu0
      %1478 = vmatprep.mubr.bf16.mxu0 0
      %1479 = vmatmul.mubr.bf16.gmra.mrb[0].mxu0 %v1365
      %v1480 = vpop.f32.mrb[0].mxu0
      %v1481 = vadd.f32 %v1344, %v1480
      %v1482 = vpop.f32.mrb[0].mxu0
      %v1483 = vpop.f32.mrb[0].mxu0
      %v1484 = vadd.f32 %v1344, %v1483
      %v1485 = vpop.f32.mrb[0].mxu0
      %1486 = vmatprep.mubr.bf16.mxu0 0
      %1487 = vmatmul.mubr.bf16.gmra.mrb[0].mxu0 %v1368
      %v1488 = vpop.f32.mrb[0].mxu0
      %v1489 = vadd.f32 %v1344, %v1488
      %v1490 = vpop.f32.mrb[0].mxu0
      %v1491 = vpop.f32.mrb[0].mxu0
      %v1492 = vadd.f32 %v1344, %v1491
      %v1493 = vpop.f32.mrb[0].mxu0
      %1494 = vmatprep.mubr.bf16.mxu0 0
      %1495 = vmatmul.mubr.bf16.gmra.mrb[0].mxu0 %v1371
      %v1496 = vpop.f32.mrb[0].mxu0
      %v1497 = vadd.f32 %v1344, %v1496
      %v1498 = vpop.f32.mrb[0].mxu0
      %v1499 = vpop.f32.mrb[0].mxu0
      %v1500 = vadd.f32 %v1344, %v1499
      %v1501 = vpop.f32.mrb[0].mxu0
      %1502 = vmatprep.mubr.bf16.mxu0 0
      %1503 = vmatmul.mubr.bf16.gmra.mrb[0].mxu0 %v1374
      %v1504 = vpop.f32.mrb[0].mxu0
      %v1505 = vadd.f32 %v1344, %v1504
      %v1506 = vpop.f32.mrb[0].mxu0
      %v1507 = vpop.f32.mrb[0].mxu0
      %v1508 = vadd.f32 %v1344, %v1507
      %v1509 = vpop.f32.mrb[0].mxu0
      %1510 = vmatprep.mubr.bf16.mxu0 0
      %1511 = vmatmul.mubr.bf16.gmra.mrb[0].mxu0 %v1377
      %v1512 = vpop.f32.mrb[0].mxu0
      %v1513 = vadd.f32 %v1344, %v1512
      %v1514 = vpop.f32.mrb[0].mxu0
      %v1515 = vpop.f32.mrb[0].mxu0
      %v1516 = vadd.f32 %v1344, %v1515
      %v1517 = vpop.f32.mrb[0].mxu0
      %1518 = vmatprep.mubr.bf16.mxu0 0
      %1519 = vmatmul.mubr.bf16.gmra.mrb[0].mxu0 %v1380
      %v1520 = vpop.f32.mrb[0].mxu0
      %v1521 = vadd.f32 %v1344, %v1520
      %v1522 = vpop.f32.mrb[0].mxu0
      %v1523 = vpop.f32.mrb[0].mxu0
      %v1524 = vadd.f32 %v1344, %v1523
      %v1525 = vpop.f32.mrb[0].mxu0
      %1526 = vmatprep.mubr.bf16.mxu0 0
      %1527 = vmatmul.mubr.bf16.gmra.mrb[0].mxu0 %v1383
      %v1528 = vpop.f32.mrb[0].mxu0
      %v1529 = vadd.f32 %v1344, %v1528
      %v1530 = vpop.f32.mrb[0].mxu0
      %v1531 = vpop.f32.mrb[0].mxu0
      %v1532 = vadd.f32 %v1344, %v1531
      %v1533 = vpop.f32.mrb[0].mxu0
      %1534 = vmatprep.mubr.bf16.mxu0 0
      %1535 = vmatmul.mubr.bf16.gmra.mrb[0].mxu0 %v1386
      %v1536 = vpop.f32.mrb[0].mxu0
      %v1537 = vadd.f32 %v1344, %v1536
      %v1538 = vpop.f32.mrb[0].mxu0
      %v1539 = vpop.f32.mrb[0].mxu0
      %v1540 = vadd.f32 %v1344, %v1539
      %v1541 = vpop.f32.mrb[0].mxu0
      %1542 = vmatprep.mubr.bf16.mxu0 0
      %1543 = vmatmul.mubr.bf16.gmra.mrb[0].mxu0 %v1389
      %v1544 = vpop.f32.mrb[0].mxu0
      %v1545 = vadd.f32 %v1344, %v1544
      %v1546 = vpop.f32.mrb[0].mxu0
      %v1547 = vpop.f32.mrb[0].mxu0
      %v1548 = vadd.f32 %v1344, %v1547
      %v1549 = vpop.f32.mrb[0].mxu0
      %1550 = vmatprep.mubr.bf16.mxu0 0
      %1551 = vmatmul.mubr.bf16.gmra.mrb[0].mxu0 %v1392
      %v1552 = vpop.f32.mrb[0].mxu0
      %v1553 = vadd.f32 %v1344, %v1552
      %v1554 = vpop.f32.mrb[0].mxu0
      %v1555 = vpop.f32.mrb[0].mxu0
      %v1556 = vadd.f32 %v1344, %v1555
      %v1557 = vpop.f32.mrb[0].mxu0
      %1558 = vdwg.mxu0
      %v1559 = vld [vmem:[%s687] sm:$0xff]
      %v1560 = vld [vmem:[%s687 + $0x8] sm:$0x1]
      %vm1592 = vcmask 1040384
      %v1593 = vrot.slane 0.0, 7
      %v1594 = vsel %vm1592, %v1593, %v1593
      %v1595 = vrot.slane %v1433, 7
      %v1596 = vrot.slane %v1436, 7
      %v1597 = vsel %vm1592, %v1595, %v1596
      %v1598 = vrot.slane %v1441, 7
      %v1599 = vrot.slane %v1444, 7
      %v1600 = vsel %vm1592, %v1598, %v1599
      %v1601 = vrot.slane %v1449, 7
      %v1602 = vrot.slane %v1452, 7
      %v1603 = vsel %vm1592, %v1601, %v1602
      %v1604 = vrot.slane %v1457, 7
      %v1605 = vrot.slane %v1460, 7
      %v1606 = vsel %vm1592, %v1604, %v1605
      %v1607 = vrot.slane %v1465, 7
      %v1608 = vrot.slane %v1468, 7
      %v1609 = vsel %vm1592, %v1607, %v1608
      %v1610 = vrot.slane %v1473, 7
      %v1611 = vrot.slane %v1476, 7
      %v1612 = vsel %vm1592, %v1610, %v1611
      %v1613 = vrot.slane %v1481, 7
      %v1614 = vrot.slane %v1484, 7
      %v1615 = vsel %vm1592, %v1613, %v1614
      %v1616 = vrot.slane %v1489, 7
      %v1617 = vrot.slane %v1492, 7
      %v1618 = vsel %vm1592, %v1616, %v1617
      %v1619 = vrot.slane %v1497, 7
      %v1620 = vrot.slane %v1500, 7
      %v1621 = vsel %vm1592, %v1619, %v1620
      %v1622 = vrot.slane %v1505, 7
      %v1623 = vrot.slane %v1508, 7
      %v1624 = vsel %vm1592, %v1622, %v1623
      %v1625 = vrot.slane %v1513, 7
      %v1626 = vrot.slane %v1516, 7
      %v1627 = vsel %vm1592, %v1625, %v1626
      %v1628 = vrot.slane %v1521, 7
      %v1629 = vrot.slane %v1524, 7
      %v1630 = vsel %vm1592, %v1628, %v1629
      %v1631 = vrot.slane %v1529, 7
      %v1632 = vrot.slane %v1532, 7
      %v1633 = vsel %vm1592, %v1631, %v1632
      %v1634 = vrot.slane %v1537, 7
      %v1635 = vrot.slane %v1540, 7
      %v1636 = vsel %vm1592, %v1634, %v1635
      %v1637 = vrot.slane %v1545, 7
      %v1638 = vrot.slane %v1548, 7
      %v1639 = vsel %vm1592, %v1637, %v1638
      %v1672 = vsel %vm1592, 0.0, %v1593
      %v1673 = vsel %vm1592, 0.0, %v1595
      %v1674 = vsel %vm1592, 0.0, %v1598
      %v1675 = vsel %vm1592, 0.0, %v1601
      %v1676 = vsel %vm1592, 0.0, %v1604
      %v1677 = vsel %vm1592, 0.0, %v1607
      %v1678 = vsel %vm1592, 0.0, %v1610
      %v1679 = vsel %vm1592, 0.0, %v1613
      %v1680 = vsel %vm1592, 0.0, %v1616
      %v1681 = vsel %vm1592, 0.0, %v1619
      %v1682 = vsel %vm1592, 0.0, %v1622
      %v1683 = vsel %vm1592, 0.0, %v1625
      %v1684 = vsel %vm1592, 0.0, %v1628
      %v1685 = vsel %vm1592, 0.0, %v1631
      %v1686 = vsel %vm1592, 0.0, %v1634
      %v1687 = vsel %vm1592, 0.0, %v1637
      %v1688 = vlaneseq
      %v1689 = vshrl.u32 %v1688, 7
      %v1690 = vsub.s32 0, %v1689
      %v1691 = vrot.slane %v1559, %v1690
      %v1692 = vmul.f32 %v1672, %v1691
      %v1693 = vmul.f32 %v1594, %v1691
      %v1694 = vmul.f32 %v1673, %v1691
      %v1695 = vmul.f32 %v1597, %v1691
      %v1696 = vmul.f32 %v1674, %v1691
      %v1697 = vmul.f32 %v1600, %v1691
      %v1698 = vmul.f32 %v1675, %v1691
      %v1699 = vmul.f32 %v1603, %v1691
      %v1700 = vmul.f32 %v1676, %v1691
      %v1701 = vmul.f32 %v1606, %v1691
      %v1702 = vmul.f32 %v1677, %v1691
      %v1703 = vmul.f32 %v1609, %v1691
      %v1704 = vmul.f32 %v1678, %v1691
      %v1705 = vmul.f32 %v1612, %v1691
      %v1706 = vmul.f32 %v1679, %v1691
      %v1707 = vmul.f32 %v1615, %v1691
      %v1708 = vmul.f32 %v1680, %v1691
      %v1709 = vmul.f32 %v1618, %v1691
      %v1710 = vmul.f32 %v1681, %v1691
      %v1711 = vmul.f32 %v1621, %v1691
      %v1712 = vmul.f32 %v1682, %v1691
      %v1713 = vmul.f32 %v1624, %v1691
      %v1714 = vmul.f32 %v1683, %v1691
      %v1715 = vmul.f32 %v1627, %v1691
      %v1716 = vmul.f32 %v1684, %v1691
      %v1717 = vmul.f32 %v1630, %v1691
      %v1718 = vmul.f32 %v1685, %v1691
      %v1719 = vmul.f32 %v1633, %v1691
      %v1720 = vmul.f32 %v1686, %v1691
      %v1721 = vmul.f32 %v1636, %v1691
      %v1722 = vmul.f32 %v1687, %v1691
      %v1723 = vmul.f32 %v1639, %v1691
      %v1724 = vadd.f32 %v1692, 0.0
      %v1725 = vadd.f32 %v1693, 0.0
      %v1726 = vadd.f32 %v1694, 0.0
      %v1727 = vadd.f32 %v1695, 0.0
      %v1728 = vadd.f32 %v1696, 0.0
      %v1729 = vadd.f32 %v1697, 0.0
      %v1730 = vadd.f32 %v1698, 0.0
      %v1731 = vadd.f32 %v1699, 0.0
      %v1732 = vadd.f32 %v1700, 0.0
      %v1733 = vadd.f32 %v1701, 0.0
      %v1734 = vadd.f32 %v1702, 0.0
      %v1735 = vadd.f32 %v1703, 0.0
      %v1736 = vadd.f32 %v1704, 0.0
      %v1737 = vadd.f32 %v1705, 0.0
      %v1738 = vadd.f32 %v1706, 0.0
      %v1739 = vadd.f32 %v1707, 0.0
      %v1740 = vadd.f32 %v1708, 0.0
      %v1741 = vadd.f32 %v1709, 0.0
      %v1742 = vadd.f32 %v1710, 0.0
      %v1743 = vadd.f32 %v1711, 0.0
      %v1744 = vadd.f32 %v1712, 0.0
      %v1745 = vadd.f32 %v1713, 0.0
      %v1746 = vadd.f32 %v1714, 0.0
      %v1747 = vadd.f32 %v1715, 0.0
      %v1748 = vadd.f32 %v1716, 0.0
      %v1749 = vadd.f32 %v1717, 0.0
      %v1750 = vadd.f32 %v1718, 0.0
      %v1751 = vadd.f32 %v1719, 0.0
      %v1752 = vadd.f32 %v1720, 0.0
      %v1753 = vadd.f32 %v1721, 0.0
      %v1754 = vadd.f32 %v1722, 0.0
      %v1755 = vadd.f32 %v1723, 0.0
      %v1756 = vlaneseq
      %v1757 = vshrl.u32 %v1756, 7
      %v1758 = vsub.s32 1, %v1757
      %v1759 = vrot.slane %v1559, %v1758
      %v1760 = vmul.f32 %v1759, 0.0
      %v1761 = vmul.f32 %v1433, %v1759
      %v1762 = vmul.f32 %v1436, %v1759
      %v1763 = vmul.f32 %v1441, %v1759
      %v1764 = vmul.f32 %v1444, %v1759
      %v1765 = vmul.f32 %v1449, %v1759
      %v1766 = vmul.f32 %v1452, %v1759
      %v1767 = vmul.f32 %v1457, %v1759
      %v1768 = vmul.f32 %v1460, %v1759
      %v1769 = vmul.f32 %v1465, %v1759
      %v1770 = vmul.f32 %v1468, %v1759
      %v1771 = vmul.f32 %v1473, %v1759
      %v1772 = vmul.f32 %v1476, %v1759
      %v1773 = vmul.f32 %v1481, %v1759
      %v1774 = vmul.f32 %v1484, %v1759
      %v1775 = vmul.f32 %v1489, %v1759
      %v1776 = vmul.f32 %v1492, %v1759
      %v1777 = vmul.f32 %v1497, %v1759
      %v1778 = vmul.f32 %v1500, %v1759
      %v1779 = vmul.f32 %v1505, %v1759
      %v1780 = vmul.f32 %v1508, %v1759
      %v1781 = vmul.f32 %v1513, %v1759
      %v1782 = vmul.f32 %v1516, %v1759
      %v1783 = vmul.f32 %v1521, %v1759
      %v1784 = vmul.f32 %v1524, %v1759
      %v1785 = vmul.f32 %v1529, %v1759
      %v1786 = vmul.f32 %v1532, %v1759
      %v1787 = vmul.f32 %v1537, %v1759
      %v1788 = vmul.f32 %v1540, %v1759
      %v1789 = vmul.f32 %v1545, %v1759
      %v1790 = vmul.f32 %v1548, %v1759
      %v1791 = vadd.f32 %v1724, %v1760
      %v1792 = vadd.f32 %v1725, %v1760
      %v1793 = vadd.f32 %v1726, %v1761
      %v1794 = vadd.f32 %v1727, %v1762
      %v1795 = vadd.f32 %v1728, %v1763
      %v1796 = vadd.f32 %v1729, %v1764
      %v1797 = vadd.f32 %v1730, %v1765
      %v1798 = vadd.f32 %v1731, %v1766
      %v1799 = vadd.f32 %v1732, %v1767
      %v1800 = vadd.f32 %v1733, %v1768
      %v1801 = vadd.f32 %v1734, %v1769
      %v1802 = vadd.f32 %v1735, %v1770
      %v1803 = vadd.f32 %v1736, %v1771
      %v1804 = vadd.f32 %v1737, %v1772
      %v1805 = vadd.f32 %v1738, %v1773
      %v1806 = vadd.f32 %v1739, %v1774
      %v1807 = vadd.f32 %v1740, %v1775
      %v1808 = vadd.f32 %v1741, %v1776
      %v1809 = vadd.f32 %v1742, %v1777
      %v1810 = vadd.f32 %v1743, %v1778
      %v1811 = vadd.f32 %v1744, %v1779
      %v1812 = vadd.f32 %v1745, %v1780
      %v1813 = vadd.f32 %v1746, %v1781
      %v1814 = vadd.f32 %v1747, %v1782
      %v1815 = vadd.f32 %v1748, %v1783
      %v1816 = vadd.f32 %v1749, %v1784
      %v1817 = vadd.f32 %v1750, %v1785
      %v1818 = vadd.f32 %v1751, %v1786
      %v1819 = vadd.f32 %v1752, %v1787
      %v1820 = vadd.f32 %v1753, %v1788
      %v1821 = vadd.f32 %v1754, %v1789
      %v1822 = vadd.f32 %v1755, %v1790
      %vm1823 = vcmask 1046528
      %v1824 = vrot.slane 0.0, 1
      %v1825 = vsel %vm1823, %v1824, %v1824
      %v1826 = vrot.slane %v1433, 1
      %v1827 = vrot.slane %v1436, 1
      %v1828 = vsel %vm1823, %v1826, %v1827
      %v1829 = vrot.slane %v1441, 1
      %v1830 = vrot.slane %v1444, 1
      %v1831 = vsel %vm1823, %v1829, %v1830
      %v1832 = vrot.slane %v1449, 1
      %v1833 = vrot.slane %v1452, 1
      %v1834 = vsel %vm1823, %v1832, %v1833
      %v1835 = vrot.slane %v1457, 1
      %v1836 = vrot.slane %v1460, 1
      %v1837 = vsel %vm1823, %v1835, %v1836
      %v1838 = vrot.slane %v1465, 1
      %v1839 = vrot.slane %v1468, 1
      %v1840 = vsel %vm1823, %v1838, %v1839
      %v1841 = vrot.slane %v1473, 1
      %v1842 = vrot.slane %v1476, 1
      %v1843 = vsel %vm1823, %v1841, %v1842
      %v1844 = vrot.slane %v1481, 1
      %v1845 = vrot.slane %v1484, 1
      %v1846 = vsel %vm1823, %v1844, %v1845
      %v1847 = vrot.slane %v1489, 1
      %v1848 = vrot.slane %v1492, 1
      %v1849 = vsel %vm1823, %v1847, %v1848
      %v1850 = vrot.slane %v1497, 1
      %v1851 = vrot.slane %v1500, 1
      %v1852 = vsel %vm1823, %v1850, %v1851
      %v1853 = vrot.slane %v1505, 1
      %v1854 = vrot.slane %v1508, 1
      %v1855 = vsel %vm1823, %v1853, %v1854
      %v1856 = vrot.slane %v1513, 1
      %v1857 = vrot.slane %v1516, 1
      %v1858 = vsel %vm1823, %v1856, %v1857
      %v1859 = vrot.slane %v1521, 1
      %v1860 = vrot.slane %v1524, 1
      %v1861 = vsel %vm1823, %v1859, %v1860
      %v1862 = vrot.slane %v1529, 1
      %v1863 = vrot.slane %v1532, 1
      %v1864 = vsel %vm1823, %v1862, %v1863
      %v1865 = vrot.slane %v1537, 1
      %v1866 = vrot.slane %v1540, 1
      %v1867 = vsel %vm1823, %v1865, %v1866
      %v1868 = vrot.slane %v1545, 1
      %v1869 = vrot.slane %v1548, 1
      %v1870 = vsel %vm1823, %v1868, %v1869
      %v1903 = vsel %vm1823, %v1824, 0.0
      %v1904 = vsel %vm1823, %v1827, 0.0
      %v1905 = vsel %vm1823, %v1830, 0.0
      %v1906 = vsel %vm1823, %v1833, 0.0
      %v1907 = vsel %vm1823, %v1836, 0.0
      %v1908 = vsel %vm1823, %v1839, 0.0
      %v1909 = vsel %vm1823, %v1842, 0.0
      %v1910 = vsel %vm1823, %v1845, 0.0
      %v1911 = vsel %vm1823, %v1848, 0.0
      %v1912 = vsel %vm1823, %v1851, 0.0
      %v1913 = vsel %vm1823, %v1854, 0.0
      %v1914 = vsel %vm1823, %v1857, 0.0
      %v1915 = vsel %vm1823, %v1860, 0.0
      %v1916 = vsel %vm1823, %v1863, 0.0
      %v1917 = vsel %vm1823, %v1866, 0.0
      %v1918 = vsel %vm1823, %v1869, 0.0
      %v1919 = vlaneseq
      %v1920 = vshrl.u32 %v1919, 7
      %v1921 = vsub.s32 2, %v1920
      %v1922 = vrot.slane %v1559, %v1921
      %v1923 = vmul.f32 %v1825, %v1922
      %v1924 = vmul.f32 %v1903, %v1922
      %v1925 = vmul.f32 %v1828, %v1922
      %v1926 = vmul.f32 %v1904, %v1922
      %v1927 = vmul.f32 %v1831, %v1922
      %v1928 = vmul.f32 %v1905, %v1922
      %v1929 = vmul.f32 %v1834, %v1922
      %v1930 = vmul.f32 %v1906, %v1922
      %v1931 = vmul.f32 %v1837, %v1922
      %v1932 = vmul.f32 %v1907, %v1922
      %v1933 = vmul.f32 %v1840, %v1922
      %v1934 = vmul.f32 %v1908, %v1922
      %v1935 = vmul.f32 %v1843, %v1922
      %v1936 = vmul.f32 %v1909, %v1922
      %v1937 = vmul.f32 %v1846, %v1922
      %v1938 = vmul.f32 %v1910, %v1922
      %v1939 = vmul.f32 %v1849, %v1922
      %v1940 = vmul.f32 %v1911, %v1922
      %v1941 = vmul.f32 %v1852, %v1922
      %v1942 = vmul.f32 %v1912, %v1922
      %v1943 = vmul.f32 %v1855, %v1922
      %v1944 = vmul.f32 %v1913, %v1922
      %v1945 = vmul.f32 %v1858, %v1922
      %v1946 = vmul.f32 %v1914, %v1922
      %v1947 = vmul.f32 %v1861, %v1922
      %v1948 = vmul.f32 %v1915, %v1922
      %v1949 = vmul.f32 %v1864, %v1922
      %v1950 = vmul.f32 %v1916, %v1922
      %v1951 = vmul.f32 %v1867, %v1922
      %v1952 = vmul.f32 %v1917, %v1922
      %v1953 = vmul.f32 %v1870, %v1922
      %v1954 = vmul.f32 %v1918, %v1922
      %v1955 = vadd.f32 %v1791, %v1923
      %v1956 = vadd.f32 %v1792, %v1924
      %v1957 = vadd.f32 %v1793, %v1925
      %v1958 = vadd.f32 %v1794, %v1926
      %v1959 = vadd.f32 %v1795, %v1927
      %v1960 = vadd.f32 %v1796, %v1928
      %v1961 = vadd.f32 %v1797, %v1929
      %v1962 = vadd.f32 %v1798, %v1930
      %v1963 = vadd.f32 %v1799, %v1931
      %v1964 = vadd.f32 %v1800, %v1932
      %v1965 = vadd.f32 %v1801, %v1933
      %v1966 = vadd.f32 %v1802, %v1934
      %v1967 = vadd.f32 %v1803, %v1935
      %v1968 = vadd.f32 %v1804, %v1936
      %v1969 = vadd.f32 %v1805, %v1937
      %v1970 = vadd.f32 %v1806, %v1938
      %v1971 = vadd.f32 %v1807, %v1939
      %v1972 = vadd.f32 %v1808, %v1940
      %v1973 = vadd.f32 %v1809, %v1941
      %v1974 = vadd.f32 %v1810, %v1942
      %v1975 = vadd.f32 %v1811, %v1943
      %v1976 = vadd.f32 %v1812, %v1944
      %v1977 = vadd.f32 %v1813, %v1945
      %v1978 = vadd.f32 %v1814, %v1946
      %v1979 = vadd.f32 %v1815, %v1947
      %v1980 = vadd.f32 %v1816, %v1948
      %v1981 = vadd.f32 %v1817, %v1949
      %v1982 = vadd.f32 %v1818, %v1950
      %v1983 = vadd.f32 %v1819, %v1951
      %v1984 = vadd.f32 %v1820, %v1952
      %v1985 = vadd.f32 %v1821, %v1953
      %v1986 = vadd.f32 %v1822, %v1954
      %v1989 = vrot.slane %v1553, 7
      %v1990 = vrot.slane %v1556, 7
      %v1991 = vsel %vm1592, %v1989, %v1990
      %v1994 = vsel %vm1592, 0.0, %v1989
      %v1995 = vlaneseq
      %v1996 = vshrl.u32 %v1995, 7
      %v1997 = vsub.s32 3, %v1996
      %v1998 = vrot.slane %v1559, %v1997
      %v1999 = vmul.f32 %v1673, %v1998
      %v2000 = vmul.f32 %v1597, %v1998
      %v2001 = vmul.f32 %v1674, %v1998
      %v2002 = vmul.f32 %v1600, %v1998
      %v2003 = vmul.f32 %v1675, %v1998
      %v2004 = vmul.f32 %v1603, %v1998
      %v2005 = vmul.f32 %v1676, %v1998
      %v2006 = vmul.f32 %v1606, %v1998
      %v2007 = vmul.f32 %v1677, %v1998
      %v2008 = vmul.f32 %v1609, %v1998
      %v2009 = vmul.f32 %v1678, %v1998
      %v2010 = vmul.f32 %v1612, %v1998
      %v2011 = vmul.f32 %v1679, %v1998
      %v2012 = vmul.f32 %v1615, %v1998
      %v2013 = vmul.f32 %v1680, %v1998
      %v2014 = vmul.f32 %v1618, %v1998
      %v2015 = vmul.f32 %v1681, %v1998
      %v2016 = vmul.f32 %v1621, %v1998
      %v2017 = vmul.f32 %v1682, %v1998
      %v2018 = vmul.f32 %v1624, %v1998
      %v2019 = vmul.f32 %v1683, %v1998
      %v2020 = vmul.f32 %v1627, %v1998
      %v2021 = vmul.f32 %v1684, %v1998
      %v2022 = vmul.f32 %v1630, %v1998
      %v2023 = vmul.f32 %v1685, %v1998
      %v2024 = vmul.f32 %v1633, %v1998
      %v2025 = vmul.f32 %v1686, %v1998
      %v2026 = vmul.f32 %v1636, %v1998
      %v2027 = vmul.f32 %v1687, %v1998
      %v2028 = vmul.f32 %v1639, %v1998
      %v2029 = vmul.f32 %v1994, %v1998
      %v2030 = vmul.f32 %v1991, %v1998
      %v2031 = vadd.f32 %v1955, %v1999
      %v2032 = vadd.f32 %v1956, %v2000
      %v2033 = vadd.f32 %v1957, %v2001
      %v2034 = vadd.f32 %v1958, %v2002
      %v2035 = vadd.f32 %v1959, %v2003
      %v2036 = vadd.f32 %v1960, %v2004
      %v2037 = vadd.f32 %v1961, %v2005
      %v2038 = vadd.f32 %v1962, %v2006
      %v2039 = vadd.f32 %v1963, %v2007
      %v2040 = vadd.f32 %v1964, %v2008
      %v2041 = vadd.f32 %v1965, %v2009
      %v2042 = vadd.f32 %v1966, %v2010
      %v2043 = vadd.f32 %v1967, %v2011
      %v2044 = vadd.f32 %v1968, %v2012
      %v2045 = vadd.f32 %v1969, %v2013
      %v2046 = vadd.f32 %v1970, %v2014
      %v2047 = vadd.f32 %v1971, %v2015
      %v2048 = vadd.f32 %v1972, %v2016
      %v2049 = vadd.f32 %v1973, %v2017
      %v2050 = vadd.f32 %v1974, %v2018
      %v2051 = vadd.f32 %v1975, %v2019
      %v2052 = vadd.f32 %v1976, %v2020
      %v2053 = vadd.f32 %v1977, %v2021
      %v2054 = vadd.f32 %v1978, %v2022
      %v2055 = vadd.f32 %v1979, %v2023
      %v2056 = vadd.f32 %v1980, %v2024
      %v2057 = vadd.f32 %v1981, %v2025
      %v2058 = vadd.f32 %v1982, %v2026
      %v2059 = vadd.f32 %v1983, %v2027
      %v2060 = vadd.f32 %v1984, %v2028
      %v2061 = vadd.f32 %v1985, %v2029
      %v2062 = vadd.f32 %v1986, %v2030
      %v2063 = vlaneseq
      %v2064 = vshrl.u32 %v2063, 7
      %v2065 = vsub.s32 4, %v2064
      %v2066 = vrot.slane %v1559, %v2065
      %v2067 = vmul.f32 %v1433, %v2066
      %v2068 = vmul.f32 %v1436, %v2066
      %v2069 = vmul.f32 %v1441, %v2066
      %v2070 = vmul.f32 %v1444, %v2066
      %v2071 = vmul.f32 %v1449, %v2066
      %v2072 = vmul.f32 %v1452, %v2066
      %v2073 = vmul.f32 %v1457, %v2066
      %v2074 = vmul.f32 %v1460, %v2066
      %v2075 = vmul.f32 %v1465, %v2066
      %v2076 = vmul.f32 %v1468, %v2066
      %v2077 = vmul.f32 %v1473, %v2066
      %v2078 = vmul.f32 %v1476, %v2066
      %v2079 = vmul.f32 %v1481, %v2066
      %v2080 = vmul.f32 %v1484, %v2066
      %v2081 = vmul.f32 %v1489, %v2066
      %v2082 = vmul.f32 %v1492, %v2066
      %v2083 = vmul.f32 %v1497, %v2066
      %v2084 = vmul.f32 %v1500, %v2066
      %v2085 = vmul.f32 %v1505, %v2066
      %v2086 = vmul.f32 %v1508, %v2066
      %v2087 = vmul.f32 %v1513, %v2066
      %v2088 = vmul.f32 %v1516, %v2066
      %v2089 = vmul.f32 %v1521, %v2066
      %v2090 = vmul.f32 %v1524, %v2066
      %v2091 = vmul.f32 %v1529, %v2066
      %v2092 = vmul.f32 %v1532, %v2066
      %v2093 = vmul.f32 %v1537, %v2066
      %v2094 = vmul.f32 %v1540, %v2066
      %v2095 = vmul.f32 %v1545, %v2066
      %v2096 = vmul.f32 %v1548, %v2066
      %v2097 = vmul.f32 %v1553, %v2066
      %v2098 = vmul.f32 %v1556, %v2066
      %v2099 = vadd.f32 %v2031, %v2067
      %v2100 = vadd.f32 %v2032, %v2068
      %v2101 = vadd.f32 %v2033, %v2069
      %v2102 = vadd.f32 %v2034, %v2070
      %v2103 = vadd.f32 %v2035, %v2071
      %v2104 = vadd.f32 %v2036, %v2072
      %v2105 = vadd.f32 %v2037, %v2073
      %v2106 = vadd.f32 %v2038, %v2074
      %v2107 = vadd.f32 %v2039, %v2075
      %v2108 = vadd.f32 %v2040, %v2076
      %v2109 = vadd.f32 %v2041, %v2077
      %v2110 = vadd.f32 %v2042, %v2078
      %v2111 = vadd.f32 %v2043, %v2079
      %v2112 = vadd.f32 %v2044, %v2080
      %v2113 = vadd.f32 %v2045, %v2081
      %v2114 = vadd.f32 %v2046, %v2082
      %v2115 = vadd.f32 %v2047, %v2083
      %v2116 = vadd.f32 %v2048, %v2084
      %v2117 = vadd.f32 %v2049, %v2085
      %v2118 = vadd.f32 %v2050, %v2086
      %v2119 = vadd.f32 %v2051, %v2087
      %v2120 = vadd.f32 %v2052, %v2088
      %v2121 = vadd.f32 %v2053, %v2089
      %v2122 = vadd.f32 %v2054, %v2090
      %v2123 = vadd.f32 %v2055, %v2091
      %v2124 = vadd.f32 %v2056, %v2092
      %v2125 = vadd.f32 %v2057, %v2093
      %v2126 = vadd.f32 %v2058, %v2094
      %v2127 = vadd.f32 %v2059, %v2095
      %v2128 = vadd.f32 %v2060, %v2096
      %v2129 = vadd.f32 %v2061, %v2097
      %v2130 = vadd.f32 %v2062, %v2098
      %v2131 = vrot.slane %v1553, 1
      %v2132 = vrot.slane %v1556, 1
      %v2133 = vsel %vm1823, %v2131, %v2132
      %v2136 = vsel %vm1823, %v2132, 0.0
      %v2137 = vlaneseq
      %v2138 = vshrl.u32 %v2137, 7
      %v2139 = vsub.s32 5, %v2138
      %v2140 = vrot.slane %v1559, %v2139
      %v2141 = vmul.f32 %v1828, %v2140
      %v2142 = vmul.f32 %v1904, %v2140
      %v2143 = vmul.f32 %v1831, %v2140
      %v2144 = vmul.f32 %v1905, %v2140
      %v2145 = vmul.f32 %v1834, %v2140
      %v2146 = vmul.f32 %v1906, %v2140
      %v2147 = vmul.f32 %v1837, %v2140
      %v2148 = vmul.f32 %v1907, %v2140
      %v2149 = vmul.f32 %v1840, %v2140
      %v2150 = vmul.f32 %v1908, %v2140
      %v2151 = vmul.f32 %v1843, %v2140
      %v2152 = vmul.f32 %v1909, %v2140
      %v2153 = vmul.f32 %v1846, %v2140
      %v2154 = vmul.f32 %v1910, %v2140
      %v2155 = vmul.f32 %v1849, %v2140
      %v2156 = vmul.f32 %v1911, %v2140
      %v2157 = vmul.f32 %v1852, %v2140
      %v2158 = vmul.f32 %v1912, %v2140
      %v2159 = vmul.f32 %v1855, %v2140
      %v2160 = vmul.f32 %v1913, %v2140
      %v2161 = vmul.f32 %v1858, %v2140
      %v2162 = vmul.f32 %v1914, %v2140
      %v2163 = vmul.f32 %v1861, %v2140
      %v2164 = vmul.f32 %v1915, %v2140
      %v2165 = vmul.f32 %v1864, %v2140
      %v2166 = vmul.f32 %v1916, %v2140
      %v2167 = vmul.f32 %v1867, %v2140
      %v2168 = vmul.f32 %v1917, %v2140
      %v2169 = vmul.f32 %v1870, %v2140
      %v2170 = vmul.f32 %v1918, %v2140
      %v2171 = vmul.f32 %v2133, %v2140
      %v2172 = vmul.f32 %v2136, %v2140
      %v2173 = vadd.f32 %v2099, %v2141
      %v2174 = vadd.f32 %v2100, %v2142
      %v2175 = vadd.f32 %v2101, %v2143
      %v2176 = vadd.f32 %v2102, %v2144
      %v2177 = vadd.f32 %v2103, %v2145
      %v2178 = vadd.f32 %v2104, %v2146
      %v2179 = vadd.f32 %v2105, %v2147
      %v2180 = vadd.f32 %v2106, %v2148
      %v2181 = vadd.f32 %v2107, %v2149
      %v2182 = vadd.f32 %v2108, %v2150
      %v2183 = vadd.f32 %v2109, %v2151
      %v2184 = vadd.f32 %v2110, %v2152
      %v2185 = vadd.f32 %v2111, %v2153
      %v2186 = vadd.f32 %v2112, %v2154
      %v2187 = vadd.f32 %v2113, %v2155
      %v2188 = vadd.f32 %v2114, %v2156
      %v2189 = vadd.f32 %v2115, %v2157
      %v2190 = vadd.f32 %v2116, %v2158
      %v2191 = vadd.f32 %v2117, %v2159
      %v2192 = vadd.f32 %v2118, %v2160
      %v2193 = vadd.f32 %v2119, %v2161
      %v2194 = vadd.f32 %v2120, %v2162
      %v2195 = vadd.f32 %v2121, %v2163
      %v2196 = vadd.f32 %v2122, %v2164
      %v2197 = vadd.f32 %v2123, %v2165
      %v2198 = vadd.f32 %v2124, %v2166
      %v2199 = vadd.f32 %v2125, %v2167
      %v2200 = vadd.f32 %v2126, %v2168
      %v2201 = vadd.f32 %v2127, %v2169
      %v2202 = vadd.f32 %v2128, %v2170
      %v2203 = vadd.f32 %v2129, %v2171
      %v2204 = vadd.f32 %v2130, %v2172
      %v2205 = vlaneseq
      %v2206 = vshrl.u32 %v2205, 7
      %v2207 = vsub.s32 6, %v2206
      %v2208 = vrot.slane %v1559, %v2207
      %v2209 = vmul.f32 %v1674, %v2208
      %v2210 = vmul.f32 %v1600, %v2208
      %v2211 = vmul.f32 %v1675, %v2208
      %v2212 = vmul.f32 %v1603, %v2208
      %v2213 = vmul.f32 %v1676, %v2208
      %v2214 = vmul.f32 %v1606, %v2208
      %v2215 = vmul.f32 %v1677, %v2208
      %v2216 = vmul.f32 %v1609, %v2208
      %v2217 = vmul.f32 %v1678, %v2208
      %v2218 = vmul.f32 %v1612, %v2208
      %v2219 = vmul.f32 %v1679, %v2208
      %v2220 = vmul.f32 %v1615, %v2208
      %v2221 = vmul.f32 %v1680, %v2208
      %v2222 = vmul.f32 %v1618, %v2208
      %v2223 = vmul.f32 %v1681, %v2208
      %v2224 = vmul.f32 %v1621, %v2208
      %v2225 = vmul.f32 %v1682, %v2208
      %v2226 = vmul.f32 %v1624, %v2208
      %v2227 = vmul.f32 %v1683, %v2208
      %v2228 = vmul.f32 %v1627, %v2208
      %v2229 = vmul.f32 %v1684, %v2208
      %v2230 = vmul.f32 %v1630, %v2208
      %v2231 = vmul.f32 %v1685, %v2208
      %v2232 = vmul.f32 %v1633, %v2208
      %v2233 = vmul.f32 %v1686, %v2208
      %v2234 = vmul.f32 %v1636, %v2208
      %v2235 = vmul.f32 %v1687, %v2208
      %v2236 = vmul.f32 %v1639, %v2208
      %v2237 = vmul.f32 %v1994, %v2208
      %v2238 = vmul.f32 %v1991, %v2208
      %v2239 = vmul.f32 %v1672, %v2208
      %v2240 = vmul.f32 %v1594, %v2208
      %v2241 = vadd.f32 %v2173, %v2209
      %v2242 = vadd.f32 %v2174, %v2210
      %v2243 = vadd.f32 %v2175, %v2211
      %v2244 = vadd.f32 %v2176, %v2212
      %v2245 = vadd.f32 %v2177, %v2213
      %v2246 = vadd.f32 %v2178, %v2214
      %v2247 = vadd.f32 %v2179, %v2215
      %v2248 = vadd.f32 %v2180, %v2216
      %v2249 = vadd.f32 %v2181, %v2217
      %v2250 = vadd.f32 %v2182, %v2218
      %v2251 = vadd.f32 %v2183, %v2219
      %v2252 = vadd.f32 %v2184, %v2220
      %v2253 = vadd.f32 %v2185, %v2221
      %v2254 = vadd.f32 %v2186, %v2222
      %v2255 = vadd.f32 %v2187, %v2223
      %v2256 = vadd.f32 %v2188, %v2224
      %v2257 = vadd.f32 %v2189, %v2225
      %v2258 = vadd.f32 %v2190, %v2226
      %v2259 = vadd.f32 %v2191, %v2227
      %v2260 = vadd.f32 %v2192, %v2228
      %v2261 = vadd.f32 %v2193, %v2229
      %v2262 = vadd.f32 %v2194, %v2230
      %v2263 = vadd.f32 %v2195, %v2231
      %v2264 = vadd.f32 %v2196, %v2232
      %v2265 = vadd.f32 %v2197, %v2233
      %v2266 = vadd.f32 %v2198, %v2234
      %v2267 = vadd.f32 %v2199, %v2235
      %v2268 = vadd.f32 %v2200, %v2236
      %v2269 = vadd.f32 %v2201, %v2237
      %v2270 = vadd.f32 %v2202, %v2238
      %v2271 = vadd.f32 %v2203, %v2239
      %v2272 = vadd.f32 %v2204, %v2240
      %v2273 = vlaneseq
      %v2274 = vshrl.u32 %v2273, 7
      %v2275 = vsub.s32 7, %v2274
      %v2276 = vrot.slane %v1559, %v2275
      %v2277 = vmul.f32 %v1441, %v2276
      %v2278 = vmul.f32 %v1444, %v2276
      %v2279 = vmul.f32 %v1449, %v2276
      %v2280 = vmul.f32 %v1452, %v2276
      %v2281 = vmul.f32 %v1457, %v2276
      %v2282 = vmul.f32 %v1460, %v2276
      %v2283 = vmul.f32 %v1465, %v2276
      %v2284 = vmul.f32 %v1468, %v2276
      %v2285 = vmul.f32 %v1473, %v2276
      %v2286 = vmul.f32 %v1476, %v2276
      %v2287 = vmul.f32 %v1481, %v2276
      %v2288 = vmul.f32 %v1484, %v2276
      %v2289 = vmul.f32 %v1489, %v2276
      %v2290 = vmul.f32 %v1492, %v2276
      %v2291 = vmul.f32 %v1497, %v2276
      %v2292 = vmul.f32 %v1500, %v2276
      %v2293 = vmul.f32 %v1505, %v2276
      %v2294 = vmul.f32 %v1508, %v2276
      %v2295 = vmul.f32 %v1513, %v2276
      %v2296 = vmul.f32 %v1516, %v2276
      %v2297 = vmul.f32 %v1521, %v2276
      %v2298 = vmul.f32 %v1524, %v2276
      %v2299 = vmul.f32 %v1529, %v2276
      %v2300 = vmul.f32 %v1532, %v2276
      %v2301 = vmul.f32 %v1537, %v2276
      %v2302 = vmul.f32 %v1540, %v2276
      %v2303 = vmul.f32 %v1545, %v2276
      %v2304 = vmul.f32 %v1548, %v2276
      %v2305 = vmul.f32 %v1553, %v2276
      %v2306 = vmul.f32 %v1556, %v2276
      %v2307 = vmul.f32 %v2276, 0.0
      %v2308 = vadd.f32 %v2241, %v2277
      %v2309 = vadd.f32 %v2242, %v2278
      %v2310 = vadd.f32 %v2243, %v2279
      %v2311 = vadd.f32 %v2244, %v2280
      %v2312 = vadd.f32 %v2245, %v2281
      %v2313 = vadd.f32 %v2246, %v2282
      %v2314 = vadd.f32 %v2247, %v2283
      %v2315 = vadd.f32 %v2248, %v2284
      %v2316 = vadd.f32 %v2249, %v2285
      %v2317 = vadd.f32 %v2250, %v2286
      %v2318 = vadd.f32 %v2251, %v2287
      %v2319 = vadd.f32 %v2252, %v2288
      %v2320 = vadd.f32 %v2253, %v2289
      %v2321 = vadd.f32 %v2254, %v2290
      %v2322 = vadd.f32 %v2255, %v2291
      %v2323 = vadd.f32 %v2256, %v2292
      %v2324 = vadd.f32 %v2257, %v2293
      %v2325 = vadd.f32 %v2258, %v2294
      %v2326 = vadd.f32 %v2259, %v2295
      %v2327 = vadd.f32 %v2260, %v2296
      %v2328 = vadd.f32 %v2261, %v2297
      %v2329 = vadd.f32 %v2262, %v2298
      %v2330 = vadd.f32 %v2263, %v2299
      %v2331 = vadd.f32 %v2264, %v2300
      %v2332 = vadd.f32 %v2265, %v2301
      %v2333 = vadd.f32 %v2266, %v2302
      %v2334 = vadd.f32 %v2267, %v2303
      %v2335 = vadd.f32 %v2268, %v2304
      %v2336 = vadd.f32 %v2269, %v2305
      %v2337 = vadd.f32 %v2270, %v2306
      %v2338 = vadd.f32 %v2271, %v2307
      %v2339 = vadd.f32 %v2272, %v2307
      %v2340 = vlaneseq
      %v2341 = vshrl.u32 %v2340, 7
      %v2342 = vsub.s32 0, %v2341
      %v2343 = vrot.slane %v1560, %v2342
      %v2344 = vmul.f32 %v1831, %v2343
      %v2345 = vmul.f32 %v1905, %v2343
      %v2346 = vmul.f32 %v1834, %v2343
      %v2347 = vmul.f32 %v1906, %v2343
      %v2348 = vmul.f32 %v1837, %v2343
      %v2349 = vmul.f32 %v1907, %v2343
      %v2350 = vmul.f32 %v1840, %v2343
      %v2351 = vmul.f32 %v1908, %v2343
      %v2352 = vmul.f32 %v1843, %v2343
      %v2353 = vmul.f32 %v1909, %v2343
      %v2354 = vmul.f32 %v1846, %v2343
      %v2355 = vmul.f32 %v1910, %v2343
      %v2356 = vmul.f32 %v1849, %v2343
      %v2357 = vmul.f32 %v1911, %v2343
      %v2358 = vmul.f32 %v1852, %v2343
      %v2359 = vmul.f32 %v1912, %v2343
      %v2360 = vmul.f32 %v1855, %v2343
      %v2361 = vmul.f32 %v1913, %v2343
      %v2362 = vmul.f32 %v1858, %v2343
      %v2363 = vmul.f32 %v1914, %v2343
      %v2364 = vmul.f32 %v1861, %v2343
      %v2365 = vmul.f32 %v1915, %v2343
      %v2366 = vmul.f32 %v1864, %v2343
      %v2367 = vmul.f32 %v1916, %v2343
      %v2368 = vmul.f32 %v1867, %v2343
      %v2369 = vmul.f32 %v1917, %v2343
      %v2370 = vmul.f32 %v1870, %v2343
      %v2371 = vmul.f32 %v1918, %v2343
      %v2372 = vmul.f32 %v2133, %v2343
      %v2373 = vmul.f32 %v2136, %v2343
      %v2374 = vmul.f32 %v1825, %v2343
      %v2375 = vmul.f32 %v1903, %v2343
      %v2376 = vadd.f32 %v2308, %v2344
      %v2377 = vadd.f32 %v2309, %v2345
      %v2378 = vadd.f32 %v2310, %v2346
      %v2379 = vadd.f32 %v2311, %v2347
      %v2380 = vadd.f32 %v2312, %v2348
      %v2381 = vadd.f32 %v2313, %v2349
      %v2382 = vadd.f32 %v2314, %v2350
      %v2383 = vadd.f32 %v2315, %v2351
      %v2384 = vadd.f32 %v2316, %v2352
      %v2385 = vadd.f32 %v2317, %v2353
      %v2386 = vadd.f32 %v2318, %v2354
      %v2387 = vadd.f32 %v2319, %v2355
      %v2388 = vadd.f32 %v2320, %v2356
      %v2389 = vadd.f32 %v2321, %v2357
      %v2390 = vadd.f32 %v2322, %v2358
      %v2391 = vadd.f32 %v2323, %v2359
      %v2392 = vadd.f32 %v2324, %v2360
      %v2393 = vadd.f32 %v2325, %v2361
      %v2394 = vadd.f32 %v2326, %v2362
      %v2395 = vadd.f32 %v2327, %v2363
      %v2396 = vadd.f32 %v2328, %v2364
      %v2397 = vadd.f32 %v2329, %v2365
      %v2398 = vadd.f32 %v2330, %v2366
      %v2399 = vadd.f32 %v2331, %v2367
      %v2400 = vadd.f32 %v2332, %v2368
      %v2401 = vadd.f32 %v2333, %v2369
      %v2402 = vadd.f32 %v2334, %v2370
      %v2403 = vadd.f32 %v2335, %v2371
      %v2404 = vadd.f32 %v2336, %v2372
      %v2405 = vadd.f32 %v2337, %v2373
      %v2406 = vadd.f32 %v2338, %v2374
      %v2407 = vadd.f32 %v2339, %v2375
      %v2408 = vld [vmem:[%s690] sm:$0x1]
      %v2410 = vlaneseq
      %v2411 = vshrl.u32 %v2410, 7
      %v2412 = vsub.s32 0, %v2411
      %v2413 = vrot.slane %v2408, %v2412
      %v2415 = vadd.f32 %v2376, %v2413
      %v2416 = vadd.f32 %v2377, %v2413
      %v2417 = vadd.f32 %v2378, %v2413
      %v2418 = vadd.f32 %v2379, %v2413
      %v2419 = vadd.f32 %v2380, %v2413
      %v2420 = vadd.f32 %v2381, %v2413
      %v2421 = vadd.f32 %v2382, %v2413
      %v2422 = vadd.f32 %v2383, %v2413
      %v2423 = vadd.f32 %v2384, %v2413
      %v2424 = vadd.f32 %v2385, %v2413
      %v2425 = vadd.f32 %v2386, %v2413
      %v2426 = vadd.f32 %v2387, %v2413
      %v2427 = vadd.f32 %v2388, %v2413
      %v2428 = vadd.f32 %v2389, %v2413
      %v2429 = vadd.f32 %v2390, %v2413
      %v2430 = vadd.f32 %v2391, %v2413
      %v2431 = vadd.f32 %v2392, %v2413
      %v2432 = vadd.f32 %v2393, %v2413
      %v2433 = vadd.f32 %v2394, %v2413
      %v2434 = vadd.f32 %v2395, %v2413
      %v2435 = vadd.f32 %v2396, %v2413
      %v2436 = vadd.f32 %v2397, %v2413
      %v2437 = vadd.f32 %v2398, %v2413
      %v2438 = vadd.f32 %v2399, %v2413
      %v2439 = vadd.f32 %v2400, %v2413
      %v2440 = vadd.f32 %v2401, %v2413
      %v2441 = vadd.f32 %v2402, %v2413
      %v2442 = vadd.f32 %v2403, %v2413
      %v2443 = vadd.f32 %v2404, %v2413
      %v2444 = vadd.f32 %v2405, %v2413
      %v2445 = vadd.f32 %v2406, %v2413
      %v2446 = vadd.f32 %v2407, %v2413
      %v2447 = vand.u32 2147483647, %v2415
      %v2448 = vand.u32 2147483647, %v2416
      %v2449 = vand.u32 2147483647, %v2417
      %v2450 = vand.u32 2147483647, %v2418
      %v2451 = vand.u32 2147483647, %v2419
      %v2452 = vand.u32 2147483647, %v2420
      %v2453 = vand.u32 2147483647, %v2421
      %v2454 = vand.u32 2147483647, %v2422
      %v2455 = vand.u32 2147483647, %v2423
      %v2456 = vand.u32 2147483647, %v2424
      %v2457 = vand.u32 2147483647, %v2425
      %v2458 = vand.u32 2147483647, %v2426
      %v2459 = vand.u32 2147483647, %v2427
      %v2460 = vand.u32 2147483647, %v2428
      %v2461 = vand.u32 2147483647, %v2429
      %v2462 = vand.u32 2147483647, %v2430
      %v2463 = vand.u32 2147483647, %v2431
      %v2464 = vand.u32 2147483647, %v2432
      %v2465 = vand.u32 2147483647, %v2433
      %v2466 = vand.u32 2147483647, %v2434
      %v2467 = vand.u32 2147483647, %v2435
      %v2468 = vand.u32 2147483647, %v2436
      %v2469 = vand.u32 2147483647, %v2437
      %v2470 = vand.u32 2147483647, %v2438
      %v2471 = vand.u32 2147483647, %v2439
      %v2472 = vand.u32 2147483647, %v2440
      %v2473 = vand.u32 2147483647, %v2441
      %v2474 = vand.u32 2147483647, %v2442
      %v2475 = vand.u32 2147483647, %v2443
      %v2476 = vand.u32 2147483647, %v2444
      %v2477 = vand.u32 2147483647, %v2445
      %v2478 = vand.u32 2147483647, %v2446
      %v2479 = vsub.f32 0.0, %v2447
      %v2480 = vsub.f32 0.0, %v2448
      %v2481 = vsub.f32 0.0, %v2449
      %v2482 = vsub.f32 0.0, %v2450
      %v2483 = vsub.f32 0.0, %v2451
      %v2484 = vsub.f32 0.0, %v2452
      %v2485 = vsub.f32 0.0, %v2453
      %v2486 = vsub.f32 0.0, %v2454
      %v2487 = vsub.f32 0.0, %v2455
      %v2488 = vsub.f32 0.0, %v2456
      %v2489 = vsub.f32 0.0, %v2457
      %v2490 = vsub.f32 0.0, %v2458
      %v2491 = vsub.f32 0.0, %v2459
      %v2492 = vsub.f32 0.0, %v2460
      %v2493 = vsub.f32 0.0, %v2461
      %v2494 = vsub.f32 0.0, %v2462
      %v2495 = vsub.f32 0.0, %v2463
      %v2496 = vsub.f32 0.0, %v2464
      %v2497 = vsub.f32 0.0, %v2465
      %v2498 = vsub.f32 0.0, %v2466
      %v2499 = vsub.f32 0.0, %v2467
      %v2500 = vsub.f32 0.0, %v2468
      %v2501 = vsub.f32 0.0, %v2469
      %v2502 = vsub.f32 0.0, %v2470
      %v2503 = vsub.f32 0.0, %v2471
      %v2504 = vsub.f32 0.0, %v2472
      %v2505 = vsub.f32 0.0, %v2473
      %v2506 = vsub.f32 0.0, %v2474
      %v2507 = vsub.f32 0.0, %v2475
      %v2508 = vsub.f32 0.0, %v2476
      %v2509 = vsub.f32 0.0, %v2477
      %v2510 = vsub.f32 0.0, %v2478
      %v2511 = vmul.f32 %v2479, 1.442695
      %v2512 = vpow.pop %v2511
      %v2513 = vmul.f32 %v2480, 1.442695
      %v2514 = vpow.pop %v2513
      %v2515 = vmul.f32 %v2481, 1.442695
      %v2516 = vpow.pop %v2515
      %v2517 = vmul.f32 %v2482, 1.442695
      %v2518 = vpow.pop %v2517
      %v2519 = vmul.f32 %v2483, 1.442695
      %v2520 = vpow.pop %v2519
      %v2521 = vmul.f32 %v2484, 1.442695
      %v2522 = vpow.pop %v2521
      %v2523 = vmul.f32 %v2485, 1.442695
      %v2524 = vpow.pop %v2523
      %v2525 = vmul.f32 %v2486, 1.442695
      %v2526 = vpow.pop %v2525
      %v2527 = vmul.f32 %v2487, 1.442695
      %v2528 = vpow.pop %v2527
      %v2529 = vmul.f32 %v2488, 1.442695
      %v2530 = vpow.pop %v2529
      %v2531 = vmul.f32 %v2489, 1.442695
      %v2532 = vpow.pop %v2531
      %v2533 = vmul.f32 %v2490, 1.442695
      %v2534 = vpow.pop %v2533
      %v2535 = vmul.f32 %v2491, 1.442695
      %v2536 = vpow.pop %v2535
      %v2537 = vmul.f32 %v2492, 1.442695
      %v2538 = vpow.pop %v2537
      %v2539 = vmul.f32 %v2493, 1.442695
      %v2540 = vpow.pop %v2539
      %v2541 = vmul.f32 %v2494, 1.442695
      %v2542 = vpow.pop %v2541
      %v2543 = vmul.f32 %v2495, 1.442695
      %v2544 = vpow.pop %v2543
      %v2545 = vmul.f32 %v2496, 1.442695
      %v2546 = vpow.pop %v2545
      %v2547 = vmul.f32 %v2497, 1.442695
      %v2548 = vpow.pop %v2547
      %v2549 = vmul.f32 %v2498, 1.442695
      %v2550 = vpow.pop %v2549
      %v2551 = vmul.f32 %v2499, 1.442695
      %v2552 = vpow.pop %v2551
      %v2553 = vmul.f32 %v2500, 1.442695
      %v2554 = vpow.pop %v2553
      %v2555 = vmul.f32 %v2501, 1.442695
      %v2556 = vpow.pop %v2555
      %v2557 = vmul.f32 %v2502, 1.442695
      %v2558 = vpow.pop %v2557
      %v2559 = vmul.f32 %v2503, 1.442695
      %v2560 = vpow.pop %v2559
      %v2561 = vmul.f32 %v2504, 1.442695
      %v2562 = vpow.pop %v2561
      %v2563 = vmul.f32 %v2505, 1.442695
      %v2564 = vpow.pop %v2563
      %v2565 = vmul.f32 %v2506, 1.442695
      %v2566 = vpow.pop %v2565
      %v2567 = vmul.f32 %v2507, 1.442695
      %v2568 = vpow.pop %v2567
      %v2569 = vmul.f32 %v2508, 1.442695
      %v2570 = vpow.pop %v2569
      %v2571 = vmul.f32 %v2509, 1.442695
      %v2572 = vpow.pop %v2571
      %v2573 = vmul.f32 %v2510, 1.442695
      %v2574 = vpow.pop %v2573
      %vm2575 = vcmp.ge.f32.partialorder %v2415, 0.0
      %vm2576 = vcmp.ge.f32.partialorder %v2416, 0.0
      %vm2577 = vcmp.ge.f32.partialorder %v2417, 0.0
      %vm2578 = vcmp.ge.f32.partialorder %v2418, 0.0
      %vm2579 = vcmp.ge.f32.partialorder %v2419, 0.0
      %vm2580 = vcmp.ge.f32.partialorder %v2420, 0.0
      %vm2581 = vcmp.ge.f32.partialorder %v2421, 0.0
      %vm2582 = vcmp.ge.f32.partialorder %v2422, 0.0
      %vm2583 = vcmp.ge.f32.partialorder %v2423, 0.0
      %vm2584 = vcmp.ge.f32.partialorder %v2424, 0.0
      %vm2585 = vcmp.ge.f32.partialorder %v2425, 0.0
      %vm2586 = vcmp.ge.f32.partialorder %v2426, 0.0
      %vm2587 = vcmp.ge.f32.partialorder %v2427, 0.0
      %vm2588 = vcmp.ge.f32.partialorder %v2428, 0.0
      %vm2589 = vcmp.ge.f32.partialorder %v2429, 0.0
      %vm2590 = vcmp.ge.f32.partialorder %v2430, 0.0
      %vm2591 = vcmp.ge.f32.partialorder %v2431, 0.0
      %vm2592 = vcmp.ge.f32.partialorder %v2432, 0.0
      %vm2593 = vcmp.ge.f32.partialorder %v2433, 0.0
      %vm2594 = vcmp.ge.f32.partialorder %v2434, 0.0
      %vm2595 = vcmp.ge.f32.partialorder %v2435, 0.0
      %vm2596 = vcmp.ge.f32.partialorder %v2436, 0.0
      %vm2597 = vcmp.ge.f32.partialorder %v2437, 0.0
      %vm2598 = vcmp.ge.f32.partialorder %v2438, 0.0
      %vm2599 = vcmp.ge.f32.partialorder %v2439, 0.0
      %vm2600 = vcmp.ge.f32.partialorder %v2440, 0.0
      %vm2601 = vcmp.ge.f32.partialorder %v2441, 0.0
      %vm2602 = vcmp.ge.f32.partialorder %v2442, 0.0
      %vm2603 = vcmp.ge.f32.partialorder %v2443, 0.0
      %vm2604 = vcmp.ge.f32.partialorder %v2444, 0.0
      %vm2605 = vcmp.ge.f32.partialorder %v2445, 0.0
      %vm2606 = vcmp.ge.f32.partialorder %v2446, 0.0
      %v2607 = vadd.f32 %v2512, 1.0
      %v2608 = vadd.f32 %v2514, 1.0
      %v2609 = vadd.f32 %v2516, 1.0
      %v2610 = vadd.f32 %v2518, 1.0
      %v2611 = vadd.f32 %v2520, 1.0
      %v2612 = vadd.f32 %v2522, 1.0
      %v2613 = vadd.f32 %v2524, 1.0
      %v2614 = vadd.f32 %v2526, 1.0
      %v2615 = vadd.f32 %v2528, 1.0
      %v2616 = vadd.f32 %v2530, 1.0
      %v2617 = vadd.f32 %v2532, 1.0
      %v2618 = vadd.f32 %v2534, 1.0
      %v2619 = vadd.f32 %v2536, 1.0
      %v2620 = vadd.f32 %v2538, 1.0
      %v2621 = vadd.f32 %v2540, 1.0
      %v2622 = vadd.f32 %v2542, 1.0
      %v2623 = vadd.f32 %v2544, 1.0
      %v2624 = vadd.f32 %v2546, 1.0
      %v2625 = vadd.f32 %v2548, 1.0
      %v2626 = vadd.f32 %v2550, 1.0
      %v2627 = vadd.f32 %v2552, 1.0
      %v2628 = vadd.f32 %v2554, 1.0
      %v2629 = vadd.f32 %v2556, 1.0
      %v2630 = vadd.f32 %v2558, 1.0
      %v2631 = vadd.f32 %v2560, 1.0
      %v2632 = vadd.f32 %v2562, 1.0
      %v2633 = vadd.f32 %v2564, 1.0
      %v2634 = vadd.f32 %v2566, 1.0
      %v2635 = vadd.f32 %v2568, 1.0
      %v2636 = vadd.f32 %v2570, 1.0
      %v2637 = vadd.f32 %v2572, 1.0
      %v2638 = vadd.f32 %v2574, 1.0
      %v2639 = vrcp.pop %v2607
      %v2640 = vmul.f32 1.0, %v2639
      %v2641 = vrcp.pop %v2608
      %v2642 = vmul.f32 1.0, %v2641
      %v2643 = vrcp.pop %v2609
      %v2644 = vmul.f32 1.0, %v2643
      %v2645 = vrcp.pop %v2610
      %v2646 = vmul.f32 1.0, %v2645
      %v2647 = vrcp.pop %v2611
      %v2648 = vmul.f32 1.0, %v2647
      %v2649 = vrcp.pop %v2612
      %v2650 = vmul.f32 1.0, %v2649
      %v2651 = vrcp.pop %v2613
      %v2652 = vmul.f32 1.0, %v2651
      %v2653 = vrcp.pop %v2614
      %v2654 = vmul.f32 1.0, %v2653
      %v2655 = vrcp.pop %v2615
      %v2656 = vmul.f32 1.0, %v2655
      %v2657 = vrcp.pop %v2616
      %v2658 = vmul.f32 1.0, %v2657
      %v2659 = vrcp.pop %v2617
      %v2660 = vmul.f32 1.0, %v2659
      %v2661 = vrcp.pop %v2618
      %v2662 = vmul.f32 1.0, %v2661
      %v2663 = vrcp.pop %v2619
      %v2664 = vmul.f32 1.0, %v2663
      %v2665 = vrcp.pop %v2620
      %v2666 = vmul.f32 1.0, %v2665
      %v2667 = vrcp.pop %v2621
      %v2668 = vmul.f32 1.0, %v2667
      %v2669 = vrcp.pop %v2622
      %v2670 = vmul.f32 1.0, %v2669
      %v2671 = vrcp.pop %v2623
      %v2672 = vmul.f32 1.0, %v2671
      %v2673 = vrcp.pop %v2624
      %v2674 = vmul.f32 1.0, %v2673
      %v2675 = vrcp.pop %v2625
      %v2676 = vmul.f32 1.0, %v2675
      %v2677 = vrcp.pop %v2626
      %v2678 = vmul.f32 1.0, %v2677
      %v2679 = vrcp.pop %v2627
      %v2680 = vmul.f32 1.0, %v2679
      %v2681 = vrcp.pop %v2628
      %v2682 = vmul.f32 1.0, %v2681
      %v2683 = vrcp.pop %v2629
      %v2684 = vmul.f32 1.0, %v2683
      %v2685 = vrcp.pop %v2630
      %v2686 = vmul.f32 1.0, %v2685
      %v2687 = vrcp.pop %v2631
      %v2688 = vmul.f32 1.0, %v2687
      %v2689 = vrcp.pop %v2632
      %v2690 = vmul.f32 1.0, %v2689
      %v2691 = vrcp.pop %v2633
      %v2692 = vmul.f32 1.0, %v2691
      %v2693 = vrcp.pop %v2634
      %v2694 = vmul.f32 1.0, %v2693
      %v2695 = vrcp.pop %v2635
      %v2696 = vmul.f32 1.0, %v2695
      %v2697 = vrcp.pop %v2636
      %v2698 = vmul.f32 1.0, %v2697
      %v2699 = vrcp.pop %v2637
      %v2700 = vmul.f32 1.0, %v2699
      %v2701 = vrcp.pop %v2638
      %v2702 = vmul.f32 1.0, %v2701
      %v2703 = vmul.f32 %v2512, %v2639
      %v2704 = vmul.f32 %v2514, %v2641
      %v2705 = vmul.f32 %v2516, %v2643
      %v2706 = vmul.f32 %v2518, %v2645
      %v2707 = vmul.f32 %v2520, %v2647
      %v2708 = vmul.f32 %v2522, %v2649
      %v2709 = vmul.f32 %v2524, %v2651
      %v2710 = vmul.f32 %v2526, %v2653
      %v2711 = vmul.f32 %v2528, %v2655
      %v2712 = vmul.f32 %v2530, %v2657
      %v2713 = vmul.f32 %v2532, %v2659
      %v2714 = vmul.f32 %v2534, %v2661
      %v2715 = vmul.f32 %v2536, %v2663
      %v2716 = vmul.f32 %v2538, %v2665
      %v2717 = vmul.f32 %v2540, %v2667
      %v2718 = vmul.f32 %v2542, %v2669
      %v2719 = vmul.f32 %v2544, %v2671
      %v2720 = vmul.f32 %v2546, %v2673
      %v2721 = vmul.f32 %v2548, %v2675
      %v2722 = vmul.f32 %v2550, %v2677
      %v2723 = vmul.f32 %v2552, %v2679
      %v2724 = vmul.f32 %v2554, %v2681
      %v2725 = vmul.f32 %v2556, %v2683
      %v2726 = vmul.f32 %v2558, %v2685
      %v2727 = vmul.f32 %v2560, %v2687
      %v2728 = vmul.f32 %v2562, %v2689
      %v2729 = vmul.f32 %v2564, %v2691
      %v2730 = vmul.f32 %v2566, %v2693
      %v2731 = vmul.f32 %v2568, %v2695
      %v2732 = vmul.f32 %v2570, %v2697
      %v2733 = vmul.f32 %v2572, %v2699
      %v2734 = vmul.f32 %v2574, %v2701
      %v2735 = vsel %vm2575, %v2640, %v2703
      %v2736 = vsel %vm2576, %v2642, %v2704
      %v2737 = vsel %vm2577, %v2644, %v2705
      %v2738 = vsel %vm2578, %v2646, %v2706
      %v2739 = vsel %vm2579, %v2648, %v2707
      %v2740 = vsel %vm2580, %v2650, %v2708
      %v2741 = vsel %vm2581, %v2652, %v2709
      %v2742 = vsel %vm2582, %v2654, %v2710
      %v2743 = vsel %vm2583, %v2656, %v2711
      %v2744 = vsel %vm2584, %v2658, %v2712
      %v2745 = vsel %vm2585, %v2660, %v2713
      %v2746 = vsel %vm2586, %v2662, %v2714
      %v2747 = vsel %vm2587, %v2664, %v2715
      %v2748 = vsel %vm2588, %v2666, %v2716
      %v2749 = vsel %vm2589, %v2668, %v2717
      %v2750 = vsel %vm2590, %v2670, %v2718
      %v2751 = vsel %vm2591, %v2672, %v2719
      %v2752 = vsel %vm2592, %v2674, %v2720
      %v2753 = vsel %vm2593, %v2676, %v2721
      %v2754 = vsel %vm2594, %v2678, %v2722
      %v2755 = vsel %vm2595, %v2680, %v2723
      %v2756 = vsel %vm2596, %v2682, %v2724
      %v2757 = vsel %vm2597, %v2684, %v2725
      %v2758 = vsel %vm2598, %v2686, %v2726
      %v2759 = vsel %vm2599, %v2688, %v2727
      %v2760 = vsel %vm2600, %v2690, %v2728
      %v2761 = vsel %vm2601, %v2692, %v2729
      %v2762 = vsel %vm2602, %v2694, %v2730
      %v2763 = vsel %vm2603, %v2696, %v2731
      %v2764 = vsel %vm2604, %v2698, %v2732
      %v2765 = vsel %vm2605, %v2700, %v2733
      %v2766 = vsel %vm2606, %v2702, %v2734
      %v2767 = vmul.f32 %v2415, %v2735
      %v2768 = vmul.f32 %v2416, %v2736
      %v2769 = vmul.f32 %v2417, %v2737
      %v2770 = vmul.f32 %v2418, %v2738
      %v2771 = vmul.f32 %v2419, %v2739
      %v2772 = vmul.f32 %v2420, %v2740
      %v2773 = vmul.f32 %v2421, %v2741
      %v2774 = vmul.f32 %v2422, %v2742
      %v2775 = vmul.f32 %v2423, %v2743
      %v2776 = vmul.f32 %v2424, %v2744
      %v2777 = vmul.f32 %v2425, %v2745
      %v2778 = vmul.f32 %v2426, %v2746
      %v2779 = vmul.f32 %v2427, %v2747
      %v2780 = vmul.f32 %v2428, %v2748
      %v2781 = vmul.f32 %v2429, %v2749
      %v2782 = vmul.f32 %v2430, %v2750
      %v2783 = vmul.f32 %v2431, %v2751
      %v2784 = vmul.f32 %v2432, %v2752
      %v2785 = vmul.f32 %v2433, %v2753
      %v2786 = vmul.f32 %v2434, %v2754
      %v2787 = vmul.f32 %v2435, %v2755
      %v2788 = vmul.f32 %v2436, %v2756
      %v2789 = vmul.f32 %v2437, %v2757
      %v2790 = vmul.f32 %v2438, %v2758
      %v2791 = vmul.f32 %v2439, %v2759
      %v2792 = vmul.f32 %v2440, %v2760
      %v2793 = vmul.f32 %v2441, %v2761
      %v2794 = vmul.f32 %v2442, %v2762
      %v2795 = vmul.f32 %v2443, %v2763
      %v2796 = vmul.f32 %v2444, %v2764
      %v2797 = vmul.f32 %v2445, %v2765
      %v2798 = vmul.f32 %v2446, %v2766
      %v2799 = vpack.c.bf16 %v2768, %v2767
      %v2800 = vpack.c.bf16 %v2770, %v2769
      %v2801 = vpack.c.bf16 %v2772, %v2771
      %v2802 = vpack.c.bf16 %v2774, %v2773
      %v2803 = vpack.c.bf16 %v2776, %v2775
      %v2804 = vpack.c.bf16 %v2778, %v2777
      %v2805 = vpack.c.bf16 %v2780, %v2779
      %v2806 = vpack.c.bf16 %v2782, %v2781
      %v2807 = vpack.c.bf16 %v2784, %v2783
      %v2808 = vpack.c.bf16 %v2786, %v2785
      %v2809 = vpack.c.bf16 %v2788, %v2787
      %v2810 = vpack.c.bf16 %v2790, %v2789
      %v2811 = vpack.c.bf16 %v2792, %v2791
      %v2812 = vpack.c.bf16 %v2794, %v2793
      %v2813 = vpack.c.bf16 %v2796, %v2795
      %v2814 = vpack.c.bf16 %v2798, %v2797
      %v2815 = vld [vmem:[%s694] sm:$0xf]
      %vm2816 = vcmask 64512
      %v2818 = vsel %vm2816, %v2799, 0
      %v2821 = vsel %vm2816, %v2800, 0
      %v2824 = vsel %vm2816, %v2801, 0
      %v2827 = vsel %vm2816, %v2802, 0
      %v2830 = vsel %vm2816, %v2803, 0
      %v2833 = vsel %vm2816, %v2804, 0
      %v2836 = vsel %vm2816, %v2805, 0
      %v2839 = vsel %vm2816, %v2806, 0
      %v2842 = vsel %vm2816, %v2807, 0
      %v2845 = vsel %vm2816, %v2808, 0
      %v2848 = vsel %vm2816, %v2809, 0
      %v2851 = vsel %vm2816, %v2810, 0
      %v2854 = vsel %vm2816, %v2811, 0
      %v2857 = vsel %vm2816, %v2812, 0
      %v2860 = vsel %vm2816, %v2813, 0
      %v2863 = vsel %vm2816, %v2814, 0
      %vm2865 = vcmask 1043456
      %v2867 = vsel %vm2865, %v2815, 0
      %2869 = vmatprep.subr.bf16.mxu0 0
      %2870 = vmatpush1.bf16.msra.mxu0 %v2867
      %2871 = vmatprep.subr.bf16.mxu0 0
      %2872 = vmatpush1.bf16.msra.mxu0 0
      %2873 = vmatprep.subr.bf16.mxu0 0
      %2874 = vmatpush1.bf16.msra.mxu0 0
      %2875 = vmatprep.subr.bf16.mxu0 0
      %2876 = vmatpush1.bf16.msra.mxu0 0
      %2877 = vmatprep.subr.bf16.mxu0 0
      %2878 = vmatpush1.bf16.msra.mxu0 0
      %2879 = vmatprep.subr.bf16.mxu0 0
      %2880 = vmatpush1.bf16.msra.mxu0 0
      %2881 = vmatprep.subr.bf16.mxu0 0
      %2882 = vmatpush1.bf16.msra.mxu0 0
      %2883 = vmatprep.subr.bf16.mxu0 0
      %2884 = vmatpush1.bf16.msra.mxu0 0
      %2885 = vmatprep.subr.bf16.mxu0 0
      %2886 = vmatpush1.bf16.msra.mxu0 0
      %2887 = vmatprep.subr.bf16.mxu0 0
      %2888 = vmatpush1.bf16.msra.mxu0 0
      %2889 = vmatprep.subr.bf16.mxu0 0
      %2890 = vmatpush1.bf16.msra.mxu0 0
      %2891 = vmatprep.subr.bf16.mxu0 0
      %2892 = vmatpush1.bf16.msra.mxu0 0
      %2893 = vmatprep.subr.bf16.mxu0 0
      %2894 = vmatpush1.bf16.msra.mxu0 0
      %2895 = vmatprep.subr.bf16.mxu0 0
      %2896 = vmatpush1.bf16.msra.mxu0 0
      %2897 = vmatprep.subr.bf16.mxu0 0
      %2898 = vmatpush1.bf16.msra.mxu0 0
      %2899 = vmatprep.subr.bf16.mxu0 0
      %2900 = vmatpush1.bf16.msra.mxu0 0
      %2901 = vmatprep.mubr.bf16.mxu0 0
      %2902 = vmatmul.mubr.bf16.gmra.mrb[0].mxu0 %v2818
      %v2903 = vpop.f32.mrb[0].mxu0
      %v2904 = vadd.f32 0.0, %v2903
      %v2905 = vpop.f32.mrb[0].mxu0
      %v2906 = vpop.f32.mrb[0].mxu0
      %v2907 = vadd.f32 0.0, %v2906
      %v2908 = vpop.f32.mrb[0].mxu0
      %2909 = vmatprep.mubr.bf16.mxu0 0
      %2910 = vmatmul.mubr.bf16.gmra.mrb[0].mxu0 %v2821
      %v2911 = vpop.f32.mrb[0].mxu0
      %v2912 = vadd.f32 0.0, %v2911
      %v2913 = vpop.f32.mrb[0].mxu0
      %v2914 = vpop.f32.mrb[0].mxu0
      %v2915 = vadd.f32 0.0, %v2914
      %v2916 = vpop.f32.mrb[0].mxu0
      %2917 = vmatprep.mubr.bf16.mxu0 0
      %2918 = vmatmul.mubr.bf16.gmra.mrb[0].mxu0 %v2824
      %v2919 = vpop.f32.mrb[0].mxu0
      %v2920 = vadd.f32 0.0, %v2919
      %v2921 = vpop.f32.mrb[0].mxu0
      %v2922 = vpop.f32.mrb[0].mxu0
      %v2923 = vadd.f32 0.0, %v2922
      %v2924 = vpop.f32.mrb[0].mxu0
      %2925 = vmatprep.mubr.bf16.mxu0 0
      %2926 = vmatmul.mubr.bf16.gmra.mrb[0].mxu0 %v2827
      %v2927 = vpop.f32.mrb[0].mxu0
      %v2928 = vadd.f32 0.0, %v2927
      %v2929 = vpop.f32.mrb[0].mxu0
      %v2930 = vpop.f32.mrb[0].mxu0
      %v2931 = vadd.f32 0.0, %v2930
      %v2932 = vpop.f32.mrb[0].mxu0
      %2933 = vmatprep.mubr.bf16.mxu0 0
      %2934 = vmatmul.mubr.bf16.gmra.mrb[0].mxu0 %v2830
      %v2935 = vpop.f32.mrb[0].mxu0
      %v2936 = vadd.f32 0.0, %v2935
      %v2937 = vpop.f32.mrb[0].mxu0
      %v2938 = vpop.f32.mrb[0].mxu0
      %v2939 = vadd.f32 0.0, %v2938
      %v2940 = vpop.f32.mrb[0].mxu0
      %2941 = vmatprep.mubr.bf16.mxu0 0
      %2942 = vmatmul.mubr.bf16.gmra.mrb[0].mxu0 %v2833
      %v2943 = vpop.f32.mrb[0].mxu0
      %v2944 = vadd.f32 0.0, %v2943
      %v2945 = vpop.f32.mrb[0].mxu0
      %v2946 = vpop.f32.mrb[0].mxu0
      %v2947 = vadd.f32 0.0, %v2946
      %v2948 = vpop.f32.mrb[0].mxu0
      %2949 = vmatprep.mubr.bf16.mxu0 0
      %2950 = vmatmul.mubr.bf16.gmra.mrb[0].mxu0 %v2836
      %v2951 = vpop.f32.mrb[0].mxu0
      %v2952 = vadd.f32 0.0, %v2951
      %v2953 = vpop.f32.mrb[0].mxu0
      %v2954 = vpop.f32.mrb[0].mxu0
      %v2955 = vadd.f32 0.0, %v2954
      %v2956 = vpop.f32.mrb[0].mxu0
      %2957 = vmatprep.mubr.bf16.mxu0 0
      %2958 = vmatmul.mubr.bf16.gmra.mrb[0].mxu0 %v2839
      %v2959 = vpop.f32.mrb[0].mxu0
      %v2960 = vadd.f32 0.0, %v2959
      %v2961 = vpop.f32.mrb[0].mxu0
      %v2962 = vpop.f32.mrb[0].mxu0
      %v2963 = vadd.f32 0.0, %v2962
      %v2964 = vpop.f32.mrb[0].mxu0
      %2965 = vmatprep.mubr.bf16.mxu0 0
      %2966 = vmatmul.mubr.bf16.gmra.mrb[0].mxu0 %v2842
      %v2967 = vpop.f32.mrb[0].mxu0
      %v2968 = vadd.f32 0.0, %v2967
      %v2969 = vpop.f32.mrb[0].mxu0
      %v2970 = vpop.f32.mrb[0].mxu0
      %v2971 = vadd.f32 0.0, %v2970
      %v2972 = vpop.f32.mrb[0].mxu0
      %2973 = vmatprep.mubr.bf16.mxu0 0
      %2974 = vmatmul.mubr.bf16.gmra.mrb[0].mxu0 %v2845
      %v2975 = vpop.f32.mrb[0].mxu0
      %v2976 = vadd.f32 0.0, %v2975
      %v2977 = vpop.f32.mrb[0].mxu0
      %v2978 = vpop.f32.mrb[0].mxu0
      %v2979 = vadd.f32 0.0, %v2978
      %v2980 = vpop.f32.mrb[0].mxu0
      %2981 = vmatprep.mubr.bf16.mxu0 0
      %2982 = vmatmul.mubr.bf16.gmra.mrb[0].mxu0 %v2848
      %v2983 = vpop.f32.mrb[0].mxu0
      %v2984 = vadd.f32 0.0, %v2983
      %v2985 = vpop.f32.mrb[0].mxu0
      %v2986 = vpop.f32.mrb[0].mxu0
      %v2987 = vadd.f32 0.0, %v2986
      %v2988 = vpop.f32.mrb[0].mxu0
      %2989 = vmatprep.mubr.bf16.mxu0 0
      %2990 = vmatmul.mubr.bf16.gmra.mrb[0].mxu0 %v2851
      %v2991 = vpop.f32.mrb[0].mxu0
      %v2992 = vadd.f32 0.0, %v2991
      %v2993 = vpop.f32.mrb[0].mxu0
      %v2994 = vpop.f32.mrb[0].mxu0
      %v2995 = vadd.f32 0.0, %v2994
      %v2996 = vpop.f32.mrb[0].mxu0
      %2997 = vmatprep.mubr.bf16.mxu0 0
      %2998 = vmatmul.mubr.bf16.gmra.mrb[0].mxu0 %v2854
      %v2999 = vpop.f32.mrb[0].mxu0
      %v3000 = vadd.f32 0.0, %v2999
      %v3001 = vpop.f32.mrb[0].mxu0
      %v3002 = vpop.f32.mrb[0].mxu0
      %v3003 = vadd.f32 0.0, %v3002
      %v3004 = vpop.f32.mrb[0].mxu0
      %3005 = vmatprep.mubr.bf16.mxu0 0
      %3006 = vmatmul.mubr.bf16.gmra.mrb[0].mxu0 %v2857
      %v3007 = vpop.f32.mrb[0].mxu0
      %v3008 = vadd.f32 0.0, %v3007
      %v3009 = vpop.f32.mrb[0].mxu0
      %v3010 = vpop.f32.mrb[0].mxu0
      %v3011 = vadd.f32 0.0, %v3010
      %v3012 = vpop.f32.mrb[0].mxu0
      %3013 = vmatprep.mubr.bf16.mxu0 0
      %3014 = vmatmul.mubr.bf16.gmra.mrb[0].mxu0 %v2860
      %v3015 = vpop.f32.mrb[0].mxu0
      %v3016 = vadd.f32 0.0, %v3015
      %v3017 = vpop.f32.mrb[0].mxu0
      %v3018 = vpop.f32.mrb[0].mxu0
      %v3019 = vadd.f32 0.0, %v3018
      %v3020 = vpop.f32.mrb[0].mxu0
      %3021 = vmatprep.mubr.bf16.mxu0 0
      %3022 = vmatmul.mubr.bf16.gmra.mrb[0].mxu0 %v2863
      %v3023 = vpop.f32.mrb[0].mxu0
      %v3024 = vadd.f32 0.0, %v3023
      %v3025 = vpop.f32.mrb[0].mxu0
      %v3026 = vpop.f32.mrb[0].mxu0
      %v3027 = vadd.f32 0.0, %v3026
      %v3028 = vpop.f32.mrb[0].mxu0
      %3029 = vdwg.mxu0
      %v3030 = vld [vmem:[%s697] sm:$0x1]
      %v3032 = vlaneseq
      %v3033 = vshrl.u32 %v3032, 7
      %v3034 = vsub.s32 0, %v3033
      %v3035 = vrot.slane %v3030, %v3034
      %v3037 = vadd.f32 %v2904, %v3035
      %v3038 = vadd.f32 %v2907, %v3035
      %v3039 = vadd.f32 %v2912, %v3035
      %v3040 = vadd.f32 %v2915, %v3035
      %v3041 = vadd.f32 %v2920, %v3035
      %v3042 = vadd.f32 %v2923, %v3035
      %v3043 = vadd.f32 %v2928, %v3035
      %v3044 = vadd.f32 %v2931, %v3035
      %v3045 = vadd.f32 %v2936, %v3035
      %v3046 = vadd.f32 %v2939, %v3035
      %v3047 = vadd.f32 %v2944, %v3035
      %v3048 = vadd.f32 %v2947, %v3035
      %v3049 = vadd.f32 %v2952, %v3035
      %v3050 = vadd.f32 %v2955, %v3035
      %v3051 = vadd.f32 %v2960, %v3035
      %v3052 = vadd.f32 %v2963, %v3035
      %v3053 = vadd.f32 %v2968, %v3035
      %v3054 = vadd.f32 %v2971, %v3035
      %v3055 = vadd.f32 %v2976, %v3035
      %v3056 = vadd.f32 %v2979, %v3035
      %v3057 = vadd.f32 %v2984, %v3035
      %v3058 = vadd.f32 %v2987, %v3035
      %v3059 = vadd.f32 %v2992, %v3035
      %v3060 = vadd.f32 %v2995, %v3035
      %v3061 = vadd.f32 %v3000, %v3035
      %v3062 = vadd.f32 %v3003, %v3035
      %v3063 = vadd.f32 %v3008, %v3035
      %v3064 = vadd.f32 %v3011, %v3035
      %v3065 = vadd.f32 %v3016, %v3035
      %v3066 = vadd.f32 %v3019, %v3035
      %v3067 = vadd.f32 %v3024, %v3035
      %v3068 = vadd.f32 %v3027, %v3035
      %vm3069 = vcmp.gt.f32.partialorder %v3037, 20.0
      %vm3070 = vcmp.gt.f32.partialorder %v3038, 20.0
      %vm3071 = vcmp.gt.f32.partialorder %v3039, 20.0
      %vm3072 = vcmp.gt.f32.partialorder %v3040, 20.0
      %vm3073 = vcmp.gt.f32.partialorder %v3041, 20.0
      %vm3074 = vcmp.gt.f32.partialorder %v3042, 20.0
      %vm3075 = vcmp.gt.f32.partialorder %v3043, 20.0
      %vm3076 = vcmp.gt.f32.partialorder %v3044, 20.0
      %vm3077 = vcmp.gt.f32.partialorder %v3045, 20.0
      %vm3078 = vcmp.gt.f32.partialorder %v3046, 20.0
      %vm3079 = vcmp.gt.f32.partialorder %v3047, 20.0
      %vm3080 = vcmp.gt.f32.partialorder %v3048, 20.0
      %vm3081 = vcmp.gt.f32.partialorder %v3049, 20.0
      %vm3082 = vcmp.gt.f32.partialorder %v3050, 20.0
      %vm3083 = vcmp.gt.f32.partialorder %v3051, 20.0
      %vm3084 = vcmp.gt.f32.partialorder %v3052, 20.0
      %vm3085 = vcmp.gt.f32.partialorder %v3053, 20.0
      %vm3086 = vcmp.gt.f32.partialorder %v3054, 20.0
      %vm3087 = vcmp.gt.f32.partialorder %v3055, 20.0
      %vm3088 = vcmp.gt.f32.partialorder %v3056, 20.0
      %vm3089 = vcmp.gt.f32.partialorder %v3057, 20.0
      %vm3090 = vcmp.gt.f32.partialorder %v3058, 20.0
      %vm3091 = vcmp.gt.f32.partialorder %v3059, 20.0
      %vm3092 = vcmp.gt.f32.partialorder %v3060, 20.0
      %vm3093 = vcmp.gt.f32.partialorder %v3061, 20.0
      %vm3094 = vcmp.gt.f32.partialorder %v3062, 20.0
      %vm3095 = vcmp.gt.f32.partialorder %v3063, 20.0
      %vm3096 = vcmp.gt.f32.partialorder %v3064, 20.0
      %vm3097 = vcmp.gt.f32.partialorder %v3065, 20.0
      %vm3098 = vcmp.gt.f32.partialorder %v3066, 20.0
      %vm3099 = vcmp.gt.f32.partialorder %v3067, 20.0
      %vm3100 = vcmp.gt.f32.partialorder %v3068, 20.0
      %v3101 = vmin.f32 %v3037, 20.0
      %v3102 = vmin.f32 %v3038, 20.0
      %v3103 = vmin.f32 %v3039, 20.0
      %v3104 = vmin.f32 %v3040, 20.0
      %v3105 = vmin.f32 %v3041, 20.0
      %v3106 = vmin.f32 %v3042, 20.0
      %v3107 = vmin.f32 %v3043, 20.0
      %v3108 = vmin.f32 %v3044, 20.0
      %v3109 = vmin.f32 %v3045, 20.0
      %v3110 = vmin.f32 %v3046, 20.0
      %v3111 = vmin.f32 %v3047, 20.0
      %v3112 = vmin.f32 %v3048, 20.0
      %v3113 = vmin.f32 %v3049, 20.0
      %v3114 = vmin.f32 %v3050, 20.0
      %v3115 = vmin.f32 %v3051, 20.0
      %v3116 = vmin.f32 %v3052, 20.0
      %v3117 = vmin.f32 %v3053, 20.0
      %v3118 = vmin.f32 %v3054, 20.0
      %v3119 = vmin.f32 %v3055, 20.0
      %v3120 = vmin.f32 %v3056, 20.0
      %v3121 = vmin.f32 %v3057, 20.0
      %v3122 = vmin.f32 %v3058, 20.0
      %v3123 = vmin.f32 %v3059, 20.0
      %v3124 = vmin.f32 %v3060, 20.0
      %v3125 = vmin.f32 %v3061, 20.0
      %v3126 = vmin.f32 %v3062, 20.0
      %v3127 = vmin.f32 %v3063, 20.0
      %v3128 = vmin.f32 %v3064, 20.0
      %v3129 = vmin.f32 %v3065, 20.0
      %v3130 = vmin.f32 %v3066, 20.0
      %v3131 = vmin.f32 %v3067, 20.0
      %v3132 = vmin.f32 %v3068, 20.0
      %v3133 = vmul.f32 %v3101, 1.442695
      %v3134 = vpow.pop %v3133
      %v3135 = vmul.f32 %v3102, 1.442695
      %v3136 = vpow.pop %v3135
      %v3137 = vmul.f32 %v3103, 1.442695
      %v3138 = vpow.pop %v3137
      %v3139 = vmul.f32 %v3104, 1.442695
      %v3140 = vpow.pop %v3139
      %v3141 = vmul.f32 %v3105, 1.442695
      %v3142 = vpow.pop %v3141
      %v3143 = vmul.f32 %v3106, 1.442695
      %v3144 = vpow.pop %v3143
      %v3145 = vmul.f32 %v3107, 1.442695
      %v3146 = vpow.pop %v3145
      %v3147 = vmul.f32 %v3108, 1.442695
      %v3148 = vpow.pop %v3147
      %v3149 = vmul.f32 %v3109, 1.442695
      %v3150 = vpow.pop %v3149
      %v3151 = vmul.f32 %v3110, 1.442695
      %v3152 = vpow.pop %v3151
      %v3153 = vmul.f32 %v3111, 1.442695
      %v3154 = vpow.pop %v3153
      %v3155 = vmul.f32 %v3112, 1.442695
      %v3156 = vpow.pop %v3155
      %v3157 = vmul.f32 %v3113, 1.442695
      %v3158 = vpow.pop %v3157
      %v3159 = vmul.f32 %v3114, 1.442695
      %v3160 = vpow.pop %v3159
      %v3161 = vmul.f32 %v3115, 1.442695
      %v3162 = vpow.pop %v3161
      %v3163 = vmul.f32 %v3116, 1.442695
      %v3164 = vpow.pop %v3163
      %v3165 = vmul.f32 %v3117, 1.442695
      %v3166 = vpow.pop %v3165
      %v3167 = vmul.f32 %v3118, 1.442695
      %v3168 = vpow.pop %v3167
      %v3169 = vmul.f32 %v3119, 1.442695
      %v3170 = vpow.pop %v3169
      %v3171 = vmul.f32 %v3120, 1.442695
      %v3172 = vpow.pop %v3171
      %v3173 = vmul.f32 %v3121, 1.442695
      %v3174 = vpow.pop %v3173
      %v3175 = vmul.f32 %v3122, 1.442695
      %v3176 = vpow.pop %v3175
      %v3177 = vmul.f32 %v3123, 1.442695
      %v3178 = vpow.pop %v3177
      %v3179 = vmul.f32 %v3124, 1.442695
      %v3180 = vpow.pop %v3179
      %v3181 = vmul.f32 %v3125, 1.442695
      %v3182 = vpow.pop %v3181
      %v3183 = vmul.f32 %v3126, 1.442695
      %v3184 = vpow.pop %v3183
      %v3185 = vmul.f32 %v3127, 1.442695
      %v3186 = vpow.pop %v3185
      %v3187 = vmul.f32 %v3128, 1.442695
      %v3188 = vpow.pop %v3187
      %v3189 = vmul.f32 %v3129, 1.442695
      %v3190 = vpow.pop %v3189
      %v3191 = vmul.f32 %v3130, 1.442695
      %v3192 = vpow.pop %v3191
      %v3193 = vmul.f32 %v3131, 1.442695
      %v3194 = vpow.pop %v3193
      %v3195 = vmul.f32 %v3132, 1.442695
      %v3196 = vpow.pop %v3195
      %v3197 = vadd.f32 %v3134, 1.0
      %v3198 = vlog2.pop %v3197
      %v3199 = vmul.f32 %v3198, 0.6931472
      %v3200 = vmul.f32 -0.5, %v3134
      %v3201 = vadd.f32 %v3200, 1.0
      %v3202 = vmul.f32 %v3201, %v3134
      %v3203 = vand.u32 2147483647, %v3134
      %vm3204 = vcmp.lt.f32.partialorder %v3203, 0.0004427343
      %v3205 = vsel %vm3204, %v3202, %v3199
      %v3206 = vadd.f32 %v3136, 1.0
      %v3207 = vlog2.pop %v3206
      %v3208 = vmul.f32 %v3207, 0.6931472
      %v3209 = vmul.f32 -0.5, %v3136
      %v3210 = vadd.f32 %v3209, 1.0
      %v3211 = vmul.f32 %v3210, %v3136
      %v3212 = vand.u32 2147483647, %v3136
      %vm3213 = vcmp.lt.f32.partialorder %v3212, 0.0004427343
      %v3214 = vsel %vm3213, %v3211, %v3208
      %v3215 = vadd.f32 %v3138, 1.0
      %v3216 = vlog2.pop %v3215
      %v3217 = vmul.f32 %v3216, 0.6931472
      %v3218 = vmul.f32 -0.5, %v3138
      %v3219 = vadd.f32 %v3218, 1.0
      %v3220 = vmul.f32 %v3219, %v3138
      %v3221 = vand.u32 2147483647, %v3138
      %vm3222 = vcmp.lt.f32.partialorder %v3221, 0.0004427343
      %v3223 = vsel %vm3222, %v3220, %v3217
      %v3224 = vadd.f32 %v3140, 1.0
      %v3225 = vlog2.pop %v3224
      %v3226 = vmul.f32 %v3225, 0.6931472
      %v3227 = vmul.f32 -0.5, %v3140
      %v3228 = vadd.f32 %v3227, 1.0
      %v3229 = vmul.f32 %v3228, %v3140
      %v3230 = vand.u32 2147483647, %v3140
      %vm3231 = vcmp.lt.f32.partialorder %v3230, 0.0004427343
      %v3232 = vsel %vm3231, %v3229, %v3226
      %v3233 = vadd.f32 %v3142, 1.0
      %v3234 = vlog2.pop %v3233
      %v3235 = vmul.f32 %v3234, 0.6931472
      %v3236 = vmul.f32 -0.5, %v3142
      %v3237 = vadd.f32 %v3236, 1.0
      %v3238 = vmul.f32 %v3237, %v3142
      %v3239 = vand.u32 2147483647, %v3142
      %vm3240 = vcmp.lt.f32.partialorder %v3239, 0.0004427343
      %v3241 = vsel %vm3240, %v3238, %v3235
      %v3242 = vadd.f32 %v3144, 1.0
      %v3243 = vlog2.pop %v3242
      %v3244 = vmul.f32 %v3243, 0.6931472
      %v3245 = vmul.f32 -0.5, %v3144
      %v3246 = vadd.f32 %v3245, 1.0
      %v3247 = vmul.f32 %v3246, %v3144
      %v3248 = vand.u32 2147483647, %v3144
      %vm3249 = vcmp.lt.f32.partialorder %v3248, 0.0004427343
      %v3250 = vsel %vm3249, %v3247, %v3244
      %v3251 = vadd.f32 %v3146, 1.0
      %v3252 = vlog2.pop %v3251
      %v3253 = vmul.f32 %v3252, 0.6931472
      %v3254 = vmul.f32 -0.5, %v3146
      %v3255 = vadd.f32 %v3254, 1.0
      %v3256 = vmul.f32 %v3255, %v3146
      %v3257 = vand.u32 2147483647, %v3146
      %vm3258 = vcmp.lt.f32.partialorder %v3257, 0.0004427343
      %v3259 = vsel %vm3258, %v3256, %v3253
      %v3260 = vadd.f32 %v3148, 1.0
      %v3261 = vlog2.pop %v3260
      %v3262 = vmul.f32 %v3261, 0.6931472
      %v3263 = vmul.f32 -0.5, %v3148
      %v3264 = vadd.f32 %v3263, 1.0
      %v3265 = vmul.f32 %v3264, %v3148
      %v3266 = vand.u32 2147483647, %v3148
      %vm3267 = vcmp.lt.f32.partialorder %v3266, 0.0004427343
      %v3268 = vsel %vm3267, %v3265, %v3262
      %v3269 = vadd.f32 %v3150, 1.0
      %v3270 = vlog2.pop %v3269
      %v3271 = vmul.f32 %v3270, 0.6931472
      %v3272 = vmul.f32 -0.5, %v3150
      %v3273 = vadd.f32 %v3272, 1.0
      %v3274 = vmul.f32 %v3273, %v3150
      %v3275 = vand.u32 2147483647, %v3150
      %vm3276 = vcmp.lt.f32.partialorder %v3275, 0.0004427343
      %v3277 = vsel %vm3276, %v3274, %v3271
      %v3278 = vadd.f32 %v3152, 1.0
      %v3279 = vlog2.pop %v3278
      %v3280 = vmul.f32 %v3279, 0.6931472
      %v3281 = vmul.f32 -0.5, %v3152
      %v3282 = vadd.f32 %v3281, 1.0
      %v3283 = vmul.f32 %v3282, %v3152
      %v3284 = vand.u32 2147483647, %v3152
      %vm3285 = vcmp.lt.f32.partialorder %v3284, 0.0004427343
      %v3286 = vsel %vm3285, %v3283, %v3280
      %v3287 = vadd.f32 %v3154, 1.0
      %v3288 = vlog2.pop %v3287
      %v3289 = vmul.f32 %v3288, 0.6931472
      %v3290 = vmul.f32 -0.5, %v3154
      %v3291 = vadd.f32 %v3290, 1.0
      %v3292 = vmul.f32 %v3291, %v3154
      %v3293 = vand.u32 2147483647, %v3154
      %vm3294 = vcmp.lt.f32.partialorder %v3293, 0.0004427343
      %v3295 = vsel %vm3294, %v3292, %v3289
      %v3296 = vadd.f32 %v3156, 1.0
      %v3297 = vlog2.pop %v3296
      %v3298 = vmul.f32 %v3297, 0.6931472
      %v3299 = vmul.f32 -0.5, %v3156
      %v3300 = vadd.f32 %v3299, 1.0
      %v3301 = vmul.f32 %v3300, %v3156
      %v3302 = vand.u32 2147483647, %v3156
      %vm3303 = vcmp.lt.f32.partialorder %v3302, 0.0004427343
      %v3304 = vsel %vm3303, %v3301, %v3298
      %v3305 = vadd.f32 %v3158, 1.0
      %v3306 = vlog2.pop %v3305
      %v3307 = vmul.f32 %v3306, 0.6931472
      %v3308 = vmul.f32 -0.5, %v3158
      %v3309 = vadd.f32 %v3308, 1.0
      %v3310 = vmul.f32 %v3309, %v3158
      %v3311 = vand.u32 2147483647, %v3158
      %vm3312 = vcmp.lt.f32.partialorder %v3311, 0.0004427343
      %v3313 = vsel %vm3312, %v3310, %v3307
      %v3314 = vadd.f32 %v3160, 1.0
      %v3315 = vlog2.pop %v3314
      %v3316 = vmul.f32 %v3315, 0.6931472
      %v3317 = vmul.f32 -0.5, %v3160
      %v3318 = vadd.f32 %v3317, 1.0
      %v3319 = vmul.f32 %v3318, %v3160
      %v3320 = vand.u32 2147483647, %v3160
      %vm3321 = vcmp.lt.f32.partialorder %v3320, 0.0004427343
      %v3322 = vsel %vm3321, %v3319, %v3316
      %v3323 = vadd.f32 %v3162, 1.0
      %v3324 = vlog2.pop %v3323
      %v3325 = vmul.f32 %v3324, 0.6931472
      %v3326 = vmul.f32 -0.5, %v3162
      %v3327 = vadd.f32 %v3326, 1.0
      %v3328 = vmul.f32 %v3327, %v3162
      %v3329 = vand.u32 2147483647, %v3162
      %vm3330 = vcmp.lt.f32.partialorder %v3329, 0.0004427343
      %v3331 = vsel %vm3330, %v3328, %v3325
      %v3332 = vadd.f32 %v3164, 1.0
      %v3333 = vlog2.pop %v3332
      %v3334 = vmul.f32 %v3333, 0.6931472
      %v3335 = vmul.f32 -0.5, %v3164
      %v3336 = vadd.f32 %v3335, 1.0
      %v3337 = vmul.f32 %v3336, %v3164
      %v3338 = vand.u32 2147483647, %v3164
      %vm3339 = vcmp.lt.f32.partialorder %v3338, 0.0004427343
      %v3340 = vsel %vm3339, %v3337, %v3334
      %v3341 = vadd.f32 %v3166, 1.0
      %v3342 = vlog2.pop %v3341
      %v3343 = vmul.f32 %v3342, 0.6931472
      %v3344 = vmul.f32 -0.5, %v3166
      %v3345 = vadd.f32 %v3344, 1.0
      %v3346 = vmul.f32 %v3345, %v3166
      %v3347 = vand.u32 2147483647, %v3166
      %vm3348 = vcmp.lt.f32.partialorder %v3347, 0.0004427343
      %v3349 = vsel %vm3348, %v3346, %v3343
      %v3350 = vadd.f32 %v3168, 1.0
      %v3351 = vlog2.pop %v3350
      %v3352 = vmul.f32 %v3351, 0.6931472
      %v3353 = vmul.f32 -0.5, %v3168
      %v3354 = vadd.f32 %v3353, 1.0
      %v3355 = vmul.f32 %v3354, %v3168
      %v3356 = vand.u32 2147483647, %v3168
      %vm3357 = vcmp.lt.f32.partialorder %v3356, 0.0004427343
      %v3358 = vsel %vm3357, %v3355, %v3352
      %v3359 = vadd.f32 %v3170, 1.0
      %v3360 = vlog2.pop %v3359
      %v3361 = vmul.f32 %v3360, 0.6931472
      %v3362 = vmul.f32 -0.5, %v3170
      %v3363 = vadd.f32 %v3362, 1.0
      %v3364 = vmul.f32 %v3363, %v3170
      %v3365 = vand.u32 2147483647, %v3170
      %vm3366 = vcmp.lt.f32.partialorder %v3365, 0.0004427343
      %v3367 = vsel %vm3366, %v3364, %v3361
      %v3368 = vadd.f32 %v3172, 1.0
      %v3369 = vlog2.pop %v3368
      %v3370 = vmul.f32 %v3369, 0.6931472
      %v3371 = vmul.f32 -0.5, %v3172
      %v3372 = vadd.f32 %v3371, 1.0
      %v3373 = vmul.f32 %v3372, %v3172
      %v3374 = vand.u32 2147483647, %v3172
      %vm3375 = vcmp.lt.f32.partialorder %v3374, 0.0004427343
      %v3376 = vsel %vm3375, %v3373, %v3370
      %v3377 = vadd.f32 %v3174, 1.0
      %v3378 = vlog2.pop %v3377
      %v3379 = vmul.f32 %v3378, 0.6931472
      %v3380 = vmul.f32 -0.5, %v3174
      %v3381 = vadd.f32 %v3380, 1.0
      %v3382 = vmul.f32 %v3381, %v3174
      %v3383 = vand.u32 2147483647, %v3174
      %vm3384 = vcmp.lt.f32.partialorder %v3383, 0.0004427343
      %v3385 = vsel %vm3384, %v3382, %v3379
      %v3386 = vadd.f32 %v3176, 1.0
      %v3387 = vlog2.pop %v3386
      %v3388 = vmul.f32 %v3387, 0.6931472
      %v3389 = vmul.f32 -0.5, %v3176
      %v3390 = vadd.f32 %v3389, 1.0
      %v3391 = vmul.f32 %v3390, %v3176
      %v3392 = vand.u32 2147483647, %v3176
      %vm3393 = vcmp.lt.f32.partialorder %v3392, 0.0004427343
      %v3394 = vsel %vm3393, %v3391, %v3388
      %v3395 = vadd.f32 %v3178, 1.0
      %v3396 = vlog2.pop %v3395
      %v3397 = vmul.f32 %v3396, 0.6931472
      %v3398 = vmul.f32 -0.5, %v3178
      %v3399 = vadd.f32 %v3398, 1.0
      %v3400 = vmul.f32 %v3399, %v3178
      %v3401 = vand.u32 2147483647, %v3178
      %vm3402 = vcmp.lt.f32.partialorder %v3401, 0.0004427343
      %v3403 = vsel %vm3402, %v3400, %v3397
      %v3404 = vadd.f32 %v3180, 1.0
      %v3405 = vlog2.pop %v3404
      %v3406 = vmul.f32 %v3405, 0.6931472
      %v3407 = vmul.f32 -0.5, %v3180
      %v3408 = vadd.f32 %v3407, 1.0
      %v3409 = vmul.f32 %v3408, %v3180
      %v3410 = vand.u32 2147483647, %v3180
      %vm3411 = vcmp.lt.f32.partialorder %v3410, 0.0004427343
      %v3412 = vsel %vm3411, %v3409, %v3406
      %v3413 = vadd.f32 %v3182, 1.0
      %v3414 = vlog2.pop %v3413
      %v3415 = vmul.f32 %v3414, 0.6931472
      %v3416 = vmul.f32 -0.5, %v3182
      %v3417 = vadd.f32 %v3416, 1.0
      %v3418 = vmul.f32 %v3417, %v3182
      %v3419 = vand.u32 2147483647, %v3182
      %vm3420 = vcmp.lt.f32.partialorder %v3419, 0.0004427343
      %v3421 = vsel %vm3420, %v3418, %v3415
      %v3422 = vadd.f32 %v3184, 1.0
      %v3423 = vlog2.pop %v3422
      %v3424 = vmul.f32 %v3423, 0.6931472
      %v3425 = vmul.f32 -0.5, %v3184
      %v3426 = vadd.f32 %v3425, 1.0
      %v3427 = vmul.f32 %v3426, %v3184
      %v3428 = vand.u32 2147483647, %v3184
      %vm3429 = vcmp.lt.f32.partialorder %v3428, 0.0004427343
      %v3430 = vsel %vm3429, %v3427, %v3424
      %v3431 = vadd.f32 %v3186, 1.0
      %v3432 = vlog2.pop %v3431
      %v3433 = vmul.f32 %v3432, 0.6931472
      %v3434 = vmul.f32 -0.5, %v3186
      %v3435 = vadd.f32 %v3434, 1.0
      %v3436 = vmul.f32 %v3435, %v3186
      %v3437 = vand.u32 2147483647, %v3186
      %vm3438 = vcmp.lt.f32.partialorder %v3437, 0.0004427343
      %v3439 = vsel %vm3438, %v3436, %v3433
      %v3440 = vadd.f32 %v3188, 1.0
      %v3441 = vlog2.pop %v3440
      %v3442 = vmul.f32 %v3441, 0.6931472
      %v3443 = vmul.f32 -0.5, %v3188
      %v3444 = vadd.f32 %v3443, 1.0
      %v3445 = vmul.f32 %v3444, %v3188
      %v3446 = vand.u32 2147483647, %v3188
      %vm3447 = vcmp.lt.f32.partialorder %v3446, 0.0004427343
      %v3448 = vsel %vm3447, %v3445, %v3442
      %v3449 = vadd.f32 %v3190, 1.0
      %v3450 = vlog2.pop %v3449
      %v3451 = vmul.f32 %v3450, 0.6931472
      %v3452 = vmul.f32 -0.5, %v3190
      %v3453 = vadd.f32 %v3452, 1.0
      %v3454 = vmul.f32 %v3453, %v3190
      %v3455 = vand.u32 2147483647, %v3190
      %vm3456 = vcmp.lt.f32.partialorder %v3455, 0.0004427343
      %v3457 = vsel %vm3456, %v3454, %v3451
      %v3458 = vadd.f32 %v3192, 1.0
      %v3459 = vlog2.pop %v3458
      %v3460 = vmul.f32 %v3459, 0.6931472
      %v3461 = vmul.f32 -0.5, %v3192
      %v3462 = vadd.f32 %v3461, 1.0
      %v3463 = vmul.f32 %v3462, %v3192
      %v3464 = vand.u32 2147483647, %v3192
      %vm3465 = vcmp.lt.f32.partialorder %v3464, 0.0004427343
      %v3466 = vsel %vm3465, %v3463, %v3460
      %v3467 = vadd.f32 %v3194, 1.0
      %v3468 = vlog2.pop %v3467
      %v3469 = vmul.f32 %v3468, 0.6931472
      %v3470 = vmul.f32 -0.5, %v3194
      %v3471 = vadd.f32 %v3470, 1.0
      %v3472 = vmul.f32 %v3471, %v3194
      %v3473 = vand.u32 2147483647, %v3194
      %vm3474 = vcmp.lt.f32.partialorder %v3473, 0.0004427343
      %v3475 = vsel %vm3474, %v3472, %v3469
      %v3476 = vadd.f32 %v3196, 1.0
      %v3477 = vlog2.pop %v3476
      %v3478 = vmul.f32 %v3477, 0.6931472
      %v3479 = vmul.f32 -0.5, %v3196
      %v3480 = vadd.f32 %v3479, 1.0
      %v3481 = vmul.f32 %v3480, %v3196
      %v3482 = vand.u32 2147483647, %v3196
      %vm3483 = vcmp.lt.f32.partialorder %v3482, 0.0004427343
      %v3484 = vsel %vm3483, %v3481, %v3478
      %v3485 = vsel %vm3069, %v3037, %v3205
      %v3486 = vsel %vm3070, %v3038, %v3214
      %v3487 = vsel %vm3071, %v3039, %v3223
      %v3488 = vsel %vm3072, %v3040, %v3232
      %v3489 = vsel %vm3073, %v3041, %v3241
      %v3490 = vsel %vm3074, %v3042, %v3250
      %v3491 = vsel %vm3075, %v3043, %v3259
      %v3492 = vsel %vm3076, %v3044, %v3268
      %v3493 = vsel %vm3077, %v3045, %v3277
      %v3494 = vsel %vm3078, %v3046, %v3286
      %v3495 = vsel %vm3079, %v3047, %v3295
      %v3496 = vsel %vm3080, %v3048, %v3304
      %v3497 = vsel %vm3081, %v3049, %v3313
      %v3498 = vsel %vm3082, %v3050, %v3322
      %v3499 = vsel %vm3083, %v3051, %v3331
      %v3500 = vsel %vm3084, %v3052, %v3340
      %v3501 = vsel %vm3085, %v3053, %v3349
      %v3502 = vsel %vm3086, %v3054, %v3358
      %v3503 = vsel %vm3087, %v3055, %v3367
      %v3504 = vsel %vm3088, %v3056, %v3376
      %v3505 = vsel %vm3089, %v3057, %v3385
      %v3506 = vsel %vm3090, %v3058, %v3394
      %v3507 = vsel %vm3091, %v3059, %v3403
      %v3508 = vsel %vm3092, %v3060, %v3412
      %v3509 = vsel %vm3093, %v3061, %v3421
      %v3510 = vsel %vm3094, %v3062, %v3430
      %v3511 = vsel %vm3095, %v3063, %v3439
      %v3512 = vsel %vm3096, %v3064, %v3448
      %v3513 = vsel %vm3097, %v3065, %v3457
      %v3514 = vsel %vm3098, %v3066, %v3466
      %v3515 = vsel %vm3099, %v3067, %v3475
      %v3516 = vsel %vm3100, %v3068, %v3484
      %3517 = vst.msk [vmem:[#allocation3] sm:$0xff] %vm2816, %v2767
      %3518 = vst.msk [vmem:[#allocation3 + $0x8] sm:$0xff] %vm2816, %v2768
      %3519 = vst.msk [vmem:[#allocation3 + $0x10] sm:$0xff] %vm2816, %v2769
      %3520 = vst.msk [vmem:[#allocation3 + $0x18] sm:$0xff] %vm2816, %v2770
      %3521 = vst.msk [vmem:[#allocation3 + $0x20] sm:$0xff] %vm2816, %v2771
      %3522 = vst.msk [vmem:[#allocation3 + $0x28] sm:$0xff] %vm2816, %v2772
      %3523 = vst.msk [vmem:[#allocation3 + $0x30] sm:$0xff] %vm2816, %v2773
      %3524 = vst.msk [vmem:[#allocation3 + $0x38] sm:$0xff] %vm2816, %v2774
      %3525 = vst.msk [vmem:[#allocation3 + $0x40] sm:$0xff] %vm2816, %v2775
      %3526 = vst.msk [vmem:[#allocation3 + $0x48] sm:$0xff] %vm2816, %v2776
      %3527 = vst.msk [vmem:[#allocation3 + $0x50] sm:$0xff] %vm2816, %v2777
      %3528 = vst.msk [vmem:[#allocation3 + $0x58] sm:$0xff] %vm2816, %v2778
      %3529 = vst.msk [vmem:[#allocation3 + $0x60] sm:$0xff] %vm2816, %v2779
      %3530 = vst.msk [vmem:[#allocation3 + $0x68] sm:$0xff] %vm2816, %v2780
      %3531 = vst.msk [vmem:[#allocation3 + $0x70] sm:$0xff] %vm2816, %v2781
      %3532 = vst.msk [vmem:[#allocation3 + $0x78] sm:$0xff] %vm2816, %v2782
      %3533 = vst.msk [vmem:[#allocation3 + $0x80] sm:$0xff] %vm2816, %v2783
      %3534 = vst.msk [vmem:[#allocation3 + $0x88] sm:$0xff] %vm2816, %v2784
      %3535 = vst.msk [vmem:[#allocation3 + $0x90] sm:$0xff] %vm2816, %v2785
      %3536 = vst.msk [vmem:[#allocation3 + $0x98] sm:$0xff] %vm2816, %v2786
      %3537 = vst.msk [vmem:[#allocation3 + $0xa0] sm:$0xff] %vm2816, %v2787
      %3538 = vst.msk [vmem:[#allocation3 + $0xa8] sm:$0xff] %vm2816, %v2788
      %3539 = vst.msk [vmem:[#allocation3 + $0xb0] sm:$0xff] %vm2816, %v2789
      %3540 = vst.msk [vmem:[#allocation3 + $0xb8] sm:$0xff] %vm2816, %v2790
      %3541 = vst.msk [vmem:[#allocation3 + $0xc0] sm:$0xff] %vm2816, %v2791
      %3542 = vst.msk [vmem:[#allocation3 + $0xc8] sm:$0xff] %vm2816, %v2792
      %3543 = vst.msk [vmem:[#allocation3 + $0xd0] sm:$0xff] %vm2816, %v2793
      %3544 = vst.msk [vmem:[#allocation3 + $0xd8] sm:$0xff] %vm2816, %v2794
      %3545 = vst.msk [vmem:[#allocation3 + $0xe0] sm:$0xff] %vm2816, %v2795
      %3546 = vst.msk [vmem:[#allocation3 + $0xe8] sm:$0xff] %vm2816, %v2796
      %3547 = vst.msk [vmem:[#allocation3 + $0xf0] sm:$0xff] %vm2816, %v2797
      %3548 = vst.msk [vmem:[#allocation3 + $0xf8] sm:$0xff] %vm2816, %v2798
      %3549 = vst.msk [vmem:[#allocation2] sm:$0xff] %vm2816, %v3485
      %3550 = vst.msk [vmem:[#allocation2 + $0x8] sm:$0xff] %vm2816, %v3486
      %3551 = vst.msk [vmem:[#allocation2 + $0x10] sm:$0xff] %vm2816, %v3487
      %3552 = vst.msk [vmem:[#allocation2 + $0x18] sm:$0xff] %vm2816, %v3488
      %3553 = vst.msk [vmem:[#allocation2 + $0x20] sm:$0xff] %vm2816, %v3489
      %3554 = vst.msk [vmem:[#allocation2 + $0x28] sm:$0xff] %vm2816, %v3490
      %3555 = vst.msk [vmem:[#allocation2 + $0x30] sm:$0xff] %vm2816, %v3491
      %3556 = vst.msk [vmem:[#allocation2 + $0x38] sm:$0xff] %vm2816, %v3492
      %3557 = vst.msk [vmem:[#allocation2 + $0x40] sm:$0xff] %vm2816, %v3493
      %3558 = vst.msk [vmem:[#allocation2 + $0x48] sm:$0xff] %vm2816, %v3494
      %3559 = vst.msk [vmem:[#allocation2 + $0x50] sm:$0xff] %vm2816, %v3495
      %3560 = vst.msk [vmem:[#allocation2 + $0x58] sm:$0xff] %vm2816, %v3496
      %3561 = vst.msk [vmem:[#allocation2 + $0x60] sm:$0xff] %vm2816, %v3497
      %3562 = vst.msk [vmem:[#allocation2 + $0x68] sm:$0xff] %vm2816, %v3498
      %3563 = vst.msk [vmem:[#allocation2 + $0x70] sm:$0xff] %vm2816, %v3499
      %3564 = vst.msk [vmem:[#allocation2 + $0x78] sm:$0xff] %vm2816, %v3500
      %3565 = vst.msk [vmem:[#allocation2 + $0x80] sm:$0xff] %vm2816, %v3501
      %3566 = vst.msk [vmem:[#allocation2 + $0x88] sm:$0xff] %vm2816, %v3502
      %3567 = vst.msk [vmem:[#allocation2 + $0x90] sm:$0xff] %vm2816, %v3503
      %3568 = vst.msk [vmem:[#allocation2 + $0x98] sm:$0xff] %vm2816, %v3504
      %3569 = vst.msk [vmem:[#allocation2 + $0xa0] sm:$0xff] %vm2816, %v3505
      %3570 = vst.msk [vmem:[#allocation2 + $0xa8] sm:$0xff] %vm2816, %v3506
      %3571 = vst.msk [vmem:[#allocation2 + $0xb0] sm:$0xff] %vm2816, %v3507
      %3572 = vst.msk [vmem:[#allocation2 + $0xb8] sm:$0xff] %vm2816, %v3508
      %3573 = vst.msk [vmem:[#allocation2 + $0xc0] sm:$0xff] %vm2816, %v3509
      %3574 = vst.msk [vmem:[#allocation2 + $0xc8] sm:$0xff] %vm2816, %v3510
      %3575 = vst.msk [vmem:[#allocation2 + $0xd0] sm:$0xff] %vm2816, %v3511
      %3576 = vst.msk [vmem:[#allocation2 + $0xd8] sm:$0xff] %vm2816, %v3512
      %3577 = vst.msk [vmem:[#allocation2 + $0xe0] sm:$0xff] %vm2816, %v3513
      %3578 = vst.msk [vmem:[#allocation2 + $0xe8] sm:$0xff] %vm2816, %v3514
      %3579 = vst.msk [vmem:[#allocation2 + $0xf0] sm:$0xff] %vm2816, %v3515
      %3580 = vst.msk [vmem:[#allocation2 + $0xf8] sm:$0xff] %vm2816, %v3516
      %3613 = vrot.lane.b32.xlu0 %v2904, 120
      %v3614 = vpop.permute.xlu0 %3613
      %3615 = vrot.lane.b32.xlu0 %v2907, 120
      %v3616 = vpop.permute.xlu0 %3615
      %3617 = vrot.lane.b32.xlu0 %v2912, 120
      %v3618 = vpop.permute.xlu0 %3617
      %3619 = vrot.lane.b32.xlu0 %v2915, 120
      %v3620 = vpop.permute.xlu0 %3619
      %3621 = vrot.lane.b32.xlu0 %v2920, 120
      %v3622 = vpop.permute.xlu0 %3621
      %3623 = vrot.lane.b32.xlu0 %v2923, 120
      %v3624 = vpop.permute.xlu0 %3623
      %3625 = vrot.lane.b32.xlu0 %v2928, 120
      %v3626 = vpop.permute.xlu0 %3625
      %3627 = vrot.lane.b32.xlu0 %v2931, 120
      %v3628 = vpop.permute.xlu0 %3627
      %3629 = vrot.lane.b32.xlu0 %v2936, 120
      %v3630 = vpop.permute.xlu0 %3629
      %3631 = vrot.lane.b32.xlu0 %v2939, 120
      %v3632 = vpop.permute.xlu0 %3631
      %3633 = vrot.lane.b32.xlu0 %v2944, 120
      %v3634 = vpop.permute.xlu0 %3633
      %3635 = vrot.lane.b32.xlu0 %v2947, 120
      %v3636 = vpop.permute.xlu0 %3635
      %3637 = vrot.lane.b32.xlu0 %v2952, 120
      %v3638 = vpop.permute.xlu0 %3637
      %3639 = vrot.lane.b32.xlu0 %v2955, 120
      %v3640 = vpop.permute.xlu0 %3639
      %3641 = vrot.lane.b32.xlu0 %v2960, 120
      %v3642 = vpop.permute.xlu0 %3641
      %3643 = vrot.lane.b32.xlu0 %v2963, 120
      %v3644 = vpop.permute.xlu0 %3643
      %3645 = vrot.lane.b32.xlu0 %v2968, 120
      %v3646 = vpop.permute.xlu0 %3645
      %3647 = vrot.lane.b32.xlu0 %v2971, 120
      %v3648 = vpop.permute.xlu0 %3647
      %3649 = vrot.lane.b32.xlu0 %v2976, 120
      %v3650 = vpop.permute.xlu0 %3649
      %3651 = vrot.lane.b32.xlu0 %v2979, 120
      %v3652 = vpop.permute.xlu0 %3651
      %3653 = vrot.lane.b32.xlu0 %v2984, 120
      %v3654 = vpop.permute.xlu0 %3653
      %3655 = vrot.lane.b32.xlu0 %v2987, 120
      %v3656 = vpop.permute.xlu0 %3655
      %3657 = vrot.lane.b32.xlu0 %v2992, 120
      %v3658 = vpop.permute.xlu0 %3657
      %3659 = vrot.lane.b32.xlu0 %v2995, 120
      %v3660 = vpop.permute.xlu0 %3659
      %3661 = vrot.lane.b32.xlu0 %v3000, 120
      %v3662 = vpop.permute.xlu0 %3661
      %3663 = vrot.lane.b32.xlu0 %v3003, 120
      %v3664 = vpop.permute.xlu0 %3663
      %3665 = vrot.lane.b32.xlu0 %v3008, 120
      %v3666 = vpop.permute.xlu0 %3665
      %3667 = vrot.lane.b32.xlu0 %v3011, 120
      %v3668 = vpop.permute.xlu0 %3667
      %3669 = vrot.lane.b32.xlu0 %v3016, 120
      %v3670 = vpop.permute.xlu0 %3669
      %3671 = vrot.lane.b32.xlu0 %v3019, 120
      %v3672 = vpop.permute.xlu0 %3671
      %3673 = vrot.lane.b32.xlu0 %v3024, 120
      %v3674 = vpop.permute.xlu0 %3673
      %3675 = vrot.lane.b32.xlu0 %v3027, 120
      %v3676 = vpop.permute.xlu0 %3675
      %vm3709 = vcmask 130048
      %3710 = vst.msk [vmem:[#allocation5] sm:$0xff] %vm3709, %v3614
      %3711 = vst.msk [vmem:[#allocation5 + $0x8] sm:$0xff] %vm3709, %v3616
      %3712 = vst.msk [vmem:[#allocation5 + $0x10] sm:$0xff] %vm3709, %v3618
      %3713 = vst.msk [vmem:[#allocation5 + $0x18] sm:$0xff] %vm3709, %v3620
      %3714 = vst.msk [vmem:[#allocation5 + $0x20] sm:$0xff] %vm3709, %v3622
      %3715 = vst.msk [vmem:[#allocation5 + $0x28] sm:$0xff] %vm3709, %v3624
      %3716 = vst.msk [vmem:[#allocation5 + $0x30] sm:$0xff] %vm3709, %v3626
      %3717 = vst.msk [vmem:[#allocation5 + $0x38] sm:$0xff] %vm3709, %v3628
      %3718 = vst.msk [vmem:[#allocation5 + $0x40] sm:$0xff] %vm3709, %v3630
      %3719 = vst.msk [vmem:[#allocation5 + $0x48] sm:$0xff] %vm3709, %v3632
      %3720 = vst.msk [vmem:[#allocation5 + $0x50] sm:$0xff] %vm3709, %v3634
      %3721 = vst.msk [vmem:[#allocation5 + $0x58] sm:$0xff] %vm3709, %v3636
      %3722 = vst.msk [vmem:[#allocation5 + $0x60] sm:$0xff] %vm3709, %v3638
      %3723 = vst.msk [vmem:[#allocation5 + $0x68] sm:$0xff] %vm3709, %v3640
      %3724 = vst.msk [vmem:[#allocation5 + $0x70] sm:$0xff] %vm3709, %v3642
      %3725 = vst.msk [vmem:[#allocation5 + $0x78] sm:$0xff] %vm3709, %v3644
      %3726 = vst.msk [vmem:[#allocation5 + $0x80] sm:$0xff] %vm3709, %v3646
      %3727 = vst.msk [vmem:[#allocation5 + $0x88] sm:$0xff] %vm3709, %v3648
      %3728 = vst.msk [vmem:[#allocation5 + $0x90] sm:$0xff] %vm3709, %v3650
      %3729 = vst.msk [vmem:[#allocation5 + $0x98] sm:$0xff] %vm3709, %v3652
      %3730 = vst.msk [vmem:[#allocation5 + $0xa0] sm:$0xff] %vm3709, %v3654
      %3731 = vst.msk [vmem:[#allocation5 + $0xa8] sm:$0xff] %vm3709, %v3656
      %3732 = vst.msk [vmem:[#allocation5 + $0xb0] sm:$0xff] %vm3709, %v3658
      %3733 = vst.msk [vmem:[#allocation5 + $0xb8] sm:$0xff] %vm3709, %v3660
      %3734 = vst.msk [vmem:[#allocation5 + $0xc0] sm:$0xff] %vm3709, %v3662
      %3735 = vst.msk [vmem:[#allocation5 + $0xc8] sm:$0xff] %vm3709, %v3664
      %3736 = vst.msk [vmem:[#allocation5 + $0xd0] sm:$0xff] %vm3709, %v3666
      %3737 = vst.msk [vmem:[#allocation5 + $0xd8] sm:$0xff] %vm3709, %v3668
      %3738 = vst.msk [vmem:[#allocation5 + $0xe0] sm:$0xff] %vm3709, %v3670
      %3739 = vst.msk [vmem:[#allocation5 + $0xe8] sm:$0xff] %vm3709, %v3672
      %3740 = vst.msk [vmem:[#allocation5 + $0xf0] sm:$0xff] %vm3709, %v3674
      %3741 = vst.msk [vmem:[#allocation5 + $0xf8] sm:$0xff] %vm3709, %v3676
      %3742 = vrot.lane.b32.xlu0 %v2904, 104
      %v3743 = vpop.permute.xlu0 %3742
      %3744 = vrot.lane.b32.xlu0 %v2907, 104
      %v3745 = vpop.permute.xlu0 %3744
      %3746 = vrot.lane.b32.xlu0 %v2912, 104
      %v3747 = vpop.permute.xlu0 %3746
      %3748 = vrot.lane.b32.xlu0 %v2915, 104
      %v3749 = vpop.permute.xlu0 %3748
      %3750 = vrot.lane.b32.xlu0 %v2920, 104
      %v3751 = vpop.permute.xlu0 %3750
      %3752 = vrot.lane.b32.xlu0 %v2923, 104
      %v3753 = vpop.permute.xlu0 %3752
      %3754 = vrot.lane.b32.xlu0 %v2928, 104
      %v3755 = vpop.permute.xlu0 %3754
      %3756 = vrot.lane.b32.xlu0 %v2931, 104
      %v3757 = vpop.permute.xlu0 %3756
      %3758 = vrot.lane.b32.xlu0 %v2936, 104
      %v3759 = vpop.permute.xlu0 %3758
      %3760 = vrot.lane.b32.xlu0 %v2939, 104
      %v3761 = vpop.permute.xlu0 %3760
      %3762 = vrot.lane.b32.xlu0 %v2944, 104
      %v3763 = vpop.permute.xlu0 %3762
      %3764 = vrot.lane.b32.xlu0 %v2947, 104
      %v3765 = vpop.permute.xlu0 %3764
      %3766 = vrot.lane.b32.xlu0 %v2952, 104
      %v3767 = vpop.permute.xlu0 %3766
      %3768 = vrot.lane.b32.xlu0 %v2955, 104
      %v3769 = vpop.permute.xlu0 %3768
      %3770 = vrot.lane.b32.xlu0 %v2960, 104
      %v3771 = vpop.permute.xlu0 %3770
      %3772 = vrot.lane.b32.xlu0 %v2963, 104
      %v3773 = vpop.permute.xlu0 %3772
      %3774 = vrot.lane.b32.xlu0 %v2968, 104
      %v3775 = vpop.permute.xlu0 %3774
      %3776 = vrot.lane.b32.xlu0 %v2971, 104
      %v3777 = vpop.permute.xlu0 %3776
      %3778 = vrot.lane.b32.xlu0 %v2976, 104
      %v3779 = vpop.permute.xlu0 %3778
      %3780 = vrot.lane.b32.xlu0 %v2979, 104
      %v3781 = vpop.permute.xlu0 %3780
      %3782 = vrot.lane.b32.xlu0 %v2984, 104
      %v3783 = vpop.permute.xlu0 %3782
      %3784 = vrot.lane.b32.xlu0 %v2987, 104
      %v3785 = vpop.permute.xlu0 %3784
      %3786 = vrot.lane.b32.xlu0 %v2992, 104
      %v3787 = vpop.permute.xlu0 %3786
      %3788 = vrot.lane.b32.xlu0 %v2995, 104
      %v3789 = vpop.permute.xlu0 %3788
      %3790 = vrot.lane.b32.xlu0 %v3000, 104
      %v3791 = vpop.permute.xlu0 %3790
      %3792 = vrot.lane.b32.xlu0 %v3003, 104
      %v3793 = vpop.permute.xlu0 %3792
      %3794 = vrot.lane.b32.xlu0 %v3008, 104
      %v3795 = vpop.permute.xlu0 %3794
      %3796 = vrot.lane.b32.xlu0 %v3011, 104
      %v3797 = vpop.permute.xlu0 %3796
      %3798 = vrot.lane.b32.xlu0 %v3016, 104
      %v3799 = vpop.permute.xlu0 %3798
      %3800 = vrot.lane.b32.xlu0 %v3019, 104
      %v3801 = vpop.permute.xlu0 %3800
      %3802 = vrot.lane.b32.xlu0 %v3024, 104
      %v3803 = vpop.permute.xlu0 %3802
      %3804 = vrot.lane.b32.xlu0 %v3027, 104
      %v3805 = vpop.permute.xlu0 %3804
      %3838 = vst.msk [vmem:[#allocation6] sm:$0xff] %vm3709, %v3743
      %3839 = vst.msk [vmem:[#allocation6 + $0x8] sm:$0xff] %vm3709, %v3745
      %3840 = vst.msk [vmem:[#allocation6 + $0x10] sm:$0xff] %vm3709, %v3747
      %3841 = vst.msk [vmem:[#allocation6 + $0x18] sm:$0xff] %vm3709, %v3749
      %3842 = vst.msk [vmem:[#allocation6 + $0x20] sm:$0xff] %vm3709, %v3751
      %3843 = vst.msk [vmem:[#allocation6 + $0x28] sm:$0xff] %vm3709, %v3753
      %3844 = vst.msk [vmem:[#allocation6 + $0x30] sm:$0xff] %vm3709, %v3755
      %3845 = vst.msk [vmem:[#allocation6 + $0x38] sm:$0xff] %vm3709, %v3757
      %3846 = vst.msk [vmem:[#allocation6 + $0x40] sm:$0xff] %vm3709, %v3759
      %3847 = vst.msk [vmem:[#allocation6 + $0x48] sm:$0xff] %vm3709, %v3761
      %3848 = vst.msk [vmem:[#allocation6 + $0x50] sm:$0xff] %vm3709, %v3763
      %3849 = vst.msk [vmem:[#allocation6 + $0x58] sm:$0xff] %vm3709, %v3765
      %3850 = vst.msk [vmem:[#allocation6 + $0x60] sm:$0xff] %vm3709, %v3767
      %3851 = vst.msk [vmem:[#allocation6 + $0x68] sm:$0xff] %vm3709, %v3769
      %3852 = vst.msk [vmem:[#allocation6 + $0x70] sm:$0xff] %vm3709, %v3771
      %3853 = vst.msk [vmem:[#allocation6 + $0x78] sm:$0xff] %vm3709, %v3773
      %3854 = vst.msk [vmem:[#allocation6 + $0x80] sm:$0xff] %vm3709, %v3775
      %3855 = vst.msk [vmem:[#allocation6 + $0x88] sm:$0xff] %vm3709, %v3777
      %3856 = vst.msk [vmem:[#allocation6 + $0x90] sm:$0xff] %vm3709, %v3779
      %3857 = vst.msk [vmem:[#allocation6 + $0x98] sm:$0xff] %vm3709, %v3781
      %3858 = vst.msk [vmem:[#allocation6 + $0xa0] sm:$0xff] %vm3709, %v3783
      %3859 = vst.msk [vmem:[#allocation6 + $0xa8] sm:$0xff] %vm3709, %v3785
      %3860 = vst.msk [vmem:[#allocation6 + $0xb0] sm:$0xff] %vm3709, %v3787
      %3861 = vst.msk [vmem:[#allocation6 + $0xb8] sm:$0xff] %vm3709, %v3789
      %3862 = vst.msk [vmem:[#allocation6 + $0xc0] sm:$0xff] %vm3709, %v3791
      %3863 = vst.msk [vmem:[#allocation6 + $0xc8] sm:$0xff] %vm3709, %v3793
      %3864 = vst.msk [vmem:[#allocation6 + $0xd0] sm:$0xff] %vm3709, %v3795
      %3865 = vst.msk [vmem:[#allocation6 + $0xd8] sm:$0xff] %vm3709, %v3797
      %3866 = vst.msk [vmem:[#allocation6 + $0xe0] sm:$0xff] %vm3709, %v3799
      %3867 = vst.msk [vmem:[#allocation6 + $0xe8] sm:$0xff] %vm3709, %v3801
      %3868 = vst.msk [vmem:[#allocation6 + $0xf0] sm:$0xff] %vm3709, %v3803
      %3869 = vst.msk [vmem:[#allocation6 + $0xf8] sm:$0xff] %vm3709, %v3805
      %v3870 = vld [vmem:[%s702] sm:$0xff]
      %v3871 = vld [vmem:[%s702 + $0x8] sm:$0xff]
      %v3872 = vmul.f32 %v3870, 1.442695
      %v3873 = vpow.pop %v3872
      %v3874 = vmul.f32 %v3871, 1.442695
      %v3875 = vpow.pop %v3874
      %v3876 = vsub.f32 0.0, %v3873
      %v3877 = vsub.f32 0.0, %v3875
      loop: start=0, step=1, limit=32
      $region85: #{tpu_custom_call.1} parent=79 // loop_pre_header
        _
      $region86: #{tpu_custom_call.1} parent=79 // loop_header
        %s3879 = sphi 0, %s3883
        %p3880 = scmp.ge.s32.totalorder %s3879, 32
        %v3884 = vphi 0.0, %v4412
        %v3885 = vphi 0.0, %v4413
      $region87: #{tpu_custom_call.1} parent=79 // loop_header_branch
        %3882 = sbr.rel (%p3880) target = $region91
      $region88: #{tpu_custom_call.1} parent=79 // loop_body
        %s3886 = smul.u32 %s3879, 8
        %s3887 = scalar_lea.vmem [#allocation2], %s3886
        %v3888 = vld [vmem:[%s3887] sm:$0xff]
        %s3889 = scalar_lea.vmem [#allocation3], %s3886
        %v3890 = vld [vmem:[%s3889] sm:$0xff]
        %s3891 = scalar_lea.vmem [#allocation5], %s3886
        %v3892 = vld [vmem:[%s3891] sm:$0xff]
        %s3893 = scalar_lea.vmem [#allocation6], %s3886
        %v3894 = vld [vmem:[%s3893] sm:$0xff]
        %v3896 = vcombine.high %v3888, %v3888
        %v3898 = vunpack.c.l.s4 1966171168
        %v3899 = vunpack.c.0.s8 %v3898
        %v3900 = vlaneseq
        %v3901 = vshrl.u32 %v3900, 7
        %v3902 = vsub.s32 %v3899, %v3901
        %v3903 = vrot.slane %v3888, %v3902
        %v3905 = vunpack.c.l.s4 1966171168
        %v3906 = vunpack.c.0.s8 %v3905
        %v3907 = vlaneseq
        %v3908 = vshrl.u32 %v3907, 7
        %v3909 = vsub.s32 %v3906, %v3908
        %v3910 = vrot.slane %v3896, %v3909
        %v3911 = vcombine.high %v3903, %v3903
        %v3912 = vcombine.high %v3910, %v3910
        %v3914 = vunpack.c.l.s4 1966171168
        %v3915 = vunpack.c.0.s8 %v3914
        %v3916 = vlaneseq
        %v3917 = vshrl.u32 %v3916, 7
        %v3918 = vsub.s32 %v3915, %v3917
        %v3919 = vrot.slane %v3903, %v3918
        %v3921 = vunpack.c.l.s4 1966171168
        %v3922 = vunpack.c.0.s8 %v3921
        %v3923 = vlaneseq
        %v3924 = vshrl.u32 %v3923, 7
        %v3925 = vsub.s32 %v3922, %v3924
        %v3926 = vrot.slane %v3910, %v3925
        %v3928 = vunpack.c.l.s4 1966171168
        %v3929 = vunpack.c.0.s8 %v3928
        %v3930 = vlaneseq
        %v3931 = vshrl.u32 %v3930, 7
        %v3932 = vsub.s32 %v3929, %v3931
        %v3933 = vrot.slane %v3911, %v3932
        %v3935 = vunpack.c.l.s4 1966171168
        %v3936 = vunpack.c.0.s8 %v3935
        %v3937 = vlaneseq
        %v3938 = vshrl.u32 %v3937, 7
        %v3939 = vsub.s32 %v3936, %v3938
        %v3940 = vrot.slane %v3912, %v3939
        %v3941 = vcombine.high %v3919, %v3919
        %v3942 = vcombine.high %v3926, %v3926
        %v3943 = vcombine.high %v3933, %v3933
        %v3944 = vcombine.high %v3940, %v3940
        %v3945 = vlaneseq
        %v3946 = vshrl.u32 %v3945, 7
        %v3947 = vsub.s32 0, %v3946
        %v3948 = vrot.slane %v3919, %v3947
        %v3949 = vlaneseq
        %v3950 = vshrl.u32 %v3949, 7
        %v3951 = vsub.s32 0, %v3950
        %v3952 = vrot.slane %v3933, %v3951
        %v3953 = vlaneseq
        %v3954 = vshrl.u32 %v3953, 7
        %v3955 = vsub.s32 0, %v3954
        %v3956 = vrot.slane %v3941, %v3955
        %v3957 = vlaneseq
        %v3958 = vshrl.u32 %v3957, 7
        %v3959 = vsub.s32 0, %v3958
        %v3960 = vrot.slane %v3943, %v3959
        %v3961 = vlaneseq
        %v3962 = vshrl.u32 %v3961, 7
        %v3963 = vsub.s32 0, %v3962
        %v3964 = vrot.slane %v3926, %v3963
        %v3965 = vlaneseq
        %v3966 = vshrl.u32 %v3965, 7
        %v3967 = vsub.s32 0, %v3966
        %v3968 = vrot.slane %v3940, %v3967
        %v3969 = vlaneseq
        %v3970 = vshrl.u32 %v3969, 7
        %v3971 = vsub.s32 0, %v3970
        %v3972 = vrot.slane %v3942, %v3971
        %v3973 = vlaneseq
        %v3974 = vshrl.u32 %v3973, 7
        %v3975 = vsub.s32 0, %v3974
        %v3976 = vrot.slane %v3944, %v3975
        %v3985 = vmul.f32 %v3948, %v3876
        %v3986 = vmul.f32 %v3948, %v3877
        %v3987 = vmul.f32 %v3952, %v3876
        %v3988 = vmul.f32 %v3952, %v3877
        %v3989 = vmul.f32 %v3956, %v3876
        %v3990 = vmul.f32 %v3956, %v3877
        %v3991 = vmul.f32 %v3960, %v3876
        %v3992 = vmul.f32 %v3960, %v3877
        %v3993 = vmul.f32 %v3964, %v3876
        %v3994 = vmul.f32 %v3964, %v3877
        %v3995 = vmul.f32 %v3968, %v3876
        %v3996 = vmul.f32 %v3968, %v3877
        %v3997 = vmul.f32 %v3972, %v3876
        %v3998 = vmul.f32 %v3972, %v3877
        %v3999 = vmul.f32 %v3976, %v3876
        %v4000 = vmul.f32 %v3976, %v3877
        %v4001 = vmul.f32 %v3985, 1.442695
        %v4002 = vpow.pop %v4001
        %v4003 = vmul.f32 %v3986, 1.442695
        %v4004 = vpow.pop %v4003
        %v4005 = vmul.f32 %v3987, 1.442695
        %v4006 = vpow.pop %v4005
        %v4007 = vmul.f32 %v3988, 1.442695
        %v4008 = vpow.pop %v4007
        %v4009 = vmul.f32 %v3989, 1.442695
        %v4010 = vpow.pop %v4009
        %v4011 = vmul.f32 %v3990, 1.442695
        %v4012 = vpow.pop %v4011
        %v4013 = vmul.f32 %v3991, 1.442695
        %v4014 = vpow.pop %v4013
        %v4015 = vmul.f32 %v3992, 1.442695
        %v4016 = vpow.pop %v4015
        %v4017 = vmul.f32 %v3993, 1.442695
        %v4018 = vpow.pop %v4017
        %v4019 = vmul.f32 %v3994, 1.442695
        %v4020 = vpow.pop %v4019
        %v4021 = vmul.f32 %v3995, 1.442695
        %v4022 = vpow.pop %v4021
        %v4023 = vmul.f32 %v3996, 1.442695
        %v4024 = vpow.pop %v4023
        %v4025 = vmul.f32 %v3997, 1.442695
        %v4026 = vpow.pop %v4025
        %v4027 = vmul.f32 %v3998, 1.442695
        %v4028 = vpow.pop %v4027
        %v4029 = vmul.f32 %v3999, 1.442695
        %v4030 = vpow.pop %v4029
        %v4031 = vmul.f32 %v4000, 1.442695
        %v4032 = vpow.pop %v4031
        %v4033 = vmul.f32 %v3888, %v3890
        %v4035 = vcombine.high %v4033, %v4033
        %v4037 = vunpack.c.l.s4 1966171168
        %v4038 = vunpack.c.0.s8 %v4037
        %v4039 = vlaneseq
        %v4040 = vshrl.u32 %v4039, 7
        %v4041 = vsub.s32 %v4038, %v4040
        %v4042 = vrot.slane %v4033, %v4041
        %v4044 = vunpack.c.l.s4 1966171168
        %v4045 = vunpack.c.0.s8 %v4044
        %v4046 = vlaneseq
        %v4047 = vshrl.u32 %v4046, 7
        %v4048 = vsub.s32 %v4045, %v4047
        %v4049 = vrot.slane %v4035, %v4048
        %v4050 = vcombine.high %v4042, %v4042
        %v4051 = vcombine.high %v4049, %v4049
        %v4053 = vunpack.c.l.s4 1966171168
        %v4054 = vunpack.c.0.s8 %v4053
        %v4055 = vlaneseq
        %v4056 = vshrl.u32 %v4055, 7
        %v4057 = vsub.s32 %v4054, %v4056
        %v4058 = vrot.slane %v4042, %v4057
        %v4060 = vunpack.c.l.s4 1966171168
        %v4061 = vunpack.c.0.s8 %v4060
        %v4062 = vlaneseq
        %v4063 = vshrl.u32 %v4062, 7
        %v4064 = vsub.s32 %v4061, %v4063
        %v4065 = vrot.slane %v4049, %v4064
        %v4067 = vunpack.c.l.s4 1966171168
        %v4068 = vunpack.c.0.s8 %v4067
        %v4069 = vlaneseq
        %v4070 = vshrl.u32 %v4069, 7
        %v4071 = vsub.s32 %v4068, %v4070
        %v4072 = vrot.slane %v4050, %v4071
        %v4074 = vunpack.c.l.s4 1966171168
        %v4075 = vunpack.c.0.s8 %v4074
        %v4076 = vlaneseq
        %v4077 = vshrl.u32 %v4076, 7
        %v4078 = vsub.s32 %v4075, %v4077
        %v4079 = vrot.slane %v4051, %v4078
        %v4080 = vcombine.high %v4058, %v4058
        %v4081 = vcombine.high %v4065, %v4065
        %v4082 = vcombine.high %v4072, %v4072
        %v4083 = vcombine.high %v4079, %v4079
        %v4084 = vlaneseq
        %v4085 = vshrl.u32 %v4084, 7
        %v4086 = vsub.s32 0, %v4085
        %v4087 = vrot.slane %v3892, %v4086
        %4089 = vbcast.lane.b32.xlu0 %v4087, 256
        %v4090 = vpop.permute.xlu0 %4089
        %s4092 = sor.u32 256, 8
        %4093 = vbcast.lane.b32.xlu0 %v4087, %s4092
        %v4094 = vpop.permute.xlu0 %4093
        %v4095 = vlaneseq
        %v4096 = vshrl.u32 %v4095, 7
        %v4097 = vsub.s32 1, %v4096
        %v4098 = vrot.slane %v3892, %v4097
        %4100 = vbcast.lane.b32.xlu0 %v4098, 256
        %v4101 = vpop.permute.xlu0 %4100
        %s4103 = sor.u32 256, 8
        %4104 = vbcast.lane.b32.xlu0 %v4098, %s4103
        %v4105 = vpop.permute.xlu0 %4104
        %v4106 = vlaneseq
        %v4107 = vshrl.u32 %v4106, 7
        %v4108 = vsub.s32 2, %v4107
        %v4109 = vrot.slane %v3892, %v4108
        %4111 = vbcast.lane.b32.xlu0 %v4109, 256
        %v4112 = vpop.permute.xlu0 %4111
        %s4114 = sor.u32 256, 8
        %4115 = vbcast.lane.b32.xlu0 %v4109, %s4114
        %v4116 = vpop.permute.xlu0 %4115
        %v4117 = vlaneseq
        %v4118 = vshrl.u32 %v4117, 7
        %v4119 = vsub.s32 3, %v4118
        %v4120 = vrot.slane %v3892, %v4119
        %4122 = vbcast.lane.b32.xlu0 %v4120, 256
        %v4123 = vpop.permute.xlu0 %4122
        %s4125 = sor.u32 256, 8
        %4126 = vbcast.lane.b32.xlu0 %v4120, %s4125
        %v4127 = vpop.permute.xlu0 %4126
        %v4128 = vlaneseq
        %v4129 = vshrl.u32 %v4128, 7
        %v4130 = vsub.s32 4, %v4129
        %v4131 = vrot.slane %v3892, %v4130
        %4133 = vbcast.lane.b32.xlu0 %v4131, 256
        %v4134 = vpop.permute.xlu0 %4133
        %s4136 = sor.u32 256, 8
        %4137 = vbcast.lane.b32.xlu0 %v4131, %s4136
        %v4138 = vpop.permute.xlu0 %4137
        %v4139 = vlaneseq
        %v4140 = vshrl.u32 %v4139, 7
        %v4141 = vsub.s32 5, %v4140
        %v4142 = vrot.slane %v3892, %v4141
        %4144 = vbcast.lane.b32.xlu0 %v4142, 256
        %v4145 = vpop.permute.xlu0 %4144
        %s4147 = sor.u32 256, 8
        %4148 = vbcast.lane.b32.xlu0 %v4142, %s4147
        %v4149 = vpop.permute.xlu0 %4148
        %v4150 = vlaneseq
        %v4151 = vshrl.u32 %v4150, 7
        %v4152 = vsub.s32 6, %v4151
        %v4153 = vrot.slane %v3892, %v4152
        %4155 = vbcast.lane.b32.xlu0 %v4153, 256
        %v4156 = vpop.permute.xlu0 %4155
        %s4158 = sor.u32 256, 8
        %4159 = vbcast.lane.b32.xlu0 %v4153, %s4158
        %v4160 = vpop.permute.xlu0 %4159
        %v4161 = vlaneseq
        %v4162 = vshrl.u32 %v4161, 7
        %v4163 = vsub.s32 7, %v4162
        %v4164 = vrot.slane %v3892, %v4163
        %4166 = vbcast.lane.b32.xlu0 %v4164, 256
        %v4167 = vpop.permute.xlu0 %4166
        %s4169 = sor.u32 256, 8
        %4170 = vbcast.lane.b32.xlu0 %v4164, %s4169
        %v4171 = vpop.permute.xlu0 %4170
        %v4172 = vlaneseq
        %v4173 = vshrl.u32 %v4172, 7
        %v4174 = vsub.s32 0, %v4173
        %v4175 = vrot.slane %v4058, %v4174
        %v4176 = vlaneseq
        %v4177 = vshrl.u32 %v4176, 7
        %v4178 = vsub.s32 0, %v4177
        %v4179 = vrot.slane %v4072, %v4178
        %v4180 = vlaneseq
        %v4181 = vshrl.u32 %v4180, 7
        %v4182 = vsub.s32 0, %v4181
        %v4183 = vrot.slane %v4080, %v4182
        %v4184 = vlaneseq
        %v4185 = vshrl.u32 %v4184, 7
        %v4186 = vsub.s32 0, %v4185
        %v4187 = vrot.slane %v4082, %v4186
        %v4188 = vlaneseq
        %v4189 = vshrl.u32 %v4188, 7
        %v4190 = vsub.s32 0, %v4189
        %v4191 = vrot.slane %v4065, %v4190
        %v4192 = vlaneseq
        %v4193 = vshrl.u32 %v4192, 7
        %v4194 = vsub.s32 0, %v4193
        %v4195 = vrot.slane %v4079, %v4194
        %v4196 = vlaneseq
        %v4197 = vshrl.u32 %v4196, 7
        %v4198 = vsub.s32 0, %v4197
        %v4199 = vrot.slane %v4081, %v4198
        %v4200 = vlaneseq
        %v4201 = vshrl.u32 %v4200, 7
        %v4202 = vsub.s32 0, %v4201
        %v4203 = vrot.slane %v4083, %v4202
        %v4212 = vmul.f32 %v4175, %v4090
        %v4213 = vmul.f32 %v4175, %v4094
        %v4214 = vmul.f32 %v4179, %v4101
        %v4215 = vmul.f32 %v4179, %v4105
        %v4216 = vmul.f32 %v4183, %v4112
        %v4217 = vmul.f32 %v4183, %v4116
        %v4218 = vmul.f32 %v4187, %v4123
        %v4219 = vmul.f32 %v4187, %v4127
        %v4220 = vmul.f32 %v4191, %v4134
        %v4221 = vmul.f32 %v4191, %v4138
        %v4222 = vmul.f32 %v4195, %v4145
        %v4223 = vmul.f32 %v4195, %v4149
        %v4224 = vmul.f32 %v4199, %v4156
        %v4225 = vmul.f32 %v4199, %v4160
        %v4226 = vmul.f32 %v4203, %v4167
        %v4227 = vmul.f32 %v4203, %v4171
        %v4228 = vmul.f32 %v4002, %v3884
        %v4229 = vmul.f32 %v4004, %v3885
        %v4230 = vadd.f32 %v4228, %v4212
        %v4231 = vadd.f32 %v4229, %v4213
        %v4232 = vlaneseq
        %v4233 = vshrl.u32 %v4232, 7
        %v4234 = vsub.s32 0, %v4233
        %v4235 = vrot.slane %v3894, %v4234
        %4237 = vbcast.lane.b32.xlu0 %v4235, 256
        %v4238 = vpop.permute.xlu0 %4237
        %s4240 = sor.u32 256, 8
        %4241 = vbcast.lane.b32.xlu0 %v4235, %s4240
        %v4242 = vpop.permute.xlu0 %4241
        %v4243 = vmul.f32 %v4230, %v4238
        %v4244 = vmul.f32 %v4231, %v4242
        %v4245 = vsel %vm2816, %v4243, 0.0
        %v4246 = vsel %vm2816, %v4244, 0.0
        %v4247 = vadd.f32 %v4245, %v4246
        %v4248 = vrot.slane %v4247, 4
        %v4249 = vadd.f32 %v4247, %v4248
        %v4250 = vrot.slane %v4249, 2
        %v4251 = vadd.f32 %v4249, %v4250
        %v4252 = vrot.slane %v4251, 1
        %v4253 = vadd.f32 %v4251, %v4252
        %v4254 = vmul.f32 %v4006, %v4230
        %v4255 = vmul.f32 %v4008, %v4231
        %v4256 = vadd.f32 %v4254, %v4214
        %v4257 = vadd.f32 %v4255, %v4215
        %v4258 = vlaneseq
        %v4259 = vshrl.u32 %v4258, 7
        %v4260 = vsub.s32 1, %v4259
        %v4261 = vrot.slane %v3894, %v4260
        %4263 = vbcast.lane.b32.xlu0 %v4261, 256
        %v4264 = vpop.permute.xlu0 %4263
        %s4266 = sor.u32 256, 8
        %4267 = vbcast.lane.b32.xlu0 %v4261, %s4266
        %v4268 = vpop.permute.xlu0 %4267
        %v4269 = vmul.f32 %v4256, %v4264
        %v4270 = vmul.f32 %v4257, %v4268
        %v4271 = vsel %vm2816, %v4269, 0.0
        %v4272 = vsel %vm2816, %v4270, 0.0
        %v4273 = vadd.f32 %v4271, %v4272
        %v4274 = vrot.slane %v4273, 4
        %v4275 = vadd.f32 %v4273, %v4274
        %v4276 = vrot.slane %v4275, 2
        %v4277 = vadd.f32 %v4275, %v4276
        %v4278 = vrot.slane %v4277, 1
        %v4279 = vadd.f32 %v4277, %v4278
        %v4280 = vmul.f32 %v4010, %v4256
        %v4281 = vmul.f32 %v4012, %v4257
        %v4282 = vadd.f32 %v4280, %v4216
        %v4283 = vadd.f32 %v4281, %v4217
        %v4284 = vlaneseq
        %v4285 = vshrl.u32 %v4284, 7
        %v4286 = vsub.s32 2, %v4285
        %v4287 = vrot.slane %v3894, %v4286
        %4289 = vbcast.lane.b32.xlu0 %v4287, 256
        %v4290 = vpop.permute.xlu0 %4289
        %s4292 = sor.u32 256, 8
        %4293 = vbcast.lane.b32.xlu0 %v4287, %s4292
        %v4294 = vpop.permute.xlu0 %4293
        %v4295 = vmul.f32 %v4282, %v4290
        %v4296 = vmul.f32 %v4283, %v4294
        %v4297 = vsel %vm2816, %v4295, 0.0
        %v4298 = vsel %vm2816, %v4296, 0.0
        %v4299 = vadd.f32 %v4297, %v4298
        %v4300 = vrot.slane %v4299, 4
        %v4301 = vadd.f32 %v4299, %v4300
        %v4302 = vrot.slane %v4301, 2
        %v4303 = vadd.f32 %v4301, %v4302
        %v4304 = vrot.slane %v4303, 1
        %v4305 = vadd.f32 %v4303, %v4304
        %v4306 = vmul.f32 %v4014, %v4282
        %v4307 = vmul.f32 %v4016, %v4283
        %v4308 = vadd.f32 %v4306, %v4218
        %v4309 = vadd.f32 %v4307, %v4219
        %v4310 = vlaneseq
        %v4311 = vshrl.u32 %v4310, 7
        %v4312 = vsub.s32 3, %v4311
        %v4313 = vrot.slane %v3894, %v4312
        %4315 = vbcast.lane.b32.xlu0 %v4313, 256
        %v4316 = vpop.permute.xlu0 %4315
        %s4318 = sor.u32 256, 8
        %4319 = vbcast.lane.b32.xlu0 %v4313, %s4318
        %v4320 = vpop.permute.xlu0 %4319
        %v4321 = vmul.f32 %v4308, %v4316
        %v4322 = vmul.f32 %v4309, %v4320
        %v4323 = vsel %vm2816, %v4321, 0.0
        %v4324 = vsel %vm2816, %v4322, 0.0
        %v4325 = vadd.f32 %v4323, %v4324
        %v4326 = vrot.slane %v4325, 4
        %v4327 = vadd.f32 %v4325, %v4326
        %v4328 = vrot.slane %v4327, 2
        %v4329 = vadd.f32 %v4327, %v4328
        %v4330 = vrot.slane %v4329, 1
        %v4331 = vadd.f32 %v4329, %v4330
        %v4332 = vmul.f32 %v4018, %v4308
        %v4333 = vmul.f32 %v4020, %v4309
        %v4334 = vadd.f32 %v4332, %v4220
        %v4335 = vadd.f32 %v4333, %v4221
        %v4336 = vlaneseq
        %v4337 = vshrl.u32 %v4336, 7
        %v4338 = vsub.s32 4, %v4337
        %v4339 = vrot.slane %v3894, %v4338
        %4341 = vbcast.lane.b32.xlu0 %v4339, 256
        %v4342 = vpop.permute.xlu0 %4341
        %s4344 = sor.u32 256, 8
        %4345 = vbcast.lane.b32.xlu0 %v4339, %s4344
        %v4346 = vpop.permute.xlu0 %4345
        %v4347 = vmul.f32 %v4334, %v4342
        %v4348 = vmul.f32 %v4335, %v4346
        %v4349 = vsel %vm2816, %v4347, 0.0
        %v4350 = vsel %vm2816, %v4348, 0.0
        %v4351 = vadd.f32 %v4349, %v4350
        %v4352 = vrot.slane %v4351, 4
        %v4353 = vadd.f32 %v4351, %v4352
        %v4354 = vrot.slane %v4353, 2
        %v4355 = vadd.f32 %v4353, %v4354
        %v4356 = vrot.slane %v4355, 1
        %v4357 = vadd.f32 %v4355, %v4356
        %v4358 = vmul.f32 %v4022, %v4334
        %v4359 = vmul.f32 %v4024, %v4335
        %v4360 = vadd.f32 %v4358, %v4222
        %v4361 = vadd.f32 %v4359, %v4223
        %v4362 = vlaneseq
        %v4363 = vshrl.u32 %v4362, 7
        %v4364 = vsub.s32 5, %v4363
        %v4365 = vrot.slane %v3894, %v4364
        %4367 = vbcast.lane.b32.xlu0 %v4365, 256
        %v4368 = vpop.permute.xlu0 %4367
        %s4370 = sor.u32 256, 8
        %4371 = vbcast.lane.b32.xlu0 %v4365, %s4370
        %v4372 = vpop.permute.xlu0 %4371
        %v4373 = vmul.f32 %v4360, %v4368
        %v4374 = vmul.f32 %v4361, %v4372
        %v4375 = vsel %vm2816, %v4373, 0.0
        %v4376 = vsel %vm2816, %v4374, 0.0
        %v4377 = vadd.f32 %v4375, %v4376
        %v4378 = vrot.slane %v4377, 4
        %v4379 = vadd.f32 %v4377, %v4378
        %v4380 = vrot.slane %v4379, 2
        %v4381 = vadd.f32 %v4379, %v4380
        %v4382 = vrot.slane %v4381, 1
        %v4383 = vadd.f32 %v4381, %v4382
        %v4384 = vmul.f32 %v4026, %v4360
        %v4385 = vmul.f32 %v4028, %v4361
        %v4386 = vadd.f32 %v4384, %v4224
        %v4387 = vadd.f32 %v4385, %v4225
        %v4388 = vlaneseq
        %v4389 = vshrl.u32 %v4388, 7
        %v4390 = vsub.s32 6, %v4389
        %v4391 = vrot.slane %v3894, %v4390
        %4393 = vbcast.lane.b32.xlu0 %v4391, 256
        %v4394 = vpop.permute.xlu0 %4393
        %s4396 = sor.u32 256, 8
        %4397 = vbcast.lane.b32.xlu0 %v4391, %s4396
        %v4398 = vpop.permute.xlu0 %4397
        %v4399 = vmul.f32 %v4386, %v4394
        %v4400 = vmul.f32 %v4387, %v4398
        %v4401 = vsel %vm2816, %v4399, 0.0
        %v4402 = vsel %vm2816, %v4400, 0.0
        %v4403 = vadd.f32 %v4401, %v4402
        %v4404 = vrot.slane %v4403, 4
        %v4405 = vadd.f32 %v4403, %v4404
        %v4406 = vrot.slane %v4405, 2
        %v4407 = vadd.f32 %v4405, %v4406
        %v4408 = vrot.slane %v4407, 1
        %v4409 = vadd.f32 %v4407, %v4408
        %v4410 = vmul.f32 %v4030, %v4386
        %v4411 = vmul.f32 %v4032, %v4387
        %v4412 = vadd.f32 %v4410, %v4226
        %v4413 = vadd.f32 %v4411, %v4227
        %v4414 = vlaneseq
        %v4415 = vshrl.u32 %v4414, 7
        %v4416 = vsub.s32 7, %v4415
        %v4417 = vrot.slane %v3894, %v4416
        %4419 = vbcast.lane.b32.xlu0 %v4417, 256
        %v4420 = vpop.permute.xlu0 %4419
        %s4422 = sor.u32 256, 8
        %4423 = vbcast.lane.b32.xlu0 %v4417, %s4422
        %v4424 = vpop.permute.xlu0 %4423
        %v4425 = vmul.f32 %v4412, %v4420
        %v4426 = vmul.f32 %v4413, %v4424
        %v4427 = vsel %vm2816, %v4425, 0.0
        %v4428 = vsel %vm2816, %v4426, 0.0
        %v4429 = vadd.f32 %v4427, %v4428
        %v4430 = vrot.slane %v4429, 4
        %v4431 = vadd.f32 %v4429, %v4430
        %v4432 = vrot.slane %v4431, 2
        %v4433 = vadd.f32 %v4431, %v4432
        %v4434 = vrot.slane %v4433, 1
        %v4435 = vadd.f32 %v4433, %v4434
        %v4436 = vsel %vm1592, %v4253, %v4279
        %v4437 = vsel %vm1394, %v4436, %v4305
        %vm4438 = vcmask 1042432
        %v4439 = vsel %vm4438, %v4437, %v4331
        %v4440 = vsel %vm2865, %v4439, %v4357
        %vm4441 = vcmask 1044480
        %v4442 = vsel %vm4441, %v4440, %v4383
        %vm4443 = vcmask 1045504
        %v4444 = vsel %vm4443, %v4442, %v4409
        %v4445 = vsel %vm1823, %v4444, %v4435
        %s4446 = scalar_lea.vmem [#allocation4], %s3886
        %4447 = vst.msk [vmem:[%s4446] sm:$0xff] %vm2816, %v4445
      $region89: #{tpu_custom_call.1} parent=79 // loop_footer
        %s3883 = sadd.s32 1, %s3879
      $region90: #{tpu_custom_call.1} parent=79 // loop_footer_branch
        %3878 = sbr.rel target = $region86
      $region91: #{tpu_custom_call.1} parent=79 // loop_exit
        _
      %v4448 = vld [vmem:[#allocation4] sm:$0xff]
      %v4449 = vld [vmem:[#allocation4 + $0x8] sm:$0xff]
      %v4450 = vld [vmem:[#allocation4 + $0x10] sm:$0xff]
      %v4451 = vld [vmem:[#allocation4 + $0x18] sm:$0xff]
      %v4452 = vld [vmem:[#allocation4 + $0x20] sm:$0xff]
      %v4453 = vld [vmem:[#allocation4 + $0x28] sm:$0xff]
      %v4454 = vld [vmem:[#allocation4 + $0x30] sm:$0xff]
      %v4455 = vld [vmem:[#allocation4 + $0x38] sm:$0xff]
      %v4456 = vld [vmem:[#allocation4 + $0x40] sm:$0xff]
      %v4457 = vld [vmem:[#allocation4 + $0x48] sm:$0xff]
      %v4458 = vld [vmem:[#allocation4 + $0x50] sm:$0xff]
      %v4459 = vld [vmem:[#allocation4 + $0x58] sm:$0xff]
      %v4460 = vld [vmem:[#allocation4 + $0x60] sm:$0xff]
      %v4461 = vld [vmem:[#allocation4 + $0x68] sm:$0xff]
      %v4462 = vld [vmem:[#allocation4 + $0x70] sm:$0xff]
      %v4463 = vld [vmem:[#allocation4 + $0x78] sm:$0xff]
      %v4464 = vld [vmem:[#allocation4 + $0x80] sm:$0xff]
      %v4465 = vld [vmem:[#allocation4 + $0x88] sm:$0xff]
      %v4466 = vld [vmem:[#allocation4 + $0x90] sm:$0xff]
      %v4467 = vld [vmem:[#allocation4 + $0x98] sm:$0xff]
      %v4468 = vld [vmem:[#allocation4 + $0xa0] sm:$0xff]
      %v4469 = vld [vmem:[#allocation4 + $0xa8] sm:$0xff]
      %v4470 = vld [vmem:[#allocation4 + $0xb0] sm:$0xff]
      %v4471 = vld [vmem:[#allocation4 + $0xb8] sm:$0xff]
      %v4472 = vld [vmem:[#allocation4 + $0xc0] sm:$0xff]
      %v4473 = vld [vmem:[#allocation4 + $0xc8] sm:$0xff]
      %v4474 = vld [vmem:[#allocation4 + $0xd0] sm:$0xff]
      %v4475 = vld [vmem:[#allocation4 + $0xd8] sm:$0xff]
      %v4476 = vld [vmem:[#allocation4 + $0xe0] sm:$0xff]
      %v4477 = vld [vmem:[#allocation4 + $0xe8] sm:$0xff]
      %v4478 = vld [vmem:[#allocation4 + $0xf0] sm:$0xff]
      %v4479 = vld [vmem:[#allocation4 + $0xf8] sm:$0xff]
      %v4480 = vld [vmem:[#allocation3] sm:$0xff]
      %v4481 = vld [vmem:[#allocation3 + $0x8] sm:$0xff]
      %v4482 = vld [vmem:[#allocation3 + $0x10] sm:$0xff]
      %v4483 = vld [vmem:[#allocation3 + $0x18] sm:$0xff]
      %v4484 = vld [vmem:[#allocation3 + $0x20] sm:$0xff]
      %v4485 = vld [vmem:[#allocation3 + $0x28] sm:$0xff]
      %v4486 = vld [vmem:[#allocation3 + $0x30] sm:$0xff]
      %v4487 = vld [vmem:[#allocation3 + $0x38] sm:$0xff]
      %v4488 = vld [vmem:[#allocation3 + $0x40] sm:$0xff]
      %v4489 = vld [vmem:[#allocation3 + $0x48] sm:$0xff]
      %v4490 = vld [vmem:[#allocation3 + $0x50] sm:$0xff]
      %v4491 = vld [vmem:[#allocation3 + $0x58] sm:$0xff]
      %v4492 = vld [vmem:[#allocation3 + $0x60] sm:$0xff]
      %v4493 = vld [vmem:[#allocation3 + $0x68] sm:$0xff]
      %v4494 = vld [vmem:[#allocation3 + $0x70] sm:$0xff]
      %v4495 = vld [vmem:[#allocation3 + $0x78] sm:$0xff]
      %v4496 = vld [vmem:[#allocation3 + $0x80] sm:$0xff]
      %v4497 = vld [vmem:[#allocation3 + $0x88] sm:$0xff]
      %v4498 = vld [vmem:[#allocation3 + $0x90] sm:$0xff]
      %v4499 = vld [vmem:[#allocation3 + $0x98] sm:$0xff]
      %v4500 = vld [vmem:[#allocation3 + $0xa0] sm:$0xff]
      %v4501 = vld [vmem:[#allocation3 + $0xa8] sm:$0xff]
      %v4502 = vld [vmem:[#allocation3 + $0xb0] sm:$0xff]
      %v4503 = vld [vmem:[#allocation3 + $0xb8] sm:$0xff]
      %v4504 = vld [vmem:[#allocation3 + $0xc0] sm:$0xff]
      %v4505 = vld [vmem:[#allocation3 + $0xc8] sm:$0xff]
      %v4506 = vld [vmem:[#allocation3 + $0xd0] sm:$0xff]
      %v4507 = vld [vmem:[#allocation3 + $0xd8] sm:$0xff]
      %v4508 = vld [vmem:[#allocation3 + $0xe0] sm:$0xff]
      %v4509 = vld [vmem:[#allocation3 + $0xe8] sm:$0xff]
      %v4510 = vld [vmem:[#allocation3 + $0xf0] sm:$0xff]
      %v4511 = vld [vmem:[#allocation3 + $0xf8] sm:$0xff]
      %v4512 = vld [vmem:[%s705] sm:$0x1]
      %v4514 = vlaneseq
      %v4515 = vshrl.u32 %v4514, 7
      %v4516 = vsub.s32 0, %v4515
      %v4517 = vrot.slane %v4512, %v4516
      %v4519 = vmul.f32 %v4480, %v4517
      %v4520 = vmul.f32 %v4481, %v4517
      %v4521 = vmul.f32 %v4482, %v4517
      %v4522 = vmul.f32 %v4483, %v4517
      %v4523 = vmul.f32 %v4484, %v4517
      %v4524 = vmul.f32 %v4485, %v4517
      %v4525 = vmul.f32 %v4486, %v4517
      %v4526 = vmul.f32 %v4487, %v4517
      %v4527 = vmul.f32 %v4488, %v4517
      %v4528 = vmul.f32 %v4489, %v4517
      %v4529 = vmul.f32 %v4490, %v4517
      %v4530 = vmul.f32 %v4491, %v4517
      %v4531 = vmul.f32 %v4492, %v4517
      %v4532 = vmul.f32 %v4493, %v4517
      %v4533 = vmul.f32 %v4494, %v4517
      %v4534 = vmul.f32 %v4495, %v4517
      %v4535 = vmul.f32 %v4496, %v4517
      %v4536 = vmul.f32 %v4497, %v4517
      %v4537 = vmul.f32 %v4498, %v4517
      %v4538 = vmul.f32 %v4499, %v4517
      %v4539 = vmul.f32 %v4500, %v4517
      %v4540 = vmul.f32 %v4501, %v4517
      %v4541 = vmul.f32 %v4502, %v4517
      %v4542 = vmul.f32 %v4503, %v4517
      %v4543 = vmul.f32 %v4504, %v4517
      %v4544 = vmul.f32 %v4505, %v4517
      %v4545 = vmul.f32 %v4506, %v4517
      %v4546 = vmul.f32 %v4507, %v4517
      %v4547 = vmul.f32 %v4508, %v4517
      %v4548 = vmul.f32 %v4509, %v4517
      %v4549 = vmul.f32 %v4510, %v4517
      %v4550 = vmul.f32 %v4511, %v4517
      %v4551 = vadd.f32 %v4448, %v4519
      %v4552 = vadd.f32 %v4449, %v4520
      %v4553 = vadd.f32 %v4450, %v4521
      %v4554 = vadd.f32 %v4451, %v4522
      %v4555 = vadd.f32 %v4452, %v4523
      %v4556 = vadd.f32 %v4453, %v4524
      %v4557 = vadd.f32 %v4454, %v4525
      %v4558 = vadd.f32 %v4455, %v4526
      %v4559 = vadd.f32 %v4456, %v4527
      %v4560 = vadd.f32 %v4457, %v4528
      %v4561 = vadd.f32 %v4458, %v4529
      %v4562 = vadd.f32 %v4459, %v4530
      %v4563 = vadd.f32 %v4460, %v4531
      %v4564 = vadd.f32 %v4461, %v4532
      %v4565 = vadd.f32 %v4462, %v4533
      %v4566 = vadd.f32 %v4463, %v4534
      %v4567 = vadd.f32 %v4464, %v4535
      %v4568 = vadd.f32 %v4465, %v4536
      %v4569 = vadd.f32 %v4466, %v4537
      %v4570 = vadd.f32 %v4467, %v4538
      %v4571 = vadd.f32 %v4468, %v4539
      %v4572 = vadd.f32 %v4469, %v4540
      %v4573 = vadd.f32 %v4470, %v4541
      %v4574 = vadd.f32 %v4471, %v4542
      %v4575 = vadd.f32 %v4472, %v4543
      %v4576 = vadd.f32 %v4473, %v4544
      %v4577 = vadd.f32 %v4474, %v4545
      %v4578 = vadd.f32 %v4475, %v4546
      %v4579 = vadd.f32 %v4476, %v4547
      %v4580 = vadd.f32 %v4477, %v4548
      %v4581 = vadd.f32 %v4478, %v4549
      %v4582 = vadd.f32 %v4479, %v4550
      %v4583 = vsel %vm2816, %v4551, 0.0
      %4584 = vadd.xlane.f32.xlu0 %v4583
      %v4585 = vpop.xlane.xlu0 %4584
      %v4586 = vsel %vm2816, %v4552, 0.0
      %4587 = vadd.xlane.f32.xlu0 %v4586
      %v4588 = vpop.xlane.xlu0 %4587
      %v4589 = vsel %vm2816, %v4553, 0.0
      %4590 = vadd.xlane.f32.xlu0 %v4589
      %v4591 = vpop.xlane.xlu0 %4590
      %v4592 = vsel %vm2816, %v4554, 0.0
      %4593 = vadd.xlane.f32.xlu0 %v4592
      %v4594 = vpop.xlane.xlu0 %4593
      %v4595 = vsel %vm2816, %v4555, 0.0
      %4596 = vadd.xlane.f32.xlu0 %v4595
      %v4597 = vpop.xlane.xlu0 %4596
      %v4598 = vsel %vm2816, %v4556, 0.0
      %4599 = vadd.xlane.f32.xlu0 %v4598
      %v4600 = vpop.xlane.xlu0 %4599
      %v4601 = vsel %vm2816, %v4557, 0.0
      %4602 = vadd.xlane.f32.xlu0 %v4601
      %v4603 = vpop.xlane.xlu0 %4602
      %v4604 = vsel %vm2816, %v4558, 0.0
      %4605 = vadd.xlane.f32.xlu0 %v4604
      %v4606 = vpop.xlane.xlu0 %4605
      %v4607 = vsel %vm2816, %v4559, 0.0
      %4608 = vadd.xlane.f32.xlu0 %v4607
      %v4609 = vpop.xlane.xlu0 %4608
      %v4610 = vsel %vm2816, %v4560, 0.0
      %4611 = vadd.xlane.f32.xlu0 %v4610
      %v4612 = vpop.xlane.xlu0 %4611
      %v4613 = vsel %vm2816, %v4561, 0.0
      %4614 = vadd.xlane.f32.xlu0 %v4613
      %v4615 = vpop.xlane.xlu0 %4614
      %v4616 = vsel %vm2816, %v4562, 0.0
      %4617 = vadd.xlane.f32.xlu0 %v4616
      %v4618 = vpop.xlane.xlu0 %4617
      %v4619 = vsel %vm2816, %v4563, 0.0
      %4620 = vadd.xlane.f32.xlu0 %v4619
      %v4621 = vpop.xlane.xlu0 %4620
      %v4622 = vsel %vm2816, %v4564, 0.0
      %4623 = vadd.xlane.f32.xlu0 %v4622
      %v4624 = vpop.xlane.xlu0 %4623
      %v4625 = vsel %vm2816, %v4565, 0.0
      %4626 = vadd.xlane.f32.xlu0 %v4625
      %v4627 = vpop.xlane.xlu0 %4626
      %v4628 = vsel %vm2816, %v4566, 0.0
      %4629 = vadd.xlane.f32.xlu0 %v4628
      %v4630 = vpop.xlane.xlu0 %4629
      %v4631 = vsel %vm2816, %v4567, 0.0
      %4632 = vadd.xlane.f32.xlu0 %v4631
      %v4633 = vpop.xlane.xlu0 %4632
      %v4634 = vsel %vm2816, %v4568, 0.0
      %4635 = vadd.xlane.f32.xlu0 %v4634
      %v4636 = vpop.xlane.xlu0 %4635
      %v4637 = vsel %vm2816, %v4569, 0.0
      %4638 = vadd.xlane.f32.xlu0 %v4637
      %v4639 = vpop.xlane.xlu0 %4638
      %v4640 = vsel %vm2816, %v4570, 0.0
      %4641 = vadd.xlane.f32.xlu0 %v4640
      %v4642 = vpop.xlane.xlu0 %4641
      %v4643 = vsel %vm2816, %v4571, 0.0
      %4644 = vadd.xlane.f32.xlu0 %v4643
      %v4645 = vpop.xlane.xlu0 %4644
      %v4646 = vsel %vm2816, %v4572, 0.0
      %4647 = vadd.xlane.f32.xlu0 %v4646
      %v4648 = vpop.xlane.xlu0 %4647
      %v4649 = vsel %vm2816, %v4573, 0.0
      %4650 = vadd.xlane.f32.xlu0 %v4649
      %v4651 = vpop.xlane.xlu0 %4650
      %v4652 = vsel %vm2816, %v4574, 0.0
      %4653 = vadd.xlane.f32.xlu0 %v4652
      %v4654 = vpop.xlane.xlu0 %4653
      %v4655 = vsel %vm2816, %v4575, 0.0
      %4656 = vadd.xlane.f32.xlu0 %v4655
      %v4657 = vpop.xlane.xlu0 %4656
      %v4658 = vsel %vm2816, %v4576, 0.0
      %4659 = vadd.xlane.f32.xlu0 %v4658
      %v4660 = vpop.xlane.xlu0 %4659
      %v4661 = vsel %vm2816, %v4577, 0.0
      %4662 = vadd.xlane.f32.xlu0 %v4661
      %v4663 = vpop.xlane.xlu0 %4662
      %v4664 = vsel %vm2816, %v4578, 0.0
      %4665 = vadd.xlane.f32.xlu0 %v4664
      %v4666 = vpop.xlane.xlu0 %4665
      %v4667 = vsel %vm2816, %v4579, 0.0
      %4668 = vadd.xlane.f32.xlu0 %v4667
      %v4669 = vpop.xlane.xlu0 %4668
      %v4670 = vsel %vm2816, %v4580, 0.0
      %4671 = vadd.xlane.f32.xlu0 %v4670
      %v4672 = vpop.xlane.xlu0 %4671
      %v4673 = vsel %vm2816, %v4581, 0.0
      %4674 = vadd.xlane.f32.xlu0 %v4673
      %v4675 = vpop.xlane.xlu0 %4674
      %v4676 = vsel %vm2816, %v4582, 0.0
      %4677 = vadd.xlane.f32.xlu0 %v4676
      %v4678 = vpop.xlane.xlu0 %4677
      %v4679 = vrcp.pop 8.0
      %v4680 = vmul.f32 %v4585, %v4679
      %v4681 = vmul.f32 %v4588, %v4679
      %v4682 = vmul.f32 %v4591, %v4679
      %v4683 = vmul.f32 %v4594, %v4679
      %v4684 = vmul.f32 %v4597, %v4679
      %v4685 = vmul.f32 %v4600, %v4679
      %v4686 = vmul.f32 %v4603, %v4679
      %v4687 = vmul.f32 %v4606, %v4679
      %v4688 = vmul.f32 %v4609, %v4679
      %v4689 = vmul.f32 %v4612, %v4679
      %v4690 = vmul.f32 %v4615, %v4679
      %v4691 = vmul.f32 %v4618, %v4679
      %v4692 = vmul.f32 %v4621, %v4679
      %v4693 = vmul.f32 %v4624, %v4679
      %v4694 = vmul.f32 %v4627, %v4679
      %v4695 = vmul.f32 %v4630, %v4679
      %v4696 = vmul.f32 %v4633, %v4679
      %v4697 = vmul.f32 %v4636, %v4679
      %v4698 = vmul.f32 %v4639, %v4679
      %v4699 = vmul.f32 %v4642, %v4679
      %v4700 = vmul.f32 %v4645, %v4679
      %v4701 = vmul.f32 %v4648, %v4679
      %v4702 = vmul.f32 %v4651, %v4679
      %v4703 = vmul.f32 %v4654, %v4679
      %v4704 = vmul.f32 %v4657, %v4679
      %v4705 = vmul.f32 %v4660, %v4679
      %v4706 = vmul.f32 %v4663, %v4679
      %v4707 = vmul.f32 %v4666, %v4679
      %v4708 = vmul.f32 %v4669, %v4679
      %v4709 = vmul.f32 %v4672, %v4679
      %v4710 = vmul.f32 %v4675, %v4679
      %v4711 = vmul.f32 %v4678, %v4679
      %v4712 = vsub.f32 %v4551, %v4680
      %v4713 = vsub.f32 %v4552, %v4681
      %v4714 = vsub.f32 %v4553, %v4682
      %v4715 = vsub.f32 %v4554, %v4683
      %v4716 = vsub.f32 %v4555, %v4684
      %v4717 = vsub.f32 %v4556, %v4685
      %v4718 = vsub.f32 %v4557, %v4686
      %v4719 = vsub.f32 %v4558, %v4687
      %v4720 = vsub.f32 %v4559, %v4688
      %v4721 = vsub.f32 %v4560, %v4689
      %v4722 = vsub.f32 %v4561, %v4690
      %v4723 = vsub.f32 %v4562, %v4691
      %v4724 = vsub.f32 %v4563, %v4692
      %v4725 = vsub.f32 %v4564, %v4693
      %v4726 = vsub.f32 %v4565, %v4694
      %v4727 = vsub.f32 %v4566, %v4695
      %v4728 = vsub.f32 %v4567, %v4696
      %v4729 = vsub.f32 %v4568, %v4697
      %v4730 = vsub.f32 %v4569, %v4698
      %v4731 = vsub.f32 %v4570, %v4699
      %v4732 = vsub.f32 %v4571, %v4700
      %v4733 = vsub.f32 %v4572, %v4701
      %v4734 = vsub.f32 %v4573, %v4702
      %v4735 = vsub.f32 %v4574, %v4703
      %v4736 = vsub.f32 %v4575, %v4704
      %v4737 = vsub.f32 %v4576, %v4705
      %v4738 = vsub.f32 %v4577, %v4706
      %v4739 = vsub.f32 %v4578, %v4707
      %v4740 = vsub.f32 %v4579, %v4708
      %v4741 = vsub.f32 %v4580, %v4709
      %v4742 = vsub.f32 %v4581, %v4710
      %v4743 = vsub.f32 %v4582, %v4711
      %v4744 = vmul.f32 %v4712, %v4712
      %v4745 = vmul.f32 %v4713, %v4713
      %v4746 = vmul.f32 %v4714, %v4714
      %v4747 = vmul.f32 %v4715, %v4715
      %v4748 = vmul.f32 %v4716, %v4716
      %v4749 = vmul.f32 %v4717, %v4717
      %v4750 = vmul.f32 %v4718, %v4718
      %v4751 = vmul.f32 %v4719, %v4719
      %v4752 = vmul.f32 %v4720, %v4720
      %v4753 = vmul.f32 %v4721, %v4721
      %v4754 = vmul.f32 %v4722, %v4722
      %v4755 = vmul.f32 %v4723, %v4723
      %v4756 = vmul.f32 %v4724, %v4724
      %v4757 = vmul.f32 %v4725, %v4725
      %v4758 = vmul.f32 %v4726, %v4726
      %v4759 = vmul.f32 %v4727, %v4727
      %v4760 = vmul.f32 %v4728, %v4728
      %v4761 = vmul.f32 %v4729, %v4729
      %v4762 = vmul.f32 %v4730, %v4730
      %v4763 = vmul.f32 %v4731, %v4731
      %v4764 = vmul.f32 %v4732, %v4732
      %v4765 = vmul.f32 %v4733, %v4733
      %v4766 = vmul.f32 %v4734, %v4734
      %v4767 = vmul.f32 %v4735, %v4735
      %v4768 = vmul.f32 %v4736, %v4736
      %v4769 = vmul.f32 %v4737, %v4737
      %v4770 = vmul.f32 %v4738, %v4738
      %v4771 = vmul.f32 %v4739, %v4739
      %v4772 = vmul.f32 %v4740, %v4740
      %v4773 = vmul.f32 %v4741, %v4741
      %v4774 = vmul.f32 %v4742, %v4742
      %v4775 = vmul.f32 %v4743, %v4743
      %v4776 = vsel %vm2816, %v4744, 0.0
      %4777 = vadd.xlane.f32.xlu0 %v4776
      %v4778 = vpop.xlane.xlu0 %4777
      %v4779 = vsel %vm2816, %v4745, 0.0
      %4780 = vadd.xlane.f32.xlu0 %v4779
      %v4781 = vpop.xlane.xlu0 %4780
      %v4782 = vsel %vm2816, %v4746, 0.0
      %4783 = vadd.xlane.f32.xlu0 %v4782
      %v4784 = vpop.xlane.xlu0 %4783
      %v4785 = vsel %vm2816, %v4747, 0.0
      %4786 = vadd.xlane.f32.xlu0 %v4785
      %v4787 = vpop.xlane.xlu0 %4786
      %v4788 = vsel %vm2816, %v4748, 0.0
      %4789 = vadd.xlane.f32.xlu0 %v4788
      %v4790 = vpop.xlane.xlu0 %4789
      %v4791 = vsel %vm2816, %v4749, 0.0
      %4792 = vadd.xlane.f32.xlu0 %v4791
      %v4793 = vpop.xlane.xlu0 %4792
      %v4794 = vsel %vm2816, %v4750, 0.0
      %4795 = vadd.xlane.f32.xlu0 %v4794
      %v4796 = vpop.xlane.xlu0 %4795
      %v4797 = vsel %vm2816, %v4751, 0.0
      %4798 = vadd.xlane.f32.xlu0 %v4797
      %v4799 = vpop.xlane.xlu0 %4798
      %v4800 = vsel %vm2816, %v4752, 0.0
      %4801 = vadd.xlane.f32.xlu0 %v4800
      %v4802 = vpop.xlane.xlu0 %4801
      %v4803 = vsel %vm2816, %v4753, 0.0
      %4804 = vadd.xlane.f32.xlu0 %v4803
      %v4805 = vpop.xlane.xlu0 %4804
      %v4806 = vsel %vm2816, %v4754, 0.0
      %4807 = vadd.xlane.f32.xlu0 %v4806
      %v4808 = vpop.xlane.xlu0 %4807
      %v4809 = vsel %vm2816, %v4755, 0.0
      %4810 = vadd.xlane.f32.xlu0 %v4809
      %v4811 = vpop.xlane.xlu0 %4810
      %v4812 = vsel %vm2816, %v4756, 0.0
      %4813 = vadd.xlane.f32.xlu0 %v4812
      %v4814 = vpop.xlane.xlu0 %4813
      %v4815 = vsel %vm2816, %v4757, 0.0
      %4816 = vadd.xlane.f32.xlu0 %v4815
      %v4817 = vpop.xlane.xlu0 %4816
      %v4818 = vsel %vm2816, %v4758, 0.0
      %4819 = vadd.xlane.f32.xlu0 %v4818
      %v4820 = vpop.xlane.xlu0 %4819
      %v4821 = vsel %vm2816, %v4759, 0.0
      %4822 = vadd.xlane.f32.xlu0 %v4821
      %v4823 = vpop.xlane.xlu0 %4822
      %v4824 = vsel %vm2816, %v4760, 0.0
      %4825 = vadd.xlane.f32.xlu0 %v4824
      %v4826 = vpop.xlane.xlu0 %4825
      %v4827 = vsel %vm2816, %v4761, 0.0
      %4828 = vadd.xlane.f32.xlu0 %v4827
      %v4829 = vpop.xlane.xlu0 %4828
      %v4830 = vsel %vm2816, %v4762, 0.0
      %4831 = vadd.xlane.f32.xlu0 %v4830
      %v4832 = vpop.xlane.xlu0 %4831
      %v4833 = vsel %vm2816, %v4763, 0.0
      %4834 = vadd.xlane.f32.xlu0 %v4833
      %v4835 = vpop.xlane.xlu0 %4834
      %v4836 = vsel %vm2816, %v4764, 0.0
      %4837 = vadd.xlane.f32.xlu0 %v4836
      %v4838 = vpop.xlane.xlu0 %4837
      %v4839 = vsel %vm2816, %v4765, 0.0
      %4840 = vadd.xlane.f32.xlu0 %v4839
      %v4841 = vpop.xlane.xlu0 %4840
      %v4842 = vsel %vm2816, %v4766, 0.0
      %4843 = vadd.xlane.f32.xlu0 %v4842
      %v4844 = vpop.xlane.xlu0 %4843
      %v4845 = vsel %vm2816, %v4767, 0.0
      %4846 = vadd.xlane.f32.xlu0 %v4845
      %v4847 = vpop.xlane.xlu0 %4846
      %v4848 = vsel %vm2816, %v4768, 0.0
      %4849 = vadd.xlane.f32.xlu0 %v4848
      %v4850 = vpop.xlane.xlu0 %4849
      %v4851 = vsel %vm2816, %v4769, 0.0
      %4852 = vadd.xlane.f32.xlu0 %v4851
      %v4853 = vpop.xlane.xlu0 %4852
      %v4854 = vsel %vm2816, %v4770, 0.0
      %4855 = vadd.xlane.f32.xlu0 %v4854
      %v4856 = vpop.xlane.xlu0 %4855
      %v4857 = vsel %vm2816, %v4771, 0.0
      %4858 = vadd.xlane.f32.xlu0 %v4857
      %v4859 = vpop.xlane.xlu0 %4858
      %v4860 = vsel %vm2816, %v4772, 0.0
      %4861 = vadd.xlane.f32.xlu0 %v4860
      %v4862 = vpop.xlane.xlu0 %4861
      %v4863 = vsel %vm2816, %v4773, 0.0
      %4864 = vadd.xlane.f32.xlu0 %v4863
      %v4865 = vpop.xlane.xlu0 %4864
      %v4866 = vsel %vm2816, %v4774, 0.0
      %4867 = vadd.xlane.f32.xlu0 %v4866
      %v4868 = vpop.xlane.xlu0 %4867
      %v4869 = vsel %vm2816, %v4775, 0.0
      %4870 = vadd.xlane.f32.xlu0 %v4869
      %v4871 = vpop.xlane.xlu0 %4870
      %v4872 = vmul.f32 %v4778, %v4679
      %v4873 = vmul.f32 %v4781, %v4679
      %v4874 = vmul.f32 %v4784, %v4679
      %v4875 = vmul.f32 %v4787, %v4679
      %v4876 = vmul.f32 %v4790, %v4679
      %v4877 = vmul.f32 %v4793, %v4679
      %v4878 = vmul.f32 %v4796, %v4679
      %v4879 = vmul.f32 %v4799, %v4679
      %v4880 = vmul.f32 %v4802, %v4679
      %v4881 = vmul.f32 %v4805, %v4679
      %v4882 = vmul.f32 %v4808, %v4679
      %v4883 = vmul.f32 %v4811, %v4679
      %v4884 = vmul.f32 %v4814, %v4679
      %v4885 = vmul.f32 %v4817, %v4679
      %v4886 = vmul.f32 %v4820, %v4679
      %v4887 = vmul.f32 %v4823, %v4679
      %v4888 = vmul.f32 %v4826, %v4679
      %v4889 = vmul.f32 %v4829, %v4679
      %v4890 = vmul.f32 %v4832, %v4679
      %v4891 = vmul.f32 %v4835, %v4679
      %v4892 = vmul.f32 %v4838, %v4679
      %v4893 = vmul.f32 %v4841, %v4679
      %v4894 = vmul.f32 %v4844, %v4679
      %v4895 = vmul.f32 %v4847, %v4679
      %v4896 = vmul.f32 %v4850, %v4679
      %v4897 = vmul.f32 %v4853, %v4679
      %v4898 = vmul.f32 %v4856, %v4679
      %v4899 = vmul.f32 %v4859, %v4679
      %v4900 = vmul.f32 %v4862, %v4679
      %v4901 = vmul.f32 %v4865, %v4679
      %v4902 = vmul.f32 %v4868, %v4679
      %v4903 = vmul.f32 %v4871, %v4679
      %v4904 = vadd.f32 %v4872, 1e-05
      %v4905 = vadd.f32 %v4873, 1e-05
      %v4906 = vadd.f32 %v4874, 1e-05
      %v4907 = vadd.f32 %v4875, 1e-05
      %v4908 = vadd.f32 %v4876, 1e-05
      %v4909 = vadd.f32 %v4877, 1e-05
      %v4910 = vadd.f32 %v4878, 1e-05
      %v4911 = vadd.f32 %v4879, 1e-05
      %v4912 = vadd.f32 %v4880, 1e-05
      %v4913 = vadd.f32 %v4881, 1e-05
      %v4914 = vadd.f32 %v4882, 1e-05
      %v4915 = vadd.f32 %v4883, 1e-05
      %v4916 = vadd.f32 %v4884, 1e-05
      %v4917 = vadd.f32 %v4885, 1e-05
      %v4918 = vadd.f32 %v4886, 1e-05
      %v4919 = vadd.f32 %v4887, 1e-05
      %v4920 = vadd.f32 %v4888, 1e-05
      %v4921 = vadd.f32 %v4889, 1e-05
      %v4922 = vadd.f32 %v4890, 1e-05
      %v4923 = vadd.f32 %v4891, 1e-05
      %v4924 = vadd.f32 %v4892, 1e-05
      %v4925 = vadd.f32 %v4893, 1e-05
      %v4926 = vadd.f32 %v4894, 1e-05
      %v4927 = vadd.f32 %v4895, 1e-05
      %v4928 = vadd.f32 %v4896, 1e-05
      %v4929 = vadd.f32 %v4897, 1e-05
      %v4930 = vadd.f32 %v4898, 1e-05
      %v4931 = vadd.f32 %v4899, 1e-05
      %v4932 = vadd.f32 %v4900, 1e-05
      %v4933 = vadd.f32 %v4901, 1e-05
      %v4934 = vadd.f32 %v4902, 1e-05
      %v4935 = vadd.f32 %v4903, 1e-05
      %v4936 = vrsqrt.pop %v4904
      %v4937 = vrsqrt.pop %v4905
      %v4938 = vrsqrt.pop %v4906
      %v4939 = vrsqrt.pop %v4907
      %v4940 = vrsqrt.pop %v4908
      %v4941 = vrsqrt.pop %v4909
      %v4942 = vrsqrt.pop %v4910
      %v4943 = vrsqrt.pop %v4911
      %v4944 = vrsqrt.pop %v4912
      %v4945 = vrsqrt.pop %v4913
      %v4946 = vrsqrt.pop %v4914
      %v4947 = vrsqrt.pop %v4915
      %v4948 = vrsqrt.pop %v4916
      %v4949 = vrsqrt.pop %v4917
      %v4950 = vrsqrt.pop %v4918
      %v4951 = vrsqrt.pop %v4919
      %v4952 = vrsqrt.pop %v4920
      %v4953 = vrsqrt.pop %v4921
      %v4954 = vrsqrt.pop %v4922
      %v4955 = vrsqrt.pop %v4923
      %v4956 = vrsqrt.pop %v4924
      %v4957 = vrsqrt.pop %v4925
      %v4958 = vrsqrt.pop %v4926
      %v4959 = vrsqrt.pop %v4927
      %v4960 = vrsqrt.pop %v4928
      %v4961 = vrsqrt.pop %v4929
      %v4962 = vrsqrt.pop %v4930
      %v4963 = vrsqrt.pop %v4931
      %v4964 = vrsqrt.pop %v4932
      %v4965 = vrsqrt.pop %v4933
      %v4966 = vrsqrt.pop %v4934
      %v4967 = vrsqrt.pop %v4935
      %v4968 = vmul.f32 %v4712, %v4936
      %v4969 = vmul.f32 %v4713, %v4937
      %v4970 = vmul.f32 %v4714, %v4938
      %v4971 = vmul.f32 %v4715, %v4939
      %v4972 = vmul.f32 %v4716, %v4940
      %v4973 = vmul.f32 %v4717, %v4941
      %v4974 = vmul.f32 %v4718, %v4942
      %v4975 = vmul.f32 %v4719, %v4943
      %v4976 = vmul.f32 %v4720, %v4944
      %v4977 = vmul.f32 %v4721, %v4945
      %v4978 = vmul.f32 %v4722, %v4946
      %v4979 = vmul.f32 %v4723, %v4947
      %v4980 = vmul.f32 %v4724, %v4948
      %v4981 = vmul.f32 %v4725, %v4949
      %v4982 = vmul.f32 %v4726, %v4950
      %v4983 = vmul.f32 %v4727, %v4951
      %v4984 = vmul.f32 %v4728, %v4952
      %v4985 = vmul.f32 %v4729, %v4953
      %v4986 = vmul.f32 %v4730, %v4954
      %v4987 = vmul.f32 %v4731, %v4955
      %v4988 = vmul.f32 %v4732, %v4956
      %v4989 = vmul.f32 %v4733, %v4957
      %v4990 = vmul.f32 %v4734, %v4958
      %v4991 = vmul.f32 %v4735, %v4959
      %v4992 = vmul.f32 %v4736, %v4960
      %v4993 = vmul.f32 %v4737, %v4961
      %v4994 = vmul.f32 %v4738, %v4962
      %v4995 = vmul.f32 %v4739, %v4963
      %v4996 = vmul.f32 %v4740, %v4964
      %v4997 = vmul.f32 %v4741, %v4965
      %v4998 = vmul.f32 %v4742, %v4966
      %v4999 = vmul.f32 %v4743, %v4967
      %v5000 = vld [vmem:[%s708] sm:$0x1]
      %v5002 = vlaneseq
      %v5003 = vshrl.u32 %v5002, 7
      %v5004 = vsub.s32 0, %v5003
      %v5005 = vrot.slane %v5000, %v5004
      %v5007 = vmul.f32 %v4968, %v5005
      %v5008 = vmul.f32 %v4969, %v5005
      %v5009 = vmul.f32 %v4970, %v5005
      %v5010 = vmul.f32 %v4971, %v5005
      %v5011 = vmul.f32 %v4972, %v5005
      %v5012 = vmul.f32 %v4973, %v5005
      %v5013 = vmul.f32 %v4974, %v5005
      %v5014 = vmul.f32 %v4975, %v5005
      %v5015 = vmul.f32 %v4976, %v5005
      %v5016 = vmul.f32 %v4977, %v5005
      %v5017 = vmul.f32 %v4978, %v5005
      %v5018 = vmul.f32 %v4979, %v5005
      %v5019 = vmul.f32 %v4980, %v5005
      %v5020 = vmul.f32 %v4981, %v5005
      %v5021 = vmul.f32 %v4982, %v5005
      %v5022 = vmul.f32 %v4983, %v5005
      %v5023 = vmul.f32 %v4984, %v5005
      %v5024 = vmul.f32 %v4985, %v5005
      %v5025 = vmul.f32 %v4986, %v5005
      %v5026 = vmul.f32 %v4987, %v5005
      %v5027 = vmul.f32 %v4988, %v5005
      %v5028 = vmul.f32 %v4989, %v5005
      %v5029 = vmul.f32 %v4990, %v5005
      %v5030 = vmul.f32 %v4991, %v5005
      %v5031 = vmul.f32 %v4992, %v5005
      %v5032 = vmul.f32 %v4993, %v5005
      %v5033 = vmul.f32 %v4994, %v5005
      %v5034 = vmul.f32 %v4995, %v5005
      %v5035 = vmul.f32 %v4996, %v5005
      %v5036 = vmul.f32 %v4997, %v5005
      %v5037 = vmul.f32 %v4998, %v5005
      %v5038 = vmul.f32 %v4999, %v5005
      %v5039 = vld [vmem:[%s711] sm:$0x1]
      %v5041 = vlaneseq
      %v5042 = vshrl.u32 %v5041, 7
      %v5043 = vsub.s32 0, %v5042
      %v5044 = vrot.slane %v5039, %v5043
      %v5046 = vadd.f32 %v5007, %v5044
      %v5047 = vadd.f32 %v5008, %v5044
      %v5048 = vadd.f32 %v5009, %v5044
      %v5049 = vadd.f32 %v5010, %v5044
      %v5050 = vadd.f32 %v5011, %v5044
      %v5051 = vadd.f32 %v5012, %v5044
      %v5052 = vadd.f32 %v5013, %v5044
      %v5053 = vadd.f32 %v5014, %v5044
      %v5054 = vadd.f32 %v5015, %v5044
      %v5055 = vadd.f32 %v5016, %v5044
      %v5056 = vadd.f32 %v5017, %v5044
      %v5057 = vadd.f32 %v5018, %v5044
      %v5058 = vadd.f32 %v5019, %v5044
      %v5059 = vadd.f32 %v5020, %v5044
      %v5060 = vadd.f32 %v5021, %v5044
      %v5061 = vadd.f32 %v5022, %v5044
      %v5062 = vadd.f32 %v5023, %v5044
      %v5063 = vadd.f32 %v5024, %v5044
      %v5064 = vadd.f32 %v5025, %v5044
      %v5065 = vadd.f32 %v5026, %v5044
      %v5066 = vadd.f32 %v5027, %v5044
      %v5067 = vadd.f32 %v5028, %v5044
      %v5068 = vadd.f32 %v5029, %v5044
      %v5069 = vadd.f32 %v5030, %v5044
      %v5070 = vadd.f32 %v5031, %v5044
      %v5071 = vadd.f32 %v5032, %v5044
      %v5072 = vadd.f32 %v5033, %v5044
      %v5073 = vadd.f32 %v5034, %v5044
      %v5074 = vadd.f32 %v5035, %v5044
      %v5075 = vadd.f32 %v5036, %v5044
      %v5076 = vadd.f32 %v5037, %v5044
      %v5077 = vadd.f32 %v5038, %v5044
      %v5078 = vand.u32 2147483647, %v1433
      %v5079 = vand.u32 2147483647, %v1436
      %v5080 = vand.u32 2147483647, %v1441
      %v5081 = vand.u32 2147483647, %v1444
      %v5082 = vand.u32 2147483647, %v1449
      %v5083 = vand.u32 2147483647, %v1452
      %v5084 = vand.u32 2147483647, %v1457
      %v5085 = vand.u32 2147483647, %v1460
      %v5086 = vand.u32 2147483647, %v1465
      %v5087 = vand.u32 2147483647, %v1468
      %v5088 = vand.u32 2147483647, %v1473
      %v5089 = vand.u32 2147483647, %v1476
      %v5090 = vand.u32 2147483647, %v1481
      %v5091 = vand.u32 2147483647, %v1484
      %v5092 = vand.u32 2147483647, %v1489
      %v5093 = vand.u32 2147483647, %v1492
      %v5094 = vand.u32 2147483647, %v1497
      %v5095 = vand.u32 2147483647, %v1500
      %v5096 = vand.u32 2147483647, %v1505
      %v5097 = vand.u32 2147483647, %v1508
      %v5098 = vand.u32 2147483647, %v1513
      %v5099 = vand.u32 2147483647, %v1516
      %v5100 = vand.u32 2147483647, %v1521
      %v5101 = vand.u32 2147483647, %v1524
      %v5102 = vand.u32 2147483647, %v1529
      %v5103 = vand.u32 2147483647, %v1532
      %v5104 = vand.u32 2147483647, %v1537
      %v5105 = vand.u32 2147483647, %v1540
      %v5106 = vand.u32 2147483647, %v1545
      %v5107 = vand.u32 2147483647, %v1548
      %v5108 = vand.u32 2147483647, %v1553
      %v5109 = vand.u32 2147483647, %v1556
      %v5110 = vsub.f32 0.0, %v5078
      %v5111 = vsub.f32 0.0, %v5079
      %v5112 = vsub.f32 0.0, %v5080
      %v5113 = vsub.f32 0.0, %v5081
      %v5114 = vsub.f32 0.0, %v5082
      %v5115 = vsub.f32 0.0, %v5083
      %v5116 = vsub.f32 0.0, %v5084
      %v5117 = vsub.f32 0.0, %v5085
      %v5118 = vsub.f32 0.0, %v5086
      %v5119 = vsub.f32 0.0, %v5087
      %v5120 = vsub.f32 0.0, %v5088
      %v5121 = vsub.f32 0.0, %v5089
      %v5122 = vsub.f32 0.0, %v5090
      %v5123 = vsub.f32 0.0, %v5091
      %v5124 = vsub.f32 0.0, %v5092
      %v5125 = vsub.f32 0.0, %v5093
      %v5126 = vsub.f32 0.0, %v5094
      %v5127 = vsub.f32 0.0, %v5095
      %v5128 = vsub.f32 0.0, %v5096
      %v5129 = vsub.f32 0.0, %v5097
      %v5130 = vsub.f32 0.0, %v5098
      %v5131 = vsub.f32 0.0, %v5099
      %v5132 = vsub.f32 0.0, %v5100
      %v5133 = vsub.f32 0.0, %v5101
      %v5134 = vsub.f32 0.0, %v5102
      %v5135 = vsub.f32 0.0, %v5103
      %v5136 = vsub.f32 0.0, %v5104
      %v5137 = vsub.f32 0.0, %v5105
      %v5138 = vsub.f32 0.0, %v5106
      %v5139 = vsub.f32 0.0, %v5107
      %v5140 = vsub.f32 0.0, %v5108
      %v5141 = vsub.f32 0.0, %v5109
      %v5142 = vmul.f32 %v5110, 1.442695
      %v5143 = vpow.pop %v5142
      %v5144 = vmul.f32 %v5111, 1.442695
      %v5145 = vpow.pop %v5144
      %v5146 = vmul.f32 %v5112, 1.442695
      %v5147 = vpow.pop %v5146
      %v5148 = vmul.f32 %v5113, 1.442695
      %v5149 = vpow.pop %v5148
      %v5150 = vmul.f32 %v5114, 1.442695
      %v5151 = vpow.pop %v5150
      %v5152 = vmul.f32 %v5115, 1.442695
      %v5153 = vpow.pop %v5152
      %v5154 = vmul.f32 %v5116, 1.442695
      %v5155 = vpow.pop %v5154
      %v5156 = vmul.f32 %v5117, 1.442695
      %v5157 = vpow.pop %v5156
      %v5158 = vmul.f32 %v5118, 1.442695
      %v5159 = vpow.pop %v5158
      %v5160 = vmul.f32 %v5119, 1.442695
      %v5161 = vpow.pop %v5160
      %v5162 = vmul.f32 %v5120, 1.442695
      %v5163 = vpow.pop %v5162
      %v5164 = vmul.f32 %v5121, 1.442695
      %v5165 = vpow.pop %v5164
      %v5166 = vmul.f32 %v5122, 1.442695
      %v5167 = vpow.pop %v5166
      %v5168 = vmul.f32 %v5123, 1.442695
      %v5169 = vpow.pop %v5168
      %v5170 = vmul.f32 %v5124, 1.442695
      %v5171 = vpow.pop %v5170
      %v5172 = vmul.f32 %v5125, 1.442695
      %v5173 = vpow.pop %v5172
      %v5174 = vmul.f32 %v5126, 1.442695
      %v5175 = vpow.pop %v5174
      %v5176 = vmul.f32 %v5127, 1.442695
      %v5177 = vpow.pop %v5176
      %v5178 = vmul.f32 %v5128, 1.442695
      %v5179 = vpow.pop %v5178
      %v5180 = vmul.f32 %v5129, 1.442695
      %v5181 = vpow.pop %v5180
      %v5182 = vmul.f32 %v5130, 1.442695
      %v5183 = vpow.pop %v5182
      %v5184 = vmul.f32 %v5131, 1.442695
      %v5185 = vpow.pop %v5184
      %v5186 = vmul.f32 %v5132, 1.442695
      %v5187 = vpow.pop %v5186
      %v5188 = vmul.f32 %v5133, 1.442695
      %v5189 = vpow.pop %v5188
      %v5190 = vmul.f32 %v5134, 1.442695
      %v5191 = vpow.pop %v5190
      %v5192 = vmul.f32 %v5135, 1.442695
      %v5193 = vpow.pop %v5192
      %v5194 = vmul.f32 %v5136, 1.442695
      %v5195 = vpow.pop %v5194
      %v5196 = vmul.f32 %v5137, 1.442695
      %v5197 = vpow.pop %v5196
      %v5198 = vmul.f32 %v5138, 1.442695
      %v5199 = vpow.pop %v5198
      %v5200 = vmul.f32 %v5139, 1.442695
      %v5201 = vpow.pop %v5200
      %v5202 = vmul.f32 %v5140, 1.442695
      %v5203 = vpow.pop %v5202
      %v5204 = vmul.f32 %v5141, 1.442695
      %v5205 = vpow.pop %v5204
      %vm5206 = vcmp.ge.f32.partialorder %v1433, 0.0
      %vm5207 = vcmp.ge.f32.partialorder %v1436, 0.0
      %vm5208 = vcmp.ge.f32.partialorder %v1441, 0.0
      %vm5209 = vcmp.ge.f32.partialorder %v1444, 0.0
      %vm5210 = vcmp.ge.f32.partialorder %v1449, 0.0
      %vm5211 = vcmp.ge.f32.partialorder %v1452, 0.0
      %vm5212 = vcmp.ge.f32.partialorder %v1457, 0.0
      %vm5213 = vcmp.ge.f32.partialorder %v1460, 0.0
      %vm5214 = vcmp.ge.f32.partialorder %v1465, 0.0
      %vm5215 = vcmp.ge.f32.partialorder %v1468, 0.0
      %vm5216 = vcmp.ge.f32.partialorder %v1473, 0.0
      %vm5217 = vcmp.ge.f32.partialorder %v1476, 0.0
      %vm5218 = vcmp.ge.f32.partialorder %v1481, 0.0
      %vm5219 = vcmp.ge.f32.partialorder %v1484, 0.0
      %vm5220 = vcmp.ge.f32.partialorder %v1489, 0.0
      %vm5221 = vcmp.ge.f32.partialorder %v1492, 0.0
      %vm5222 = vcmp.ge.f32.partialorder %v1497, 0.0
      %vm5223 = vcmp.ge.f32.partialorder %v1500, 0.0
      %vm5224 = vcmp.ge.f32.partialorder %v1505, 0.0
      %vm5225 = vcmp.ge.f32.partialorder %v1508, 0.0
      %vm5226 = vcmp.ge.f32.partialorder %v1513, 0.0
      %vm5227 = vcmp.ge.f32.partialorder %v1516, 0.0
      %vm5228 = vcmp.ge.f32.partialorder %v1521, 0.0
      %vm5229 = vcmp.ge.f32.partialorder %v1524, 0.0
      %vm5230 = vcmp.ge.f32.partialorder %v1529, 0.0
      %vm5231 = vcmp.ge.f32.partialorder %v1532, 0.0
      %vm5232 = vcmp.ge.f32.partialorder %v1537, 0.0
      %vm5233 = vcmp.ge.f32.partialorder %v1540, 0.0
      %vm5234 = vcmp.ge.f32.partialorder %v1545, 0.0
      %vm5235 = vcmp.ge.f32.partialorder %v1548, 0.0
      %vm5236 = vcmp.ge.f32.partialorder %v1553, 0.0
      %vm5237 = vcmp.ge.f32.partialorder %v1556, 0.0
      %v5238 = vadd.f32 %v5143, 1.0
      %v5239 = vadd.f32 %v5145, 1.0
      %v5240 = vadd.f32 %v5147, 1.0
      %v5241 = vadd.f32 %v5149, 1.0
      %v5242 = vadd.f32 %v5151, 1.0
      %v5243 = vadd.f32 %v5153, 1.0
      %v5244 = vadd.f32 %v5155, 1.0
      %v5245 = vadd.f32 %v5157, 1.0
      %v5246 = vadd.f32 %v5159, 1.0
      %v5247 = vadd.f32 %v5161, 1.0
      %v5248 = vadd.f32 %v5163, 1.0
      %v5249 = vadd.f32 %v5165, 1.0
      %v5250 = vadd.f32 %v5167, 1.0
      %v5251 = vadd.f32 %v5169, 1.0
      %v5252 = vadd.f32 %v5171, 1.0
      %v5253 = vadd.f32 %v5173, 1.0
      %v5254 = vadd.f32 %v5175, 1.0
      %v5255 = vadd.f32 %v5177, 1.0
      %v5256 = vadd.f32 %v5179, 1.0
      %v5257 = vadd.f32 %v5181, 1.0
      %v5258 = vadd.f32 %v5183, 1.0
      %v5259 = vadd.f32 %v5185, 1.0
      %v5260 = vadd.f32 %v5187, 1.0
      %v5261 = vadd.f32 %v5189, 1.0
      %v5262 = vadd.f32 %v5191, 1.0
      %v5263 = vadd.f32 %v5193, 1.0
      %v5264 = vadd.f32 %v5195, 1.0
      %v5265 = vadd.f32 %v5197, 1.0
      %v5266 = vadd.f32 %v5199, 1.0
      %v5267 = vadd.f32 %v5201, 1.0
      %v5268 = vadd.f32 %v5203, 1.0
      %v5269 = vadd.f32 %v5205, 1.0
      %v5270 = vrcp.pop %v5238
      %v5271 = vmul.f32 1.0, %v5270
      %v5272 = vrcp.pop %v5239
      %v5273 = vmul.f32 1.0, %v5272
      %v5274 = vrcp.pop %v5240
      %v5275 = vmul.f32 1.0, %v5274
      %v5276 = vrcp.pop %v5241
      %v5277 = vmul.f32 1.0, %v5276
      %v5278 = vrcp.pop %v5242
      %v5279 = vmul.f32 1.0, %v5278
      %v5280 = vrcp.pop %v5243
      %v5281 = vmul.f32 1.0, %v5280
      %v5282 = vrcp.pop %v5244
      %v5283 = vmul.f32 1.0, %v5282
      %v5284 = vrcp.pop %v5245
      %v5285 = vmul.f32 1.0, %v5284
      %v5286 = vrcp.pop %v5246
      %v5287 = vmul.f32 1.0, %v5286
      %v5288 = vrcp.pop %v5247
      %v5289 = vmul.f32 1.0, %v5288
      %v5290 = vrcp.pop %v5248
      %v5291 = vmul.f32 1.0, %v5290
      %v5292 = vrcp.pop %v5249
      %v5293 = vmul.f32 1.0, %v5292
      %v5294 = vrcp.pop %v5250
      %v5295 = vmul.f32 1.0, %v5294
      %v5296 = vrcp.pop %v5251
      %v5297 = vmul.f32 1.0, %v5296
      %v5298 = vrcp.pop %v5252
      %v5299 = vmul.f32 1.0, %v5298
      %v5300 = vrcp.pop %v5253
      %v5301 = vmul.f32 1.0, %v5300
      %v5302 = vrcp.pop %v5254
      %v5303 = vmul.f32 1.0, %v5302
      %v5304 = vrcp.pop %v5255
      %v5305 = vmul.f32 1.0, %v5304
      %v5306 = vrcp.pop %v5256
      %v5307 = vmul.f32 1.0, %v5306
      %v5308 = vrcp.pop %v5257
      %v5309 = vmul.f32 1.0, %v5308
      %v5310 = vrcp.pop %v5258
      %v5311 = vmul.f32 1.0, %v5310
      %v5312 = vrcp.pop %v5259
      %v5313 = vmul.f32 1.0, %v5312
      %v5314 = vrcp.pop %v5260
      %v5315 = vmul.f32 1.0, %v5314
      %v5316 = vrcp.pop %v5261
      %v5317 = vmul.f32 1.0, %v5316
      %v5318 = vrcp.pop %v5262
      %v5319 = vmul.f32 1.0, %v5318
      %v5320 = vrcp.pop %v5263
      %v5321 = vmul.f32 1.0, %v5320
      %v5322 = vrcp.pop %v5264
      %v5323 = vmul.f32 1.0, %v5322
      %v5324 = vrcp.pop %v5265
      %v5325 = vmul.f32 1.0, %v5324
      %v5326 = vrcp.pop %v5266
      %v5327 = vmul.f32 1.0, %v5326
      %v5328 = vrcp.pop %v5267
      %v5329 = vmul.f32 1.0, %v5328
      %v5330 = vrcp.pop %v5268
      %v5331 = vmul.f32 1.0, %v5330
      %v5332 = vrcp.pop %v5269
      %v5333 = vmul.f32 1.0, %v5332
      %v5334 = vmul.f32 %v5143, %v5270
      %v5335 = vmul.f32 %v5145, %v5272
      %v5336 = vmul.f32 %v5147, %v5274
      %v5337 = vmul.f32 %v5149, %v5276
      %v5338 = vmul.f32 %v5151, %v5278
      %v5339 = vmul.f32 %v5153, %v5280
      %v5340 = vmul.f32 %v5155, %v5282
      %v5341 = vmul.f32 %v5157, %v5284
      %v5342 = vmul.f32 %v5159, %v5286
      %v5343 = vmul.f32 %v5161, %v5288
      %v5344 = vmul.f32 %v5163, %v5290
      %v5345 = vmul.f32 %v5165, %v5292
      %v5346 = vmul.f32 %v5167, %v5294
      %v5347 = vmul.f32 %v5169, %v5296
      %v5348 = vmul.f32 %v5171, %v5298
      %v5349 = vmul.f32 %v5173, %v5300
      %v5350 = vmul.f32 %v5175, %v5302
      %v5351 = vmul.f32 %v5177, %v5304
      %v5352 = vmul.f32 %v5179, %v5306
      %v5353 = vmul.f32 %v5181, %v5308
      %v5354 = vmul.f32 %v5183, %v5310
      %v5355 = vmul.f32 %v5185, %v5312
      %v5356 = vmul.f32 %v5187, %v5314
      %v5357 = vmul.f32 %v5189, %v5316
      %v5358 = vmul.f32 %v5191, %v5318
      %v5359 = vmul.f32 %v5193, %v5320
      %v5360 = vmul.f32 %v5195, %v5322
      %v5361 = vmul.f32 %v5197, %v5324
      %v5362 = vmul.f32 %v5199, %v5326
      %v5363 = vmul.f32 %v5201, %v5328
      %v5364 = vmul.f32 %v5203, %v5330
      %v5365 = vmul.f32 %v5205, %v5332
      %v5366 = vsel %vm5206, %v5271, %v5334
      %v5367 = vsel %vm5207, %v5273, %v5335
      %v5368 = vsel %vm5208, %v5275, %v5336
      %v5369 = vsel %vm5209, %v5277, %v5337
      %v5370 = vsel %vm5210, %v5279, %v5338
      %v5371 = vsel %vm5211, %v5281, %v5339
      %v5372 = vsel %vm5212, %v5283, %v5340
      %v5373 = vsel %vm5213, %v5285, %v5341
      %v5374 = vsel %vm5214, %v5287, %v5342
      %v5375 = vsel %vm5215, %v5289, %v5343
      %v5376 = vsel %vm5216, %v5291, %v5344
      %v5377 = vsel %vm5217, %v5293, %v5345
      %v5378 = vsel %vm5218, %v5295, %v5346
      %v5379 = vsel %vm5219, %v5297, %v5347
      %v5380 = vsel %vm5220, %v5299, %v5348
      %v5381 = vsel %vm5221, %v5301, %v5349
      %v5382 = vsel %vm5222, %v5303, %v5350
      %v5383 = vsel %vm5223, %v5305, %v5351
      %v5384 = vsel %vm5224, %v5307, %v5352
      %v5385 = vsel %vm5225, %v5309, %v5353
      %v5386 = vsel %vm5226, %v5311, %v5354
      %v5387 = vsel %vm5227, %v5313, %v5355
      %v5388 = vsel %vm5228, %v5315, %v5356
      %v5389 = vsel %vm5229, %v5317, %v5357
      %v5390 = vsel %vm5230, %v5319, %v5358
      %v5391 = vsel %vm5231, %v5321, %v5359
      %v5392 = vsel %vm5232, %v5323, %v5360
      %v5393 = vsel %vm5233, %v5325, %v5361
      %v5394 = vsel %vm5234, %v5327, %v5362
      %v5395 = vsel %vm5235, %v5329, %v5363
      %v5396 = vsel %vm5236, %v5331, %v5364
      %v5397 = vsel %vm5237, %v5333, %v5365
      %v5398 = vmul.f32 %v1433, %v5366
      %v5399 = vmul.f32 %v1436, %v5367
      %v5400 = vmul.f32 %v1441, %v5368
      %v5401 = vmul.f32 %v1444, %v5369
      %v5402 = vmul.f32 %v1449, %v5370
      %v5403 = vmul.f32 %v1452, %v5371
      %v5404 = vmul.f32 %v1457, %v5372
      %v5405 = vmul.f32 %v1460, %v5373
      %v5406 = vmul.f32 %v1465, %v5374
      %v5407 = vmul.f32 %v1468, %v5375
      %v5408 = vmul.f32 %v1473, %v5376
      %v5409 = vmul.f32 %v1476, %v5377
      %v5410 = vmul.f32 %v1481, %v5378
      %v5411 = vmul.f32 %v1484, %v5379
      %v5412 = vmul.f32 %v1489, %v5380
      %v5413 = vmul.f32 %v1492, %v5381
      %v5414 = vmul.f32 %v1497, %v5382
      %v5415 = vmul.f32 %v1500, %v5383
      %v5416 = vmul.f32 %v1505, %v5384
      %v5417 = vmul.f32 %v1508, %v5385
      %v5418 = vmul.f32 %v1513, %v5386
      %v5419 = vmul.f32 %v1516, %v5387
      %v5420 = vmul.f32 %v1521, %v5388
      %v5421 = vmul.f32 %v1524, %v5389
      %v5422 = vmul.f32 %v1529, %v5390
      %v5423 = vmul.f32 %v1532, %v5391
      %v5424 = vmul.f32 %v1537, %v5392
      %v5425 = vmul.f32 %v1540, %v5393
      %v5426 = vmul.f32 %v1545, %v5394
      %v5427 = vmul.f32 %v1548, %v5395
      %v5428 = vmul.f32 %v1553, %v5396
      %v5429 = vmul.f32 %v1556, %v5397
      %5462 = vrot.lane.b32.xlu0 %v5398, 120
      %v5463 = vpop.permute.xlu0 %5462
      %5464 = vrot.lane.b32.xlu0 %v5399, 120
      %v5465 = vpop.permute.xlu0 %5464
      %5466 = vrot.lane.b32.xlu0 %v5400, 120
      %v5467 = vpop.permute.xlu0 %5466
      %5468 = vrot.lane.b32.xlu0 %v5401, 120
      %v5469 = vpop.permute.xlu0 %5468
      %5470 = vrot.lane.b32.xlu0 %v5402, 120
      %v5471 = vpop.permute.xlu0 %5470
      %5472 = vrot.lane.b32.xlu0 %v5403, 120
      %v5473 = vpop.permute.xlu0 %5472
      %5474 = vrot.lane.b32.xlu0 %v5404, 120
      %v5475 = vpop.permute.xlu0 %5474
      %5476 = vrot.lane.b32.xlu0 %v5405, 120
      %v5477 = vpop.permute.xlu0 %5476
      %5478 = vrot.lane.b32.xlu0 %v5406, 120
      %v5479 = vpop.permute.xlu0 %5478
      %5480 = vrot.lane.b32.xlu0 %v5407, 120
      %v5481 = vpop.permute.xlu0 %5480
      %5482 = vrot.lane.b32.xlu0 %v5408, 120
      %v5483 = vpop.permute.xlu0 %5482
      %5484 = vrot.lane.b32.xlu0 %v5409, 120
      %v5485 = vpop.permute.xlu0 %5484
      %5486 = vrot.lane.b32.xlu0 %v5410, 120
      %v5487 = vpop.permute.xlu0 %5486
      %5488 = vrot.lane.b32.xlu0 %v5411, 120
      %v5489 = vpop.permute.xlu0 %5488
      %5490 = vrot.lane.b32.xlu0 %v5412, 120
      %v5491 = vpop.permute.xlu0 %5490
      %5492 = vrot.lane.b32.xlu0 %v5413, 120
      %v5493 = vpop.permute.xlu0 %5492
      %5494 = vrot.lane.b32.xlu0 %v5414, 120
      %v5495 = vpop.permute.xlu0 %5494
      %5496 = vrot.lane.b32.xlu0 %v5415, 120
      %v5497 = vpop.permute.xlu0 %5496
      %5498 = vrot.lane.b32.xlu0 %v5416, 120
      %v5499 = vpop.permute.xlu0 %5498
      %5500 = vrot.lane.b32.xlu0 %v5417, 120
      %v5501 = vpop.permute.xlu0 %5500
      %5502 = vrot.lane.b32.xlu0 %v5418, 120
      %v5503 = vpop.permute.xlu0 %5502
      %5504 = vrot.lane.b32.xlu0 %v5419, 120
      %v5505 = vpop.permute.xlu0 %5504
      %5506 = vrot.lane.b32.xlu0 %v5420, 120
      %v5507 = vpop.permute.xlu0 %5506
      %5508 = vrot.lane.b32.xlu0 %v5421, 120
      %v5509 = vpop.permute.xlu0 %5508
      %5510 = vrot.lane.b32.xlu0 %v5422, 120
      %v5511 = vpop.permute.xlu0 %5510
      %5512 = vrot.lane.b32.xlu0 %v5423, 120
      %v5513 = vpop.permute.xlu0 %5512
      %5514 = vrot.lane.b32.xlu0 %v5424, 120
      %v5515 = vpop.permute.xlu0 %5514
      %5516 = vrot.lane.b32.xlu0 %v5425, 120
      %v5517 = vpop.permute.xlu0 %5516
      %5518 = vrot.lane.b32.xlu0 %v5426, 120
      %v5519 = vpop.permute.xlu0 %5518
      %5520 = vrot.lane.b32.xlu0 %v5427, 120
      %v5521 = vpop.permute.xlu0 %5520
      %5522 = vrot.lane.b32.xlu0 %v5428, 120
      %v5523 = vpop.permute.xlu0 %5522
      %5524 = vrot.lane.b32.xlu0 %v5429, 120
      %v5525 = vpop.permute.xlu0 %5524
      %v5558 = vmul.f32 %v5046, %v5463
      %v5559 = vmul.f32 %v5047, %v5465
      %v5560 = vmul.f32 %v5048, %v5467
      %v5561 = vmul.f32 %v5049, %v5469
      %v5562 = vmul.f32 %v5050, %v5471
      %v5563 = vmul.f32 %v5051, %v5473
      %v5564 = vmul.f32 %v5052, %v5475
      %v5565 = vmul.f32 %v5053, %v5477
      %v5566 = vmul.f32 %v5054, %v5479
      %v5567 = vmul.f32 %v5055, %v5481
      %v5568 = vmul.f32 %v5056, %v5483
      %v5569 = vmul.f32 %v5057, %v5485
      %v5570 = vmul.f32 %v5058, %v5487
      %v5571 = vmul.f32 %v5059, %v5489
      %v5572 = vmul.f32 %v5060, %v5491
      %v5573 = vmul.f32 %v5061, %v5493
      %v5574 = vmul.f32 %v5062, %v5495
      %v5575 = vmul.f32 %v5063, %v5497
      %v5576 = vmul.f32 %v5064, %v5499
      %v5577 = vmul.f32 %v5065, %v5501
      %v5578 = vmul.f32 %v5066, %v5503
      %v5579 = vmul.f32 %v5067, %v5505
      %v5580 = vmul.f32 %v5068, %v5507
      %v5581 = vmul.f32 %v5069, %v5509
      %v5582 = vmul.f32 %v5070, %v5511
      %v5583 = vmul.f32 %v5071, %v5513
      %v5584 = vmul.f32 %v5072, %v5515
      %v5585 = vmul.f32 %v5073, %v5517
      %v5586 = vmul.f32 %v5074, %v5519
      %v5587 = vmul.f32 %v5075, %v5521
      %v5588 = vmul.f32 %v5076, %v5523
      %v5589 = vmul.f32 %v5077, %v5525
      %v5590 = vpack.c.bf16 %v5559, %v5558
      %v5591 = vpack.c.bf16 %v5561, %v5560
      %v5592 = vpack.c.bf16 %v5563, %v5562
      %v5593 = vpack.c.bf16 %v5565, %v5564
      %v5594 = vpack.c.bf16 %v5567, %v5566
      %v5595 = vpack.c.bf16 %v5569, %v5568
      %v5596 = vpack.c.bf16 %v5571, %v5570
      %v5597 = vpack.c.bf16 %v5573, %v5572
      %v5598 = vpack.c.bf16 %v5575, %v5574
      %v5599 = vpack.c.bf16 %v5577, %v5576
      %v5600 = vpack.c.bf16 %v5579, %v5578
      %v5601 = vpack.c.bf16 %v5581, %v5580
      %v5602 = vpack.c.bf16 %v5583, %v5582
      %v5603 = vpack.c.bf16 %v5585, %v5584
      %v5604 = vpack.c.bf16 %v5587, %v5586
      %v5605 = vpack.c.bf16 %v5589, %v5588
      %v5606 = vld [vmem:[%s715] sm:$0xf]
      %v5607 = vld [vmem:[%s718] sm:$0x1]
      %v5609 = vlaneseq
      %v5610 = vshrl.u32 %v5609, 7
      %v5611 = vsub.s32 0, %v5610
      %v5612 = vrot.slane %v5607, %v5611
      %v5615 = vsel %vm2816, %v5590, 0
      %v5618 = vsel %vm2816, %v5591, 0
      %v5621 = vsel %vm2816, %v5592, 0
      %v5624 = vsel %vm2816, %v5593, 0
      %v5627 = vsel %vm2816, %v5594, 0
      %v5630 = vsel %vm2816, %v5595, 0
      %v5633 = vsel %vm2816, %v5596, 0
      %v5636 = vsel %vm2816, %v5597, 0
      %v5639 = vsel %vm2816, %v5598, 0
      %v5642 = vsel %vm2816, %v5599, 0
      %v5645 = vsel %vm2816, %v5600, 0
      %v5648 = vsel %vm2816, %v5601, 0
      %v5651 = vsel %vm2816, %v5602, 0
      %v5654 = vsel %vm2816, %v5603, 0
      %v5657 = vsel %vm2816, %v5604, 0
      %v5660 = vsel %vm2816, %v5605, 0
      %v5663 = vsel %vm2865, %v5606, 0
      %5665 = vmatprep.subr.bf16.mxu0 0
      %5666 = vmatpush1.bf16.msra.mxu0 %v5663
      %5667 = vmatprep.subr.bf16.mxu0 0
      %5668 = vmatpush1.bf16.msra.mxu0 0
      %5669 = vmatprep.subr.bf16.mxu0 0
      %5670 = vmatpush1.bf16.msra.mxu0 0
      %5671 = vmatprep.subr.bf16.mxu0 0
      %5672 = vmatpush1.bf16.msra.mxu0 0
      %5673 = vmatprep.subr.bf16.mxu0 0
      %5674 = vmatpush1.bf16.msra.mxu0 0
      %5675 = vmatprep.subr.bf16.mxu0 0
      %5676 = vmatpush1.bf16.msra.mxu0 0
      %5677 = vmatprep.subr.bf16.mxu0 0
      %5678 = vmatpush1.bf16.msra.mxu0 0
      %5679 = vmatprep.subr.bf16.mxu0 0
      %5680 = vmatpush1.bf16.msra.mxu0 0
      %5681 = vmatprep.subr.bf16.mxu0 0
      %5682 = vmatpush1.bf16.msra.mxu0 0
      %5683 = vmatprep.subr.bf16.mxu0 0
      %5684 = vmatpush1.bf16.msra.mxu0 0
      %5685 = vmatprep.subr.bf16.mxu0 0
      %5686 = vmatpush1.bf16.msra.mxu0 0
      %5687 = vmatprep.subr.bf16.mxu0 0
      %5688 = vmatpush1.bf16.msra.mxu0 0
      %5689 = vmatprep.subr.bf16.mxu0 0
      %5690 = vmatpush1.bf16.msra.mxu0 0
      %5691 = vmatprep.subr.bf16.mxu0 0
      %5692 = vmatpush1.bf16.msra.mxu0 0
      %5693 = vmatprep.subr.bf16.mxu0 0
      %5694 = vmatpush1.bf16.msra.mxu0 0
      %5695 = vmatprep.subr.bf16.mxu0 0
      %5696 = vmatpush1.bf16.msra.mxu0 0
      %5697 = vmatprep.mubr.bf16.mxu0 0
      %5698 = vmatmul.mubr.bf16.gmra.mrb[0].mxu0 %v5615
      %v5699 = vpop.f32.mrb[0].mxu0
      %v5700 = vadd.f32 %v5612, %v5699
      %v5701 = vpop.f32.mrb[0].mxu0
      %v5702 = vpop.f32.mrb[0].mxu0
      %v5703 = vadd.f32 %v5612, %v5702
      %v5704 = vpop.f32.mrb[0].mxu0
      %5705 = vmatprep.mubr.bf16.mxu0 0
      %5706 = vmatmul.mubr.bf16.gmra.mrb[0].mxu0 %v5618
      %v5707 = vpop.f32.mrb[0].mxu0
      %v5708 = vadd.f32 %v5612, %v5707
      %v5709 = vpop.f32.mrb[0].mxu0
      %v5710 = vpop.f32.mrb[0].mxu0
      %v5711 = vadd.f32 %v5612, %v5710
      %v5712 = vpop.f32.mrb[0].mxu0
      %5713 = vmatprep.mubr.bf16.mxu0 0
      %5714 = vmatmul.mubr.bf16.gmra.mrb[0].mxu0 %v5621
      %v5715 = vpop.f32.mrb[0].mxu0
      %v5716 = vadd.f32 %v5612, %v5715
      %v5717 = vpop.f32.mrb[0].mxu0
      %v5718 = vpop.f32.mrb[0].mxu0
      %v5719 = vadd.f32 %v5612, %v5718
      %v5720 = vpop.f32.mrb[0].mxu0
      %5721 = vmatprep.mubr.bf16.mxu0 0
      %5722 = vmatmul.mubr.bf16.gmra.mrb[0].mxu0 %v5624
      %v5723 = vpop.f32.mrb[0].mxu0
      %v5724 = vadd.f32 %v5612, %v5723
      %v5725 = vpop.f32.mrb[0].mxu0
      %v5726 = vpop.f32.mrb[0].mxu0
      %v5727 = vadd.f32 %v5612, %v5726
      %v5728 = vpop.f32.mrb[0].mxu0
      %5729 = vmatprep.mubr.bf16.mxu0 0
      %5730 = vmatmul.mubr.bf16.gmra.mrb[0].mxu0 %v5627
      %v5731 = vpop.f32.mrb[0].mxu0
      %v5732 = vadd.f32 %v5612, %v5731
      %v5733 = vpop.f32.mrb[0].mxu0
      %v5734 = vpop.f32.mrb[0].mxu0
      %v5735 = vadd.f32 %v5612, %v5734
      %v5736 = vpop.f32.mrb[0].mxu0
      %5737 = vmatprep.mubr.bf16.mxu0 0
      %5738 = vmatmul.mubr.bf16.gmra.mrb[0].mxu0 %v5630
      %v5739 = vpop.f32.mrb[0].mxu0
      %v5740 = vadd.f32 %v5612, %v5739
      %v5741 = vpop.f32.mrb[0].mxu0
      %v5742 = vpop.f32.mrb[0].mxu0
      %v5743 = vadd.f32 %v5612, %v5742
      %v5744 = vpop.f32.mrb[0].mxu0
      %5745 = vmatprep.mubr.bf16.mxu0 0
      %5746 = vmatmul.mubr.bf16.gmra.mrb[0].mxu0 %v5633
      %v5747 = vpop.f32.mrb[0].mxu0
      %v5748 = vadd.f32 %v5612, %v5747
      %v5749 = vpop.f32.mrb[0].mxu0
      %v5750 = vpop.f32.mrb[0].mxu0
      %v5751 = vadd.f32 %v5612, %v5750
      %v5752 = vpop.f32.mrb[0].mxu0
      %5753 = vmatprep.mubr.bf16.mxu0 0
      %5754 = vmatmul.mubr.bf16.gmra.mrb[0].mxu0 %v5636
      %v5755 = vpop.f32.mrb[0].mxu0
      %v5756 = vadd.f32 %v5612, %v5755
      %v5757 = vpop.f32.mrb[0].mxu0
      %v5758 = vpop.f32.mrb[0].mxu0
      %v5759 = vadd.f32 %v5612, %v5758
      %v5760 = vpop.f32.mrb[0].mxu0
      %5761 = vmatprep.mubr.bf16.mxu0 0
      %5762 = vmatmul.mubr.bf16.gmra.mrb[0].mxu0 %v5639
      %v5763 = vpop.f32.mrb[0].mxu0
      %v5764 = vadd.f32 %v5612, %v5763
      %v5765 = vpop.f32.mrb[0].mxu0
      %v5766 = vpop.f32.mrb[0].mxu0
      %v5767 = vadd.f32 %v5612, %v5766
      %v5768 = vpop.f32.mrb[0].mxu0
      %5769 = vmatprep.mubr.bf16.mxu0 0
      %5770 = vmatmul.mubr.bf16.gmra.mrb[0].mxu0 %v5642
      %v5771 = vpop.f32.mrb[0].mxu0
      %v5772 = vadd.f32 %v5612, %v5771
      %v5773 = vpop.f32.mrb[0].mxu0
      %v5774 = vpop.f32.mrb[0].mxu0
      %v5775 = vadd.f32 %v5612, %v5774
      %v5776 = vpop.f32.mrb[0].mxu0
      %5777 = vmatprep.mubr.bf16.mxu0 0
      %5778 = vmatmul.mubr.bf16.gmra.mrb[0].mxu0 %v5645
      %v5779 = vpop.f32.mrb[0].mxu0
      %v5780 = vadd.f32 %v5612, %v5779
      %v5781 = vpop.f32.mrb[0].mxu0
      %v5782 = vpop.f32.mrb[0].mxu0
      %v5783 = vadd.f32 %v5612, %v5782
      %v5784 = vpop.f32.mrb[0].mxu0
      %5785 = vmatprep.mubr.bf16.mxu0 0
      %5786 = vmatmul.mubr.bf16.gmra.mrb[0].mxu0 %v5648
      %v5787 = vpop.f32.mrb[0].mxu0
      %v5788 = vadd.f32 %v5612, %v5787
      %v5789 = vpop.f32.mrb[0].mxu0
      %v5790 = vpop.f32.mrb[0].mxu0
      %v5791 = vadd.f32 %v5612, %v5790
      %v5792 = vpop.f32.mrb[0].mxu0
      %5793 = vmatprep.mubr.bf16.mxu0 0
      %5794 = vmatmul.mubr.bf16.gmra.mrb[0].mxu0 %v5651
      %v5795 = vpop.f32.mrb[0].mxu0
      %v5796 = vadd.f32 %v5612, %v5795
      %v5797 = vpop.f32.mrb[0].mxu0
      %v5798 = vpop.f32.mrb[0].mxu0
      %v5799 = vadd.f32 %v5612, %v5798
      %v5800 = vpop.f32.mrb[0].mxu0
      %5801 = vmatprep.mubr.bf16.mxu0 0
      %5802 = vmatmul.mubr.bf16.gmra.mrb[0].mxu0 %v5654
      %v5803 = vpop.f32.mrb[0].mxu0
      %v5804 = vadd.f32 %v5612, %v5803
      %v5805 = vpop.f32.mrb[0].mxu0
      %v5806 = vpop.f32.mrb[0].mxu0
      %v5807 = vadd.f32 %v5612, %v5806
      %v5808 = vpop.f32.mrb[0].mxu0
      %5809 = vmatprep.mubr.bf16.mxu0 0
      %5810 = vmatmul.mubr.bf16.gmra.mrb[0].mxu0 %v5657
      %v5811 = vpop.f32.mrb[0].mxu0
      %v5812 = vadd.f32 %v5612, %v5811
      %v5813 = vpop.f32.mrb[0].mxu0
      %v5814 = vpop.f32.mrb[0].mxu0
      %v5815 = vadd.f32 %v5612, %v5814
      %v5816 = vpop.f32.mrb[0].mxu0
      %5817 = vmatprep.mubr.bf16.mxu0 0
      %5818 = vmatmul.mubr.bf16.gmra.mrb[0].mxu0 %v5660
      %v5819 = vpop.f32.mrb[0].mxu0
      %v5820 = vadd.f32 %v5612, %v5819
      %v5821 = vpop.f32.mrb[0].mxu0
      %v5822 = vpop.f32.mrb[0].mxu0
      %v5823 = vadd.f32 %v5612, %v5822
      %v5824 = vpop.f32.mrb[0].mxu0
      %5825 = vdwg.mxu0
      %v5826 = vadd.f32 %v794, %v5700
      %v5827 = vadd.f32 %v795, %v5703
      %v5828 = vadd.f32 %v796, %v5708
      %v5829 = vadd.f32 %v797, %v5711
      %v5830 = vadd.f32 %v798, %v5716
      %v5831 = vadd.f32 %v799, %v5719
      %v5832 = vadd.f32 %v800, %v5724
      %v5833 = vadd.f32 %v801, %v5727
      %v5834 = vadd.f32 %v802, %v5732
      %v5835 = vadd.f32 %v803, %v5735
      %v5836 = vadd.f32 %v804, %v5740
      %v5837 = vadd.f32 %v805, %v5743
      %v5838 = vadd.f32 %v806, %v5748
      %v5839 = vadd.f32 %v807, %v5751
      %v5840 = vadd.f32 %v808, %v5756
      %v5841 = vadd.f32 %v809, %v5759
      %v5842 = vadd.f32 %v810, %v5764
      %v5843 = vadd.f32 %v811, %v5767
      %v5844 = vadd.f32 %v812, %v5772
      %v5845 = vadd.f32 %v813, %v5775
      %v5846 = vadd.f32 %v814, %v5780
      %v5847 = vadd.f32 %v815, %v5783
      %v5848 = vadd.f32 %v816, %v5788
      %v5849 = vadd.f32 %v817, %v5791
      %v5850 = vadd.f32 %v818, %v5796
      %v5851 = vadd.f32 %v819, %v5799
      %v5852 = vadd.f32 %v820, %v5804
      %v5853 = vadd.f32 %v821, %v5807
      %v5854 = vadd.f32 %v822, %v5812
      %v5855 = vadd.f32 %v823, %v5815
      %v5856 = vadd.f32 %v824, %v5820
      %v5857 = vadd.f32 %v825, %v5823
      %5858 = vst.msk [vmem:[%s723] sm:$0xff] %vm826, %v5826
      %5859 = vst.msk [vmem:[%s723 + $0x8] sm:$0xff] %vm826, %v5827
      %5860 = vst.msk [vmem:[%s723 + $0x10] sm:$0xff] %vm826, %v5828
      %5861 = vst.msk [vmem:[%s723 + $0x18] sm:$0xff] %vm826, %v5829
      %5862 = vst.msk [vmem:[%s723 + $0x20] sm:$0xff] %vm826, %v5830
      %5863 = vst.msk [vmem:[%s723 + $0x28] sm:$0xff] %vm826, %v5831
      %5864 = vst.msk [vmem:[%s723 + $0x30] sm:$0xff] %vm826, %v5832
      %5865 = vst.msk [vmem:[%s723 + $0x38] sm:$0xff] %vm826, %v5833
      %5866 = vst.msk [vmem:[%s723 + $0x40] sm:$0xff] %vm826, %v5834
      %5867 = vst.msk [vmem:[%s723 + $0x48] sm:$0xff] %vm826, %v5835
      %5868 = vst.msk [vmem:[%s723 + $0x50] sm:$0xff] %vm826, %v5836
      %5869 = vst.msk [vmem:[%s723 + $0x58] sm:$0xff] %vm826, %v5837
      %5870 = vst.msk [vmem:[%s723 + $0x60] sm:$0xff] %vm826, %v5838
      %5871 = vst.msk [vmem:[%s723 + $0x68] sm:$0xff] %vm826, %v5839
      %5872 = vst.msk [vmem:[%s723 + $0x70] sm:$0xff] %vm826, %v5840
      %5873 = vst.msk [vmem:[%s723 + $0x78] sm:$0xff] %vm826, %v5841
      %5874 = vst.msk [vmem:[%s723 + $0x80] sm:$0xff] %vm826, %v5842
      %5875 = vst.msk [vmem:[%s723 + $0x88] sm:$0xff] %vm826, %v5843
      %5876 = vst.msk [vmem:[%s723 + $0x90] sm:$0xff] %vm826, %v5844
      %5877 = vst.msk [vmem:[%s723 + $0x98] sm:$0xff] %vm826, %v5845
      %5878 = vst.msk [vmem:[%s723 + $0xa0] sm:$0xff] %vm826, %v5846
      %5879 = vst.msk [vmem:[%s723 + $0xa8] sm:$0xff] %vm826, %v5847
      %5880 = vst.msk [vmem:[%s723 + $0xb0] sm:$0xff] %vm826, %v5848
      %5881 = vst.msk [vmem:[%s723 + $0xb8] sm:$0xff] %vm826, %v5849
      %5882 = vst.msk [vmem:[%s723 + $0xc0] sm:$0xff] %vm826, %v5850
      %5883 = vst.msk [vmem:[%s723 + $0xc8] sm:$0xff] %vm826, %v5851
      %5884 = vst.msk [vmem:[%s723 + $0xd0] sm:$0xff] %vm826, %v5852
      %5885 = vst.msk [vmem:[%s723 + $0xd8] sm:$0xff] %vm826, %v5853
      %5886 = vst.msk [vmem:[%s723 + $0xe0] sm:$0xff] %vm826, %v5854
      %5887 = vst.msk [vmem:[%s723 + $0xe8] sm:$0xff] %vm826, %v5855
      %5888 = vst.msk [vmem:[%s723 + $0xf0] sm:$0xff] %vm826, %v5856
      %5889 = vst.msk [vmem:[%s723 + $0xf8] sm:$0xff] %vm826, %v5857
      %p5890 = scmp.lt.s32.totalorder %s30, 1
      %s5891 = scalar_select %p5890, %s30, 1
      %s5892 = smul.addr %s5891, 32
      %s5893 = smul.addr %s5892, 8
      %s5894 = scalar_lea.vmem %s15, %s5893
      // Predicated region
      $region92: #{tpu_custom_call.1} parent=79 // pred_check
        %p5895 = pneg %p446
      $region93: #{tpu_custom_call.1} parent=79 // pred_check_branch
        %5897 = sbr.rel (%p5895) target = $region95
      $region94: #{tpu_custom_call.1} parent=79 // pred_region
        _
      $region95: #{tpu_custom_call.1} parent=79 // pred_fallthru
        _
    $region80: #{tpu_custom_call.1} parent=5 // pred_fallthru
      _
    %p5898 = scmp.le.s32.totalorder 2, %s21
    // Predicated region
    $region96: #{tpu_custom_call.1} parent=5 // pred_check
      %p5899 = pneg %p5898
    $region97: #{tpu_custom_call.1} parent=5 // pred_check_branch
      %5901 = sbr.rel (%p5899) target = $region99
    $region98: #{tpu_custom_call.1} parent=5 // pred_region
      %s5902 = ssub.s32 %s21, 2
      // Predicated region
      $region100: #{tpu_custom_call.1} parent=98 // pred_check
        %p5903 = pneg %p452
      $region101: #{tpu_custom_call.1} parent=98 // pred_check_branch
        %5905 = sbr.rel (%p5903) target = $region103
      $region102: #{tpu_custom_call.1} parent=98 // pred_region
        %p5906 = scmp.lt.s32.totalorder %s32, 1
        %s5907 = scalar_select %p5906, %s32, 1
        %s5908 = smul.addr %s5907, 32
        %s5909 = smul.addr %s5908, 8
        %s5910 = scalar_lea.vmem %s15, %s5909
      $region103: #{tpu_custom_call.1} parent=98 // pred_fallthru
        _
    $region99: #{tpu_custom_call.1} parent=5 // pred_fallthru
      _
  $region6: #{tpu_custom_call.1} parent=0 // loop_footer
    %s25 = sadd.s32 1, %s21
  $region7: #{tpu_custom_call.1} parent=0 // loop_footer_branch
    %20 = sbr.rel target = $region3
  $region8: #{tpu_custom_call.1} parent=0 // loop_exit
    _

</llo_original>
